<compile_context>
chip_gen: v6e
topology: v6e:2x2x1
jax: 0.10.0
libtpu: 0.0.40
codegen_flags: <defaults>
</compile_context>

<pallas_src>
import numpy as np
import jax
import jax.numpy as jnp
from jax import lax
from jax.experimental import pallas as pl
from jax.experimental.pallas import tpu as pltpu

# (dy, dx) offsets implied by kernel1..kernel8 (cross-correlation semantics)
OFFSETS = [(-1, -1), (-1, 0), (-1, 1), (0, 1), (1, 1), (1, 0), (1, -1), (0, -1)]


def make_kernel(C, in_r, out_c, TH, W, H, n_th):
    """Kernel for one (batch, row-tile) grid step, plane layout
    (H rows on sublanes, W columns on lanes)."""

    def kernel(x_hbm, w1_ref, b1_ref, w2_ref, b2_ref, wl1_ref, bl1_ref,
               w_out_ref, b_out_ref, o_ref, slab, sem):
        f32 = jnp.float32
        b = pl.program_id(0)
        t = pl.program_id(1)
        slot = t % 2

        # ---- manual double-buffered input DMA of the (C, TH+2, W) halo slab
        def issue(tile_idx, s):
            pltpu.make_async_copy(
                x_hbm.at[b, :, pl.ds(tile_idx * TH, TH + 2), :],
                slab.at[s], sem.at[s]).start()

        @pl.when(t == 0)            # first row-tile of this batch: fetch self
        def _():
            issue(0, 0)

        @pl.when(t + 1 < n_th)      # prefetch next row-tile (same batch/core)
        def _():
            issue(t + 1, 1 - slot)

        # wait for the current slab (descriptor only needs matching shapes)
        pltpu.make_async_copy(
            x_hbm.at[0, :, pl.ds(0, TH + 2), :],
            slab.at[slot], sem.at[slot]).wait()

        # ---- boundary masks, built in-kernel (no HBM mask input) -----------
        rows_g = lax.broadcasted_iota(jnp.int32, (TH, W), 0) + t * TH
        cols_h = lax.broadcasted_iota(jnp.int32, (TH + 2, W), 1)
        row_ok_up = rows_g >= 1            # image row above exists
        row_ok_dn = rows_g <= H - 2        # image row below exists
        col_ok_right = cols_h <= W - 2     # source column w+1 in range
        col_ok_left = cols_h >= 1          # source column w-1 in range

        # ---- lane-shift direction: one scalar probe per tile ---------------
        # pltpu.roll is expected to follow jnp.roll semantics
        # (out[j] = in[(j - shift) % W]); the probe folds to a scalar so the
        # per-plane rolls below just use (dynamic) shift amounts — no
        # plane-wide convention selects.
        pcols = lax.broadcasted_iota(jnp.int32, (8, W), 1)
        probe = pltpu.roll(pcols.astype(f32), W - 1, 1)
        expected = jnp.where(pcols == W - 1, 0, pcols + 1).astype(f32)
        mismatch = jnp.sum(jnp.abs(probe - expected))
        right_amt = jnp.where(mismatch == 0.0, W - 1, 1).astype(jnp.int32)
        left_amt = (W - right_amt).astype(jnp.int32)

        def lane_shifted(p_h):
            """(p(:, w+1), p(:, w-1)), zero where the source column is OOB."""
            p_right = jnp.where(col_ok_right, pltpu.roll(p_h, right_amt, 1), 0.0)
            p_left = jnp.where(col_ok_left, pltpu.roll(p_h, left_amt, 1), 0.0)
            return p_right, p_left

        def shifted_planes(p_h):
            """The 8 zero-padded neighbour planes, interior height TH."""
            # TODO(synk): row starts 0/1/2 are sublane-unaligned slices; if the
            # bundle dump shows relayout copies, switch the dy shifts to
            # pltpu.roll(axis=0) with a one-row halo fixup.
            p_right, p_left = lane_shifted(p_h)
            variants = {0: p_h, 1: p_right, -1: p_left}
            outs = []
            for dy, dx in OFFSETS:
                s = variants[dx][1 + dy:1 + dy + TH, :]   # row shift = halo slice
                if dy == -1:
                    s = jnp.where(row_ok_up, s, 0.0)
                elif dy == 1:
                    s = jnp.where(row_ok_dn, s, 0.0)
                outs.append(s)
            return outs

        # ---- single channel pass: fused out_conv_1 x-term + input_layer1/2 -
        acc = [jnp.full((TH, W), b_out_ref[o], f32) for o in range(out_c)]
        cen1 = [jnp.full((TH + 2, W), b1_ref[g], f32) for g in range(in_r)]
        cen2 = [jnp.full((TH + 2, W), b2_ref[g], f32) for g in range(in_r)]
        for c in range(C):
            xc_h = slab[slot, c]             # (TH+2, W): one load stream
            xc = xc_h[1:TH + 1, :]           # interior rows derived, no reload
            for o in range(out_c):
                acc[o] = acc[o] + xc * w_out_ref[o, c]
            for g in range(in_r):
                cen1[g] = cen1[g] + xc_h * w1_ref[g, c]
                cen2[g] = cen2[g] + xc_h * w2_ref[g, c]

        # ---- square_conv path: products, elementwise sort-4, layer1 --------
        for g in range(in_r):
            c2_int = cen2[g][1:TH + 1, :]
            sh = shifted_planes(cen2[g])
            d = [c2_int - s for s in sh]
            p0, p1, p2, p3 = (d[k] * d[k + 4] for k in range(4))
            lo01, hi01 = jnp.minimum(p0, p1), jnp.maximum(p0, p1)
            lo23, hi23 = jnp.minimum(p2, p3), jnp.maximum(p2, p3)
            s0 = jnp.minimum(lo01, lo23)
            s3 = jnp.maximum(hi01, hi23)
            m1 = jnp.maximum(lo01, lo23)
            m2 = jnp.minimum(hi01, hi23)
            s1 = jnp.minimum(m1, m2)
            s2 = jnp.maximum(m1, m2)
            sout_g = (s0 * wl1_ref[g, 0] + s1 * wl1_ref[g, 1] +
                      s2 * wl1_ref[g, 2] + s3 * wl1_ref[g, 3] + bl1_ref[g])
            for o in range(out_c):
                acc[o] = acc[o] + sout_g * w_out_ref[o, C + g]

        # ---- delta_conv path, accumulated straight into the fused out conv -
        for g in range(in_r):
            c1_int = cen1[g][1:TH + 1, :]
            sh = shifted_planes(cen1[g])
            for k in range(8):
                dk = c1_int - sh[k]
                col = C + in_r + k * in_r + g
                for o in range(out_c):
                    acc[o] = acc[o] + dk * w_out_ref[o, col]

        for o in range(out_c):
            o_ref[0, o] = acc[o]

    return kernel


def _vmem_capacity_bytes():
    """Generation-aware VMEM capacity (64 MiB v7x, 128 MiB v5e/v6e)."""
    try:
        return int(pltpu.get_tpu_info().vmem_capacity_bytes)
    except Exception:
        return 64 * 1024 * 1024   # conservative (v7x)


def _pick_tile_rows(C, in_r, out_c, B, H, W, vmem_budget):
    """Rows per tile: biggest tile fitting the VMEM budget, preferring a TH
    that divides H (no padded output rows) and keeping >= 2 grid steps when
    B == 1 so both v7x TensorCores get work."""
    # resident bytes per image row:
    #   2*C     input slab double buffer      2*out_c  output block (dbl-buf)
    #   out_c   acc planes                    2*in_r   cen1/cen2 halo planes
    #   24      live stencil temporaries (shifted planes/diffs/products/sort)
    per_row = 4 * W * (2 * C + 3 * out_c + 2 * in_r + 24)
    max_th = max(8, vmem_budget // max(per_row, 1))
    min_tiles = 2 if B == 1 else 1

    if H < 16:
        return H                               # cannot split into 8-row tiles
    if H <= max_th and B >= min_tiles:
        return H                               # single full-height tile

    best = 0
    for th in range(8, min(H, max_th) + 1, 8):
        if H % th == 0 and B * (H // th) >= min_tiles:
            best = th
    if best:
        return best
    # Fallback: 8-aligned non-divisor (output rows padded, sliced afterwards).
    return max(8, (min(H, max_th) // 8) * 8)


def gradient_based_module(x_nchw, params, out_c, tile_rows=None):
    """Forward pass. x_nchw: (B, C, H, W) float32 -> (B, out_c, H, W)."""
    B, C, H, W = x_nchw.shape
    in_r = max(C // 8, 1)
    assert W >= 3, "kernel assumes W >= 3"

    vmem_cap = _vmem_capacity_bytes()
    vmem_limit = int(vmem_cap * 0.80)
    vmem_budget = int(vmem_cap * 0.60)

    TH = (_pick_tile_rows(C, in_r, out_c, B, H, W, vmem_budget)
          if tile_rows is None else int(tile_rows))
    TH = min(TH, H)
    if TH < H:
        TH = max(8, (TH // 8) * 8)   # tiled output blocks need 8-aligned rows
    n_th = -(-H // TH)
    H_pad = n_th * TH

    # Single padded copy of x supplies the +/-1-row halo; the kernel DMAs
    # overlapping (C, TH+2, W) slabs out of it (double-buffered), so no
    # stacked per-tile copy of x is ever materialized.
    xp = jnp.pad(x_nchw, ((0, 0), (0, 0), (1, 1 + H_pad - H), (0, 0)))

    smem = pl.BlockSpec(memory_space=pltpu.MemorySpace.SMEM)
    kernel = make_kernel(C, in_r, out_c, TH, W, H, n_th)

    out_pad = pl.pallas_call(
        kernel,
        out_shape=jax.ShapeDtypeStruct((B, out_c, H_pad, W), jnp.float32),
        grid=(B, n_th),
        in_specs=[
            pl.BlockSpec(memory_space=pl.ANY),   # padded x stays in HBM
            smem, smem, smem, smem, smem, smem, smem, smem,
        ],
        out_specs=pl.BlockSpec((1, out_c, TH, W), lambda b, t: (b, 0, t, 0)),
        scratch_shapes=[
            pltpu.VMEM((2, C, TH + 2, W), jnp.float32),   # input slab, 2-deep
            pltpu.SemaphoreType.DMA((2,)),
        ],
        compiler_params=pltpu.CompilerParams(
            # batch axis parallel (megacore); row-tile axis arbitrary so the
            # in-kernel prefetch of tile t+1 always stays on the same core.
            dimension_semantics=("parallel", "arbitrary"),
            vmem_limit_bytes=vmem_limit,
        ),
    )(xp,
      params['w_il1'], params['b_il1'],
      params['w_il2'], params['b_il2'],
      params['w_l1'], params['b_l1'],
      params['w_out'], params['b_out'])

    if H_pad != H:
        out_pad = out_pad[:, :, :H, :]
    return out_pad


def ref_forward(x, P):
    """Pure-JAX reference mirroring the PyTorch module (NCHW)."""
    B, C, H, W = x.shape

    def conv1x1(w, b, a):
        return jnp.einsum('oi,bihw->bohw', w, a) + b[None, :, None, None]

    def shift(a, dy, dx):
        ap = jnp.pad(a, ((0, 0), (0, 0), (1, 1), (1, 1)))
        return ap[:, :, 1 + dy:1 + dy + H, 1 + dx:1 + dx + W]

    cen1 = conv1x1(P['w_il1'], P['b_il1'], x)
    cen2 = conv1x1(P['w_il2'], P['b_il2'], x)
    d1 = [cen1 - shift(cen1, dy, dx) for dy, dx in OFFSETS]
    d2 = [cen2 - shift(cen2, dy, dx) for dy, dx in OFFSETS]
    dout = jnp.concatenate(d1, axis=1)
    prods = jnp.stack([d2[k] * d2[k + 4] for k in range(4)], axis=2)
    sq = jnp.sort(prods, axis=2)
    sout = jnp.einsum('gm,bgmhw->bghw', P['w_l1'], sq) + P['b_l1'][None, :, None, None]
    cat = jnp.concatenate([x, sout, dout], axis=1)
    return jnp.einsum('oi,bihw->bohw', P['w_out'], cat) + P['b_out'][None, :, None, None]


if __name__ == "__main__":
    # Small but layout-representative: W = 128 (one full lane width),
    # H = 16 so the multi-tile + halo + prefetch path can be exercised.
    B, C, H, W = 2, 16, 16, 128
    out_c = 8
    in_r = max(C // 8, 1)

    key = jax.random.PRNGKey(0)
    ks = jax.random.split(key, 9)
    P = {
        'w_il1': 0.1 * jax.random.normal(ks[0], (in_r, C), jnp.float32),
        'b_il1': 0.1 * jax.random.normal(ks[1], (in_r,), jnp.float32),
        'w_il2': 0.1 * jax.random.normal(ks[2], (in_r, C), jnp.float32),
        'b_il2': 0.1 * jax.random.normal(ks[3], (in_r,), jnp.float32),
        'w_l1':  0.1 * jax.random.normal(ks[4], (in_r, 4), jnp.float32),
        'b_l1':  0.1 * jax.random.normal(ks[5], (in_r,), jnp.float32),
        'w_out': 0.1 * jax.random.normal(ks[6], (out_c, C + 9 * in_r), jnp.float32),
        'b_out': 0.1 * jax.random.normal(ks[7], (out_c,), jnp.float32),
    }
    x = jax.random.normal(ks[8], (B, C, H, W), jnp.float32)

    ref = ref_forward(x, P)

    # Multi-tile path: 2 row tiles per batch, halo + double-buffered slab DMA.
    out_tiled = jax.block_until_ready(gradient_based_module(x, P, out_c, tile_rows=8))
    assert out_tiled.shape == (B, out_c, H, W)
    np.testing.assert_allclose(np.asarray(out_tiled), np.asarray(ref),
                               atol=1e-4, rtol=1e-4)

    # Auto-picked tile path (generation-aware VMEM budget; single tile here).
    out_auto = jax.block_until_ready(gradient_based_module(x, P, out_c))
    np.testing.assert_allclose(np.asarray(out_auto), np.asarray(ref),
                               atol=1e-4, rtol=1e-4)

    print("KERNEL_OK")
</pallas_src>

<mosaic_0001>
module attributes {stable_mosaic.version = 11 : i64} {
  func.func @kernel(%arg0: i32, %arg1: i32, %arg2: memref<2x16x18x128xf32, #tpu.memory_space<any>>, %arg3: memref<2x16xf32, #tpu.memory_space<smem>>, %arg4: memref<2xf32, #tpu.memory_space<smem>>, %arg5: memref<2x16xf32, #tpu.memory_space<smem>>, %arg6: memref<2xf32, #tpu.memory_space<smem>>, %arg7: memref<2x4xf32, #tpu.memory_space<smem>>, %arg8: memref<2xf32, #tpu.memory_space<smem>>, %arg9: memref<8x34xf32, #tpu.memory_space<smem>>, %arg10: memref<8xf32, #tpu.memory_space<smem>>, %arg11: memref<1x8x8x128xf32, #tpu.memory_space<vmem>>, %arg12: memref<2x16x10x128xf32, #tpu.memory_space<vmem>>, %arg13: memref<2x!tpu.dma_semaphore, #tpu.memory_space<semaphore_mem>>) attributes {dimension_semantics = [#tpu.dimension_semantics<parallel>, #tpu.dimension_semantics<arbitrary>], iteration_bounds = array<i64: 2, 2>, scalar_prefetch = 0 : i64, scratch_operands = 2 : i64, tpu.core_type = #tpu.core_type<tc>, window_params = [{}, {transform_indices = @transform_1, window_bounds = array<i64: 2, 16>}, {transform_indices = @transform_2, window_bounds = array<i64: 2>}, {transform_indices = @transform_3, window_bounds = array<i64: 2, 16>}, {transform_indices = @transform_4, window_bounds = array<i64: 2>}, {transform_indices = @transform_5, window_bounds = array<i64: 2, 4>}, {transform_indices = @transform_6, window_bounds = array<i64: 2>}, {transform_indices = @transform_7, window_bounds = array<i64: 8, 34>}, {transform_indices = @transform_8, window_bounds = array<i64: 8>}, {transform_indices = @transform_9, window_bounds = array<i64: 1, 8, 8, 128>}]} {
    %c2_i32 = arith.constant 2 : i32
    %c0_i32 = arith.constant 0 : i32
    %0 = arith.cmpi eq, %c2_i32, %c0_i32 : i32
    %c1_i32 = arith.constant 1 : i32
    %1 = arith.select %0, %c1_i32, %c2_i32 : i32
    %2 = arith.remsi %arg1, %1 : i32
    %c0_i32_0 = arith.constant 0 : i32
    %3 = arith.cmpi ne, %2, %c0_i32_0 : i32
    %c0_i32_1 = arith.constant 0 : i32
    %4 = arith.cmpi slt, %2, %c0_i32_1 : i32
    %c0_i32_2 = arith.constant 0 : i32
    %5 = arith.cmpi slt, %1, %c0_i32_2 : i32
    %6 = arith.xori %4, %5 : i1
    %7 = arith.andi %6, %3 : i1
    %8 = arith.addi %2, %1 : i32
    %9 = arith.select %7, %8, %2 : i32
    %c0_i32_3 = arith.constant 0 : i32
    %10 = arith.cmpi eq, %arg1, %c0_i32_3 : i32
    %11 = arith.extui %10 : i1 to i32
    %c0_i32_4 = arith.constant 0 : i32
    %12 = arith.cmpi ne, %11, %c0_i32_4 : i32
    scf.if %12 {
      %c0_i32_803 = arith.constant 0 : i32
      %c0_i32_804 = arith.constant 0 : i32
      %c0_i32_805 = arith.constant 0 : i32
      %c0_i32_806 = arith.constant 0 : i32
      %c0_i32_807 = arith.constant 0 : i32
      %1715 = tpu.memref_slice %arg2[%arg0, %c0_i32_805, %c0_i32_806, %c0_i32_807] : memref<2x16x18x128xf32, #tpu.memory_space<any>> -> memref<1x16x10x128xf32, #tpu.memory_space<any>>
      %1716 = tpu.memref_squeeze %1715 : memref<1x16x10x128xf32, #tpu.memory_space<any>> -> memref<16x10x128xf32, #tpu.memory_space<any>>
      %c0_i32_808 = arith.constant 0 : i32
      %c0_i32_809 = arith.constant 0 : i32
      %c0_i32_810 = arith.constant 0 : i32
      %1717 = tpu.memref_slice %arg12[%c0_i32_803, %c0_i32_808, %c0_i32_809, %c0_i32_810] : memref<2x16x10x128xf32, #tpu.memory_space<vmem>> -> memref<1x16x10x128xf32, #tpu.memory_space<vmem>>
      %1718 = tpu.memref_squeeze %1717 : memref<1x16x10x128xf32, #tpu.memory_space<vmem>> -> memref<16x10x128xf32, #tpu.memory_space<vmem>>
      %1719 = tpu.memref_slice %arg13[%c0_i32_804] : memref<2x!tpu.dma_semaphore, #tpu.memory_space<semaphore_mem>> -> memref<1x!tpu.dma_semaphore, #tpu.memory_space<semaphore_mem>>
      %1720 = tpu.memref_squeeze %1719 : memref<1x!tpu.dma_semaphore, #tpu.memory_space<semaphore_mem>> -> memref<!tpu.dma_semaphore, #tpu.memory_space<semaphore_mem>>
      tpu.enqueue_dma source(%1716 : memref<16x10x128xf32, #tpu.memory_space<any>>) target(%1718 : memref<16x10x128xf32, #tpu.memory_space<vmem>>) target_semaphore(%1720 : memref<!tpu.dma_semaphore, #tpu.memory_space<semaphore_mem>>)
    } else {
    }
    %c1_i32_5 = arith.constant 1 : i32
    %13 = arith.addi %arg1, %c1_i32_5 : i32
    %c2_i32_6 = arith.constant 2 : i32
    %14 = arith.cmpi slt, %13, %c2_i32_6 : i32
    %15 = arith.extui %14 : i1 to i32
    %c0_i32_7 = arith.constant 0 : i32
    %16 = arith.cmpi ne, %15, %c0_i32_7 : i32
    scf.if %16 {
      %c1_i32_803 = arith.constant 1 : i32
      %1715 = arith.addi %arg1, %c1_i32_803 : i32
      %c1_i32_804 = arith.constant 1 : i32
      %1716 = arith.subi %c1_i32_804, %9 : i32
      %c8_i32_805 = arith.constant 8 : i32
      %1717 = arith.muli %1715, %c8_i32_805 : i32
      %c0_i32_806 = arith.constant 0 : i32
      %c0_i32_807 = arith.constant 0 : i32
      %1718 = tpu.memref_slice %arg2[%arg0, %c0_i32_806, %1717, %c0_i32_807] : memref<2x16x18x128xf32, #tpu.memory_space<any>> -> memref<1x16x10x128xf32, #tpu.memory_space<any>>
      %1719 = tpu.memref_squeeze %1718 : memref<1x16x10x128xf32, #tpu.memory_space<any>> -> memref<16x10x128xf32, #tpu.memory_space<any>>
      %c0_i32_808 = arith.constant 0 : i32
      %c0_i32_809 = arith.constant 0 : i32
      %c0_i32_810 = arith.constant 0 : i32
      %1720 = tpu.memref_slice %arg12[%1716, %c0_i32_808, %c0_i32_809, %c0_i32_810] : memref<2x16x10x128xf32, #tpu.memory_space<vmem>> -> memref<1x16x10x128xf32, #tpu.memory_space<vmem>>
      %1721 = tpu.memref_squeeze %1720 : memref<1x16x10x128xf32, #tpu.memory_space<vmem>> -> memref<16x10x128xf32, #tpu.memory_space<vmem>>
      %1722 = tpu.memref_slice %arg13[%1716] : memref<2x!tpu.dma_semaphore, #tpu.memory_space<semaphore_mem>> -> memref<1x!tpu.dma_semaphore, #tpu.memory_space<semaphore_mem>>
      %1723 = tpu.memref_squeeze %1722 : memref<1x!tpu.dma_semaphore, #tpu.memory_space<semaphore_mem>> -> memref<!tpu.dma_semaphore, #tpu.memory_space<semaphore_mem>>
      tpu.enqueue_dma source(%1719 : memref<16x10x128xf32, #tpu.memory_space<any>>) target(%1721 : memref<16x10x128xf32, #tpu.memory_space<vmem>>) target_semaphore(%1723 : memref<!tpu.dma_semaphore, #tpu.memory_space<semaphore_mem>>)
    } else {
    }
    %c0_i32_8 = arith.constant 0 : i32
    %c0_i32_9 = arith.constant 0 : i32
    %c0_i32_10 = arith.constant 0 : i32
    %c0_i32_11 = arith.constant 0 : i32
    %17 = tpu.memref_slice %arg2[%c0_i32_8, %c0_i32_9, %c0_i32_10, %c0_i32_11] : memref<2x16x18x128xf32, #tpu.memory_space<any>> -> memref<1x16x10x128xf32, #tpu.memory_space<any>>
    %18 = tpu.memref_squeeze %17 : memref<1x16x10x128xf32, #tpu.memory_space<any>> -> memref<16x10x128xf32, #tpu.memory_space<any>>
    %c0_i32_12 = arith.constant 0 : i32
    %c0_i32_13 = arith.constant 0 : i32
    %c0_i32_14 = arith.constant 0 : i32
    %19 = tpu.memref_slice %arg12[%9, %c0_i32_12, %c0_i32_13, %c0_i32_14] : memref<2x16x10x128xf32, #tpu.memory_space<vmem>> -> memref<1x16x10x128xf32, #tpu.memory_space<vmem>>
    %20 = tpu.memref_squeeze %19 : memref<1x16x10x128xf32, #tpu.memory_space<vmem>> -> memref<16x10x128xf32, #tpu.memory_space<vmem>>
    %21 = tpu.memref_slice %arg13[%9] : memref<2x!tpu.dma_semaphore, #tpu.memory_space<semaphore_mem>> -> memref<1x!tpu.dma_semaphore, #tpu.memory_space<semaphore_mem>>
    %22 = tpu.memref_squeeze %21 : memref<1x!tpu.dma_semaphore, #tpu.memory_space<semaphore_mem>> -> memref<!tpu.dma_semaphore, #tpu.memory_space<semaphore_mem>>
    tpu.wait_dma2 semaphore(%22 : memref<!tpu.dma_semaphore, #tpu.memory_space<semaphore_mem>>) src(%18 : memref<16x10x128xf32, #tpu.memory_space<any>>) dst(%20 : memref<16x10x128xf32, #tpu.memory_space<vmem>>)
    %23 = tpu.iota {dimensions = array<i32: 0>} : vector<8x128xi32>
    %c8_i32 = arith.constant 8 : i32
    %24 = arith.muli %arg1, %c8_i32 : i32
    %25 = vector.broadcast %24 : i32 to vector<8x128xi32>
    %26 = arith.addi %23, %25 : vector<8x128xi32>
    %27 = tpu.iota {dimensions = array<i32: 1>} : vector<10x128xi32>
    %c1_i32_15 = arith.constant 1 : i32
    %28 = vector.broadcast %c1_i32_15 : i32 to vector<8x128xi32>
    %29 = arith.cmpi sge, %26, %28 : vector<8x128xi32>
    %c14_i32 = arith.constant 14 : i32
    %30 = vector.broadcast %c14_i32 : i32 to vector<8x128xi32>
    %31 = arith.cmpi sle, %26, %30 : vector<8x128xi32>
    %c126_i32 = arith.constant 126 : i32
    %32 = vector.broadcast %c126_i32 : i32 to vector<10x128xi32>
    %33 = arith.cmpi sle, %27, %32 : vector<10x128xi32>
    %c1_i32_16 = arith.constant 1 : i32
    %34 = vector.broadcast %c1_i32_16 : i32 to vector<10x128xi32>
    %35 = arith.cmpi sge, %27, %34 : vector<10x128xi32>
    %36 = tpu.iota {dimensions = array<i32: 1>} : vector<8x128xi32>
    %37 = arith.sitofp %36 : vector<8x128xi32> to vector<8x128xf32>
    %c127_i32 = arith.constant 127 : i32
    %38 = tpu.dynamic_rotate %37 by %c127_i32 dim 1 : vector<8x128xf32>, i32 -> vector<8x128xf32>
    %c127_i32_17 = arith.constant 127 : i32
    %39 = vector.broadcast %c127_i32_17 : i32 to vector<8x128xi32>
    %40 = arith.cmpi eq, %36, %39 : vector<8x128xi32>
    %c1_i32_18 = arith.constant 1 : i32
    %41 = vector.broadcast %c1_i32_18 : i32 to vector<8x128xi32>
    %42 = arith.addi %36, %41 : vector<8x128xi32>
    %c0_i32_19 = arith.constant 0 : i32
    %43 = vector.broadcast %c0_i32_19 : i32 to vector<8x128xi32>
    %44 = arith.select %40, %43, %42 : vector<8x128xi1>, vector<8x128xi32>
    %45 = arith.sitofp %44 : vector<8x128xi32> to vector<8x128xf32>
    %46 = arith.subf %38, %45 : vector<8x128xf32>
    %47 = math.absf %46 : vector<8x128xf32>
    %48 = vector.shape_cast %47 : vector<8x128xf32> to vector<1x8x128xf32>
    %cst = arith.constant dense<0.000000e+00> : vector<1xf32>
    %49 = vector.multi_reduction <add>, %48, %cst [1, 2] : vector<1x8x128xf32> to vector<1xf32>
    %50 = vector.shape_cast %49 : vector<1xf32> to vector<1x1x1xf32>
    %51 = vector.extract %50[0, 0, 0] : f32 from vector<1x1x1xf32>
    %cst_20 = arith.constant 0.000000e+00 : f32
    %52 = arith.cmpf oeq, %51, %cst_20 : f32
    %c127_i32_21 = arith.constant 127 : i32
    %c1_i32_22 = arith.constant 1 : i32
    %53 = arith.select %52, %c127_i32_21, %c1_i32_22 : i32
    %c128_i32 = arith.constant 128 : i32
    %54 = arith.subi %c128_i32, %53 : i32
    %c0 = arith.constant 0 : index
    %55 = memref.load %arg10[%c0] : memref<8xf32, #tpu.memory_space<smem>>
    %56 = vector.broadcast %55 : f32 to vector<8x128xf32>
    %c1 = arith.constant 1 : index
    %57 = memref.load %arg10[%c1] : memref<8xf32, #tpu.memory_space<smem>>
    %58 = vector.broadcast %57 : f32 to vector<8x128xf32>
    %c2 = arith.constant 2 : index
    %59 = memref.load %arg10[%c2] : memref<8xf32, #tpu.memory_space<smem>>
    %60 = vector.broadcast %59 : f32 to vector<8x128xf32>
    %c3 = arith.constant 3 : index
    %61 = memref.load %arg10[%c3] : memref<8xf32, #tpu.memory_space<smem>>
    %62 = vector.broadcast %61 : f32 to vector<8x128xf32>
    %c4 = arith.constant 4 : index
    %63 = memref.load %arg10[%c4] : memref<8xf32, #tpu.memory_space<smem>>
    %64 = vector.broadcast %63 : f32 to vector<8x128xf32>
    %c5 = arith.constant 5 : index
    %65 = memref.load %arg10[%c5] : memref<8xf32, #tpu.memory_space<smem>>
    %66 = vector.broadcast %65 : f32 to vector<8x128xf32>
    %c6 = arith.constant 6 : index
    %67 = memref.load %arg10[%c6] : memref<8xf32, #tpu.memory_space<smem>>
    %68 = vector.broadcast %67 : f32 to vector<8x128xf32>
    %c7 = arith.constant 7 : index
    %69 = memref.load %arg10[%c7] : memref<8xf32, #tpu.memory_space<smem>>
    %70 = vector.broadcast %69 : f32 to vector<8x128xf32>
    %c0_23 = arith.constant 0 : index
    %71 = memref.load %arg4[%c0_23] : memref<2xf32, #tpu.memory_space<smem>>
    %72 = vector.broadcast %71 : f32 to vector<10x128xf32>
    %c1_24 = arith.constant 1 : index
    %73 = memref.load %arg4[%c1_24] : memref<2xf32, #tpu.memory_space<smem>>
    %74 = vector.broadcast %73 : f32 to vector<10x128xf32>
    %c0_25 = arith.constant 0 : index
    %75 = memref.load %arg6[%c0_25] : memref<2xf32, #tpu.memory_space<smem>>
    %76 = vector.broadcast %75 : f32 to vector<10x128xf32>
    %c1_26 = arith.constant 1 : index
    %77 = memref.load %arg6[%c1_26] : memref<2xf32, #tpu.memory_space<smem>>
    %78 = vector.broadcast %77 : f32 to vector<10x128xf32>
    %79 = arith.index_cast %9 : i32 to index
    %c0_27 = arith.constant 0 : index
    %c0_28 = arith.constant 0 : index
    %c0_29 = arith.constant 0 : index
    %80 = vector.load %arg12[%79, %c0_27, %c0_28, %c0_29] : memref<2x16x10x128xf32, #tpu.memory_space<vmem>>, vector<1x1x10x128xf32>
    %81 = vector.shape_cast %80 : vector<1x1x10x128xf32> to vector<10x128xf32>
    %82 = vector.extract_strided_slice %81 {offsets = [1, 0], sizes = [8, 128], strides = [1, 1]} : vector<10x128xf32> to vector<8x128xf32>
    %c0_30 = arith.constant 0 : index
    %c0_31 = arith.constant 0 : index
    %83 = memref.load %arg9[%c0_30, %c0_31] : memref<8x34xf32, #tpu.memory_space<smem>>
    %84 = vector.broadcast %83 : f32 to vector<8x128xf32>
    %85 = arith.mulf %82, %84 : vector<8x128xf32>
    %86 = arith.addf %56, %85 : vector<8x128xf32>
    %c1_32 = arith.constant 1 : index
    %c0_33 = arith.constant 0 : index
    %87 = memref.load %arg9[%c1_32, %c0_33] : memref<8x34xf32, #tpu.memory_space<smem>>
    %88 = vector.broadcast %87 : f32 to vector<8x128xf32>
    %89 = arith.mulf %82, %88 : vector<8x128xf32>
    %90 = arith.addf %58, %89 : vector<8x128xf32>
    %c2_34 = arith.constant 2 : index
    %c0_35 = arith.constant 0 : index
    %91 = memref.load %arg9[%c2_34, %c0_35] : memref<8x34xf32, #tpu.memory_space<smem>>
    %92 = vector.broadcast %91 : f32 to vector<8x128xf32>
    %93 = arith.mulf %82, %92 : vector<8x128xf32>
    %94 = arith.addf %60, %93 : vector<8x128xf32>
    %c3_36 = arith.constant 3 : index
    %c0_37 = arith.constant 0 : index
    %95 = memref.load %arg9[%c3_36, %c0_37] : memref<8x34xf32, #tpu.memory_space<smem>>
    %96 = vector.broadcast %95 : f32 to vector<8x128xf32>
    %97 = arith.mulf %82, %96 : vector<8x128xf32>
    %98 = arith.addf %62, %97 : vector<8x128xf32>
    %c4_38 = arith.constant 4 : index
    %c0_39 = arith.constant 0 : index
    %99 = memref.load %arg9[%c4_38, %c0_39] : memref<8x34xf32, #tpu.memory_space<smem>>
    %100 = vector.broadcast %99 : f32 to vector<8x128xf32>
    %101 = arith.mulf %82, %100 : vector<8x128xf32>
    %102 = arith.addf %64, %101 : vector<8x128xf32>
    %c5_40 = arith.constant 5 : index
    %c0_41 = arith.constant 0 : index
    %103 = memref.load %arg9[%c5_40, %c0_41] : memref<8x34xf32, #tpu.memory_space<smem>>
    %104 = vector.broadcast %103 : f32 to vector<8x128xf32>
    %105 = arith.mulf %82, %104 : vector<8x128xf32>
    %106 = arith.addf %66, %105 : vector<8x128xf32>
    %c6_42 = arith.constant 6 : index
    %c0_43 = arith.constant 0 : index
    %107 = memref.load %arg9[%c6_42, %c0_43] : memref<8x34xf32, #tpu.memory_space<smem>>
    %108 = vector.broadcast %107 : f32 to vector<8x128xf32>
    %109 = arith.mulf %82, %108 : vector<8x128xf32>
    %110 = arith.addf %68, %109 : vector<8x128xf32>
    %c7_44 = arith.constant 7 : index
    %c0_45 = arith.constant 0 : index
    %111 = memref.load %arg9[%c7_44, %c0_45] : memref<8x34xf32, #tpu.memory_space<smem>>
    %112 = vector.broadcast %111 : f32 to vector<8x128xf32>
    %113 = arith.mulf %82, %112 : vector<8x128xf32>
    %114 = arith.addf %70, %113 : vector<8x128xf32>
    %c0_46 = arith.constant 0 : index
    %c0_47 = arith.constant 0 : index
    %115 = memref.load %arg3[%c0_46, %c0_47] : memref<2x16xf32, #tpu.memory_space<smem>>
    %116 = vector.broadcast %115 : f32 to vector<10x128xf32>
    %117 = arith.mulf %81, %116 : vector<10x128xf32>
    %118 = arith.addf %72, %117 : vector<10x128xf32>
    %c0_48 = arith.constant 0 : index
    %c0_49 = arith.constant 0 : index
    %119 = memref.load %arg5[%c0_48, %c0_49] : memref<2x16xf32, #tpu.memory_space<smem>>
    %120 = vector.broadcast %119 : f32 to vector<10x128xf32>
    %121 = arith.mulf %81, %120 : vector<10x128xf32>
    %122 = arith.addf %76, %121 : vector<10x128xf32>
    %c1_50 = arith.constant 1 : index
    %c0_51 = arith.constant 0 : index
    %123 = memref.load %arg3[%c1_50, %c0_51] : memref<2x16xf32, #tpu.memory_space<smem>>
    %124 = vector.broadcast %123 : f32 to vector<10x128xf32>
    %125 = arith.mulf %81, %124 : vector<10x128xf32>
    %126 = arith.addf %74, %125 : vector<10x128xf32>
    %c1_52 = arith.constant 1 : index
    %c0_53 = arith.constant 0 : index
    %127 = memref.load %arg5[%c1_52, %c0_53] : memref<2x16xf32, #tpu.memory_space<smem>>
    %128 = vector.broadcast %127 : f32 to vector<10x128xf32>
    %129 = arith.mulf %81, %128 : vector<10x128xf32>
    %130 = arith.addf %78, %129 : vector<10x128xf32>
    %131 = arith.index_cast %9 : i32 to index
    %c1_54 = arith.constant 1 : index
    %c0_55 = arith.constant 0 : index
    %c0_56 = arith.constant 0 : index
    %132 = vector.load %arg12[%131, %c1_54, %c0_55, %c0_56] : memref<2x16x10x128xf32, #tpu.memory_space<vmem>>, vector<1x1x10x128xf32>
    %133 = vector.shape_cast %132 : vector<1x1x10x128xf32> to vector<10x128xf32>
    %134 = vector.extract_strided_slice %133 {offsets = [1, 0], sizes = [8, 128], strides = [1, 1]} : vector<10x128xf32> to vector<8x128xf32>
    %c0_57 = arith.constant 0 : index
    %c1_58 = arith.constant 1 : index
    %135 = memref.load %arg9[%c0_57, %c1_58] : memref<8x34xf32, #tpu.memory_space<smem>>
    %136 = vector.broadcast %135 : f32 to vector<8x128xf32>
    %137 = arith.mulf %134, %136 : vector<8x128xf32>
    %138 = arith.addf %86, %137 : vector<8x128xf32>
    %c1_59 = arith.constant 1 : index
    %c1_60 = arith.constant 1 : index
    %139 = memref.load %arg9[%c1_59, %c1_60] : memref<8x34xf32, #tpu.memory_space<smem>>
    %140 = vector.broadcast %139 : f32 to vector<8x128xf32>
    %141 = arith.mulf %134, %140 : vector<8x128xf32>
    %142 = arith.addf %90, %141 : vector<8x128xf32>
    %c2_61 = arith.constant 2 : index
    %c1_62 = arith.constant 1 : index
    %143 = memref.load %arg9[%c2_61, %c1_62] : memref<8x34xf32, #tpu.memory_space<smem>>
    %144 = vector.broadcast %143 : f32 to vector<8x128xf32>
    %145 = arith.mulf %134, %144 : vector<8x128xf32>
    %146 = arith.addf %94, %145 : vector<8x128xf32>
    %c3_63 = arith.constant 3 : index
    %c1_64 = arith.constant 1 : index
    %147 = memref.load %arg9[%c3_63, %c1_64] : memref<8x34xf32, #tpu.memory_space<smem>>
    %148 = vector.broadcast %147 : f32 to vector<8x128xf32>
    %149 = arith.mulf %134, %148 : vector<8x128xf32>
    %150 = arith.addf %98, %149 : vector<8x128xf32>
    %c4_65 = arith.constant 4 : index
    %c1_66 = arith.constant 1 : index
    %151 = memref.load %arg9[%c4_65, %c1_66] : memref<8x34xf32, #tpu.memory_space<smem>>
    %152 = vector.broadcast %151 : f32 to vector<8x128xf32>
    %153 = arith.mulf %134, %152 : vector<8x128xf32>
    %154 = arith.addf %102, %153 : vector<8x128xf32>
    %c5_67 = arith.constant 5 : index
    %c1_68 = arith.constant 1 : index
    %155 = memref.load %arg9[%c5_67, %c1_68] : memref<8x34xf32, #tpu.memory_space<smem>>
    %156 = vector.broadcast %155 : f32 to vector<8x128xf32>
    %157 = arith.mulf %134, %156 : vector<8x128xf32>
    %158 = arith.addf %106, %157 : vector<8x128xf32>
    %c6_69 = arith.constant 6 : index
    %c1_70 = arith.constant 1 : index
    %159 = memref.load %arg9[%c6_69, %c1_70] : memref<8x34xf32, #tpu.memory_space<smem>>
    %160 = vector.broadcast %159 : f32 to vector<8x128xf32>
    %161 = arith.mulf %134, %160 : vector<8x128xf32>
    %162 = arith.addf %110, %161 : vector<8x128xf32>
    %c7_71 = arith.constant 7 : index
    %c1_72 = arith.constant 1 : index
    %163 = memref.load %arg9[%c7_71, %c1_72] : memref<8x34xf32, #tpu.memory_space<smem>>
    %164 = vector.broadcast %163 : f32 to vector<8x128xf32>
    %165 = arith.mulf %134, %164 : vector<8x128xf32>
    %166 = arith.addf %114, %165 : vector<8x128xf32>
    %c0_73 = arith.constant 0 : index
    %c1_74 = arith.constant 1 : index
    %167 = memref.load %arg3[%c0_73, %c1_74] : memref<2x16xf32, #tpu.memory_space<smem>>
    %168 = vector.broadcast %167 : f32 to vector<10x128xf32>
    %169 = arith.mulf %133, %168 : vector<10x128xf32>
    %170 = arith.addf %118, %169 : vector<10x128xf32>
    %c0_75 = arith.constant 0 : index
    %c1_76 = arith.constant 1 : index
    %171 = memref.load %arg5[%c0_75, %c1_76] : memref<2x16xf32, #tpu.memory_space<smem>>
    %172 = vector.broadcast %171 : f32 to vector<10x128xf32>
    %173 = arith.mulf %133, %172 : vector<10x128xf32>
    %174 = arith.addf %122, %173 : vector<10x128xf32>
    %c1_77 = arith.constant 1 : index
    %c1_78 = arith.constant 1 : index
    %175 = memref.load %arg3[%c1_77, %c1_78] : memref<2x16xf32, #tpu.memory_space<smem>>
    %176 = vector.broadcast %175 : f32 to vector<10x128xf32>
    %177 = arith.mulf %133, %176 : vector<10x128xf32>
    %178 = arith.addf %126, %177 : vector<10x128xf32>
    %c1_79 = arith.constant 1 : index
    %c1_80 = arith.constant 1 : index
    %179 = memref.load %arg5[%c1_79, %c1_80] : memref<2x16xf32, #tpu.memory_space<smem>>
    %180 = vector.broadcast %179 : f32 to vector<10x128xf32>
    %181 = arith.mulf %133, %180 : vector<10x128xf32>
    %182 = arith.addf %130, %181 : vector<10x128xf32>
    %183 = arith.index_cast %9 : i32 to index
    %c2_81 = arith.constant 2 : index
    %c0_82 = arith.constant 0 : index
    %c0_83 = arith.constant 0 : index
    %184 = vector.load %arg12[%183, %c2_81, %c0_82, %c0_83] : memref<2x16x10x128xf32, #tpu.memory_space<vmem>>, vector<1x1x10x128xf32>
    %185 = vector.shape_cast %184 : vector<1x1x10x128xf32> to vector<10x128xf32>
    %186 = vector.extract_strided_slice %185 {offsets = [1, 0], sizes = [8, 128], strides = [1, 1]} : vector<10x128xf32> to vector<8x128xf32>
    %c0_84 = arith.constant 0 : index
    %c2_85 = arith.constant 2 : index
    %187 = memref.load %arg9[%c0_84, %c2_85] : memref<8x34xf32, #tpu.memory_space<smem>>
    %188 = vector.broadcast %187 : f32 to vector<8x128xf32>
    %189 = arith.mulf %186, %188 : vector<8x128xf32>
    %190 = arith.addf %138, %189 : vector<8x128xf32>
    %c1_86 = arith.constant 1 : index
    %c2_87 = arith.constant 2 : index
    %191 = memref.load %arg9[%c1_86, %c2_87] : memref<8x34xf32, #tpu.memory_space<smem>>
    %192 = vector.broadcast %191 : f32 to vector<8x128xf32>
    %193 = arith.mulf %186, %192 : vector<8x128xf32>
    %194 = arith.addf %142, %193 : vector<8x128xf32>
    %c2_88 = arith.constant 2 : index
    %c2_89 = arith.constant 2 : index
    %195 = memref.load %arg9[%c2_88, %c2_89] : memref<8x34xf32, #tpu.memory_space<smem>>
    %196 = vector.broadcast %195 : f32 to vector<8x128xf32>
    %197 = arith.mulf %186, %196 : vector<8x128xf32>
    %198 = arith.addf %146, %197 : vector<8x128xf32>
    %c3_90 = arith.constant 3 : index
    %c2_91 = arith.constant 2 : index
    %199 = memref.load %arg9[%c3_90, %c2_91] : memref<8x34xf32, #tpu.memory_space<smem>>
    %200 = vector.broadcast %199 : f32 to vector<8x128xf32>
    %201 = arith.mulf %186, %200 : vector<8x128xf32>
    %202 = arith.addf %150, %201 : vector<8x128xf32>
    %c4_92 = arith.constant 4 : index
    %c2_93 = arith.constant 2 : index
    %203 = memref.load %arg9[%c4_92, %c2_93] : memref<8x34xf32, #tpu.memory_space<smem>>
    %204 = vector.broadcast %203 : f32 to vector<8x128xf32>
    %205 = arith.mulf %186, %204 : vector<8x128xf32>
    %206 = arith.addf %154, %205 : vector<8x128xf32>
    %c5_94 = arith.constant 5 : index
    %c2_95 = arith.constant 2 : index
    %207 = memref.load %arg9[%c5_94, %c2_95] : memref<8x34xf32, #tpu.memory_space<smem>>
    %208 = vector.broadcast %207 : f32 to vector<8x128xf32>
    %209 = arith.mulf %186, %208 : vector<8x128xf32>
    %210 = arith.addf %158, %209 : vector<8x128xf32>
    %c6_96 = arith.constant 6 : index
    %c2_97 = arith.constant 2 : index
    %211 = memref.load %arg9[%c6_96, %c2_97] : memref<8x34xf32, #tpu.memory_space<smem>>
    %212 = vector.broadcast %211 : f32 to vector<8x128xf32>
    %213 = arith.mulf %186, %212 : vector<8x128xf32>
    %214 = arith.addf %162, %213 : vector<8x128xf32>
    %c7_98 = arith.constant 7 : index
    %c2_99 = arith.constant 2 : index
    %215 = memref.load %arg9[%c7_98, %c2_99] : memref<8x34xf32, #tpu.memory_space<smem>>
    %216 = vector.broadcast %215 : f32 to vector<8x128xf32>
    %217 = arith.mulf %186, %216 : vector<8x128xf32>
    %218 = arith.addf %166, %217 : vector<8x128xf32>
    %c0_100 = arith.constant 0 : index
    %c2_101 = arith.constant 2 : index
    %219 = memref.load %arg3[%c0_100, %c2_101] : memref<2x16xf32, #tpu.memory_space<smem>>
    %220 = vector.broadcast %219 : f32 to vector<10x128xf32>
    %221 = arith.mulf %185, %220 : vector<10x128xf32>
    %222 = arith.addf %170, %221 : vector<10x128xf32>
    %c0_102 = arith.constant 0 : index
    %c2_103 = arith.constant 2 : index
    %223 = memref.load %arg5[%c0_102, %c2_103] : memref<2x16xf32, #tpu.memory_space<smem>>
    %224 = vector.broadcast %223 : f32 to vector<10x128xf32>
    %225 = arith.mulf %185, %224 : vector<10x128xf32>
    %226 = arith.addf %174, %225 : vector<10x128xf32>
    %c1_104 = arith.constant 1 : index
    %c2_105 = arith.constant 2 : index
    %227 = memref.load %arg3[%c1_104, %c2_105] : memref<2x16xf32, #tpu.memory_space<smem>>
    %228 = vector.broadcast %227 : f32 to vector<10x128xf32>
    %229 = arith.mulf %185, %228 : vector<10x128xf32>
    %230 = arith.addf %178, %229 : vector<10x128xf32>
    %c1_106 = arith.constant 1 : index
    %c2_107 = arith.constant 2 : index
    %231 = memref.load %arg5[%c1_106, %c2_107] : memref<2x16xf32, #tpu.memory_space<smem>>
    %232 = vector.broadcast %231 : f32 to vector<10x128xf32>
    %233 = arith.mulf %185, %232 : vector<10x128xf32>
    %234 = arith.addf %182, %233 : vector<10x128xf32>
    %235 = arith.index_cast %9 : i32 to index
    %c3_108 = arith.constant 3 : index
    %c0_109 = arith.constant 0 : index
    %c0_110 = arith.constant 0 : index
    %236 = vector.load %arg12[%235, %c3_108, %c0_109, %c0_110] : memref<2x16x10x128xf32, #tpu.memory_space<vmem>>, vector<1x1x10x128xf32>
    %237 = vector.shape_cast %236 : vector<1x1x10x128xf32> to vector<10x128xf32>
    %238 = vector.extract_strided_slice %237 {offsets = [1, 0], sizes = [8, 128], strides = [1, 1]} : vector<10x128xf32> to vector<8x128xf32>
    %c0_111 = arith.constant 0 : index
    %c3_112 = arith.constant 3 : index
    %239 = memref.load %arg9[%c0_111, %c3_112] : memref<8x34xf32, #tpu.memory_space<smem>>
    %240 = vector.broadcast %239 : f32 to vector<8x128xf32>
    %241 = arith.mulf %238, %240 : vector<8x128xf32>
    %242 = arith.addf %190, %241 : vector<8x128xf32>
    %c1_113 = arith.constant 1 : index
    %c3_114 = arith.constant 3 : index
    %243 = memref.load %arg9[%c1_113, %c3_114] : memref<8x34xf32, #tpu.memory_space<smem>>
    %244 = vector.broadcast %243 : f32 to vector<8x128xf32>
    %245 = arith.mulf %238, %244 : vector<8x128xf32>
    %246 = arith.addf %194, %245 : vector<8x128xf32>
    %c2_115 = arith.constant 2 : index
    %c3_116 = arith.constant 3 : index
    %247 = memref.load %arg9[%c2_115, %c3_116] : memref<8x34xf32, #tpu.memory_space<smem>>
    %248 = vector.broadcast %247 : f32 to vector<8x128xf32>
    %249 = arith.mulf %238, %248 : vector<8x128xf32>
    %250 = arith.addf %198, %249 : vector<8x128xf32>
    %c3_117 = arith.constant 3 : index
    %c3_118 = arith.constant 3 : index
    %251 = memref.load %arg9[%c3_117, %c3_118] : memref<8x34xf32, #tpu.memory_space<smem>>
    %252 = vector.broadcast %251 : f32 to vector<8x128xf32>
    %253 = arith.mulf %238, %252 : vector<8x128xf32>
    %254 = arith.addf %202, %253 : vector<8x128xf32>
    %c4_119 = arith.constant 4 : index
    %c3_120 = arith.constant 3 : index
    %255 = memref.load %arg9[%c4_119, %c3_120] : memref<8x34xf32, #tpu.memory_space<smem>>
    %256 = vector.broadcast %255 : f32 to vector<8x128xf32>
    %257 = arith.mulf %238, %256 : vector<8x128xf32>
    %258 = arith.addf %206, %257 : vector<8x128xf32>
    %c5_121 = arith.constant 5 : index
    %c3_122 = arith.constant 3 : index
    %259 = memref.load %arg9[%c5_121, %c3_122] : memref<8x34xf32, #tpu.memory_space<smem>>
    %260 = vector.broadcast %259 : f32 to vector<8x128xf32>
    %261 = arith.mulf %238, %260 : vector<8x128xf32>
    %262 = arith.addf %210, %261 : vector<8x128xf32>
    %c6_123 = arith.constant 6 : index
    %c3_124 = arith.constant 3 : index
    %263 = memref.load %arg9[%c6_123, %c3_124] : memref<8x34xf32, #tpu.memory_space<smem>>
    %264 = vector.broadcast %263 : f32 to vector<8x128xf32>
    %265 = arith.mulf %238, %264 : vector<8x128xf32>
    %266 = arith.addf %214, %265 : vector<8x128xf32>
    %c7_125 = arith.constant 7 : index
    %c3_126 = arith.constant 3 : index
    %267 = memref.load %arg9[%c7_125, %c3_126] : memref<8x34xf32, #tpu.memory_space<smem>>
    %268 = vector.broadcast %267 : f32 to vector<8x128xf32>
    %269 = arith.mulf %238, %268 : vector<8x128xf32>
    %270 = arith.addf %218, %269 : vector<8x128xf32>
    %c0_127 = arith.constant 0 : index
    %c3_128 = arith.constant 3 : index
    %271 = memref.load %arg3[%c0_127, %c3_128] : memref<2x16xf32, #tpu.memory_space<smem>>
    %272 = vector.broadcast %271 : f32 to vector<10x128xf32>
    %273 = arith.mulf %237, %272 : vector<10x128xf32>
    %274 = arith.addf %222, %273 : vector<10x128xf32>
    %c0_129 = arith.constant 0 : index
    %c3_130 = arith.constant 3 : index
    %275 = memref.load %arg5[%c0_129, %c3_130] : memref<2x16xf32, #tpu.memory_space<smem>>
    %276 = vector.broadcast %275 : f32 to vector<10x128xf32>
    %277 = arith.mulf %237, %276 : vector<10x128xf32>
    %278 = arith.addf %226, %277 : vector<10x128xf32>
    %c1_131 = arith.constant 1 : index
    %c3_132 = arith.constant 3 : index
    %279 = memref.load %arg3[%c1_131, %c3_132] : memref<2x16xf32, #tpu.memory_space<smem>>
    %280 = vector.broadcast %279 : f32 to vector<10x128xf32>
    %281 = arith.mulf %237, %280 : vector<10x128xf32>
    %282 = arith.addf %230, %281 : vector<10x128xf32>
    %c1_133 = arith.constant 1 : index
    %c3_134 = arith.constant 3 : index
    %283 = memref.load %arg5[%c1_133, %c3_134] : memref<2x16xf32, #tpu.memory_space<smem>>
    %284 = vector.broadcast %283 : f32 to vector<10x128xf32>
    %285 = arith.mulf %237, %284 : vector<10x128xf32>
    %286 = arith.addf %234, %285 : vector<10x128xf32>
    %287 = arith.index_cast %9 : i32 to index
    %c4_135 = arith.constant 4 : index
    %c0_136 = arith.constant 0 : index
    %c0_137 = arith.constant 0 : index
    %288 = vector.load %arg12[%287, %c4_135, %c0_136, %c0_137] : memref<2x16x10x128xf32, #tpu.memory_space<vmem>>, vector<1x1x10x128xf32>
    %289 = vector.shape_cast %288 : vector<1x1x10x128xf32> to vector<10x128xf32>
    %290 = vector.extract_strided_slice %289 {offsets = [1, 0], sizes = [8, 128], strides = [1, 1]} : vector<10x128xf32> to vector<8x128xf32>
    %c0_138 = arith.constant 0 : index
    %c4_139 = arith.constant 4 : index
    %291 = memref.load %arg9[%c0_138, %c4_139] : memref<8x34xf32, #tpu.memory_space<smem>>
    %292 = vector.broadcast %291 : f32 to vector<8x128xf32>
    %293 = arith.mulf %290, %292 : vector<8x128xf32>
    %294 = arith.addf %242, %293 : vector<8x128xf32>
    %c1_140 = arith.constant 1 : index
    %c4_141 = arith.constant 4 : index
    %295 = memref.load %arg9[%c1_140, %c4_141] : memref<8x34xf32, #tpu.memory_space<smem>>
    %296 = vector.broadcast %295 : f32 to vector<8x128xf32>
    %297 = arith.mulf %290, %296 : vector<8x128xf32>
    %298 = arith.addf %246, %297 : vector<8x128xf32>
    %c2_142 = arith.constant 2 : index
    %c4_143 = arith.constant 4 : index
    %299 = memref.load %arg9[%c2_142, %c4_143] : memref<8x34xf32, #tpu.memory_space<smem>>
    %300 = vector.broadcast %299 : f32 to vector<8x128xf32>
    %301 = arith.mulf %290, %300 : vector<8x128xf32>
    %302 = arith.addf %250, %301 : vector<8x128xf32>
    %c3_144 = arith.constant 3 : index
    %c4_145 = arith.constant 4 : index
    %303 = memref.load %arg9[%c3_144, %c4_145] : memref<8x34xf32, #tpu.memory_space<smem>>
    %304 = vector.broadcast %303 : f32 to vector<8x128xf32>
    %305 = arith.mulf %290, %304 : vector<8x128xf32>
    %306 = arith.addf %254, %305 : vector<8x128xf32>
    %c4_146 = arith.constant 4 : index
    %c4_147 = arith.constant 4 : index
    %307 = memref.load %arg9[%c4_146, %c4_147] : memref<8x34xf32, #tpu.memory_space<smem>>
    %308 = vector.broadcast %307 : f32 to vector<8x128xf32>
    %309 = arith.mulf %290, %308 : vector<8x128xf32>
    %310 = arith.addf %258, %309 : vector<8x128xf32>
    %c5_148 = arith.constant 5 : index
    %c4_149 = arith.constant 4 : index
    %311 = memref.load %arg9[%c5_148, %c4_149] : memref<8x34xf32, #tpu.memory_space<smem>>
    %312 = vector.broadcast %311 : f32 to vector<8x128xf32>
    %313 = arith.mulf %290, %312 : vector<8x128xf32>
    %314 = arith.addf %262, %313 : vector<8x128xf32>
    %c6_150 = arith.constant 6 : index
    %c4_151 = arith.constant 4 : index
    %315 = memref.load %arg9[%c6_150, %c4_151] : memref<8x34xf32, #tpu.memory_space<smem>>
    %316 = vector.broadcast %315 : f32 to vector<8x128xf32>
    %317 = arith.mulf %290, %316 : vector<8x128xf32>
    %318 = arith.addf %266, %317 : vector<8x128xf32>
    %c7_152 = arith.constant 7 : index
    %c4_153 = arith.constant 4 : index
    %319 = memref.load %arg9[%c7_152, %c4_153] : memref<8x34xf32, #tpu.memory_space<smem>>
    %320 = vector.broadcast %319 : f32 to vector<8x128xf32>
    %321 = arith.mulf %290, %320 : vector<8x128xf32>
    %322 = arith.addf %270, %321 : vector<8x128xf32>
    %c0_154 = arith.constant 0 : index
    %c4_155 = arith.constant 4 : index
    %323 = memref.load %arg3[%c0_154, %c4_155] : memref<2x16xf32, #tpu.memory_space<smem>>
    %324 = vector.broadcast %323 : f32 to vector<10x128xf32>
    %325 = arith.mulf %289, %324 : vector<10x128xf32>
    %326 = arith.addf %274, %325 : vector<10x128xf32>
    %c0_156 = arith.constant 0 : index
    %c4_157 = arith.constant 4 : index
    %327 = memref.load %arg5[%c0_156, %c4_157] : memref<2x16xf32, #tpu.memory_space<smem>>
    %328 = vector.broadcast %327 : f32 to vector<10x128xf32>
    %329 = arith.mulf %289, %328 : vector<10x128xf32>
    %330 = arith.addf %278, %329 : vector<10x128xf32>
    %c1_158 = arith.constant 1 : index
    %c4_159 = arith.constant 4 : index
    %331 = memref.load %arg3[%c1_158, %c4_159] : memref<2x16xf32, #tpu.memory_space<smem>>
    %332 = vector.broadcast %331 : f32 to vector<10x128xf32>
    %333 = arith.mulf %289, %332 : vector<10x128xf32>
    %334 = arith.addf %282, %333 : vector<10x128xf32>
    %c1_160 = arith.constant 1 : index
    %c4_161 = arith.constant 4 : index
    %335 = memref.load %arg5[%c1_160, %c4_161] : memref<2x16xf32, #tpu.memory_space<smem>>
    %336 = vector.broadcast %335 : f32 to vector<10x128xf32>
    %337 = arith.mulf %289, %336 : vector<10x128xf32>
    %338 = arith.addf %286, %337 : vector<10x128xf32>
    %339 = arith.index_cast %9 : i32 to index
    %c5_162 = arith.constant 5 : index
    %c0_163 = arith.constant 0 : index
    %c0_164 = arith.constant 0 : index
    %340 = vector.load %arg12[%339, %c5_162, %c0_163, %c0_164] : memref<2x16x10x128xf32, #tpu.memory_space<vmem>>, vector<1x1x10x128xf32>
    %341 = vector.shape_cast %340 : vector<1x1x10x128xf32> to vector<10x128xf32>
    %342 = vector.extract_strided_slice %341 {offsets = [1, 0], sizes = [8, 128], strides = [1, 1]} : vector<10x128xf32> to vector<8x128xf32>
    %c0_165 = arith.constant 0 : index
    %c5_166 = arith.constant 5 : index
    %343 = memref.load %arg9[%c0_165, %c5_166] : memref<8x34xf32, #tpu.memory_space<smem>>
    %344 = vector.broadcast %343 : f32 to vector<8x128xf32>
    %345 = arith.mulf %342, %344 : vector<8x128xf32>
    %346 = arith.addf %294, %345 : vector<8x128xf32>
    %c1_167 = arith.constant 1 : index
    %c5_168 = arith.constant 5 : index
    %347 = memref.load %arg9[%c1_167, %c5_168] : memref<8x34xf32, #tpu.memory_space<smem>>
    %348 = vector.broadcast %347 : f32 to vector<8x128xf32>
    %349 = arith.mulf %342, %348 : vector<8x128xf32>
    %350 = arith.addf %298, %349 : vector<8x128xf32>
    %c2_169 = arith.constant 2 : index
    %c5_170 = arith.constant 5 : index
    %351 = memref.load %arg9[%c2_169, %c5_170] : memref<8x34xf32, #tpu.memory_space<smem>>
    %352 = vector.broadcast %351 : f32 to vector<8x128xf32>
    %353 = arith.mulf %342, %352 : vector<8x128xf32>
    %354 = arith.addf %302, %353 : vector<8x128xf32>
    %c3_171 = arith.constant 3 : index
    %c5_172 = arith.constant 5 : index
    %355 = memref.load %arg9[%c3_171, %c5_172] : memref<8x34xf32, #tpu.memory_space<smem>>
    %356 = vector.broadcast %355 : f32 to vector<8x128xf32>
    %357 = arith.mulf %342, %356 : vector<8x128xf32>
    %358 = arith.addf %306, %357 : vector<8x128xf32>
    %c4_173 = arith.constant 4 : index
    %c5_174 = arith.constant 5 : index
    %359 = memref.load %arg9[%c4_173, %c5_174] : memref<8x34xf32, #tpu.memory_space<smem>>
    %360 = vector.broadcast %359 : f32 to vector<8x128xf32>
    %361 = arith.mulf %342, %360 : vector<8x128xf32>
    %362 = arith.addf %310, %361 : vector<8x128xf32>
    %c5_175 = arith.constant 5 : index
    %c5_176 = arith.constant 5 : index
    %363 = memref.load %arg9[%c5_175, %c5_176] : memref<8x34xf32, #tpu.memory_space<smem>>
    %364 = vector.broadcast %363 : f32 to vector<8x128xf32>
    %365 = arith.mulf %342, %364 : vector<8x128xf32>
    %366 = arith.addf %314, %365 : vector<8x128xf32>
    %c6_177 = arith.constant 6 : index
    %c5_178 = arith.constant 5 : index
    %367 = memref.load %arg9[%c6_177, %c5_178] : memref<8x34xf32, #tpu.memory_space<smem>>
    %368 = vector.broadcast %367 : f32 to vector<8x128xf32>
    %369 = arith.mulf %342, %368 : vector<8x128xf32>
    %370 = arith.addf %318, %369 : vector<8x128xf32>
    %c7_179 = arith.constant 7 : index
    %c5_180 = arith.constant 5 : index
    %371 = memref.load %arg9[%c7_179, %c5_180] : memref<8x34xf32, #tpu.memory_space<smem>>
    %372 = vector.broadcast %371 : f32 to vector<8x128xf32>
    %373 = arith.mulf %342, %372 : vector<8x128xf32>
    %374 = arith.addf %322, %373 : vector<8x128xf32>
    %c0_181 = arith.constant 0 : index
    %c5_182 = arith.constant 5 : index
    %375 = memref.load %arg3[%c0_181, %c5_182] : memref<2x16xf32, #tpu.memory_space<smem>>
    %376 = vector.broadcast %375 : f32 to vector<10x128xf32>
    %377 = arith.mulf %341, %376 : vector<10x128xf32>
    %378 = arith.addf %326, %377 : vector<10x128xf32>
    %c0_183 = arith.constant 0 : index
    %c5_184 = arith.constant 5 : index
    %379 = memref.load %arg5[%c0_183, %c5_184] : memref<2x16xf32, #tpu.memory_space<smem>>
    %380 = vector.broadcast %379 : f32 to vector<10x128xf32>
    %381 = arith.mulf %341, %380 : vector<10x128xf32>
    %382 = arith.addf %330, %381 : vector<10x128xf32>
    %c1_185 = arith.constant 1 : index
    %c5_186 = arith.constant 5 : index
    %383 = memref.load %arg3[%c1_185, %c5_186] : memref<2x16xf32, #tpu.memory_space<smem>>
    %384 = vector.broadcast %383 : f32 to vector<10x128xf32>
    %385 = arith.mulf %341, %384 : vector<10x128xf32>
    %386 = arith.addf %334, %385 : vector<10x128xf32>
    %c1_187 = arith.constant 1 : index
    %c5_188 = arith.constant 5 : index
    %387 = memref.load %arg5[%c1_187, %c5_188] : memref<2x16xf32, #tpu.memory_space<smem>>
    %388 = vector.broadcast %387 : f32 to vector<10x128xf32>
    %389 = arith.mulf %341, %388 : vector<10x128xf32>
    %390 = arith.addf %338, %389 : vector<10x128xf32>
    %391 = arith.index_cast %9 : i32 to index
    %c6_189 = arith.constant 6 : index
    %c0_190 = arith.constant 0 : index
    %c0_191 = arith.constant 0 : index
    %392 = vector.load %arg12[%391, %c6_189, %c0_190, %c0_191] : memref<2x16x10x128xf32, #tpu.memory_space<vmem>>, vector<1x1x10x128xf32>
    %393 = vector.shape_cast %392 : vector<1x1x10x128xf32> to vector<10x128xf32>
    %394 = vector.extract_strided_slice %393 {offsets = [1, 0], sizes = [8, 128], strides = [1, 1]} : vector<10x128xf32> to vector<8x128xf32>
    %c0_192 = arith.constant 0 : index
    %c6_193 = arith.constant 6 : index
    %395 = memref.load %arg9[%c0_192, %c6_193] : memref<8x34xf32, #tpu.memory_space<smem>>
    %396 = vector.broadcast %395 : f32 to vector<8x128xf32>
    %397 = arith.mulf %394, %396 : vector<8x128xf32>
    %398 = arith.addf %346, %397 : vector<8x128xf32>
    %c1_194 = arith.constant 1 : index
    %c6_195 = arith.constant 6 : index
    %399 = memref.load %arg9[%c1_194, %c6_195] : memref<8x34xf32, #tpu.memory_space<smem>>
    %400 = vector.broadcast %399 : f32 to vector<8x128xf32>
    %401 = arith.mulf %394, %400 : vector<8x128xf32>
    %402 = arith.addf %350, %401 : vector<8x128xf32>
    %c2_196 = arith.constant 2 : index
    %c6_197 = arith.constant 6 : index
    %403 = memref.load %arg9[%c2_196, %c6_197] : memref<8x34xf32, #tpu.memory_space<smem>>
    %404 = vector.broadcast %403 : f32 to vector<8x128xf32>
    %405 = arith.mulf %394, %404 : vector<8x128xf32>
    %406 = arith.addf %354, %405 : vector<8x128xf32>
    %c3_198 = arith.constant 3 : index
    %c6_199 = arith.constant 6 : index
    %407 = memref.load %arg9[%c3_198, %c6_199] : memref<8x34xf32, #tpu.memory_space<smem>>
    %408 = vector.broadcast %407 : f32 to vector<8x128xf32>
    %409 = arith.mulf %394, %408 : vector<8x128xf32>
    %410 = arith.addf %358, %409 : vector<8x128xf32>
    %c4_200 = arith.constant 4 : index
    %c6_201 = arith.constant 6 : index
    %411 = memref.load %arg9[%c4_200, %c6_201] : memref<8x34xf32, #tpu.memory_space<smem>>
    %412 = vector.broadcast %411 : f32 to vector<8x128xf32>
    %413 = arith.mulf %394, %412 : vector<8x128xf32>
    %414 = arith.addf %362, %413 : vector<8x128xf32>
    %c5_202 = arith.constant 5 : index
    %c6_203 = arith.constant 6 : index
    %415 = memref.load %arg9[%c5_202, %c6_203] : memref<8x34xf32, #tpu.memory_space<smem>>
    %416 = vector.broadcast %415 : f32 to vector<8x128xf32>
    %417 = arith.mulf %394, %416 : vector<8x128xf32>
    %418 = arith.addf %366, %417 : vector<8x128xf32>
    %c6_204 = arith.constant 6 : index
    %c6_205 = arith.constant 6 : index
    %419 = memref.load %arg9[%c6_204, %c6_205] : memref<8x34xf32, #tpu.memory_space<smem>>
    %420 = vector.broadcast %419 : f32 to vector<8x128xf32>
    %421 = arith.mulf %394, %420 : vector<8x128xf32>
    %422 = arith.addf %370, %421 : vector<8x128xf32>
    %c7_206 = arith.constant 7 : index
    %c6_207 = arith.constant 6 : index
    %423 = memref.load %arg9[%c7_206, %c6_207] : memref<8x34xf32, #tpu.memory_space<smem>>
    %424 = vector.broadcast %423 : f32 to vector<8x128xf32>
    %425 = arith.mulf %394, %424 : vector<8x128xf32>
    %426 = arith.addf %374, %425 : vector<8x128xf32>
    %c0_208 = arith.constant 0 : index
    %c6_209 = arith.constant 6 : index
    %427 = memref.load %arg3[%c0_208, %c6_209] : memref<2x16xf32, #tpu.memory_space<smem>>
    %428 = vector.broadcast %427 : f32 to vector<10x128xf32>
    %429 = arith.mulf %393, %428 : vector<10x128xf32>
    %430 = arith.addf %378, %429 : vector<10x128xf32>
    %c0_210 = arith.constant 0 : index
    %c6_211 = arith.constant 6 : index
    %431 = memref.load %arg5[%c0_210, %c6_211] : memref<2x16xf32, #tpu.memory_space<smem>>
    %432 = vector.broadcast %431 : f32 to vector<10x128xf32>
    %433 = arith.mulf %393, %432 : vector<10x128xf32>
    %434 = arith.addf %382, %433 : vector<10x128xf32>
    %c1_212 = arith.constant 1 : index
    %c6_213 = arith.constant 6 : index
    %435 = memref.load %arg3[%c1_212, %c6_213] : memref<2x16xf32, #tpu.memory_space<smem>>
    %436 = vector.broadcast %435 : f32 to vector<10x128xf32>
    %437 = arith.mulf %393, %436 : vector<10x128xf32>
    %438 = arith.addf %386, %437 : vector<10x128xf32>
    %c1_214 = arith.constant 1 : index
    %c6_215 = arith.constant 6 : index
    %439 = memref.load %arg5[%c1_214, %c6_215] : memref<2x16xf32, #tpu.memory_space<smem>>
    %440 = vector.broadcast %439 : f32 to vector<10x128xf32>
    %441 = arith.mulf %393, %440 : vector<10x128xf32>
    %442 = arith.addf %390, %441 : vector<10x128xf32>
    %443 = arith.index_cast %9 : i32 to index
    %c7_216 = arith.constant 7 : index
    %c0_217 = arith.constant 0 : index
    %c0_218 = arith.constant 0 : index
    %444 = vector.load %arg12[%443, %c7_216, %c0_217, %c0_218] : memref<2x16x10x128xf32, #tpu.memory_space<vmem>>, vector<1x1x10x128xf32>
    %445 = vector.shape_cast %444 : vector<1x1x10x128xf32> to vector<10x128xf32>
    %446 = vector.extract_strided_slice %445 {offsets = [1, 0], sizes = [8, 128], strides = [1, 1]} : vector<10x128xf32> to vector<8x128xf32>
    %c0_219 = arith.constant 0 : index
    %c7_220 = arith.constant 7 : index
    %447 = memref.load %arg9[%c0_219, %c7_220] : memref<8x34xf32, #tpu.memory_space<smem>>
    %448 = vector.broadcast %447 : f32 to vector<8x128xf32>
    %449 = arith.mulf %446, %448 : vector<8x128xf32>
    %450 = arith.addf %398, %449 : vector<8x128xf32>
    %c1_221 = arith.constant 1 : index
    %c7_222 = arith.constant 7 : index
    %451 = memref.load %arg9[%c1_221, %c7_222] : memref<8x34xf32, #tpu.memory_space<smem>>
    %452 = vector.broadcast %451 : f32 to vector<8x128xf32>
    %453 = arith.mulf %446, %452 : vector<8x128xf32>
    %454 = arith.addf %402, %453 : vector<8x128xf32>
    %c2_223 = arith.constant 2 : index
    %c7_224 = arith.constant 7 : index
    %455 = memref.load %arg9[%c2_223, %c7_224] : memref<8x34xf32, #tpu.memory_space<smem>>
    %456 = vector.broadcast %455 : f32 to vector<8x128xf32>
    %457 = arith.mulf %446, %456 : vector<8x128xf32>
    %458 = arith.addf %406, %457 : vector<8x128xf32>
    %c3_225 = arith.constant 3 : index
    %c7_226 = arith.constant 7 : index
    %459 = memref.load %arg9[%c3_225, %c7_226] : memref<8x34xf32, #tpu.memory_space<smem>>
    %460 = vector.broadcast %459 : f32 to vector<8x128xf32>
    %461 = arith.mulf %446, %460 : vector<8x128xf32>
    %462 = arith.addf %410, %461 : vector<8x128xf32>
    %c4_227 = arith.constant 4 : index
    %c7_228 = arith.constant 7 : index
    %463 = memref.load %arg9[%c4_227, %c7_228] : memref<8x34xf32, #tpu.memory_space<smem>>
    %464 = vector.broadcast %463 : f32 to vector<8x128xf32>
    %465 = arith.mulf %446, %464 : vector<8x128xf32>
    %466 = arith.addf %414, %465 : vector<8x128xf32>
    %c5_229 = arith.constant 5 : index
    %c7_230 = arith.constant 7 : index
    %467 = memref.load %arg9[%c5_229, %c7_230] : memref<8x34xf32, #tpu.memory_space<smem>>
    %468 = vector.broadcast %467 : f32 to vector<8x128xf32>
    %469 = arith.mulf %446, %468 : vector<8x128xf32>
    %470 = arith.addf %418, %469 : vector<8x128xf32>
    %c6_231 = arith.constant 6 : index
    %c7_232 = arith.constant 7 : index
    %471 = memref.load %arg9[%c6_231, %c7_232] : memref<8x34xf32, #tpu.memory_space<smem>>
    %472 = vector.broadcast %471 : f32 to vector<8x128xf32>
    %473 = arith.mulf %446, %472 : vector<8x128xf32>
    %474 = arith.addf %422, %473 : vector<8x128xf32>
    %c7_233 = arith.constant 7 : index
    %c7_234 = arith.constant 7 : index
    %475 = memref.load %arg9[%c7_233, %c7_234] : memref<8x34xf32, #tpu.memory_space<smem>>
    %476 = vector.broadcast %475 : f32 to vector<8x128xf32>
    %477 = arith.mulf %446, %476 : vector<8x128xf32>
    %478 = arith.addf %426, %477 : vector<8x128xf32>
    %c0_235 = arith.constant 0 : index
    %c7_236 = arith.constant 7 : index
    %479 = memref.load %arg3[%c0_235, %c7_236] : memref<2x16xf32, #tpu.memory_space<smem>>
    %480 = vector.broadcast %479 : f32 to vector<10x128xf32>
    %481 = arith.mulf %445, %480 : vector<10x128xf32>
    %482 = arith.addf %430, %481 : vector<10x128xf32>
    %c0_237 = arith.constant 0 : index
    %c7_238 = arith.constant 7 : index
    %483 = memref.load %arg5[%c0_237, %c7_238] : memref<2x16xf32, #tpu.memory_space<smem>>
    %484 = vector.broadcast %483 : f32 to vector<10x128xf32>
    %485 = arith.mulf %445, %484 : vector<10x128xf32>
    %486 = arith.addf %434, %485 : vector<10x128xf32>
    %c1_239 = arith.constant 1 : index
    %c7_240 = arith.constant 7 : index
    %487 = memref.load %arg3[%c1_239, %c7_240] : memref<2x16xf32, #tpu.memory_space<smem>>
    %488 = vector.broadcast %487 : f32 to vector<10x128xf32>
    %489 = arith.mulf %445, %488 : vector<10x128xf32>
    %490 = arith.addf %438, %489 : vector<10x128xf32>
    %c1_241 = arith.constant 1 : index
    %c7_242 = arith.constant 7 : index
    %491 = memref.load %arg5[%c1_241, %c7_242] : memref<2x16xf32, #tpu.memory_space<smem>>
    %492 = vector.broadcast %491 : f32 to vector<10x128xf32>
    %493 = arith.mulf %445, %492 : vector<10x128xf32>
    %494 = arith.addf %442, %493 : vector<10x128xf32>
    %495 = arith.index_cast %9 : i32 to index
    %c8 = arith.constant 8 : index
    %c0_243 = arith.constant 0 : index
    %c0_244 = arith.constant 0 : index
    %496 = vector.load %arg12[%495, %c8, %c0_243, %c0_244] : memref<2x16x10x128xf32, #tpu.memory_space<vmem>>, vector<1x1x10x128xf32>
    %497 = vector.shape_cast %496 : vector<1x1x10x128xf32> to vector<10x128xf32>
    %498 = vector.extract_strided_slice %497 {offsets = [1, 0], sizes = [8, 128], strides = [1, 1]} : vector<10x128xf32> to vector<8x128xf32>
    %c0_245 = arith.constant 0 : index
    %c8_246 = arith.constant 8 : index
    %499 = memref.load %arg9[%c0_245, %c8_246] : memref<8x34xf32, #tpu.memory_space<smem>>
    %500 = vector.broadcast %499 : f32 to vector<8x128xf32>
    %501 = arith.mulf %498, %500 : vector<8x128xf32>
    %502 = arith.addf %450, %501 : vector<8x128xf32>
    %c1_247 = arith.constant 1 : index
    %c8_248 = arith.constant 8 : index
    %503 = memref.load %arg9[%c1_247, %c8_248] : memref<8x34xf32, #tpu.memory_space<smem>>
    %504 = vector.broadcast %503 : f32 to vector<8x128xf32>
    %505 = arith.mulf %498, %504 : vector<8x128xf32>
    %506 = arith.addf %454, %505 : vector<8x128xf32>
    %c2_249 = arith.constant 2 : index
    %c8_250 = arith.constant 8 : index
    %507 = memref.load %arg9[%c2_249, %c8_250] : memref<8x34xf32, #tpu.memory_space<smem>>
    %508 = vector.broadcast %507 : f32 to vector<8x128xf32>
    %509 = arith.mulf %498, %508 : vector<8x128xf32>
    %510 = arith.addf %458, %509 : vector<8x128xf32>
    %c3_251 = arith.constant 3 : index
    %c8_252 = arith.constant 8 : index
    %511 = memref.load %arg9[%c3_251, %c8_252] : memref<8x34xf32, #tpu.memory_space<smem>>
    %512 = vector.broadcast %511 : f32 to vector<8x128xf32>
    %513 = arith.mulf %498, %512 : vector<8x128xf32>
    %514 = arith.addf %462, %513 : vector<8x128xf32>
    %c4_253 = arith.constant 4 : index
    %c8_254 = arith.constant 8 : index
    %515 = memref.load %arg9[%c4_253, %c8_254] : memref<8x34xf32, #tpu.memory_space<smem>>
    %516 = vector.broadcast %515 : f32 to vector<8x128xf32>
    %517 = arith.mulf %498, %516 : vector<8x128xf32>
    %518 = arith.addf %466, %517 : vector<8x128xf32>
    %c5_255 = arith.constant 5 : index
    %c8_256 = arith.constant 8 : index
    %519 = memref.load %arg9[%c5_255, %c8_256] : memref<8x34xf32, #tpu.memory_space<smem>>
    %520 = vector.broadcast %519 : f32 to vector<8x128xf32>
    %521 = arith.mulf %498, %520 : vector<8x128xf32>
    %522 = arith.addf %470, %521 : vector<8x128xf32>
    %c6_257 = arith.constant 6 : index
    %c8_258 = arith.constant 8 : index
    %523 = memref.load %arg9[%c6_257, %c8_258] : memref<8x34xf32, #tpu.memory_space<smem>>
    %524 = vector.broadcast %523 : f32 to vector<8x128xf32>
    %525 = arith.mulf %498, %524 : vector<8x128xf32>
    %526 = arith.addf %474, %525 : vector<8x128xf32>
    %c7_259 = arith.constant 7 : index
    %c8_260 = arith.constant 8 : index
    %527 = memref.load %arg9[%c7_259, %c8_260] : memref<8x34xf32, #tpu.memory_space<smem>>
    %528 = vector.broadcast %527 : f32 to vector<8x128xf32>
    %529 = arith.mulf %498, %528 : vector<8x128xf32>
    %530 = arith.addf %478, %529 : vector<8x128xf32>
    %c0_261 = arith.constant 0 : index
    %c8_262 = arith.constant 8 : index
    %531 = memref.load %arg3[%c0_261, %c8_262] : memref<2x16xf32, #tpu.memory_space<smem>>
    %532 = vector.broadcast %531 : f32 to vector<10x128xf32>
    %533 = arith.mulf %497, %532 : vector<10x128xf32>
    %534 = arith.addf %482, %533 : vector<10x128xf32>
    %c0_263 = arith.constant 0 : index
    %c8_264 = arith.constant 8 : index
    %535 = memref.load %arg5[%c0_263, %c8_264] : memref<2x16xf32, #tpu.memory_space<smem>>
    %536 = vector.broadcast %535 : f32 to vector<10x128xf32>
    %537 = arith.mulf %497, %536 : vector<10x128xf32>
    %538 = arith.addf %486, %537 : vector<10x128xf32>
    %c1_265 = arith.constant 1 : index
    %c8_266 = arith.constant 8 : index
    %539 = memref.load %arg3[%c1_265, %c8_266] : memref<2x16xf32, #tpu.memory_space<smem>>
    %540 = vector.broadcast %539 : f32 to vector<10x128xf32>
    %541 = arith.mulf %497, %540 : vector<10x128xf32>
    %542 = arith.addf %490, %541 : vector<10x128xf32>
    %c1_267 = arith.constant 1 : index
    %c8_268 = arith.constant 8 : index
    %543 = memref.load %arg5[%c1_267, %c8_268] : memref<2x16xf32, #tpu.memory_space<smem>>
    %544 = vector.broadcast %543 : f32 to vector<10x128xf32>
    %545 = arith.mulf %497, %544 : vector<10x128xf32>
    %546 = arith.addf %494, %545 : vector<10x128xf32>
    %547 = arith.index_cast %9 : i32 to index
    %c9 = arith.constant 9 : index
    %c0_269 = arith.constant 0 : index
    %c0_270 = arith.constant 0 : index
    %548 = vector.load %arg12[%547, %c9, %c0_269, %c0_270] : memref<2x16x10x128xf32, #tpu.memory_space<vmem>>, vector<1x1x10x128xf32>
    %549 = vector.shape_cast %548 : vector<1x1x10x128xf32> to vector<10x128xf32>
    %550 = vector.extract_strided_slice %549 {offsets = [1, 0], sizes = [8, 128], strides = [1, 1]} : vector<10x128xf32> to vector<8x128xf32>
    %c0_271 = arith.constant 0 : index
    %c9_272 = arith.constant 9 : index
    %551 = memref.load %arg9[%c0_271, %c9_272] : memref<8x34xf32, #tpu.memory_space<smem>>
    %552 = vector.broadcast %551 : f32 to vector<8x128xf32>
    %553 = arith.mulf %550, %552 : vector<8x128xf32>
    %554 = arith.addf %502, %553 : vector<8x128xf32>
    %c1_273 = arith.constant 1 : index
    %c9_274 = arith.constant 9 : index
    %555 = memref.load %arg9[%c1_273, %c9_274] : memref<8x34xf32, #tpu.memory_space<smem>>
    %556 = vector.broadcast %555 : f32 to vector<8x128xf32>
    %557 = arith.mulf %550, %556 : vector<8x128xf32>
    %558 = arith.addf %506, %557 : vector<8x128xf32>
    %c2_275 = arith.constant 2 : index
    %c9_276 = arith.constant 9 : index
    %559 = memref.load %arg9[%c2_275, %c9_276] : memref<8x34xf32, #tpu.memory_space<smem>>
    %560 = vector.broadcast %559 : f32 to vector<8x128xf32>
    %561 = arith.mulf %550, %560 : vector<8x128xf32>
    %562 = arith.addf %510, %561 : vector<8x128xf32>
    %c3_277 = arith.constant 3 : index
    %c9_278 = arith.constant 9 : index
    %563 = memref.load %arg9[%c3_277, %c9_278] : memref<8x34xf32, #tpu.memory_space<smem>>
    %564 = vector.broadcast %563 : f32 to vector<8x128xf32>
    %565 = arith.mulf %550, %564 : vector<8x128xf32>
    %566 = arith.addf %514, %565 : vector<8x128xf32>
    %c4_279 = arith.constant 4 : index
    %c9_280 = arith.constant 9 : index
    %567 = memref.load %arg9[%c4_279, %c9_280] : memref<8x34xf32, #tpu.memory_space<smem>>
    %568 = vector.broadcast %567 : f32 to vector<8x128xf32>
    %569 = arith.mulf %550, %568 : vector<8x128xf32>
    %570 = arith.addf %518, %569 : vector<8x128xf32>
    %c5_281 = arith.constant 5 : index
    %c9_282 = arith.constant 9 : index
    %571 = memref.load %arg9[%c5_281, %c9_282] : memref<8x34xf32, #tpu.memory_space<smem>>
    %572 = vector.broadcast %571 : f32 to vector<8x128xf32>
    %573 = arith.mulf %550, %572 : vector<8x128xf32>
    %574 = arith.addf %522, %573 : vector<8x128xf32>
    %c6_283 = arith.constant 6 : index
    %c9_284 = arith.constant 9 : index
    %575 = memref.load %arg9[%c6_283, %c9_284] : memref<8x34xf32, #tpu.memory_space<smem>>
    %576 = vector.broadcast %575 : f32 to vector<8x128xf32>
    %577 = arith.mulf %550, %576 : vector<8x128xf32>
    %578 = arith.addf %526, %577 : vector<8x128xf32>
    %c7_285 = arith.constant 7 : index
    %c9_286 = arith.constant 9 : index
    %579 = memref.load %arg9[%c7_285, %c9_286] : memref<8x34xf32, #tpu.memory_space<smem>>
    %580 = vector.broadcast %579 : f32 to vector<8x128xf32>
    %581 = arith.mulf %550, %580 : vector<8x128xf32>
    %582 = arith.addf %530, %581 : vector<8x128xf32>
    %c0_287 = arith.constant 0 : index
    %c9_288 = arith.constant 9 : index
    %583 = memref.load %arg3[%c0_287, %c9_288] : memref<2x16xf32, #tpu.memory_space<smem>>
    %584 = vector.broadcast %583 : f32 to vector<10x128xf32>
    %585 = arith.mulf %549, %584 : vector<10x128xf32>
    %586 = arith.addf %534, %585 : vector<10x128xf32>
    %c0_289 = arith.constant 0 : index
    %c9_290 = arith.constant 9 : index
    %587 = memref.load %arg5[%c0_289, %c9_290] : memref<2x16xf32, #tpu.memory_space<smem>>
    %588 = vector.broadcast %587 : f32 to vector<10x128xf32>
    %589 = arith.mulf %549, %588 : vector<10x128xf32>
    %590 = arith.addf %538, %589 : vector<10x128xf32>
    %c1_291 = arith.constant 1 : index
    %c9_292 = arith.constant 9 : index
    %591 = memref.load %arg3[%c1_291, %c9_292] : memref<2x16xf32, #tpu.memory_space<smem>>
    %592 = vector.broadcast %591 : f32 to vector<10x128xf32>
    %593 = arith.mulf %549, %592 : vector<10x128xf32>
    %594 = arith.addf %542, %593 : vector<10x128xf32>
    %c1_293 = arith.constant 1 : index
    %c9_294 = arith.constant 9 : index
    %595 = memref.load %arg5[%c1_293, %c9_294] : memref<2x16xf32, #tpu.memory_space<smem>>
    %596 = vector.broadcast %595 : f32 to vector<10x128xf32>
    %597 = arith.mulf %549, %596 : vector<10x128xf32>
    %598 = arith.addf %546, %597 : vector<10x128xf32>
    %599 = arith.index_cast %9 : i32 to index
    %c10 = arith.constant 10 : index
    %c0_295 = arith.constant 0 : index
    %c0_296 = arith.constant 0 : index
    %600 = vector.load %arg12[%599, %c10, %c0_295, %c0_296] : memref<2x16x10x128xf32, #tpu.memory_space<vmem>>, vector<1x1x10x128xf32>
    %601 = vector.shape_cast %600 : vector<1x1x10x128xf32> to vector<10x128xf32>
    %602 = vector.extract_strided_slice %601 {offsets = [1, 0], sizes = [8, 128], strides = [1, 1]} : vector<10x128xf32> to vector<8x128xf32>
    %c0_297 = arith.constant 0 : index
    %c10_298 = arith.constant 10 : index
    %603 = memref.load %arg9[%c0_297, %c10_298] : memref<8x34xf32, #tpu.memory_space<smem>>
    %604 = vector.broadcast %603 : f32 to vector<8x128xf32>
    %605 = arith.mulf %602, %604 : vector<8x128xf32>
    %606 = arith.addf %554, %605 : vector<8x128xf32>
    %c1_299 = arith.constant 1 : index
    %c10_300 = arith.constant 10 : index
    %607 = memref.load %arg9[%c1_299, %c10_300] : memref<8x34xf32, #tpu.memory_space<smem>>
    %608 = vector.broadcast %607 : f32 to vector<8x128xf32>
    %609 = arith.mulf %602, %608 : vector<8x128xf32>
    %610 = arith.addf %558, %609 : vector<8x128xf32>
    %c2_301 = arith.constant 2 : index
    %c10_302 = arith.constant 10 : index
    %611 = memref.load %arg9[%c2_301, %c10_302] : memref<8x34xf32, #tpu.memory_space<smem>>
    %612 = vector.broadcast %611 : f32 to vector<8x128xf32>
    %613 = arith.mulf %602, %612 : vector<8x128xf32>
    %614 = arith.addf %562, %613 : vector<8x128xf32>
    %c3_303 = arith.constant 3 : index
    %c10_304 = arith.constant 10 : index
    %615 = memref.load %arg9[%c3_303, %c10_304] : memref<8x34xf32, #tpu.memory_space<smem>>
    %616 = vector.broadcast %615 : f32 to vector<8x128xf32>
    %617 = arith.mulf %602, %616 : vector<8x128xf32>
    %618 = arith.addf %566, %617 : vector<8x128xf32>
    %c4_305 = arith.constant 4 : index
    %c10_306 = arith.constant 10 : index
    %619 = memref.load %arg9[%c4_305, %c10_306] : memref<8x34xf32, #tpu.memory_space<smem>>
    %620 = vector.broadcast %619 : f32 to vector<8x128xf32>
    %621 = arith.mulf %602, %620 : vector<8x128xf32>
    %622 = arith.addf %570, %621 : vector<8x128xf32>
    %c5_307 = arith.constant 5 : index
    %c10_308 = arith.constant 10 : index
    %623 = memref.load %arg9[%c5_307, %c10_308] : memref<8x34xf32, #tpu.memory_space<smem>>
    %624 = vector.broadcast %623 : f32 to vector<8x128xf32>
    %625 = arith.mulf %602, %624 : vector<8x128xf32>
    %626 = arith.addf %574, %625 : vector<8x128xf32>
    %c6_309 = arith.constant 6 : index
    %c10_310 = arith.constant 10 : index
    %627 = memref.load %arg9[%c6_309, %c10_310] : memref<8x34xf32, #tpu.memory_space<smem>>
    %628 = vector.broadcast %627 : f32 to vector<8x128xf32>
    %629 = arith.mulf %602, %628 : vector<8x128xf32>
    %630 = arith.addf %578, %629 : vector<8x128xf32>
    %c7_311 = arith.constant 7 : index
    %c10_312 = arith.constant 10 : index
    %631 = memref.load %arg9[%c7_311, %c10_312] : memref<8x34xf32, #tpu.memory_space<smem>>
    %632 = vector.broadcast %631 : f32 to vector<8x128xf32>
    %633 = arith.mulf %602, %632 : vector<8x128xf32>
    %634 = arith.addf %582, %633 : vector<8x128xf32>
    %c0_313 = arith.constant 0 : index
    %c10_314 = arith.constant 10 : index
    %635 = memref.load %arg3[%c0_313, %c10_314] : memref<2x16xf32, #tpu.memory_space<smem>>
    %636 = vector.broadcast %635 : f32 to vector<10x128xf32>
    %637 = arith.mulf %601, %636 : vector<10x128xf32>
    %638 = arith.addf %586, %637 : vector<10x128xf32>
    %c0_315 = arith.constant 0 : index
    %c10_316 = arith.constant 10 : index
    %639 = memref.load %arg5[%c0_315, %c10_316] : memref<2x16xf32, #tpu.memory_space<smem>>
    %640 = vector.broadcast %639 : f32 to vector<10x128xf32>
    %641 = arith.mulf %601, %640 : vector<10x128xf32>
    %642 = arith.addf %590, %641 : vector<10x128xf32>
    %c1_317 = arith.constant 1 : index
    %c10_318 = arith.constant 10 : index
    %643 = memref.load %arg3[%c1_317, %c10_318] : memref<2x16xf32, #tpu.memory_space<smem>>
    %644 = vector.broadcast %643 : f32 to vector<10x128xf32>
    %645 = arith.mulf %601, %644 : vector<10x128xf32>
    %646 = arith.addf %594, %645 : vector<10x128xf32>
    %c1_319 = arith.constant 1 : index
    %c10_320 = arith.constant 10 : index
    %647 = memref.load %arg5[%c1_319, %c10_320] : memref<2x16xf32, #tpu.memory_space<smem>>
    %648 = vector.broadcast %647 : f32 to vector<10x128xf32>
    %649 = arith.mulf %601, %648 : vector<10x128xf32>
    %650 = arith.addf %598, %649 : vector<10x128xf32>
    %651 = arith.index_cast %9 : i32 to index
    %c11 = arith.constant 11 : index
    %c0_321 = arith.constant 0 : index
    %c0_322 = arith.constant 0 : index
    %652 = vector.load %arg12[%651, %c11, %c0_321, %c0_322] : memref<2x16x10x128xf32, #tpu.memory_space<vmem>>, vector<1x1x10x128xf32>
    %653 = vector.shape_cast %652 : vector<1x1x10x128xf32> to vector<10x128xf32>
    %654 = vector.extract_strided_slice %653 {offsets = [1, 0], sizes = [8, 128], strides = [1, 1]} : vector<10x128xf32> to vector<8x128xf32>
    %c0_323 = arith.constant 0 : index
    %c11_324 = arith.constant 11 : index
    %655 = memref.load %arg9[%c0_323, %c11_324] : memref<8x34xf32, #tpu.memory_space<smem>>
    %656 = vector.broadcast %655 : f32 to vector<8x128xf32>
    %657 = arith.mulf %654, %656 : vector<8x128xf32>
    %658 = arith.addf %606, %657 : vector<8x128xf32>
    %c1_325 = arith.constant 1 : index
    %c11_326 = arith.constant 11 : index
    %659 = memref.load %arg9[%c1_325, %c11_326] : memref<8x34xf32, #tpu.memory_space<smem>>
    %660 = vector.broadcast %659 : f32 to vector<8x128xf32>
    %661 = arith.mulf %654, %660 : vector<8x128xf32>
    %662 = arith.addf %610, %661 : vector<8x128xf32>
    %c2_327 = arith.constant 2 : index
    %c11_328 = arith.constant 11 : index
    %663 = memref.load %arg9[%c2_327, %c11_328] : memref<8x34xf32, #tpu.memory_space<smem>>
    %664 = vector.broadcast %663 : f32 to vector<8x128xf32>
    %665 = arith.mulf %654, %664 : vector<8x128xf32>
    %666 = arith.addf %614, %665 : vector<8x128xf32>
    %c3_329 = arith.constant 3 : index
    %c11_330 = arith.constant 11 : index
    %667 = memref.load %arg9[%c3_329, %c11_330] : memref<8x34xf32, #tpu.memory_space<smem>>
    %668 = vector.broadcast %667 : f32 to vector<8x128xf32>
    %669 = arith.mulf %654, %668 : vector<8x128xf32>
    %670 = arith.addf %618, %669 : vector<8x128xf32>
    %c4_331 = arith.constant 4 : index
    %c11_332 = arith.constant 11 : index
    %671 = memref.load %arg9[%c4_331, %c11_332] : memref<8x34xf32, #tpu.memory_space<smem>>
    %672 = vector.broadcast %671 : f32 to vector<8x128xf32>
    %673 = arith.mulf %654, %672 : vector<8x128xf32>
    %674 = arith.addf %622, %673 : vector<8x128xf32>
    %c5_333 = arith.constant 5 : index
    %c11_334 = arith.constant 11 : index
    %675 = memref.load %arg9[%c5_333, %c11_334] : memref<8x34xf32, #tpu.memory_space<smem>>
    %676 = vector.broadcast %675 : f32 to vector<8x128xf32>
    %677 = arith.mulf %654, %676 : vector<8x128xf32>
    %678 = arith.addf %626, %677 : vector<8x128xf32>
    %c6_335 = arith.constant 6 : index
    %c11_336 = arith.constant 11 : index
    %679 = memref.load %arg9[%c6_335, %c11_336] : memref<8x34xf32, #tpu.memory_space<smem>>
    %680 = vector.broadcast %679 : f32 to vector<8x128xf32>
    %681 = arith.mulf %654, %680 : vector<8x128xf32>
    %682 = arith.addf %630, %681 : vector<8x128xf32>
    %c7_337 = arith.constant 7 : index
    %c11_338 = arith.constant 11 : index
    %683 = memref.load %arg9[%c7_337, %c11_338] : memref<8x34xf32, #tpu.memory_space<smem>>
    %684 = vector.broadcast %683 : f32 to vector<8x128xf32>
    %685 = arith.mulf %654, %684 : vector<8x128xf32>
    %686 = arith.addf %634, %685 : vector<8x128xf32>
    %c0_339 = arith.constant 0 : index
    %c11_340 = arith.constant 11 : index
    %687 = memref.load %arg3[%c0_339, %c11_340] : memref<2x16xf32, #tpu.memory_space<smem>>
    %688 = vector.broadcast %687 : f32 to vector<10x128xf32>
    %689 = arith.mulf %653, %688 : vector<10x128xf32>
    %690 = arith.addf %638, %689 : vector<10x128xf32>
    %c0_341 = arith.constant 0 : index
    %c11_342 = arith.constant 11 : index
    %691 = memref.load %arg5[%c0_341, %c11_342] : memref<2x16xf32, #tpu.memory_space<smem>>
    %692 = vector.broadcast %691 : f32 to vector<10x128xf32>
    %693 = arith.mulf %653, %692 : vector<10x128xf32>
    %694 = arith.addf %642, %693 : vector<10x128xf32>
    %c1_343 = arith.constant 1 : index
    %c11_344 = arith.constant 11 : index
    %695 = memref.load %arg3[%c1_343, %c11_344] : memref<2x16xf32, #tpu.memory_space<smem>>
    %696 = vector.broadcast %695 : f32 to vector<10x128xf32>
    %697 = arith.mulf %653, %696 : vector<10x128xf32>
    %698 = arith.addf %646, %697 : vector<10x128xf32>
    %c1_345 = arith.constant 1 : index
    %c11_346 = arith.constant 11 : index
    %699 = memref.load %arg5[%c1_345, %c11_346] : memref<2x16xf32, #tpu.memory_space<smem>>
    %700 = vector.broadcast %699 : f32 to vector<10x128xf32>
    %701 = arith.mulf %653, %700 : vector<10x128xf32>
    %702 = arith.addf %650, %701 : vector<10x128xf32>
    %703 = arith.index_cast %9 : i32 to index
    %c12 = arith.constant 12 : index
    %c0_347 = arith.constant 0 : index
    %c0_348 = arith.constant 0 : index
    %704 = vector.load %arg12[%703, %c12, %c0_347, %c0_348] : memref<2x16x10x128xf32, #tpu.memory_space<vmem>>, vector<1x1x10x128xf32>
    %705 = vector.shape_cast %704 : vector<1x1x10x128xf32> to vector<10x128xf32>
    %706 = vector.extract_strided_slice %705 {offsets = [1, 0], sizes = [8, 128], strides = [1, 1]} : vector<10x128xf32> to vector<8x128xf32>
    %c0_349 = arith.constant 0 : index
    %c12_350 = arith.constant 12 : index
    %707 = memref.load %arg9[%c0_349, %c12_350] : memref<8x34xf32, #tpu.memory_space<smem>>
    %708 = vector.broadcast %707 : f32 to vector<8x128xf32>
    %709 = arith.mulf %706, %708 : vector<8x128xf32>
    %710 = arith.addf %658, %709 : vector<8x128xf32>
    %c1_351 = arith.constant 1 : index
    %c12_352 = arith.constant 12 : index
    %711 = memref.load %arg9[%c1_351, %c12_352] : memref<8x34xf32, #tpu.memory_space<smem>>
    %712 = vector.broadcast %711 : f32 to vector<8x128xf32>
    %713 = arith.mulf %706, %712 : vector<8x128xf32>
    %714 = arith.addf %662, %713 : vector<8x128xf32>
    %c2_353 = arith.constant 2 : index
    %c12_354 = arith.constant 12 : index
    %715 = memref.load %arg9[%c2_353, %c12_354] : memref<8x34xf32, #tpu.memory_space<smem>>
    %716 = vector.broadcast %715 : f32 to vector<8x128xf32>
    %717 = arith.mulf %706, %716 : vector<8x128xf32>
    %718 = arith.addf %666, %717 : vector<8x128xf32>
    %c3_355 = arith.constant 3 : index
    %c12_356 = arith.constant 12 : index
    %719 = memref.load %arg9[%c3_355, %c12_356] : memref<8x34xf32, #tpu.memory_space<smem>>
    %720 = vector.broadcast %719 : f32 to vector<8x128xf32>
    %721 = arith.mulf %706, %720 : vector<8x128xf32>
    %722 = arith.addf %670, %721 : vector<8x128xf32>
    %c4_357 = arith.constant 4 : index
    %c12_358 = arith.constant 12 : index
    %723 = memref.load %arg9[%c4_357, %c12_358] : memref<8x34xf32, #tpu.memory_space<smem>>
    %724 = vector.broadcast %723 : f32 to vector<8x128xf32>
    %725 = arith.mulf %706, %724 : vector<8x128xf32>
    %726 = arith.addf %674, %725 : vector<8x128xf32>
    %c5_359 = arith.constant 5 : index
    %c12_360 = arith.constant 12 : index
    %727 = memref.load %arg9[%c5_359, %c12_360] : memref<8x34xf32, #tpu.memory_space<smem>>
    %728 = vector.broadcast %727 : f32 to vector<8x128xf32>
    %729 = arith.mulf %706, %728 : vector<8x128xf32>
    %730 = arith.addf %678, %729 : vector<8x128xf32>
    %c6_361 = arith.constant 6 : index
    %c12_362 = arith.constant 12 : index
    %731 = memref.load %arg9[%c6_361, %c12_362] : memref<8x34xf32, #tpu.memory_space<smem>>
    %732 = vector.broadcast %731 : f32 to vector<8x128xf32>
    %733 = arith.mulf %706, %732 : vector<8x128xf32>
    %734 = arith.addf %682, %733 : vector<8x128xf32>
    %c7_363 = arith.constant 7 : index
    %c12_364 = arith.constant 12 : index
    %735 = memref.load %arg9[%c7_363, %c12_364] : memref<8x34xf32, #tpu.memory_space<smem>>
    %736 = vector.broadcast %735 : f32 to vector<8x128xf32>
    %737 = arith.mulf %706, %736 : vector<8x128xf32>
    %738 = arith.addf %686, %737 : vector<8x128xf32>
    %c0_365 = arith.constant 0 : index
    %c12_366 = arith.constant 12 : index
    %739 = memref.load %arg3[%c0_365, %c12_366] : memref<2x16xf32, #tpu.memory_space<smem>>
    %740 = vector.broadcast %739 : f32 to vector<10x128xf32>
    %741 = arith.mulf %705, %740 : vector<10x128xf32>
    %742 = arith.addf %690, %741 : vector<10x128xf32>
    %c0_367 = arith.constant 0 : index
    %c12_368 = arith.constant 12 : index
    %743 = memref.load %arg5[%c0_367, %c12_368] : memref<2x16xf32, #tpu.memory_space<smem>>
    %744 = vector.broadcast %743 : f32 to vector<10x128xf32>
    %745 = arith.mulf %705, %744 : vector<10x128xf32>
    %746 = arith.addf %694, %745 : vector<10x128xf32>
    %c1_369 = arith.constant 1 : index
    %c12_370 = arith.constant 12 : index
    %747 = memref.load %arg3[%c1_369, %c12_370] : memref<2x16xf32, #tpu.memory_space<smem>>
    %748 = vector.broadcast %747 : f32 to vector<10x128xf32>
    %749 = arith.mulf %705, %748 : vector<10x128xf32>
    %750 = arith.addf %698, %749 : vector<10x128xf32>
    %c1_371 = arith.constant 1 : index
    %c12_372 = arith.constant 12 : index
    %751 = memref.load %arg5[%c1_371, %c12_372] : memref<2x16xf32, #tpu.memory_space<smem>>
    %752 = vector.broadcast %751 : f32 to vector<10x128xf32>
    %753 = arith.mulf %705, %752 : vector<10x128xf32>
    %754 = arith.addf %702, %753 : vector<10x128xf32>
    %755 = arith.index_cast %9 : i32 to index
    %c13 = arith.constant 13 : index
    %c0_373 = arith.constant 0 : index
    %c0_374 = arith.constant 0 : index
    %756 = vector.load %arg12[%755, %c13, %c0_373, %c0_374] : memref<2x16x10x128xf32, #tpu.memory_space<vmem>>, vector<1x1x10x128xf32>
    %757 = vector.shape_cast %756 : vector<1x1x10x128xf32> to vector<10x128xf32>
    %758 = vector.extract_strided_slice %757 {offsets = [1, 0], sizes = [8, 128], strides = [1, 1]} : vector<10x128xf32> to vector<8x128xf32>
    %c0_375 = arith.constant 0 : index
    %c13_376 = arith.constant 13 : index
    %759 = memref.load %arg9[%c0_375, %c13_376] : memref<8x34xf32, #tpu.memory_space<smem>>
    %760 = vector.broadcast %759 : f32 to vector<8x128xf32>
    %761 = arith.mulf %758, %760 : vector<8x128xf32>
    %762 = arith.addf %710, %761 : vector<8x128xf32>
    %c1_377 = arith.constant 1 : index
    %c13_378 = arith.constant 13 : index
    %763 = memref.load %arg9[%c1_377, %c13_378] : memref<8x34xf32, #tpu.memory_space<smem>>
    %764 = vector.broadcast %763 : f32 to vector<8x128xf32>
    %765 = arith.mulf %758, %764 : vector<8x128xf32>
    %766 = arith.addf %714, %765 : vector<8x128xf32>
    %c2_379 = arith.constant 2 : index
    %c13_380 = arith.constant 13 : index
    %767 = memref.load %arg9[%c2_379, %c13_380] : memref<8x34xf32, #tpu.memory_space<smem>>
    %768 = vector.broadcast %767 : f32 to vector<8x128xf32>
    %769 = arith.mulf %758, %768 : vector<8x128xf32>
    %770 = arith.addf %718, %769 : vector<8x128xf32>
    %c3_381 = arith.constant 3 : index
    %c13_382 = arith.constant 13 : index
    %771 = memref.load %arg9[%c3_381, %c13_382] : memref<8x34xf32, #tpu.memory_space<smem>>
    %772 = vector.broadcast %771 : f32 to vector<8x128xf32>
    %773 = arith.mulf %758, %772 : vector<8x128xf32>
    %774 = arith.addf %722, %773 : vector<8x128xf32>
    %c4_383 = arith.constant 4 : index
    %c13_384 = arith.constant 13 : index
    %775 = memref.load %arg9[%c4_383, %c13_384] : memref<8x34xf32, #tpu.memory_space<smem>>
    %776 = vector.broadcast %775 : f32 to vector<8x128xf32>
    %777 = arith.mulf %758, %776 : vector<8x128xf32>
    %778 = arith.addf %726, %777 : vector<8x128xf32>
    %c5_385 = arith.constant 5 : index
    %c13_386 = arith.constant 13 : index
    %779 = memref.load %arg9[%c5_385, %c13_386] : memref<8x34xf32, #tpu.memory_space<smem>>
    %780 = vector.broadcast %779 : f32 to vector<8x128xf32>
    %781 = arith.mulf %758, %780 : vector<8x128xf32>
    %782 = arith.addf %730, %781 : vector<8x128xf32>
    %c6_387 = arith.constant 6 : index
    %c13_388 = arith.constant 13 : index
    %783 = memref.load %arg9[%c6_387, %c13_388] : memref<8x34xf32, #tpu.memory_space<smem>>
    %784 = vector.broadcast %783 : f32 to vector<8x128xf32>
    %785 = arith.mulf %758, %784 : vector<8x128xf32>
    %786 = arith.addf %734, %785 : vector<8x128xf32>
    %c7_389 = arith.constant 7 : index
    %c13_390 = arith.constant 13 : index
    %787 = memref.load %arg9[%c7_389, %c13_390] : memref<8x34xf32, #tpu.memory_space<smem>>
    %788 = vector.broadcast %787 : f32 to vector<8x128xf32>
    %789 = arith.mulf %758, %788 : vector<8x128xf32>
    %790 = arith.addf %738, %789 : vector<8x128xf32>
    %c0_391 = arith.constant 0 : index
    %c13_392 = arith.constant 13 : index
    %791 = memref.load %arg3[%c0_391, %c13_392] : memref<2x16xf32, #tpu.memory_space<smem>>
    %792 = vector.broadcast %791 : f32 to vector<10x128xf32>
    %793 = arith.mulf %757, %792 : vector<10x128xf32>
    %794 = arith.addf %742, %793 : vector<10x128xf32>
    %c0_393 = arith.constant 0 : index
    %c13_394 = arith.constant 13 : index
    %795 = memref.load %arg5[%c0_393, %c13_394] : memref<2x16xf32, #tpu.memory_space<smem>>
    %796 = vector.broadcast %795 : f32 to vector<10x128xf32>
    %797 = arith.mulf %757, %796 : vector<10x128xf32>
    %798 = arith.addf %746, %797 : vector<10x128xf32>
    %c1_395 = arith.constant 1 : index
    %c13_396 = arith.constant 13 : index
    %799 = memref.load %arg3[%c1_395, %c13_396] : memref<2x16xf32, #tpu.memory_space<smem>>
    %800 = vector.broadcast %799 : f32 to vector<10x128xf32>
    %801 = arith.mulf %757, %800 : vector<10x128xf32>
    %802 = arith.addf %750, %801 : vector<10x128xf32>
    %c1_397 = arith.constant 1 : index
    %c13_398 = arith.constant 13 : index
    %803 = memref.load %arg5[%c1_397, %c13_398] : memref<2x16xf32, #tpu.memory_space<smem>>
    %804 = vector.broadcast %803 : f32 to vector<10x128xf32>
    %805 = arith.mulf %757, %804 : vector<10x128xf32>
    %806 = arith.addf %754, %805 : vector<10x128xf32>
    %807 = arith.index_cast %9 : i32 to index
    %c14 = arith.constant 14 : index
    %c0_399 = arith.constant 0 : index
    %c0_400 = arith.constant 0 : index
    %808 = vector.load %arg12[%807, %c14, %c0_399, %c0_400] : memref<2x16x10x128xf32, #tpu.memory_space<vmem>>, vector<1x1x10x128xf32>
    %809 = vector.shape_cast %808 : vector<1x1x10x128xf32> to vector<10x128xf32>
    %810 = vector.extract_strided_slice %809 {offsets = [1, 0], sizes = [8, 128], strides = [1, 1]} : vector<10x128xf32> to vector<8x128xf32>
    %c0_401 = arith.constant 0 : index
    %c14_402 = arith.constant 14 : index
    %811 = memref.load %arg9[%c0_401, %c14_402] : memref<8x34xf32, #tpu.memory_space<smem>>
    %812 = vector.broadcast %811 : f32 to vector<8x128xf32>
    %813 = arith.mulf %810, %812 : vector<8x128xf32>
    %814 = arith.addf %762, %813 : vector<8x128xf32>
    %c1_403 = arith.constant 1 : index
    %c14_404 = arith.constant 14 : index
    %815 = memref.load %arg9[%c1_403, %c14_404] : memref<8x34xf32, #tpu.memory_space<smem>>
    %816 = vector.broadcast %815 : f32 to vector<8x128xf32>
    %817 = arith.mulf %810, %816 : vector<8x128xf32>
    %818 = arith.addf %766, %817 : vector<8x128xf32>
    %c2_405 = arith.constant 2 : index
    %c14_406 = arith.constant 14 : index
    %819 = memref.load %arg9[%c2_405, %c14_406] : memref<8x34xf32, #tpu.memory_space<smem>>
    %820 = vector.broadcast %819 : f32 to vector<8x128xf32>
    %821 = arith.mulf %810, %820 : vector<8x128xf32>
    %822 = arith.addf %770, %821 : vector<8x128xf32>
    %c3_407 = arith.constant 3 : index
    %c14_408 = arith.constant 14 : index
    %823 = memref.load %arg9[%c3_407, %c14_408] : memref<8x34xf32, #tpu.memory_space<smem>>
    %824 = vector.broadcast %823 : f32 to vector<8x128xf32>
    %825 = arith.mulf %810, %824 : vector<8x128xf32>
    %826 = arith.addf %774, %825 : vector<8x128xf32>
    %c4_409 = arith.constant 4 : index
    %c14_410 = arith.constant 14 : index
    %827 = memref.load %arg9[%c4_409, %c14_410] : memref<8x34xf32, #tpu.memory_space<smem>>
    %828 = vector.broadcast %827 : f32 to vector<8x128xf32>
    %829 = arith.mulf %810, %828 : vector<8x128xf32>
    %830 = arith.addf %778, %829 : vector<8x128xf32>
    %c5_411 = arith.constant 5 : index
    %c14_412 = arith.constant 14 : index
    %831 = memref.load %arg9[%c5_411, %c14_412] : memref<8x34xf32, #tpu.memory_space<smem>>
    %832 = vector.broadcast %831 : f32 to vector<8x128xf32>
    %833 = arith.mulf %810, %832 : vector<8x128xf32>
    %834 = arith.addf %782, %833 : vector<8x128xf32>
    %c6_413 = arith.constant 6 : index
    %c14_414 = arith.constant 14 : index
    %835 = memref.load %arg9[%c6_413, %c14_414] : memref<8x34xf32, #tpu.memory_space<smem>>
    %836 = vector.broadcast %835 : f32 to vector<8x128xf32>
    %837 = arith.mulf %810, %836 : vector<8x128xf32>
    %838 = arith.addf %786, %837 : vector<8x128xf32>
    %c7_415 = arith.constant 7 : index
    %c14_416 = arith.constant 14 : index
    %839 = memref.load %arg9[%c7_415, %c14_416] : memref<8x34xf32, #tpu.memory_space<smem>>
    %840 = vector.broadcast %839 : f32 to vector<8x128xf32>
    %841 = arith.mulf %810, %840 : vector<8x128xf32>
    %842 = arith.addf %790, %841 : vector<8x128xf32>
    %c0_417 = arith.constant 0 : index
    %c14_418 = arith.constant 14 : index
    %843 = memref.load %arg3[%c0_417, %c14_418] : memref<2x16xf32, #tpu.memory_space<smem>>
    %844 = vector.broadcast %843 : f32 to vector<10x128xf32>
    %845 = arith.mulf %809, %844 : vector<10x128xf32>
    %846 = arith.addf %794, %845 : vector<10x128xf32>
    %c0_419 = arith.constant 0 : index
    %c14_420 = arith.constant 14 : index
    %847 = memref.load %arg5[%c0_419, %c14_420] : memref<2x16xf32, #tpu.memory_space<smem>>
    %848 = vector.broadcast %847 : f32 to vector<10x128xf32>
    %849 = arith.mulf %809, %848 : vector<10x128xf32>
    %850 = arith.addf %798, %849 : vector<10x128xf32>
    %c1_421 = arith.constant 1 : index
    %c14_422 = arith.constant 14 : index
    %851 = memref.load %arg3[%c1_421, %c14_422] : memref<2x16xf32, #tpu.memory_space<smem>>
    %852 = vector.broadcast %851 : f32 to vector<10x128xf32>
    %853 = arith.mulf %809, %852 : vector<10x128xf32>
    %854 = arith.addf %802, %853 : vector<10x128xf32>
    %c1_423 = arith.constant 1 : index
    %c14_424 = arith.constant 14 : index
    %855 = memref.load %arg5[%c1_423, %c14_424] : memref<2x16xf32, #tpu.memory_space<smem>>
    %856 = vector.broadcast %855 : f32 to vector<10x128xf32>
    %857 = arith.mulf %809, %856 : vector<10x128xf32>
    %858 = arith.addf %806, %857 : vector<10x128xf32>
    %859 = arith.index_cast %9 : i32 to index
    %c15 = arith.constant 15 : index
    %c0_425 = arith.constant 0 : index
    %c0_426 = arith.constant 0 : index
    %860 = vector.load %arg12[%859, %c15, %c0_425, %c0_426] : memref<2x16x10x128xf32, #tpu.memory_space<vmem>>, vector<1x1x10x128xf32>
    %861 = vector.shape_cast %860 : vector<1x1x10x128xf32> to vector<10x128xf32>
    %862 = vector.extract_strided_slice %861 {offsets = [1, 0], sizes = [8, 128], strides = [1, 1]} : vector<10x128xf32> to vector<8x128xf32>
    %c0_427 = arith.constant 0 : index
    %c15_428 = arith.constant 15 : index
    %863 = memref.load %arg9[%c0_427, %c15_428] : memref<8x34xf32, #tpu.memory_space<smem>>
    %864 = vector.broadcast %863 : f32 to vector<8x128xf32>
    %865 = arith.mulf %862, %864 : vector<8x128xf32>
    %866 = arith.addf %814, %865 : vector<8x128xf32>
    %c1_429 = arith.constant 1 : index
    %c15_430 = arith.constant 15 : index
    %867 = memref.load %arg9[%c1_429, %c15_430] : memref<8x34xf32, #tpu.memory_space<smem>>
    %868 = vector.broadcast %867 : f32 to vector<8x128xf32>
    %869 = arith.mulf %862, %868 : vector<8x128xf32>
    %870 = arith.addf %818, %869 : vector<8x128xf32>
    %c2_431 = arith.constant 2 : index
    %c15_432 = arith.constant 15 : index
    %871 = memref.load %arg9[%c2_431, %c15_432] : memref<8x34xf32, #tpu.memory_space<smem>>
    %872 = vector.broadcast %871 : f32 to vector<8x128xf32>
    %873 = arith.mulf %862, %872 : vector<8x128xf32>
    %874 = arith.addf %822, %873 : vector<8x128xf32>
    %c3_433 = arith.constant 3 : index
    %c15_434 = arith.constant 15 : index
    %875 = memref.load %arg9[%c3_433, %c15_434] : memref<8x34xf32, #tpu.memory_space<smem>>
    %876 = vector.broadcast %875 : f32 to vector<8x128xf32>
    %877 = arith.mulf %862, %876 : vector<8x128xf32>
    %878 = arith.addf %826, %877 : vector<8x128xf32>
    %c4_435 = arith.constant 4 : index
    %c15_436 = arith.constant 15 : index
    %879 = memref.load %arg9[%c4_435, %c15_436] : memref<8x34xf32, #tpu.memory_space<smem>>
    %880 = vector.broadcast %879 : f32 to vector<8x128xf32>
    %881 = arith.mulf %862, %880 : vector<8x128xf32>
    %882 = arith.addf %830, %881 : vector<8x128xf32>
    %c5_437 = arith.constant 5 : index
    %c15_438 = arith.constant 15 : index
    %883 = memref.load %arg9[%c5_437, %c15_438] : memref<8x34xf32, #tpu.memory_space<smem>>
    %884 = vector.broadcast %883 : f32 to vector<8x128xf32>
    %885 = arith.mulf %862, %884 : vector<8x128xf32>
    %886 = arith.addf %834, %885 : vector<8x128xf32>
    %c6_439 = arith.constant 6 : index
    %c15_440 = arith.constant 15 : index
    %887 = memref.load %arg9[%c6_439, %c15_440] : memref<8x34xf32, #tpu.memory_space<smem>>
    %888 = vector.broadcast %887 : f32 to vector<8x128xf32>
    %889 = arith.mulf %862, %888 : vector<8x128xf32>
    %890 = arith.addf %838, %889 : vector<8x128xf32>
    %c7_441 = arith.constant 7 : index
    %c15_442 = arith.constant 15 : index
    %891 = memref.load %arg9[%c7_441, %c15_442] : memref<8x34xf32, #tpu.memory_space<smem>>
    %892 = vector.broadcast %891 : f32 to vector<8x128xf32>
    %893 = arith.mulf %862, %892 : vector<8x128xf32>
    %894 = arith.addf %842, %893 : vector<8x128xf32>
    %c0_443 = arith.constant 0 : index
    %c15_444 = arith.constant 15 : index
    %895 = memref.load %arg3[%c0_443, %c15_444] : memref<2x16xf32, #tpu.memory_space<smem>>
    %896 = vector.broadcast %895 : f32 to vector<10x128xf32>
    %897 = arith.mulf %861, %896 : vector<10x128xf32>
    %898 = arith.addf %846, %897 : vector<10x128xf32>
    %c0_445 = arith.constant 0 : index
    %c15_446 = arith.constant 15 : index
    %899 = memref.load %arg5[%c0_445, %c15_446] : memref<2x16xf32, #tpu.memory_space<smem>>
    %900 = vector.broadcast %899 : f32 to vector<10x128xf32>
    %901 = arith.mulf %861, %900 : vector<10x128xf32>
    %902 = arith.addf %850, %901 : vector<10x128xf32>
    %c1_447 = arith.constant 1 : index
    %c15_448 = arith.constant 15 : index
    %903 = memref.load %arg3[%c1_447, %c15_448] : memref<2x16xf32, #tpu.memory_space<smem>>
    %904 = vector.broadcast %903 : f32 to vector<10x128xf32>
    %905 = arith.mulf %861, %904 : vector<10x128xf32>
    %906 = arith.addf %854, %905 : vector<10x128xf32>
    %c1_449 = arith.constant 1 : index
    %c15_450 = arith.constant 15 : index
    %907 = memref.load %arg5[%c1_449, %c15_450] : memref<2x16xf32, #tpu.memory_space<smem>>
    %908 = vector.broadcast %907 : f32 to vector<10x128xf32>
    %909 = arith.mulf %861, %908 : vector<10x128xf32>
    %910 = arith.addf %858, %909 : vector<10x128xf32>
    %911 = vector.extract_strided_slice %902 {offsets = [1, 0], sizes = [8, 128], strides = [1, 1]} : vector<10x128xf32> to vector<8x128xf32>
    %912 = tpu.dynamic_rotate %902 by %53 dim 1 : vector<10x128xf32>, i32 -> vector<10x128xf32>
    %cst_451 = arith.constant 0.000000e+00 : f32
    %913 = vector.broadcast %cst_451 : f32 to vector<10x128xf32>
    %914 = arith.select %33, %912, %913 : vector<10x128xi1>, vector<10x128xf32>
    %915 = tpu.dynamic_rotate %902 by %54 dim 1 : vector<10x128xf32>, i32 -> vector<10x128xf32>
    %cst_452 = arith.constant 0.000000e+00 : f32
    %916 = vector.broadcast %cst_452 : f32 to vector<10x128xf32>
    %917 = arith.select %35, %915, %916 : vector<10x128xi1>, vector<10x128xf32>
    %918 = vector.extract_strided_slice %917 {offsets = [0, 0], sizes = [8, 128], strides = [1, 1]} : vector<10x128xf32> to vector<8x128xf32>
    %cst_453 = arith.constant 0.000000e+00 : f32
    %919 = vector.broadcast %cst_453 : f32 to vector<8x128xf32>
    %920 = arith.select %29, %918, %919 : vector<8x128xi1>, vector<8x128xf32>
    %921 = vector.extract_strided_slice %902 {offsets = [0, 0], sizes = [8, 128], strides = [1, 1]} : vector<10x128xf32> to vector<8x128xf32>
    %cst_454 = arith.constant 0.000000e+00 : f32
    %922 = vector.broadcast %cst_454 : f32 to vector<8x128xf32>
    %923 = arith.select %29, %921, %922 : vector<8x128xi1>, vector<8x128xf32>
    %924 = vector.extract_strided_slice %914 {offsets = [0, 0], sizes = [8, 128], strides = [1, 1]} : vector<10x128xf32> to vector<8x128xf32>
    %cst_455 = arith.constant 0.000000e+00 : f32
    %925 = vector.broadcast %cst_455 : f32 to vector<8x128xf32>
    %926 = arith.select %29, %924, %925 : vector<8x128xi1>, vector<8x128xf32>
    %927 = vector.extract_strided_slice %914 {offsets = [1, 0], sizes = [8, 128], strides = [1, 1]} : vector<10x128xf32> to vector<8x128xf32>
    %928 = vector.extract_strided_slice %914 {offsets = [2, 0], sizes = [8, 128], strides = [1, 1]} : vector<10x128xf32> to vector<8x128xf32>
    %cst_456 = arith.constant 0.000000e+00 : f32
    %929 = vector.broadcast %cst_456 : f32 to vector<8x128xf32>
    %930 = arith.select %31, %928, %929 : vector<8x128xi1>, vector<8x128xf32>
    %931 = vector.extract_strided_slice %902 {offsets = [2, 0], sizes = [8, 128], strides = [1, 1]} : vector<10x128xf32> to vector<8x128xf32>
    %cst_457 = arith.constant 0.000000e+00 : f32
    %932 = vector.broadcast %cst_457 : f32 to vector<8x128xf32>
    %933 = arith.select %31, %931, %932 : vector<8x128xi1>, vector<8x128xf32>
    %934 = vector.extract_strided_slice %917 {offsets = [2, 0], sizes = [8, 128], strides = [1, 1]} : vector<10x128xf32> to vector<8x128xf32>
    %cst_458 = arith.constant 0.000000e+00 : f32
    %935 = vector.broadcast %cst_458 : f32 to vector<8x128xf32>
    %936 = arith.select %31, %934, %935 : vector<8x128xi1>, vector<8x128xf32>
    %937 = vector.extract_strided_slice %917 {offsets = [1, 0], sizes = [8, 128], strides = [1, 1]} : vector<10x128xf32> to vector<8x128xf32>
    %938 = arith.subf %911, %920 : vector<8x128xf32>
    %939 = arith.subf %911, %923 : vector<8x128xf32>
    %940 = arith.subf %911, %926 : vector<8x128xf32>
    %941 = arith.subf %911, %927 : vector<8x128xf32>
    %942 = arith.subf %911, %930 : vector<8x128xf32>
    %943 = arith.subf %911, %933 : vector<8x128xf32>
    %944 = arith.subf %911, %936 : vector<8x128xf32>
    %945 = arith.subf %911, %937 : vector<8x128xf32>
    %946 = arith.mulf %938, %942 : vector<8x128xf32>
    %947 = arith.mulf %939, %943 : vector<8x128xf32>
    %948 = arith.mulf %940, %944 : vector<8x128xf32>
    %949 = arith.mulf %941, %945 : vector<8x128xf32>
    %950 = arith.minimumf %946, %947 : vector<8x128xf32>
    %951 = arith.maximumf %946, %947 : vector<8x128xf32>
    %952 = arith.minimumf %948, %949 : vector<8x128xf32>
    %953 = arith.maximumf %948, %949 : vector<8x128xf32>
    %954 = arith.minimumf %950, %952 : vector<8x128xf32>
    %955 = arith.maximumf %951, %953 : vector<8x128xf32>
    %956 = arith.maximumf %950, %952 : vector<8x128xf32>
    %957 = arith.minimumf %951, %953 : vector<8x128xf32>
    %958 = arith.minimumf %956, %957 : vector<8x128xf32>
    %959 = arith.maximumf %956, %957 : vector<8x128xf32>
    %c0_459 = arith.constant 0 : index
    %c0_460 = arith.constant 0 : index
    %960 = memref.load %arg7[%c0_459, %c0_460] : memref<2x4xf32, #tpu.memory_space<smem>>
    %961 = vector.broadcast %960 : f32 to vector<8x128xf32>
    %962 = arith.mulf %954, %961 : vector<8x128xf32>
    %c0_461 = arith.constant 0 : index
    %c1_462 = arith.constant 1 : index
    %963 = memref.load %arg7[%c0_461, %c1_462] : memref<2x4xf32, #tpu.memory_space<smem>>
    %964 = vector.broadcast %963 : f32 to vector<8x128xf32>
    %965 = arith.mulf %958, %964 : vector<8x128xf32>
    %966 = arith.addf %962, %965 : vector<8x128xf32>
    %c0_463 = arith.constant 0 : index
    %c2_464 = arith.constant 2 : index
    %967 = memref.load %arg7[%c0_463, %c2_464] : memref<2x4xf32, #tpu.memory_space<smem>>
    %968 = vector.broadcast %967 : f32 to vector<8x128xf32>
    %969 = arith.mulf %959, %968 : vector<8x128xf32>
    %970 = arith.addf %966, %969 : vector<8x128xf32>
    %c0_465 = arith.constant 0 : index
    %c3_466 = arith.constant 3 : index
    %971 = memref.load %arg7[%c0_465, %c3_466] : memref<2x4xf32, #tpu.memory_space<smem>>
    %972 = vector.broadcast %971 : f32 to vector<8x128xf32>
    %973 = arith.mulf %955, %972 : vector<8x128xf32>
    %974 = arith.addf %970, %973 : vector<8x128xf32>
    %c0_467 = arith.constant 0 : index
    %975 = memref.load %arg8[%c0_467] : memref<2xf32, #tpu.memory_space<smem>>
    %976 = vector.broadcast %975 : f32 to vector<8x128xf32>
    %977 = arith.addf %974, %976 : vector<8x128xf32>
    %c0_468 = arith.constant 0 : index
    %c16 = arith.constant 16 : index
    %978 = memref.load %arg9[%c0_468, %c16] : memref<8x34xf32, #tpu.memory_space<smem>>
    %979 = vector.broadcast %978 : f32 to vector<8x128xf32>
    %980 = arith.mulf %977, %979 : vector<8x128xf32>
    %981 = arith.addf %866, %980 : vector<8x128xf32>
    %c1_469 = arith.constant 1 : index
    %c16_470 = arith.constant 16 : index
    %982 = memref.load %arg9[%c1_469, %c16_470] : memref<8x34xf32, #tpu.memory_space<smem>>
    %983 = vector.broadcast %982 : f32 to vector<8x128xf32>
    %984 = arith.mulf %977, %983 : vector<8x128xf32>
    %985 = arith.addf %870, %984 : vector<8x128xf32>
    %c2_471 = arith.constant 2 : index
    %c16_472 = arith.constant 16 : index
    %986 = memref.load %arg9[%c2_471, %c16_472] : memref<8x34xf32, #tpu.memory_space<smem>>
    %987 = vector.broadcast %986 : f32 to vector<8x128xf32>
    %988 = arith.mulf %977, %987 : vector<8x128xf32>
    %989 = arith.addf %874, %988 : vector<8x128xf32>
    %c3_473 = arith.constant 3 : index
    %c16_474 = arith.constant 16 : index
    %990 = memref.load %arg9[%c3_473, %c16_474] : memref<8x34xf32, #tpu.memory_space<smem>>
    %991 = vector.broadcast %990 : f32 to vector<8x128xf32>
    %992 = arith.mulf %977, %991 : vector<8x128xf32>
    %993 = arith.addf %878, %992 : vector<8x128xf32>
    %c4_475 = arith.constant 4 : index
    %c16_476 = arith.constant 16 : index
    %994 = memref.load %arg9[%c4_475, %c16_476] : memref<8x34xf32, #tpu.memory_space<smem>>
    %995 = vector.broadcast %994 : f32 to vector<8x128xf32>
    %996 = arith.mulf %977, %995 : vector<8x128xf32>
    %997 = arith.addf %882, %996 : vector<8x128xf32>
    %c5_477 = arith.constant 5 : index
    %c16_478 = arith.constant 16 : index
    %998 = memref.load %arg9[%c5_477, %c16_478] : memref<8x34xf32, #tpu.memory_space<smem>>
    %999 = vector.broadcast %998 : f32 to vector<8x128xf32>
    %1000 = arith.mulf %977, %999 : vector<8x128xf32>
    %1001 = arith.addf %886, %1000 : vector<8x128xf32>
    %c6_479 = arith.constant 6 : index
    %c16_480 = arith.constant 16 : index
    %1002 = memref.load %arg9[%c6_479, %c16_480] : memref<8x34xf32, #tpu.memory_space<smem>>
    %1003 = vector.broadcast %1002 : f32 to vector<8x128xf32>
    %1004 = arith.mulf %977, %1003 : vector<8x128xf32>
    %1005 = arith.addf %890, %1004 : vector<8x128xf32>
    %c7_481 = arith.constant 7 : index
    %c16_482 = arith.constant 16 : index
    %1006 = memref.load %arg9[%c7_481, %c16_482] : memref<8x34xf32, #tpu.memory_space<smem>>
    %1007 = vector.broadcast %1006 : f32 to vector<8x128xf32>
    %1008 = arith.mulf %977, %1007 : vector<8x128xf32>
    %1009 = arith.addf %894, %1008 : vector<8x128xf32>
    %1010 = vector.extract_strided_slice %910 {offsets = [1, 0], sizes = [8, 128], strides = [1, 1]} : vector<10x128xf32> to vector<8x128xf32>
    %1011 = tpu.dynamic_rotate %910 by %53 dim 1 : vector<10x128xf32>, i32 -> vector<10x128xf32>
    %cst_483 = arith.constant 0.000000e+00 : f32
    %1012 = vector.broadcast %cst_483 : f32 to vector<10x128xf32>
    %1013 = arith.select %33, %1011, %1012 : vector<10x128xi1>, vector<10x128xf32>
    %1014 = tpu.dynamic_rotate %910 by %54 dim 1 : vector<10x128xf32>, i32 -> vector<10x128xf32>
    %cst_484 = arith.constant 0.000000e+00 : f32
    %1015 = vector.broadcast %cst_484 : f32 to vector<10x128xf32>
    %1016 = arith.select %35, %1014, %1015 : vector<10x128xi1>, vector<10x128xf32>
    %1017 = vector.extract_strided_slice %1016 {offsets = [0, 0], sizes = [8, 128], strides = [1, 1]} : vector<10x128xf32> to vector<8x128xf32>
    %cst_485 = arith.constant 0.000000e+00 : f32
    %1018 = vector.broadcast %cst_485 : f32 to vector<8x128xf32>
    %1019 = arith.select %29, %1017, %1018 : vector<8x128xi1>, vector<8x128xf32>
    %1020 = vector.extract_strided_slice %910 {offsets = [0, 0], sizes = [8, 128], strides = [1, 1]} : vector<10x128xf32> to vector<8x128xf32>
    %cst_486 = arith.constant 0.000000e+00 : f32
    %1021 = vector.broadcast %cst_486 : f32 to vector<8x128xf32>
    %1022 = arith.select %29, %1020, %1021 : vector<8x128xi1>, vector<8x128xf32>
    %1023 = vector.extract_strided_slice %1013 {offsets = [0, 0], sizes = [8, 128], strides = [1, 1]} : vector<10x128xf32> to vector<8x128xf32>
    %cst_487 = arith.constant 0.000000e+00 : f32
    %1024 = vector.broadcast %cst_487 : f32 to vector<8x128xf32>
    %1025 = arith.select %29, %1023, %1024 : vector<8x128xi1>, vector<8x128xf32>
    %1026 = vector.extract_strided_slice %1013 {offsets = [1, 0], sizes = [8, 128], strides = [1, 1]} : vector<10x128xf32> to vector<8x128xf32>
    %1027 = vector.extract_strided_slice %1013 {offsets = [2, 0], sizes = [8, 128], strides = [1, 1]} : vector<10x128xf32> to vector<8x128xf32>
    %cst_488 = arith.constant 0.000000e+00 : f32
    %1028 = vector.broadcast %cst_488 : f32 to vector<8x128xf32>
    %1029 = arith.select %31, %1027, %1028 : vector<8x128xi1>, vector<8x128xf32>
    %1030 = vector.extract_strided_slice %910 {offsets = [2, 0], sizes = [8, 128], strides = [1, 1]} : vector<10x128xf32> to vector<8x128xf32>
    %cst_489 = arith.constant 0.000000e+00 : f32
    %1031 = vector.broadcast %cst_489 : f32 to vector<8x128xf32>
    %1032 = arith.select %31, %1030, %1031 : vector<8x128xi1>, vector<8x128xf32>
    %1033 = vector.extract_strided_slice %1016 {offsets = [2, 0], sizes = [8, 128], strides = [1, 1]} : vector<10x128xf32> to vector<8x128xf32>
    %cst_490 = arith.constant 0.000000e+00 : f32
    %1034 = vector.broadcast %cst_490 : f32 to vector<8x128xf32>
    %1035 = arith.select %31, %1033, %1034 : vector<8x128xi1>, vector<8x128xf32>
    %1036 = vector.extract_strided_slice %1016 {offsets = [1, 0], sizes = [8, 128], strides = [1, 1]} : vector<10x128xf32> to vector<8x128xf32>
    %1037 = arith.subf %1010, %1019 : vector<8x128xf32>
    %1038 = arith.subf %1010, %1022 : vector<8x128xf32>
    %1039 = arith.subf %1010, %1025 : vector<8x128xf32>
    %1040 = arith.subf %1010, %1026 : vector<8x128xf32>
    %1041 = arith.subf %1010, %1029 : vector<8x128xf32>
    %1042 = arith.subf %1010, %1032 : vector<8x128xf32>
    %1043 = arith.subf %1010, %1035 : vector<8x128xf32>
    %1044 = arith.subf %1010, %1036 : vector<8x128xf32>
    %1045 = arith.mulf %1037, %1041 : vector<8x128xf32>
    %1046 = arith.mulf %1038, %1042 : vector<8x128xf32>
    %1047 = arith.mulf %1039, %1043 : vector<8x128xf32>
    %1048 = arith.mulf %1040, %1044 : vector<8x128xf32>
    %1049 = arith.minimumf %1045, %1046 : vector<8x128xf32>
    %1050 = arith.maximumf %1045, %1046 : vector<8x128xf32>
    %1051 = arith.minimumf %1047, %1048 : vector<8x128xf32>
    %1052 = arith.maximumf %1047, %1048 : vector<8x128xf32>
    %1053 = arith.minimumf %1049, %1051 : vector<8x128xf32>
    %1054 = arith.maximumf %1050, %1052 : vector<8x128xf32>
    %1055 = arith.maximumf %1049, %1051 : vector<8x128xf32>
    %1056 = arith.minimumf %1050, %1052 : vector<8x128xf32>
    %1057 = arith.minimumf %1055, %1056 : vector<8x128xf32>
    %1058 = arith.maximumf %1055, %1056 : vector<8x128xf32>
    %c1_491 = arith.constant 1 : index
    %c0_492 = arith.constant 0 : index
    %1059 = memref.load %arg7[%c1_491, %c0_492] : memref<2x4xf32, #tpu.memory_space<smem>>
    %1060 = vector.broadcast %1059 : f32 to vector<8x128xf32>
    %1061 = arith.mulf %1053, %1060 : vector<8x128xf32>
    %c1_493 = arith.constant 1 : index
    %c1_494 = arith.constant 1 : index
    %1062 = memref.load %arg7[%c1_493, %c1_494] : memref<2x4xf32, #tpu.memory_space<smem>>
    %1063 = vector.broadcast %1062 : f32 to vector<8x128xf32>
    %1064 = arith.mulf %1057, %1063 : vector<8x128xf32>
    %1065 = arith.addf %1061, %1064 : vector<8x128xf32>
    %c1_495 = arith.constant 1 : index
    %c2_496 = arith.constant 2 : index
    %1066 = memref.load %arg7[%c1_495, %c2_496] : memref<2x4xf32, #tpu.memory_space<smem>>
    %1067 = vector.broadcast %1066 : f32 to vector<8x128xf32>
    %1068 = arith.mulf %1058, %1067 : vector<8x128xf32>
    %1069 = arith.addf %1065, %1068 : vector<8x128xf32>
    %c1_497 = arith.constant 1 : index
    %c3_498 = arith.constant 3 : index
    %1070 = memref.load %arg7[%c1_497, %c3_498] : memref<2x4xf32, #tpu.memory_space<smem>>
    %1071 = vector.broadcast %1070 : f32 to vector<8x128xf32>
    %1072 = arith.mulf %1054, %1071 : vector<8x128xf32>
    %1073 = arith.addf %1069, %1072 : vector<8x128xf32>
    %c1_499 = arith.constant 1 : index
    %1074 = memref.load %arg8[%c1_499] : memref<2xf32, #tpu.memory_space<smem>>
    %1075 = vector.broadcast %1074 : f32 to vector<8x128xf32>
    %1076 = arith.addf %1073, %1075 : vector<8x128xf32>
    %c0_500 = arith.constant 0 : index
    %c17 = arith.constant 17 : index
    %1077 = memref.load %arg9[%c0_500, %c17] : memref<8x34xf32, #tpu.memory_space<smem>>
    %1078 = vector.broadcast %1077 : f32 to vector<8x128xf32>
    %1079 = arith.mulf %1076, %1078 : vector<8x128xf32>
    %1080 = arith.addf %981, %1079 : vector<8x128xf32>
    %c1_501 = arith.constant 1 : index
    %c17_502 = arith.constant 17 : index
    %1081 = memref.load %arg9[%c1_501, %c17_502] : memref<8x34xf32, #tpu.memory_space<smem>>
    %1082 = vector.broadcast %1081 : f32 to vector<8x128xf32>
    %1083 = arith.mulf %1076, %1082 : vector<8x128xf32>
    %1084 = arith.addf %985, %1083 : vector<8x128xf32>
    %c2_503 = arith.constant 2 : index
    %c17_504 = arith.constant 17 : index
    %1085 = memref.load %arg9[%c2_503, %c17_504] : memref<8x34xf32, #tpu.memory_space<smem>>
    %1086 = vector.broadcast %1085 : f32 to vector<8x128xf32>
    %1087 = arith.mulf %1076, %1086 : vector<8x128xf32>
    %1088 = arith.addf %989, %1087 : vector<8x128xf32>
    %c3_505 = arith.constant 3 : index
    %c17_506 = arith.constant 17 : index
    %1089 = memref.load %arg9[%c3_505, %c17_506] : memref<8x34xf32, #tpu.memory_space<smem>>
    %1090 = vector.broadcast %1089 : f32 to vector<8x128xf32>
    %1091 = arith.mulf %1076, %1090 : vector<8x128xf32>
    %1092 = arith.addf %993, %1091 : vector<8x128xf32>
    %c4_507 = arith.constant 4 : index
    %c17_508 = arith.constant 17 : index
    %1093 = memref.load %arg9[%c4_507, %c17_508] : memref<8x34xf32, #tpu.memory_space<smem>>
    %1094 = vector.broadcast %1093 : f32 to vector<8x128xf32>
    %1095 = arith.mulf %1076, %1094 : vector<8x128xf32>
    %1096 = arith.addf %997, %1095 : vector<8x128xf32>
    %c5_509 = arith.constant 5 : index
    %c17_510 = arith.constant 17 : index
    %1097 = memref.load %arg9[%c5_509, %c17_510] : memref<8x34xf32, #tpu.memory_space<smem>>
    %1098 = vector.broadcast %1097 : f32 to vector<8x128xf32>
    %1099 = arith.mulf %1076, %1098 : vector<8x128xf32>
    %1100 = arith.addf %1001, %1099 : vector<8x128xf32>
    %c6_511 = arith.constant 6 : index
    %c17_512 = arith.constant 17 : index
    %1101 = memref.load %arg9[%c6_511, %c17_512] : memref<8x34xf32, #tpu.memory_space<smem>>
    %1102 = vector.broadcast %1101 : f32 to vector<8x128xf32>
    %1103 = arith.mulf %1076, %1102 : vector<8x128xf32>
    %1104 = arith.addf %1005, %1103 : vector<8x128xf32>
    %c7_513 = arith.constant 7 : index
    %c17_514 = arith.constant 17 : index
    %1105 = memref.load %arg9[%c7_513, %c17_514] : memref<8x34xf32, #tpu.memory_space<smem>>
    %1106 = vector.broadcast %1105 : f32 to vector<8x128xf32>
    %1107 = arith.mulf %1076, %1106 : vector<8x128xf32>
    %1108 = arith.addf %1009, %1107 : vector<8x128xf32>
    %1109 = vector.extract_strided_slice %898 {offsets = [1, 0], sizes = [8, 128], strides = [1, 1]} : vector<10x128xf32> to vector<8x128xf32>
    %1110 = tpu.dynamic_rotate %898 by %53 dim 1 : vector<10x128xf32>, i32 -> vector<10x128xf32>
    %cst_515 = arith.constant 0.000000e+00 : f32
    %1111 = vector.broadcast %cst_515 : f32 to vector<10x128xf32>
    %1112 = arith.select %33, %1110, %1111 : vector<10x128xi1>, vector<10x128xf32>
    %1113 = tpu.dynamic_rotate %898 by %54 dim 1 : vector<10x128xf32>, i32 -> vector<10x128xf32>
    %cst_516 = arith.constant 0.000000e+00 : f32
    %1114 = vector.broadcast %cst_516 : f32 to vector<10x128xf32>
    %1115 = arith.select %35, %1113, %1114 : vector<10x128xi1>, vector<10x128xf32>
    %1116 = vector.extract_strided_slice %1115 {offsets = [0, 0], sizes = [8, 128], strides = [1, 1]} : vector<10x128xf32> to vector<8x128xf32>
    %cst_517 = arith.constant 0.000000e+00 : f32
    %1117 = vector.broadcast %cst_517 : f32 to vector<8x128xf32>
    %1118 = arith.select %29, %1116, %1117 : vector<8x128xi1>, vector<8x128xf32>
    %1119 = vector.extract_strided_slice %898 {offsets = [0, 0], sizes = [8, 128], strides = [1, 1]} : vector<10x128xf32> to vector<8x128xf32>
    %cst_518 = arith.constant 0.000000e+00 : f32
    %1120 = vector.broadcast %cst_518 : f32 to vector<8x128xf32>
    %1121 = arith.select %29, %1119, %1120 : vector<8x128xi1>, vector<8x128xf32>
    %1122 = vector.extract_strided_slice %1112 {offsets = [0, 0], sizes = [8, 128], strides = [1, 1]} : vector<10x128xf32> to vector<8x128xf32>
    %cst_519 = arith.constant 0.000000e+00 : f32
    %1123 = vector.broadcast %cst_519 : f32 to vector<8x128xf32>
    %1124 = arith.select %29, %1122, %1123 : vector<8x128xi1>, vector<8x128xf32>
    %1125 = vector.extract_strided_slice %1112 {offsets = [1, 0], sizes = [8, 128], strides = [1, 1]} : vector<10x128xf32> to vector<8x128xf32>
    %1126 = vector.extract_strided_slice %1112 {offsets = [2, 0], sizes = [8, 128], strides = [1, 1]} : vector<10x128xf32> to vector<8x128xf32>
    %cst_520 = arith.constant 0.000000e+00 : f32
    %1127 = vector.broadcast %cst_520 : f32 to vector<8x128xf32>
    %1128 = arith.select %31, %1126, %1127 : vector<8x128xi1>, vector<8x128xf32>
    %1129 = vector.extract_strided_slice %898 {offsets = [2, 0], sizes = [8, 128], strides = [1, 1]} : vector<10x128xf32> to vector<8x128xf32>
    %cst_521 = arith.constant 0.000000e+00 : f32
    %1130 = vector.broadcast %cst_521 : f32 to vector<8x128xf32>
    %1131 = arith.select %31, %1129, %1130 : vector<8x128xi1>, vector<8x128xf32>
    %1132 = vector.extract_strided_slice %1115 {offsets = [2, 0], sizes = [8, 128], strides = [1, 1]} : vector<10x128xf32> to vector<8x128xf32>
    %cst_522 = arith.constant 0.000000e+00 : f32
    %1133 = vector.broadcast %cst_522 : f32 to vector<8x128xf32>
    %1134 = arith.select %31, %1132, %1133 : vector<8x128xi1>, vector<8x128xf32>
    %1135 = vector.extract_strided_slice %1115 {offsets = [1, 0], sizes = [8, 128], strides = [1, 1]} : vector<10x128xf32> to vector<8x128xf32>
    %1136 = arith.subf %1109, %1118 : vector<8x128xf32>
    %c0_523 = arith.constant 0 : index
    %c18 = arith.constant 18 : index
    %1137 = memref.load %arg9[%c0_523, %c18] : memref<8x34xf32, #tpu.memory_space<smem>>
    %1138 = vector.broadcast %1137 : f32 to vector<8x128xf32>
    %1139 = arith.mulf %1136, %1138 : vector<8x128xf32>
    %1140 = arith.addf %1080, %1139 : vector<8x128xf32>
    %c1_524 = arith.constant 1 : index
    %c18_525 = arith.constant 18 : index
    %1141 = memref.load %arg9[%c1_524, %c18_525] : memref<8x34xf32, #tpu.memory_space<smem>>
    %1142 = vector.broadcast %1141 : f32 to vector<8x128xf32>
    %1143 = arith.mulf %1136, %1142 : vector<8x128xf32>
    %1144 = arith.addf %1084, %1143 : vector<8x128xf32>
    %c2_526 = arith.constant 2 : index
    %c18_527 = arith.constant 18 : index
    %1145 = memref.load %arg9[%c2_526, %c18_527] : memref<8x34xf32, #tpu.memory_space<smem>>
    %1146 = vector.broadcast %1145 : f32 to vector<8x128xf32>
    %1147 = arith.mulf %1136, %1146 : vector<8x128xf32>
    %1148 = arith.addf %1088, %1147 : vector<8x128xf32>
    %c3_528 = arith.constant 3 : index
    %c18_529 = arith.constant 18 : index
    %1149 = memref.load %arg9[%c3_528, %c18_529] : memref<8x34xf32, #tpu.memory_space<smem>>
    %1150 = vector.broadcast %1149 : f32 to vector<8x128xf32>
    %1151 = arith.mulf %1136, %1150 : vector<8x128xf32>
    %1152 = arith.addf %1092, %1151 : vector<8x128xf32>
    %c4_530 = arith.constant 4 : index
    %c18_531 = arith.constant 18 : index
    %1153 = memref.load %arg9[%c4_530, %c18_531] : memref<8x34xf32, #tpu.memory_space<smem>>
    %1154 = vector.broadcast %1153 : f32 to vector<8x128xf32>
    %1155 = arith.mulf %1136, %1154 : vector<8x128xf32>
    %1156 = arith.addf %1096, %1155 : vector<8x128xf32>
    %c5_532 = arith.constant 5 : index
    %c18_533 = arith.constant 18 : index
    %1157 = memref.load %arg9[%c5_532, %c18_533] : memref<8x34xf32, #tpu.memory_space<smem>>
    %1158 = vector.broadcast %1157 : f32 to vector<8x128xf32>
    %1159 = arith.mulf %1136, %1158 : vector<8x128xf32>
    %1160 = arith.addf %1100, %1159 : vector<8x128xf32>
    %c6_534 = arith.constant 6 : index
    %c18_535 = arith.constant 18 : index
    %1161 = memref.load %arg9[%c6_534, %c18_535] : memref<8x34xf32, #tpu.memory_space<smem>>
    %1162 = vector.broadcast %1161 : f32 to vector<8x128xf32>
    %1163 = arith.mulf %1136, %1162 : vector<8x128xf32>
    %1164 = arith.addf %1104, %1163 : vector<8x128xf32>
    %c7_536 = arith.constant 7 : index
    %c18_537 = arith.constant 18 : index
    %1165 = memref.load %arg9[%c7_536, %c18_537] : memref<8x34xf32, #tpu.memory_space<smem>>
    %1166 = vector.broadcast %1165 : f32 to vector<8x128xf32>
    %1167 = arith.mulf %1136, %1166 : vector<8x128xf32>
    %1168 = arith.addf %1108, %1167 : vector<8x128xf32>
    %1169 = arith.subf %1109, %1121 : vector<8x128xf32>
    %c0_538 = arith.constant 0 : index
    %c20 = arith.constant 20 : index
    %1170 = memref.load %arg9[%c0_538, %c20] : memref<8x34xf32, #tpu.memory_space<smem>>
    %1171 = vector.broadcast %1170 : f32 to vector<8x128xf32>
    %1172 = arith.mulf %1169, %1171 : vector<8x128xf32>
    %1173 = arith.addf %1140, %1172 : vector<8x128xf32>
    %c1_539 = arith.constant 1 : index
    %c20_540 = arith.constant 20 : index
    %1174 = memref.load %arg9[%c1_539, %c20_540] : memref<8x34xf32, #tpu.memory_space<smem>>
    %1175 = vector.broadcast %1174 : f32 to vector<8x128xf32>
    %1176 = arith.mulf %1169, %1175 : vector<8x128xf32>
    %1177 = arith.addf %1144, %1176 : vector<8x128xf32>
    %c2_541 = arith.constant 2 : index
    %c20_542 = arith.constant 20 : index
    %1178 = memref.load %arg9[%c2_541, %c20_542] : memref<8x34xf32, #tpu.memory_space<smem>>
    %1179 = vector.broadcast %1178 : f32 to vector<8x128xf32>
    %1180 = arith.mulf %1169, %1179 : vector<8x128xf32>
    %1181 = arith.addf %1148, %1180 : vector<8x128xf32>
    %c3_543 = arith.constant 3 : index
    %c20_544 = arith.constant 20 : index
    %1182 = memref.load %arg9[%c3_543, %c20_544] : memref<8x34xf32, #tpu.memory_space<smem>>
    %1183 = vector.broadcast %1182 : f32 to vector<8x128xf32>
    %1184 = arith.mulf %1169, %1183 : vector<8x128xf32>
    %1185 = arith.addf %1152, %1184 : vector<8x128xf32>
    %c4_545 = arith.constant 4 : index
    %c20_546 = arith.constant 20 : index
    %1186 = memref.load %arg9[%c4_545, %c20_546] : memref<8x34xf32, #tpu.memory_space<smem>>
    %1187 = vector.broadcast %1186 : f32 to vector<8x128xf32>
    %1188 = arith.mulf %1169, %1187 : vector<8x128xf32>
    %1189 = arith.addf %1156, %1188 : vector<8x128xf32>
    %c5_547 = arith.constant 5 : index
    %c20_548 = arith.constant 20 : index
    %1190 = memref.load %arg9[%c5_547, %c20_548] : memref<8x34xf32, #tpu.memory_space<smem>>
    %1191 = vector.broadcast %1190 : f32 to vector<8x128xf32>
    %1192 = arith.mulf %1169, %1191 : vector<8x128xf32>
    %1193 = arith.addf %1160, %1192 : vector<8x128xf32>
    %c6_549 = arith.constant 6 : index
    %c20_550 = arith.constant 20 : index
    %1194 = memref.load %arg9[%c6_549, %c20_550] : memref<8x34xf32, #tpu.memory_space<smem>>
    %1195 = vector.broadcast %1194 : f32 to vector<8x128xf32>
    %1196 = arith.mulf %1169, %1195 : vector<8x128xf32>
    %1197 = arith.addf %1164, %1196 : vector<8x128xf32>
    %c7_551 = arith.constant 7 : index
    %c20_552 = arith.constant 20 : index
    %1198 = memref.load %arg9[%c7_551, %c20_552] : memref<8x34xf32, #tpu.memory_space<smem>>
    %1199 = vector.broadcast %1198 : f32 to vector<8x128xf32>
    %1200 = arith.mulf %1169, %1199 : vector<8x128xf32>
    %1201 = arith.addf %1168, %1200 : vector<8x128xf32>
    %1202 = arith.subf %1109, %1124 : vector<8x128xf32>
    %c0_553 = arith.constant 0 : index
    %c22 = arith.constant 22 : index
    %1203 = memref.load %arg9[%c0_553, %c22] : memref<8x34xf32, #tpu.memory_space<smem>>
    %1204 = vector.broadcast %1203 : f32 to vector<8x128xf32>
    %1205 = arith.mulf %1202, %1204 : vector<8x128xf32>
    %1206 = arith.addf %1173, %1205 : vector<8x128xf32>
    %c1_554 = arith.constant 1 : index
    %c22_555 = arith.constant 22 : index
    %1207 = memref.load %arg9[%c1_554, %c22_555] : memref<8x34xf32, #tpu.memory_space<smem>>
    %1208 = vector.broadcast %1207 : f32 to vector<8x128xf32>
    %1209 = arith.mulf %1202, %1208 : vector<8x128xf32>
    %1210 = arith.addf %1177, %1209 : vector<8x128xf32>
    %c2_556 = arith.constant 2 : index
    %c22_557 = arith.constant 22 : index
    %1211 = memref.load %arg9[%c2_556, %c22_557] : memref<8x34xf32, #tpu.memory_space<smem>>
    %1212 = vector.broadcast %1211 : f32 to vector<8x128xf32>
    %1213 = arith.mulf %1202, %1212 : vector<8x128xf32>
    %1214 = arith.addf %1181, %1213 : vector<8x128xf32>
    %c3_558 = arith.constant 3 : index
    %c22_559 = arith.constant 22 : index
    %1215 = memref.load %arg9[%c3_558, %c22_559] : memref<8x34xf32, #tpu.memory_space<smem>>
    %1216 = vector.broadcast %1215 : f32 to vector<8x128xf32>
    %1217 = arith.mulf %1202, %1216 : vector<8x128xf32>
    %1218 = arith.addf %1185, %1217 : vector<8x128xf32>
    %c4_560 = arith.constant 4 : index
    %c22_561 = arith.constant 22 : index
    %1219 = memref.load %arg9[%c4_560, %c22_561] : memref<8x34xf32, #tpu.memory_space<smem>>
    %1220 = vector.broadcast %1219 : f32 to vector<8x128xf32>
    %1221 = arith.mulf %1202, %1220 : vector<8x128xf32>
    %1222 = arith.addf %1189, %1221 : vector<8x128xf32>
    %c5_562 = arith.constant 5 : index
    %c22_563 = arith.constant 22 : index
    %1223 = memref.load %arg9[%c5_562, %c22_563] : memref<8x34xf32, #tpu.memory_space<smem>>
    %1224 = vector.broadcast %1223 : f32 to vector<8x128xf32>
    %1225 = arith.mulf %1202, %1224 : vector<8x128xf32>
    %1226 = arith.addf %1193, %1225 : vector<8x128xf32>
    %c6_564 = arith.constant 6 : index
    %c22_565 = arith.constant 22 : index
    %1227 = memref.load %arg9[%c6_564, %c22_565] : memref<8x34xf32, #tpu.memory_space<smem>>
    %1228 = vector.broadcast %1227 : f32 to vector<8x128xf32>
    %1229 = arith.mulf %1202, %1228 : vector<8x128xf32>
    %1230 = arith.addf %1197, %1229 : vector<8x128xf32>
    %c7_566 = arith.constant 7 : index
    %c22_567 = arith.constant 22 : index
    %1231 = memref.load %arg9[%c7_566, %c22_567] : memref<8x34xf32, #tpu.memory_space<smem>>
    %1232 = vector.broadcast %1231 : f32 to vector<8x128xf32>
    %1233 = arith.mulf %1202, %1232 : vector<8x128xf32>
    %1234 = arith.addf %1201, %1233 : vector<8x128xf32>
    %1235 = arith.subf %1109, %1125 : vector<8x128xf32>
    %c0_568 = arith.constant 0 : index
    %c24 = arith.constant 24 : index
    %1236 = memref.load %arg9[%c0_568, %c24] : memref<8x34xf32, #tpu.memory_space<smem>>
    %1237 = vector.broadcast %1236 : f32 to vector<8x128xf32>
    %1238 = arith.mulf %1235, %1237 : vector<8x128xf32>
    %1239 = arith.addf %1206, %1238 : vector<8x128xf32>
    %c1_569 = arith.constant 1 : index
    %c24_570 = arith.constant 24 : index
    %1240 = memref.load %arg9[%c1_569, %c24_570] : memref<8x34xf32, #tpu.memory_space<smem>>
    %1241 = vector.broadcast %1240 : f32 to vector<8x128xf32>
    %1242 = arith.mulf %1235, %1241 : vector<8x128xf32>
    %1243 = arith.addf %1210, %1242 : vector<8x128xf32>
    %c2_571 = arith.constant 2 : index
    %c24_572 = arith.constant 24 : index
    %1244 = memref.load %arg9[%c2_571, %c24_572] : memref<8x34xf32, #tpu.memory_space<smem>>
    %1245 = vector.broadcast %1244 : f32 to vector<8x128xf32>
    %1246 = arith.mulf %1235, %1245 : vector<8x128xf32>
    %1247 = arith.addf %1214, %1246 : vector<8x128xf32>
    %c3_573 = arith.constant 3 : index
    %c24_574 = arith.constant 24 : index
    %1248 = memref.load %arg9[%c3_573, %c24_574] : memref<8x34xf32, #tpu.memory_space<smem>>
    %1249 = vector.broadcast %1248 : f32 to vector<8x128xf32>
    %1250 = arith.mulf %1235, %1249 : vector<8x128xf32>
    %1251 = arith.addf %1218, %1250 : vector<8x128xf32>
    %c4_575 = arith.constant 4 : index
    %c24_576 = arith.constant 24 : index
    %1252 = memref.load %arg9[%c4_575, %c24_576] : memref<8x34xf32, #tpu.memory_space<smem>>
    %1253 = vector.broadcast %1252 : f32 to vector<8x128xf32>
    %1254 = arith.mulf %1235, %1253 : vector<8x128xf32>
    %1255 = arith.addf %1222, %1254 : vector<8x128xf32>
    %c5_577 = arith.constant 5 : index
    %c24_578 = arith.constant 24 : index
    %1256 = memref.load %arg9[%c5_577, %c24_578] : memref<8x34xf32, #tpu.memory_space<smem>>
    %1257 = vector.broadcast %1256 : f32 to vector<8x128xf32>
    %1258 = arith.mulf %1235, %1257 : vector<8x128xf32>
    %1259 = arith.addf %1226, %1258 : vector<8x128xf32>
    %c6_579 = arith.constant 6 : index
    %c24_580 = arith.constant 24 : index
    %1260 = memref.load %arg9[%c6_579, %c24_580] : memref<8x34xf32, #tpu.memory_space<smem>>
    %1261 = vector.broadcast %1260 : f32 to vector<8x128xf32>
    %1262 = arith.mulf %1235, %1261 : vector<8x128xf32>
    %1263 = arith.addf %1230, %1262 : vector<8x128xf32>
    %c7_581 = arith.constant 7 : index
    %c24_582 = arith.constant 24 : index
    %1264 = memref.load %arg9[%c7_581, %c24_582] : memref<8x34xf32, #tpu.memory_space<smem>>
    %1265 = vector.broadcast %1264 : f32 to vector<8x128xf32>
    %1266 = arith.mulf %1235, %1265 : vector<8x128xf32>
    %1267 = arith.addf %1234, %1266 : vector<8x128xf32>
    %1268 = arith.subf %1109, %1128 : vector<8x128xf32>
    %c0_583 = arith.constant 0 : index
    %c26 = arith.constant 26 : index
    %1269 = memref.load %arg9[%c0_583, %c26] : memref<8x34xf32, #tpu.memory_space<smem>>
    %1270 = vector.broadcast %1269 : f32 to vector<8x128xf32>
    %1271 = arith.mulf %1268, %1270 : vector<8x128xf32>
    %1272 = arith.addf %1239, %1271 : vector<8x128xf32>
    %c1_584 = arith.constant 1 : index
    %c26_585 = arith.constant 26 : index
    %1273 = memref.load %arg9[%c1_584, %c26_585] : memref<8x34xf32, #tpu.memory_space<smem>>
    %1274 = vector.broadcast %1273 : f32 to vector<8x128xf32>
    %1275 = arith.mulf %1268, %1274 : vector<8x128xf32>
    %1276 = arith.addf %1243, %1275 : vector<8x128xf32>
    %c2_586 = arith.constant 2 : index
    %c26_587 = arith.constant 26 : index
    %1277 = memref.load %arg9[%c2_586, %c26_587] : memref<8x34xf32, #tpu.memory_space<smem>>
    %1278 = vector.broadcast %1277 : f32 to vector<8x128xf32>
    %1279 = arith.mulf %1268, %1278 : vector<8x128xf32>
    %1280 = arith.addf %1247, %1279 : vector<8x128xf32>
    %c3_588 = arith.constant 3 : index
    %c26_589 = arith.constant 26 : index
    %1281 = memref.load %arg9[%c3_588, %c26_589] : memref<8x34xf32, #tpu.memory_space<smem>>
    %1282 = vector.broadcast %1281 : f32 to vector<8x128xf32>
    %1283 = arith.mulf %1268, %1282 : vector<8x128xf32>
    %1284 = arith.addf %1251, %1283 : vector<8x128xf32>
    %c4_590 = arith.constant 4 : index
    %c26_591 = arith.constant 26 : index
    %1285 = memref.load %arg9[%c4_590, %c26_591] : memref<8x34xf32, #tpu.memory_space<smem>>
    %1286 = vector.broadcast %1285 : f32 to vector<8x128xf32>
    %1287 = arith.mulf %1268, %1286 : vector<8x128xf32>
    %1288 = arith.addf %1255, %1287 : vector<8x128xf32>
    %c5_592 = arith.constant 5 : index
    %c26_593 = arith.constant 26 : index
    %1289 = memref.load %arg9[%c5_592, %c26_593] : memref<8x34xf32, #tpu.memory_space<smem>>
    %1290 = vector.broadcast %1289 : f32 to vector<8x128xf32>
    %1291 = arith.mulf %1268, %1290 : vector<8x128xf32>
    %1292 = arith.addf %1259, %1291 : vector<8x128xf32>
    %c6_594 = arith.constant 6 : index
    %c26_595 = arith.constant 26 : index
    %1293 = memref.load %arg9[%c6_594, %c26_595] : memref<8x34xf32, #tpu.memory_space<smem>>
    %1294 = vector.broadcast %1293 : f32 to vector<8x128xf32>
    %1295 = arith.mulf %1268, %1294 : vector<8x128xf32>
    %1296 = arith.addf %1263, %1295 : vector<8x128xf32>
    %c7_596 = arith.constant 7 : index
    %c26_597 = arith.constant 26 : index
    %1297 = memref.load %arg9[%c7_596, %c26_597] : memref<8x34xf32, #tpu.memory_space<smem>>
    %1298 = vector.broadcast %1297 : f32 to vector<8x128xf32>
    %1299 = arith.mulf %1268, %1298 : vector<8x128xf32>
    %1300 = arith.addf %1267, %1299 : vector<8x128xf32>
    %1301 = arith.subf %1109, %1131 : vector<8x128xf32>
    %c0_598 = arith.constant 0 : index
    %c28 = arith.constant 28 : index
    %1302 = memref.load %arg9[%c0_598, %c28] : memref<8x34xf32, #tpu.memory_space<smem>>
    %1303 = vector.broadcast %1302 : f32 to vector<8x128xf32>
    %1304 = arith.mulf %1301, %1303 : vector<8x128xf32>
    %1305 = arith.addf %1272, %1304 : vector<8x128xf32>
    %c1_599 = arith.constant 1 : index
    %c28_600 = arith.constant 28 : index
    %1306 = memref.load %arg9[%c1_599, %c28_600] : memref<8x34xf32, #tpu.memory_space<smem>>
    %1307 = vector.broadcast %1306 : f32 to vector<8x128xf32>
    %1308 = arith.mulf %1301, %1307 : vector<8x128xf32>
    %1309 = arith.addf %1276, %1308 : vector<8x128xf32>
    %c2_601 = arith.constant 2 : index
    %c28_602 = arith.constant 28 : index
    %1310 = memref.load %arg9[%c2_601, %c28_602] : memref<8x34xf32, #tpu.memory_space<smem>>
    %1311 = vector.broadcast %1310 : f32 to vector<8x128xf32>
    %1312 = arith.mulf %1301, %1311 : vector<8x128xf32>
    %1313 = arith.addf %1280, %1312 : vector<8x128xf32>
    %c3_603 = arith.constant 3 : index
    %c28_604 = arith.constant 28 : index
    %1314 = memref.load %arg9[%c3_603, %c28_604] : memref<8x34xf32, #tpu.memory_space<smem>>
    %1315 = vector.broadcast %1314 : f32 to vector<8x128xf32>
    %1316 = arith.mulf %1301, %1315 : vector<8x128xf32>
    %1317 = arith.addf %1284, %1316 : vector<8x128xf32>
    %c4_605 = arith.constant 4 : index
    %c28_606 = arith.constant 28 : index
    %1318 = memref.load %arg9[%c4_605, %c28_606] : memref<8x34xf32, #tpu.memory_space<smem>>
    %1319 = vector.broadcast %1318 : f32 to vector<8x128xf32>
    %1320 = arith.mulf %1301, %1319 : vector<8x128xf32>
    %1321 = arith.addf %1288, %1320 : vector<8x128xf32>
    %c5_607 = arith.constant 5 : index
    %c28_608 = arith.constant 28 : index
    %1322 = memref.load %arg9[%c5_607, %c28_608] : memref<8x34xf32, #tpu.memory_space<smem>>
    %1323 = vector.broadcast %1322 : f32 to vector<8x128xf32>
    %1324 = arith.mulf %1301, %1323 : vector<8x128xf32>
    %1325 = arith.addf %1292, %1324 : vector<8x128xf32>
    %c6_609 = arith.constant 6 : index
    %c28_610 = arith.constant 28 : index
    %1326 = memref.load %arg9[%c6_609, %c28_610] : memref<8x34xf32, #tpu.memory_space<smem>>
    %1327 = vector.broadcast %1326 : f32 to vector<8x128xf32>
    %1328 = arith.mulf %1301, %1327 : vector<8x128xf32>
    %1329 = arith.addf %1296, %1328 : vector<8x128xf32>
    %c7_611 = arith.constant 7 : index
    %c28_612 = arith.constant 28 : index
    %1330 = memref.load %arg9[%c7_611, %c28_612] : memref<8x34xf32, #tpu.memory_space<smem>>
    %1331 = vector.broadcast %1330 : f32 to vector<8x128xf32>
    %1332 = arith.mulf %1301, %1331 : vector<8x128xf32>
    %1333 = arith.addf %1300, %1332 : vector<8x128xf32>
    %1334 = arith.subf %1109, %1134 : vector<8x128xf32>
    %c0_613 = arith.constant 0 : index
    %c30 = arith.constant 30 : index
    %1335 = memref.load %arg9[%c0_613, %c30] : memref<8x34xf32, #tpu.memory_space<smem>>
    %1336 = vector.broadcast %1335 : f32 to vector<8x128xf32>
    %1337 = arith.mulf %1334, %1336 : vector<8x128xf32>
    %1338 = arith.addf %1305, %1337 : vector<8x128xf32>
    %c1_614 = arith.constant 1 : index
    %c30_615 = arith.constant 30 : index
    %1339 = memref.load %arg9[%c1_614, %c30_615] : memref<8x34xf32, #tpu.memory_space<smem>>
    %1340 = vector.broadcast %1339 : f32 to vector<8x128xf32>
    %1341 = arith.mulf %1334, %1340 : vector<8x128xf32>
    %1342 = arith.addf %1309, %1341 : vector<8x128xf32>
    %c2_616 = arith.constant 2 : index
    %c30_617 = arith.constant 30 : index
    %1343 = memref.load %arg9[%c2_616, %c30_617] : memref<8x34xf32, #tpu.memory_space<smem>>
    %1344 = vector.broadcast %1343 : f32 to vector<8x128xf32>
    %1345 = arith.mulf %1334, %1344 : vector<8x128xf32>
    %1346 = arith.addf %1313, %1345 : vector<8x128xf32>
    %c3_618 = arith.constant 3 : index
    %c30_619 = arith.constant 30 : index
    %1347 = memref.load %arg9[%c3_618, %c30_619] : memref<8x34xf32, #tpu.memory_space<smem>>
    %1348 = vector.broadcast %1347 : f32 to vector<8x128xf32>
    %1349 = arith.mulf %1334, %1348 : vector<8x128xf32>
    %1350 = arith.addf %1317, %1349 : vector<8x128xf32>
    %c4_620 = arith.constant 4 : index
    %c30_621 = arith.constant 30 : index
    %1351 = memref.load %arg9[%c4_620, %c30_621] : memref<8x34xf32, #tpu.memory_space<smem>>
    %1352 = vector.broadcast %1351 : f32 to vector<8x128xf32>
    %1353 = arith.mulf %1334, %1352 : vector<8x128xf32>
    %1354 = arith.addf %1321, %1353 : vector<8x128xf32>
    %c5_622 = arith.constant 5 : index
    %c30_623 = arith.constant 30 : index
    %1355 = memref.load %arg9[%c5_622, %c30_623] : memref<8x34xf32, #tpu.memory_space<smem>>
    %1356 = vector.broadcast %1355 : f32 to vector<8x128xf32>
    %1357 = arith.mulf %1334, %1356 : vector<8x128xf32>
    %1358 = arith.addf %1325, %1357 : vector<8x128xf32>
    %c6_624 = arith.constant 6 : index
    %c30_625 = arith.constant 30 : index
    %1359 = memref.load %arg9[%c6_624, %c30_625] : memref<8x34xf32, #tpu.memory_space<smem>>
    %1360 = vector.broadcast %1359 : f32 to vector<8x128xf32>
    %1361 = arith.mulf %1334, %1360 : vector<8x128xf32>
    %1362 = arith.addf %1329, %1361 : vector<8x128xf32>
    %c7_626 = arith.constant 7 : index
    %c30_627 = arith.constant 30 : index
    %1363 = memref.load %arg9[%c7_626, %c30_627] : memref<8x34xf32, #tpu.memory_space<smem>>
    %1364 = vector.broadcast %1363 : f32 to vector<8x128xf32>
    %1365 = arith.mulf %1334, %1364 : vector<8x128xf32>
    %1366 = arith.addf %1333, %1365 : vector<8x128xf32>
    %1367 = arith.subf %1109, %1135 : vector<8x128xf32>
    %c0_628 = arith.constant 0 : index
    %c32 = arith.constant 32 : index
    %1368 = memref.load %arg9[%c0_628, %c32] : memref<8x34xf32, #tpu.memory_space<smem>>
    %1369 = vector.broadcast %1368 : f32 to vector<8x128xf32>
    %1370 = arith.mulf %1367, %1369 : vector<8x128xf32>
    %1371 = arith.addf %1338, %1370 : vector<8x128xf32>
    %c1_629 = arith.constant 1 : index
    %c32_630 = arith.constant 32 : index
    %1372 = memref.load %arg9[%c1_629, %c32_630] : memref<8x34xf32, #tpu.memory_space<smem>>
    %1373 = vector.broadcast %1372 : f32 to vector<8x128xf32>
    %1374 = arith.mulf %1367, %1373 : vector<8x128xf32>
    %1375 = arith.addf %1342, %1374 : vector<8x128xf32>
    %c2_631 = arith.constant 2 : index
    %c32_632 = arith.constant 32 : index
    %1376 = memref.load %arg9[%c2_631, %c32_632] : memref<8x34xf32, #tpu.memory_space<smem>>
    %1377 = vector.broadcast %1376 : f32 to vector<8x128xf32>
    %1378 = arith.mulf %1367, %1377 : vector<8x128xf32>
    %1379 = arith.addf %1346, %1378 : vector<8x128xf32>
    %c3_633 = arith.constant 3 : index
    %c32_634 = arith.constant 32 : index
    %1380 = memref.load %arg9[%c3_633, %c32_634] : memref<8x34xf32, #tpu.memory_space<smem>>
    %1381 = vector.broadcast %1380 : f32 to vector<8x128xf32>
    %1382 = arith.mulf %1367, %1381 : vector<8x128xf32>
    %1383 = arith.addf %1350, %1382 : vector<8x128xf32>
    %c4_635 = arith.constant 4 : index
    %c32_636 = arith.constant 32 : index
    %1384 = memref.load %arg9[%c4_635, %c32_636] : memref<8x34xf32, #tpu.memory_space<smem>>
    %1385 = vector.broadcast %1384 : f32 to vector<8x128xf32>
    %1386 = arith.mulf %1367, %1385 : vector<8x128xf32>
    %1387 = arith.addf %1354, %1386 : vector<8x128xf32>
    %c5_637 = arith.constant 5 : index
    %c32_638 = arith.constant 32 : index
    %1388 = memref.load %arg9[%c5_637, %c32_638] : memref<8x34xf32, #tpu.memory_space<smem>>
    %1389 = vector.broadcast %1388 : f32 to vector<8x128xf32>
    %1390 = arith.mulf %1367, %1389 : vector<8x128xf32>
    %1391 = arith.addf %1358, %1390 : vector<8x128xf32>
    %c6_639 = arith.constant 6 : index
    %c32_640 = arith.constant 32 : index
    %1392 = memref.load %arg9[%c6_639, %c32_640] : memref<8x34xf32, #tpu.memory_space<smem>>
    %1393 = vector.broadcast %1392 : f32 to vector<8x128xf32>
    %1394 = arith.mulf %1367, %1393 : vector<8x128xf32>
    %1395 = arith.addf %1362, %1394 : vector<8x128xf32>
    %c7_641 = arith.constant 7 : index
    %c32_642 = arith.constant 32 : index
    %1396 = memref.load %arg9[%c7_641, %c32_642] : memref<8x34xf32, #tpu.memory_space<smem>>
    %1397 = vector.broadcast %1396 : f32 to vector<8x128xf32>
    %1398 = arith.mulf %1367, %1397 : vector<8x128xf32>
    %1399 = arith.addf %1366, %1398 : vector<8x128xf32>
    %1400 = vector.extract_strided_slice %906 {offsets = [1, 0], sizes = [8, 128], strides = [1, 1]} : vector<10x128xf32> to vector<8x128xf32>
    %1401 = tpu.dynamic_rotate %906 by %53 dim 1 : vector<10x128xf32>, i32 -> vector<10x128xf32>
    %cst_643 = arith.constant 0.000000e+00 : f32
    %1402 = vector.broadcast %cst_643 : f32 to vector<10x128xf32>
    %1403 = arith.select %33, %1401, %1402 : vector<10x128xi1>, vector<10x128xf32>
    %1404 = tpu.dynamic_rotate %906 by %54 dim 1 : vector<10x128xf32>, i32 -> vector<10x128xf32>
    %cst_644 = arith.constant 0.000000e+00 : f32
    %1405 = vector.broadcast %cst_644 : f32 to vector<10x128xf32>
    %1406 = arith.select %35, %1404, %1405 : vector<10x128xi1>, vector<10x128xf32>
    %1407 = vector.extract_strided_slice %1406 {offsets = [0, 0], sizes = [8, 128], strides = [1, 1]} : vector<10x128xf32> to vector<8x128xf32>
    %cst_645 = arith.constant 0.000000e+00 : f32
    %1408 = vector.broadcast %cst_645 : f32 to vector<8x128xf32>
    %1409 = arith.select %29, %1407, %1408 : vector<8x128xi1>, vector<8x128xf32>
    %1410 = vector.extract_strided_slice %906 {offsets = [0, 0], sizes = [8, 128], strides = [1, 1]} : vector<10x128xf32> to vector<8x128xf32>
    %cst_646 = arith.constant 0.000000e+00 : f32
    %1411 = vector.broadcast %cst_646 : f32 to vector<8x128xf32>
    %1412 = arith.select %29, %1410, %1411 : vector<8x128xi1>, vector<8x128xf32>
    %1413 = vector.extract_strided_slice %1403 {offsets = [0, 0], sizes = [8, 128], strides = [1, 1]} : vector<10x128xf32> to vector<8x128xf32>
    %cst_647 = arith.constant 0.000000e+00 : f32
    %1414 = vector.broadcast %cst_647 : f32 to vector<8x128xf32>
    %1415 = arith.select %29, %1413, %1414 : vector<8x128xi1>, vector<8x128xf32>
    %1416 = vector.extract_strided_slice %1403 {offsets = [1, 0], sizes = [8, 128], strides = [1, 1]} : vector<10x128xf32> to vector<8x128xf32>
    %1417 = vector.extract_strided_slice %1403 {offsets = [2, 0], sizes = [8, 128], strides = [1, 1]} : vector<10x128xf32> to vector<8x128xf32>
    %cst_648 = arith.constant 0.000000e+00 : f32
    %1418 = vector.broadcast %cst_648 : f32 to vector<8x128xf32>
    %1419 = arith.select %31, %1417, %1418 : vector<8x128xi1>, vector<8x128xf32>
    %1420 = vector.extract_strided_slice %906 {offsets = [2, 0], sizes = [8, 128], strides = [1, 1]} : vector<10x128xf32> to vector<8x128xf32>
    %cst_649 = arith.constant 0.000000e+00 : f32
    %1421 = vector.broadcast %cst_649 : f32 to vector<8x128xf32>
    %1422 = arith.select %31, %1420, %1421 : vector<8x128xi1>, vector<8x128xf32>
    %1423 = vector.extract_strided_slice %1406 {offsets = [2, 0], sizes = [8, 128], strides = [1, 1]} : vector<10x128xf32> to vector<8x128xf32>
    %cst_650 = arith.constant 0.000000e+00 : f32
    %1424 = vector.broadcast %cst_650 : f32 to vector<8x128xf32>
    %1425 = arith.select %31, %1423, %1424 : vector<8x128xi1>, vector<8x128xf32>
    %1426 = vector.extract_strided_slice %1406 {offsets = [1, 0], sizes = [8, 128], strides = [1, 1]} : vector<10x128xf32> to vector<8x128xf32>
    %1427 = arith.subf %1400, %1409 : vector<8x128xf32>
    %c0_651 = arith.constant 0 : index
    %c19 = arith.constant 19 : index
    %1428 = memref.load %arg9[%c0_651, %c19] : memref<8x34xf32, #tpu.memory_space<smem>>
    %1429 = vector.broadcast %1428 : f32 to vector<8x128xf32>
    %1430 = arith.mulf %1427, %1429 : vector<8x128xf32>
    %1431 = arith.addf %1371, %1430 : vector<8x128xf32>
    %c1_652 = arith.constant 1 : index
    %c19_653 = arith.constant 19 : index
    %1432 = memref.load %arg9[%c1_652, %c19_653] : memref<8x34xf32, #tpu.memory_space<smem>>
    %1433 = vector.broadcast %1432 : f32 to vector<8x128xf32>
    %1434 = arith.mulf %1427, %1433 : vector<8x128xf32>
    %1435 = arith.addf %1375, %1434 : vector<8x128xf32>
    %c2_654 = arith.constant 2 : index
    %c19_655 = arith.constant 19 : index
    %1436 = memref.load %arg9[%c2_654, %c19_655] : memref<8x34xf32, #tpu.memory_space<smem>>
    %1437 = vector.broadcast %1436 : f32 to vector<8x128xf32>
    %1438 = arith.mulf %1427, %1437 : vector<8x128xf32>
    %1439 = arith.addf %1379, %1438 : vector<8x128xf32>
    %c3_656 = arith.constant 3 : index
    %c19_657 = arith.constant 19 : index
    %1440 = memref.load %arg9[%c3_656, %c19_657] : memref<8x34xf32, #tpu.memory_space<smem>>
    %1441 = vector.broadcast %1440 : f32 to vector<8x128xf32>
    %1442 = arith.mulf %1427, %1441 : vector<8x128xf32>
    %1443 = arith.addf %1383, %1442 : vector<8x128xf32>
    %c4_658 = arith.constant 4 : index
    %c19_659 = arith.constant 19 : index
    %1444 = memref.load %arg9[%c4_658, %c19_659] : memref<8x34xf32, #tpu.memory_space<smem>>
    %1445 = vector.broadcast %1444 : f32 to vector<8x128xf32>
    %1446 = arith.mulf %1427, %1445 : vector<8x128xf32>
    %1447 = arith.addf %1387, %1446 : vector<8x128xf32>
    %c5_660 = arith.constant 5 : index
    %c19_661 = arith.constant 19 : index
    %1448 = memref.load %arg9[%c5_660, %c19_661] : memref<8x34xf32, #tpu.memory_space<smem>>
    %1449 = vector.broadcast %1448 : f32 to vector<8x128xf32>
    %1450 = arith.mulf %1427, %1449 : vector<8x128xf32>
    %1451 = arith.addf %1391, %1450 : vector<8x128xf32>
    %c6_662 = arith.constant 6 : index
    %c19_663 = arith.constant 19 : index
    %1452 = memref.load %arg9[%c6_662, %c19_663] : memref<8x34xf32, #tpu.memory_space<smem>>
    %1453 = vector.broadcast %1452 : f32 to vector<8x128xf32>
    %1454 = arith.mulf %1427, %1453 : vector<8x128xf32>
    %1455 = arith.addf %1395, %1454 : vector<8x128xf32>
    %c7_664 = arith.constant 7 : index
    %c19_665 = arith.constant 19 : index
    %1456 = memref.load %arg9[%c7_664, %c19_665] : memref<8x34xf32, #tpu.memory_space<smem>>
    %1457 = vector.broadcast %1456 : f32 to vector<8x128xf32>
    %1458 = arith.mulf %1427, %1457 : vector<8x128xf32>
    %1459 = arith.addf %1399, %1458 : vector<8x128xf32>
    %1460 = arith.subf %1400, %1412 : vector<8x128xf32>
    %c0_666 = arith.constant 0 : index
    %c21 = arith.constant 21 : index
    %1461 = memref.load %arg9[%c0_666, %c21] : memref<8x34xf32, #tpu.memory_space<smem>>
    %1462 = vector.broadcast %1461 : f32 to vector<8x128xf32>
    %1463 = arith.mulf %1460, %1462 : vector<8x128xf32>
    %1464 = arith.addf %1431, %1463 : vector<8x128xf32>
    %c1_667 = arith.constant 1 : index
    %c21_668 = arith.constant 21 : index
    %1465 = memref.load %arg9[%c1_667, %c21_668] : memref<8x34xf32, #tpu.memory_space<smem>>
    %1466 = vector.broadcast %1465 : f32 to vector<8x128xf32>
    %1467 = arith.mulf %1460, %1466 : vector<8x128xf32>
    %1468 = arith.addf %1435, %1467 : vector<8x128xf32>
    %c2_669 = arith.constant 2 : index
    %c21_670 = arith.constant 21 : index
    %1469 = memref.load %arg9[%c2_669, %c21_670] : memref<8x34xf32, #tpu.memory_space<smem>>
    %1470 = vector.broadcast %1469 : f32 to vector<8x128xf32>
    %1471 = arith.mulf %1460, %1470 : vector<8x128xf32>
    %1472 = arith.addf %1439, %1471 : vector<8x128xf32>
    %c3_671 = arith.constant 3 : index
    %c21_672 = arith.constant 21 : index
    %1473 = memref.load %arg9[%c3_671, %c21_672] : memref<8x34xf32, #tpu.memory_space<smem>>
    %1474 = vector.broadcast %1473 : f32 to vector<8x128xf32>
    %1475 = arith.mulf %1460, %1474 : vector<8x128xf32>
    %1476 = arith.addf %1443, %1475 : vector<8x128xf32>
    %c4_673 = arith.constant 4 : index
    %c21_674 = arith.constant 21 : index
    %1477 = memref.load %arg9[%c4_673, %c21_674] : memref<8x34xf32, #tpu.memory_space<smem>>
    %1478 = vector.broadcast %1477 : f32 to vector<8x128xf32>
    %1479 = arith.mulf %1460, %1478 : vector<8x128xf32>
    %1480 = arith.addf %1447, %1479 : vector<8x128xf32>
    %c5_675 = arith.constant 5 : index
    %c21_676 = arith.constant 21 : index
    %1481 = memref.load %arg9[%c5_675, %c21_676] : memref<8x34xf32, #tpu.memory_space<smem>>
    %1482 = vector.broadcast %1481 : f32 to vector<8x128xf32>
    %1483 = arith.mulf %1460, %1482 : vector<8x128xf32>
    %1484 = arith.addf %1451, %1483 : vector<8x128xf32>
    %c6_677 = arith.constant 6 : index
    %c21_678 = arith.constant 21 : index
    %1485 = memref.load %arg9[%c6_677, %c21_678] : memref<8x34xf32, #tpu.memory_space<smem>>
    %1486 = vector.broadcast %1485 : f32 to vector<8x128xf32>
    %1487 = arith.mulf %1460, %1486 : vector<8x128xf32>
    %1488 = arith.addf %1455, %1487 : vector<8x128xf32>
    %c7_679 = arith.constant 7 : index
    %c21_680 = arith.constant 21 : index
    %1489 = memref.load %arg9[%c7_679, %c21_680] : memref<8x34xf32, #tpu.memory_space<smem>>
    %1490 = vector.broadcast %1489 : f32 to vector<8x128xf32>
    %1491 = arith.mulf %1460, %1490 : vector<8x128xf32>
    %1492 = arith.addf %1459, %1491 : vector<8x128xf32>
    %1493 = arith.subf %1400, %1415 : vector<8x128xf32>
    %c0_681 = arith.constant 0 : index
    %c23 = arith.constant 23 : index
    %1494 = memref.load %arg9[%c0_681, %c23] : memref<8x34xf32, #tpu.memory_space<smem>>
    %1495 = vector.broadcast %1494 : f32 to vector<8x128xf32>
    %1496 = arith.mulf %1493, %1495 : vector<8x128xf32>
    %1497 = arith.addf %1464, %1496 : vector<8x128xf32>
    %c1_682 = arith.constant 1 : index
    %c23_683 = arith.constant 23 : index
    %1498 = memref.load %arg9[%c1_682, %c23_683] : memref<8x34xf32, #tpu.memory_space<smem>>
    %1499 = vector.broadcast %1498 : f32 to vector<8x128xf32>
    %1500 = arith.mulf %1493, %1499 : vector<8x128xf32>
    %1501 = arith.addf %1468, %1500 : vector<8x128xf32>
    %c2_684 = arith.constant 2 : index
    %c23_685 = arith.constant 23 : index
    %1502 = memref.load %arg9[%c2_684, %c23_685] : memref<8x34xf32, #tpu.memory_space<smem>>
    %1503 = vector.broadcast %1502 : f32 to vector<8x128xf32>
    %1504 = arith.mulf %1493, %1503 : vector<8x128xf32>
    %1505 = arith.addf %1472, %1504 : vector<8x128xf32>
    %c3_686 = arith.constant 3 : index
    %c23_687 = arith.constant 23 : index
    %1506 = memref.load %arg9[%c3_686, %c23_687] : memref<8x34xf32, #tpu.memory_space<smem>>
    %1507 = vector.broadcast %1506 : f32 to vector<8x128xf32>
    %1508 = arith.mulf %1493, %1507 : vector<8x128xf32>
    %1509 = arith.addf %1476, %1508 : vector<8x128xf32>
    %c4_688 = arith.constant 4 : index
    %c23_689 = arith.constant 23 : index
    %1510 = memref.load %arg9[%c4_688, %c23_689] : memref<8x34xf32, #tpu.memory_space<smem>>
    %1511 = vector.broadcast %1510 : f32 to vector<8x128xf32>
    %1512 = arith.mulf %1493, %1511 : vector<8x128xf32>
    %1513 = arith.addf %1480, %1512 : vector<8x128xf32>
    %c5_690 = arith.constant 5 : index
    %c23_691 = arith.constant 23 : index
    %1514 = memref.load %arg9[%c5_690, %c23_691] : memref<8x34xf32, #tpu.memory_space<smem>>
    %1515 = vector.broadcast %1514 : f32 to vector<8x128xf32>
    %1516 = arith.mulf %1493, %1515 : vector<8x128xf32>
    %1517 = arith.addf %1484, %1516 : vector<8x128xf32>
    %c6_692 = arith.constant 6 : index
    %c23_693 = arith.constant 23 : index
    %1518 = memref.load %arg9[%c6_692, %c23_693] : memref<8x34xf32, #tpu.memory_space<smem>>
    %1519 = vector.broadcast %1518 : f32 to vector<8x128xf32>
    %1520 = arith.mulf %1493, %1519 : vector<8x128xf32>
    %1521 = arith.addf %1488, %1520 : vector<8x128xf32>
    %c7_694 = arith.constant 7 : index
    %c23_695 = arith.constant 23 : index
    %1522 = memref.load %arg9[%c7_694, %c23_695] : memref<8x34xf32, #tpu.memory_space<smem>>
    %1523 = vector.broadcast %1522 : f32 to vector<8x128xf32>
    %1524 = arith.mulf %1493, %1523 : vector<8x128xf32>
    %1525 = arith.addf %1492, %1524 : vector<8x128xf32>
    %1526 = arith.subf %1400, %1416 : vector<8x128xf32>
    %c0_696 = arith.constant 0 : index
    %c25 = arith.constant 25 : index
    %1527 = memref.load %arg9[%c0_696, %c25] : memref<8x34xf32, #tpu.memory_space<smem>>
    %1528 = vector.broadcast %1527 : f32 to vector<8x128xf32>
    %1529 = arith.mulf %1526, %1528 : vector<8x128xf32>
    %1530 = arith.addf %1497, %1529 : vector<8x128xf32>
    %c1_697 = arith.constant 1 : index
    %c25_698 = arith.constant 25 : index
    %1531 = memref.load %arg9[%c1_697, %c25_698] : memref<8x34xf32, #tpu.memory_space<smem>>
    %1532 = vector.broadcast %1531 : f32 to vector<8x128xf32>
    %1533 = arith.mulf %1526, %1532 : vector<8x128xf32>
    %1534 = arith.addf %1501, %1533 : vector<8x128xf32>
    %c2_699 = arith.constant 2 : index
    %c25_700 = arith.constant 25 : index
    %1535 = memref.load %arg9[%c2_699, %c25_700] : memref<8x34xf32, #tpu.memory_space<smem>>
    %1536 = vector.broadcast %1535 : f32 to vector<8x128xf32>
    %1537 = arith.mulf %1526, %1536 : vector<8x128xf32>
    %1538 = arith.addf %1505, %1537 : vector<8x128xf32>
    %c3_701 = arith.constant 3 : index
    %c25_702 = arith.constant 25 : index
    %1539 = memref.load %arg9[%c3_701, %c25_702] : memref<8x34xf32, #tpu.memory_space<smem>>
    %1540 = vector.broadcast %1539 : f32 to vector<8x128xf32>
    %1541 = arith.mulf %1526, %1540 : vector<8x128xf32>
    %1542 = arith.addf %1509, %1541 : vector<8x128xf32>
    %c4_703 = arith.constant 4 : index
    %c25_704 = arith.constant 25 : index
    %1543 = memref.load %arg9[%c4_703, %c25_704] : memref<8x34xf32, #tpu.memory_space<smem>>
    %1544 = vector.broadcast %1543 : f32 to vector<8x128xf32>
    %1545 = arith.mulf %1526, %1544 : vector<8x128xf32>
    %1546 = arith.addf %1513, %1545 : vector<8x128xf32>
    %c5_705 = arith.constant 5 : index
    %c25_706 = arith.constant 25 : index
    %1547 = memref.load %arg9[%c5_705, %c25_706] : memref<8x34xf32, #tpu.memory_space<smem>>
    %1548 = vector.broadcast %1547 : f32 to vector<8x128xf32>
    %1549 = arith.mulf %1526, %1548 : vector<8x128xf32>
    %1550 = arith.addf %1517, %1549 : vector<8x128xf32>
    %c6_707 = arith.constant 6 : index
    %c25_708 = arith.constant 25 : index
    %1551 = memref.load %arg9[%c6_707, %c25_708] : memref<8x34xf32, #tpu.memory_space<smem>>
    %1552 = vector.broadcast %1551 : f32 to vector<8x128xf32>
    %1553 = arith.mulf %1526, %1552 : vector<8x128xf32>
    %1554 = arith.addf %1521, %1553 : vector<8x128xf32>
    %c7_709 = arith.constant 7 : index
    %c25_710 = arith.constant 25 : index
    %1555 = memref.load %arg9[%c7_709, %c25_710] : memref<8x34xf32, #tpu.memory_space<smem>>
    %1556 = vector.broadcast %1555 : f32 to vector<8x128xf32>
    %1557 = arith.mulf %1526, %1556 : vector<8x128xf32>
    %1558 = arith.addf %1525, %1557 : vector<8x128xf32>
    %1559 = arith.subf %1400, %1419 : vector<8x128xf32>
    %c0_711 = arith.constant 0 : index
    %c27 = arith.constant 27 : index
    %1560 = memref.load %arg9[%c0_711, %c27] : memref<8x34xf32, #tpu.memory_space<smem>>
    %1561 = vector.broadcast %1560 : f32 to vector<8x128xf32>
    %1562 = arith.mulf %1559, %1561 : vector<8x128xf32>
    %1563 = arith.addf %1530, %1562 : vector<8x128xf32>
    %c1_712 = arith.constant 1 : index
    %c27_713 = arith.constant 27 : index
    %1564 = memref.load %arg9[%c1_712, %c27_713] : memref<8x34xf32, #tpu.memory_space<smem>>
    %1565 = vector.broadcast %1564 : f32 to vector<8x128xf32>
    %1566 = arith.mulf %1559, %1565 : vector<8x128xf32>
    %1567 = arith.addf %1534, %1566 : vector<8x128xf32>
    %c2_714 = arith.constant 2 : index
    %c27_715 = arith.constant 27 : index
    %1568 = memref.load %arg9[%c2_714, %c27_715] : memref<8x34xf32, #tpu.memory_space<smem>>
    %1569 = vector.broadcast %1568 : f32 to vector<8x128xf32>
    %1570 = arith.mulf %1559, %1569 : vector<8x128xf32>
    %1571 = arith.addf %1538, %1570 : vector<8x128xf32>
    %c3_716 = arith.constant 3 : index
    %c27_717 = arith.constant 27 : index
    %1572 = memref.load %arg9[%c3_716, %c27_717] : memref<8x34xf32, #tpu.memory_space<smem>>
    %1573 = vector.broadcast %1572 : f32 to vector<8x128xf32>
    %1574 = arith.mulf %1559, %1573 : vector<8x128xf32>
    %1575 = arith.addf %1542, %1574 : vector<8x128xf32>
    %c4_718 = arith.constant 4 : index
    %c27_719 = arith.constant 27 : index
    %1576 = memref.load %arg9[%c4_718, %c27_719] : memref<8x34xf32, #tpu.memory_space<smem>>
    %1577 = vector.broadcast %1576 : f32 to vector<8x128xf32>
    %1578 = arith.mulf %1559, %1577 : vector<8x128xf32>
    %1579 = arith.addf %1546, %1578 : vector<8x128xf32>
    %c5_720 = arith.constant 5 : index
    %c27_721 = arith.constant 27 : index
    %1580 = memref.load %arg9[%c5_720, %c27_721] : memref<8x34xf32, #tpu.memory_space<smem>>
    %1581 = vector.broadcast %1580 : f32 to vector<8x128xf32>
    %1582 = arith.mulf %1559, %1581 : vector<8x128xf32>
    %1583 = arith.addf %1550, %1582 : vector<8x128xf32>
    %c6_722 = arith.constant 6 : index
    %c27_723 = arith.constant 27 : index
    %1584 = memref.load %arg9[%c6_722, %c27_723] : memref<8x34xf32, #tpu.memory_space<smem>>
    %1585 = vector.broadcast %1584 : f32 to vector<8x128xf32>
    %1586 = arith.mulf %1559, %1585 : vector<8x128xf32>
    %1587 = arith.addf %1554, %1586 : vector<8x128xf32>
    %c7_724 = arith.constant 7 : index
    %c27_725 = arith.constant 27 : index
    %1588 = memref.load %arg9[%c7_724, %c27_725] : memref<8x34xf32, #tpu.memory_space<smem>>
    %1589 = vector.broadcast %1588 : f32 to vector<8x128xf32>
    %1590 = arith.mulf %1559, %1589 : vector<8x128xf32>
    %1591 = arith.addf %1558, %1590 : vector<8x128xf32>
    %1592 = arith.subf %1400, %1422 : vector<8x128xf32>
    %c0_726 = arith.constant 0 : index
    %c29 = arith.constant 29 : index
    %1593 = memref.load %arg9[%c0_726, %c29] : memref<8x34xf32, #tpu.memory_space<smem>>
    %1594 = vector.broadcast %1593 : f32 to vector<8x128xf32>
    %1595 = arith.mulf %1592, %1594 : vector<8x128xf32>
    %1596 = arith.addf %1563, %1595 : vector<8x128xf32>
    %c1_727 = arith.constant 1 : index
    %c29_728 = arith.constant 29 : index
    %1597 = memref.load %arg9[%c1_727, %c29_728] : memref<8x34xf32, #tpu.memory_space<smem>>
    %1598 = vector.broadcast %1597 : f32 to vector<8x128xf32>
    %1599 = arith.mulf %1592, %1598 : vector<8x128xf32>
    %1600 = arith.addf %1567, %1599 : vector<8x128xf32>
    %c2_729 = arith.constant 2 : index
    %c29_730 = arith.constant 29 : index
    %1601 = memref.load %arg9[%c2_729, %c29_730] : memref<8x34xf32, #tpu.memory_space<smem>>
    %1602 = vector.broadcast %1601 : f32 to vector<8x128xf32>
    %1603 = arith.mulf %1592, %1602 : vector<8x128xf32>
    %1604 = arith.addf %1571, %1603 : vector<8x128xf32>
    %c3_731 = arith.constant 3 : index
    %c29_732 = arith.constant 29 : index
    %1605 = memref.load %arg9[%c3_731, %c29_732] : memref<8x34xf32, #tpu.memory_space<smem>>
    %1606 = vector.broadcast %1605 : f32 to vector<8x128xf32>
    %1607 = arith.mulf %1592, %1606 : vector<8x128xf32>
    %1608 = arith.addf %1575, %1607 : vector<8x128xf32>
    %c4_733 = arith.constant 4 : index
    %c29_734 = arith.constant 29 : index
    %1609 = memref.load %arg9[%c4_733, %c29_734] : memref<8x34xf32, #tpu.memory_space<smem>>
    %1610 = vector.broadcast %1609 : f32 to vector<8x128xf32>
    %1611 = arith.mulf %1592, %1610 : vector<8x128xf32>
    %1612 = arith.addf %1579, %1611 : vector<8x128xf32>
    %c5_735 = arith.constant 5 : index
    %c29_736 = arith.constant 29 : index
    %1613 = memref.load %arg9[%c5_735, %c29_736] : memref<8x34xf32, #tpu.memory_space<smem>>
    %1614 = vector.broadcast %1613 : f32 to vector<8x128xf32>
    %1615 = arith.mulf %1592, %1614 : vector<8x128xf32>
    %1616 = arith.addf %1583, %1615 : vector<8x128xf32>
    %c6_737 = arith.constant 6 : index
    %c29_738 = arith.constant 29 : index
    %1617 = memref.load %arg9[%c6_737, %c29_738] : memref<8x34xf32, #tpu.memory_space<smem>>
    %1618 = vector.broadcast %1617 : f32 to vector<8x128xf32>
    %1619 = arith.mulf %1592, %1618 : vector<8x128xf32>
    %1620 = arith.addf %1587, %1619 : vector<8x128xf32>
    %c7_739 = arith.constant 7 : index
    %c29_740 = arith.constant 29 : index
    %1621 = memref.load %arg9[%c7_739, %c29_740] : memref<8x34xf32, #tpu.memory_space<smem>>
    %1622 = vector.broadcast %1621 : f32 to vector<8x128xf32>
    %1623 = arith.mulf %1592, %1622 : vector<8x128xf32>
    %1624 = arith.addf %1591, %1623 : vector<8x128xf32>
    %1625 = arith.subf %1400, %1425 : vector<8x128xf32>
    %c0_741 = arith.constant 0 : index
    %c31 = arith.constant 31 : index
    %1626 = memref.load %arg9[%c0_741, %c31] : memref<8x34xf32, #tpu.memory_space<smem>>
    %1627 = vector.broadcast %1626 : f32 to vector<8x128xf32>
    %1628 = arith.mulf %1625, %1627 : vector<8x128xf32>
    %1629 = arith.addf %1596, %1628 : vector<8x128xf32>
    %c1_742 = arith.constant 1 : index
    %c31_743 = arith.constant 31 : index
    %1630 = memref.load %arg9[%c1_742, %c31_743] : memref<8x34xf32, #tpu.memory_space<smem>>
    %1631 = vector.broadcast %1630 : f32 to vector<8x128xf32>
    %1632 = arith.mulf %1625, %1631 : vector<8x128xf32>
    %1633 = arith.addf %1600, %1632 : vector<8x128xf32>
    %c2_744 = arith.constant 2 : index
    %c31_745 = arith.constant 31 : index
    %1634 = memref.load %arg9[%c2_744, %c31_745] : memref<8x34xf32, #tpu.memory_space<smem>>
    %1635 = vector.broadcast %1634 : f32 to vector<8x128xf32>
    %1636 = arith.mulf %1625, %1635 : vector<8x128xf32>
    %1637 = arith.addf %1604, %1636 : vector<8x128xf32>
    %c3_746 = arith.constant 3 : index
    %c31_747 = arith.constant 31 : index
    %1638 = memref.load %arg9[%c3_746, %c31_747] : memref<8x34xf32, #tpu.memory_space<smem>>
    %1639 = vector.broadcast %1638 : f32 to vector<8x128xf32>
    %1640 = arith.mulf %1625, %1639 : vector<8x128xf32>
    %1641 = arith.addf %1608, %1640 : vector<8x128xf32>
    %c4_748 = arith.constant 4 : index
    %c31_749 = arith.constant 31 : index
    %1642 = memref.load %arg9[%c4_748, %c31_749] : memref<8x34xf32, #tpu.memory_space<smem>>
    %1643 = vector.broadcast %1642 : f32 to vector<8x128xf32>
    %1644 = arith.mulf %1625, %1643 : vector<8x128xf32>
    %1645 = arith.addf %1612, %1644 : vector<8x128xf32>
    %c5_750 = arith.constant 5 : index
    %c31_751 = arith.constant 31 : index
    %1646 = memref.load %arg9[%c5_750, %c31_751] : memref<8x34xf32, #tpu.memory_space<smem>>
    %1647 = vector.broadcast %1646 : f32 to vector<8x128xf32>
    %1648 = arith.mulf %1625, %1647 : vector<8x128xf32>
    %1649 = arith.addf %1616, %1648 : vector<8x128xf32>
    %c6_752 = arith.constant 6 : index
    %c31_753 = arith.constant 31 : index
    %1650 = memref.load %arg9[%c6_752, %c31_753] : memref<8x34xf32, #tpu.memory_space<smem>>
    %1651 = vector.broadcast %1650 : f32 to vector<8x128xf32>
    %1652 = arith.mulf %1625, %1651 : vector<8x128xf32>
    %1653 = arith.addf %1620, %1652 : vector<8x128xf32>
    %c7_754 = arith.constant 7 : index
    %c31_755 = arith.constant 31 : index
    %1654 = memref.load %arg9[%c7_754, %c31_755] : memref<8x34xf32, #tpu.memory_space<smem>>
    %1655 = vector.broadcast %1654 : f32 to vector<8x128xf32>
    %1656 = arith.mulf %1625, %1655 : vector<8x128xf32>
    %1657 = arith.addf %1624, %1656 : vector<8x128xf32>
    %1658 = arith.subf %1400, %1426 : vector<8x128xf32>
    %c0_756 = arith.constant 0 : index
    %c33 = arith.constant 33 : index
    %1659 = memref.load %arg9[%c0_756, %c33] : memref<8x34xf32, #tpu.memory_space<smem>>
    %1660 = vector.broadcast %1659 : f32 to vector<8x128xf32>
    %1661 = arith.mulf %1658, %1660 : vector<8x128xf32>
    %1662 = arith.addf %1629, %1661 : vector<8x128xf32>
    %c1_757 = arith.constant 1 : index
    %c33_758 = arith.constant 33 : index
    %1663 = memref.load %arg9[%c1_757, %c33_758] : memref<8x34xf32, #tpu.memory_space<smem>>
    %1664 = vector.broadcast %1663 : f32 to vector<8x128xf32>
    %1665 = arith.mulf %1658, %1664 : vector<8x128xf32>
    %1666 = arith.addf %1633, %1665 : vector<8x128xf32>
    %c2_759 = arith.constant 2 : index
    %c33_760 = arith.constant 33 : index
    %1667 = memref.load %arg9[%c2_759, %c33_760] : memref<8x34xf32, #tpu.memory_space<smem>>
    %1668 = vector.broadcast %1667 : f32 to vector<8x128xf32>
    %1669 = arith.mulf %1658, %1668 : vector<8x128xf32>
    %1670 = arith.addf %1637, %1669 : vector<8x128xf32>
    %c3_761 = arith.constant 3 : index
    %c33_762 = arith.constant 33 : index
    %1671 = memref.load %arg9[%c3_761, %c33_762] : memref<8x34xf32, #tpu.memory_space<smem>>
    %1672 = vector.broadcast %1671 : f32 to vector<8x128xf32>
    %1673 = arith.mulf %1658, %1672 : vector<8x128xf32>
    %1674 = arith.addf %1641, %1673 : vector<8x128xf32>
    %c4_763 = arith.constant 4 : index
    %c33_764 = arith.constant 33 : index
    %1675 = memref.load %arg9[%c4_763, %c33_764] : memref<8x34xf32, #tpu.memory_space<smem>>
    %1676 = vector.broadcast %1675 : f32 to vector<8x128xf32>
    %1677 = arith.mulf %1658, %1676 : vector<8x128xf32>
    %1678 = arith.addf %1645, %1677 : vector<8x128xf32>
    %c5_765 = arith.constant 5 : index
    %c33_766 = arith.constant 33 : index
    %1679 = memref.load %arg9[%c5_765, %c33_766] : memref<8x34xf32, #tpu.memory_space<smem>>
    %1680 = vector.broadcast %1679 : f32 to vector<8x128xf32>
    %1681 = arith.mulf %1658, %1680 : vector<8x128xf32>
    %1682 = arith.addf %1649, %1681 : vector<8x128xf32>
    %c6_767 = arith.constant 6 : index
    %c33_768 = arith.constant 33 : index
    %1683 = memref.load %arg9[%c6_767, %c33_768] : memref<8x34xf32, #tpu.memory_space<smem>>
    %1684 = vector.broadcast %1683 : f32 to vector<8x128xf32>
    %1685 = arith.mulf %1658, %1684 : vector<8x128xf32>
    %1686 = arith.addf %1653, %1685 : vector<8x128xf32>
    %c7_769 = arith.constant 7 : index
    %c33_770 = arith.constant 33 : index
    %1687 = memref.load %arg9[%c7_769, %c33_770] : memref<8x34xf32, #tpu.memory_space<smem>>
    %1688 = vector.broadcast %1687 : f32 to vector<8x128xf32>
    %1689 = arith.mulf %1658, %1688 : vector<8x128xf32>
    %1690 = arith.addf %1657, %1689 : vector<8x128xf32>
    %c0_771 = arith.constant 0 : index
    %c0_772 = arith.constant 0 : index
    %c0_773 = arith.constant 0 : index
    %c0_774 = arith.constant 0 : index
    %1691 = vector.load %arg11[%c0_771, %c0_772, %c0_773, %c0_774] : memref<1x8x8x128xf32, #tpu.memory_space<vmem>>, vector<1x1x8x128xf32>
    %1692 = vector.shape_cast %1691 : vector<1x1x8x128xf32> to vector<8x128xf32>
    %1693 = vector.shape_cast %1662 : vector<8x128xf32> to vector<1x1x8x128xf32>
    tpu.vector_store %arg11[%c0_771, %c0_772, %c0_773, %c0_774], %1693 {strides = array<i32>} : memref<1x8x8x128xf32, #tpu.memory_space<vmem>>, vector<1x1x8x128xf32>,
    %c0_775 = arith.constant 0 : index
    %c1_776 = arith.constant 1 : index
    %c0_777 = arith.constant 0 : index
    %c0_778 = arith.constant 0 : index
    %1694 = vector.load %arg11[%c0_775, %c1_776, %c0_777, %c0_778] : memref<1x8x8x128xf32, #tpu.memory_space<vmem>>, vector<1x1x8x128xf32>
    %1695 = vector.shape_cast %1694 : vector<1x1x8x128xf32> to vector<8x128xf32>
    %1696 = vector.shape_cast %1666 : vector<8x128xf32> to vector<1x1x8x128xf32>
    tpu.vector_store %arg11[%c0_775, %c1_776, %c0_777, %c0_778], %1696 {strides = array<i32>} : memref<1x8x8x128xf32, #tpu.memory_space<vmem>>, vector<1x1x8x128xf32>,
    %c0_779 = arith.constant 0 : index
    %c2_780 = arith.constant 2 : index
    %c0_781 = arith.constant 0 : index
    %c0_782 = arith.constant 0 : index
    %1697 = vector.load %arg11[%c0_779, %c2_780, %c0_781, %c0_782] : memref<1x8x8x128xf32, #tpu.memory_space<vmem>>, vector<1x1x8x128xf32>
    %1698 = vector.shape_cast %1697 : vector<1x1x8x128xf32> to vector<8x128xf32>
    %1699 = vector.shape_cast %1670 : vector<8x128xf32> to vector<1x1x8x128xf32>
    tpu.vector_store %arg11[%c0_779, %c2_780, %c0_781, %c0_782], %1699 {strides = array<i32>} : memref<1x8x8x128xf32, #tpu.memory_space<vmem>>, vector<1x1x8x128xf32>,
    %c0_783 = arith.constant 0 : index
    %c3_784 = arith.constant 3 : index
    %c0_785 = arith.constant 0 : index
    %c0_786 = arith.constant 0 : index
    %1700 = vector.load %arg11[%c0_783, %c3_784, %c0_785, %c0_786] : memref<1x8x8x128xf32, #tpu.memory_space<vmem>>, vector<1x1x8x128xf32>
    %1701 = vector.shape_cast %1700 : vector<1x1x8x128xf32> to vector<8x128xf32>
    %1702 = vector.shape_cast %1674 : vector<8x128xf32> to vector<1x1x8x128xf32>
    tpu.vector_store %arg11[%c0_783, %c3_784, %c0_785, %c0_786], %1702 {strides = array<i32>} : memref<1x8x8x128xf32, #tpu.memory_space<vmem>>, vector<1x1x8x128xf32>,
    %c0_787 = arith.constant 0 : index
    %c4_788 = arith.constant 4 : index
    %c0_789 = arith.constant 0 : index
    %c0_790 = arith.constant 0 : index
    %1703 = vector.load %arg11[%c0_787, %c4_788, %c0_789, %c0_790] : memref<1x8x8x128xf32, #tpu.memory_space<vmem>>, vector<1x1x8x128xf32>
    %1704 = vector.shape_cast %1703 : vector<1x1x8x128xf32> to vector<8x128xf32>
    %1705 = vector.shape_cast %1678 : vector<8x128xf32> to vector<1x1x8x128xf32>
    tpu.vector_store %arg11[%c0_787, %c4_788, %c0_789, %c0_790], %1705 {strides = array<i32>} : memref<1x8x8x128xf32, #tpu.memory_space<vmem>>, vector<1x1x8x128xf32>,
    %c0_791 = arith.constant 0 : index
    %c5_792 = arith.constant 5 : index
    %c0_793 = arith.constant 0 : index
    %c0_794 = arith.constant 0 : index
    %1706 = vector.load %arg11[%c0_791, %c5_792, %c0_793, %c0_794] : memref<1x8x8x128xf32, #tpu.memory_space<vmem>>, vector<1x1x8x128xf32>
    %1707 = vector.shape_cast %1706 : vector<1x1x8x128xf32> to vector<8x128xf32>
    %1708 = vector.shape_cast %1682 : vector<8x128xf32> to vector<1x1x8x128xf32>
    tpu.vector_store %arg11[%c0_791, %c5_792, %c0_793, %c0_794], %1708 {strides = array<i32>} : memref<1x8x8x128xf32, #tpu.memory_space<vmem>>, vector<1x1x8x128xf32>,
    %c0_795 = arith.constant 0 : index
    %c6_796 = arith.constant 6 : index
    %c0_797 = arith.constant 0 : index
    %c0_798 = arith.constant 0 : index
    %1709 = vector.load %arg11[%c0_795, %c6_796, %c0_797, %c0_798] : memref<1x8x8x128xf32, #tpu.memory_space<vmem>>, vector<1x1x8x128xf32>
    %1710 = vector.shape_cast %1709 : vector<1x1x8x128xf32> to vector<8x128xf32>
    %1711 = vector.shape_cast %1686 : vector<8x128xf32> to vector<1x1x8x128xf32>
    tpu.vector_store %arg11[%c0_795, %c6_796, %c0_797, %c0_798], %1711 {strides = array<i32>} : memref<1x8x8x128xf32, #tpu.memory_space<vmem>>, vector<1x1x8x128xf32>,
    %c0_799 = arith.constant 0 : index
    %c7_800 = arith.constant 7 : index
    %c0_801 = arith.constant 0 : index
    %c0_802 = arith.constant 0 : index
    %1712 = vector.load %arg11[%c0_799, %c7_800, %c0_801, %c0_802] : memref<1x8x8x128xf32, #tpu.memory_space<vmem>>, vector<1x1x8x128xf32>
    %1713 = vector.shape_cast %1712 : vector<1x1x8x128xf32> to vector<8x128xf32>
    %1714 = vector.shape_cast %1690 : vector<8x128xf32> to vector<1x1x8x128xf32>
    tpu.vector_store %arg11[%c0_799, %c7_800, %c0_801, %c0_802], %1714 {strides = array<i32>} : memref<1x8x8x128xf32, #tpu.memory_space<vmem>>, vector<1x1x8x128xf32>,
    return
  }
  func.func @transform_1(%arg0: i32, %arg1: i32) -> (i32, i32) {
    %c0_i32 = arith.constant 0 : i32
    %c0_i32_0 = arith.constant 0 : i32
    %c0_i32_1 = arith.constant 0 : i32
    return %c0_i32, %c0_i32_0 : i32, i32
  }
  func.func @transform_2(%arg0: i32, %arg1: i32) -> i32 {
    %c0_i32 = arith.constant 0 : i32
    %c0_i32_0 = arith.constant 0 : i32
    return %c0_i32 : i32
  }
  func.func @transform_3(%arg0: i32, %arg1: i32) -> (i32, i32) {
    %c0_i32 = arith.constant 0 : i32
    %c0_i32_0 = arith.constant 0 : i32
    %c0_i32_1 = arith.constant 0 : i32
    return %c0_i32, %c0_i32_0 : i32, i32
  }
  func.func @transform_4(%arg0: i32, %arg1: i32) -> i32 {
    %c0_i32 = arith.constant 0 : i32
    %c0_i32_0 = arith.constant 0 : i32
    return %c0_i32 : i32
  }
  func.func @transform_5(%arg0: i32, %arg1: i32) -> (i32, i32) {
    %c0_i32 = arith.constant 0 : i32
    %c0_i32_0 = arith.constant 0 : i32
    %c0_i32_1 = arith.constant 0 : i32
    return %c0_i32, %c0_i32_0 : i32, i32
  }
  func.func @transform_6(%arg0: i32, %arg1: i32) -> i32 {
    %c0_i32 = arith.constant 0 : i32
    %c0_i32_0 = arith.constant 0 : i32
    return %c0_i32 : i32
  }
  func.func @transform_7(%arg0: i32, %arg1: i32) -> (i32, i32) {
    %c0_i32 = arith.constant 0 : i32
    %c0_i32_0 = arith.constant 0 : i32
    %c0_i32_1 = arith.constant 0 : i32
    return %c0_i32, %c0_i32_0 : i32, i32
  }
  func.func @transform_8(%arg0: i32, %arg1: i32) -> i32 {
    %c0_i32 = arith.constant 0 : i32
    %c0_i32_0 = arith.constant 0 : i32
    return %c0_i32 : i32
  }
  func.func @transform_9(%arg0: i32, %arg1: i32) -> (i32, i32, i32, i32) {
    %c0_i32 = arith.constant 0 : i32
    %c0_i32_0 = arith.constant 0 : i32
    %c0_i32_1 = arith.constant 0 : i32
    return %arg0, %c0_i32, %arg1, %c0_i32_0 : i32, i32, i32, i32
  }
}

</mosaic_0001>

<llo_original>
// kernel: tpu_custom_call.1
$region0: #{tpu_custom_call.1}
  #allocation0 [shape = 'u32[]', space=smem, size = 0x4, offset = 0x4, fixed_abs, tag = 'smem constant byte address 0x4 - core index']
  #allocation1 [shape = 'u32[144,128]{1,0:T(1,128)}', space=vmem, size = 0x12000, scoped, tag = 'internal scratch']
  #allocation2 [shape = 'f32[2,16,10,128]{3,2,1,0:T(8,128)}', space=vmem, size = 0x40000, scoped, tag = 'scratch operand']
  #allocation3 [shape = 's32[2]{0}', space=sflag, size = 0x8, scoped, tag = 'scratch operand']
  #allocation19 [shape = 's32[]', space=sflag, size = 0x4, offset = 0, fixed_abs, tag = 'sflag constant byte address 0x0 - dummy sync flag']
  #allocation20 [shape = 's32[]', space=sflag, size = 0x4, offset = 0, fixed_abs, tag = 'sflag constant byte address 0x0 - dummy sync flag']
  %s0 = inlined_call_operand.vmem [shape: f32[2,16,18,128], index: 0, kind: input, shape index: {}]
  %s1 = inlined_call_operand.vmem [shape: f32[2,16], index: 1, kind: input, shape index: {}]
  %s2 = inlined_call_operand.vmem [shape: f32[2], index: 2, kind: input, shape index: {}]
  %s3 = inlined_call_operand.vmem [shape: f32[2,16], index: 3, kind: input, shape index: {}]
  %s4 = inlined_call_operand.vmem [shape: f32[2], index: 4, kind: input, shape index: {}]
  %s5 = inlined_call_operand.vmem [shape: f32[2,4], index: 5, kind: input, shape index: {}]
  %s6 = inlined_call_operand.vmem [shape: f32[2], index: 6, kind: input, shape index: {}]
  %s7 = inlined_call_operand.vmem [shape: f32[8,34], index: 7, kind: input, shape index: {}]
  %s8 = inlined_call_operand.vmem [shape: f32[8], index: 8, kind: input, shape index: {}]
  %s9 = inlined_call_operand.hbm [shape: f32[2,8,16,128], index: 9, kind: output, shape index: {}]
  %s10 = sld [smem:[#allocation0]]
  $region179: #{tpu_custom_call.1} parent=0
    _
  %s12 = ssub.s32 1, %s10
  %s13 = scalar_select 0, %s12, %s10
  $region1: #{tpu_custom_call.1} parent=0
    #allocation4 [shape = 'u8[1024]{0}', space=smem, size = 0x400, scoped, tag = 'input window, operand 1, single buffered']
    #allocation5 [shape = 's32[2]{0}', space=sflag, size = 0x8, scoped, tag = 'scoped memory for tpu_custom_call.1']
    #allocation6 [shape = 's32[2]{0}', space=sflag, size = 0x8, scoped, tag = 'scoped memory for tpu_custom_call.1']
    #allocation7 [shape = 'u8[512]{0}', space=smem, size = 0x200, scoped, tag = 'input window, operand 2, single buffered']
    #allocation8 [shape = 's32[1]{0}', space=sflag, size = 0x4, scoped, tag = 'scoped memory for tpu_custom_call.1']
    #allocation9 [shape = 'u8[1024]{0}', space=smem, size = 0x400, scoped, tag = 'input window, operand 3, single buffered']
    #allocation10 [shape = 'u8[512]{0}', space=smem, size = 0x200, scoped, tag = 'input window, operand 4, single buffered']
    #allocation11 [shape = 's32[1]{0}', space=sflag, size = 0x4, scoped, tag = 'scoped memory for tpu_custom_call.1']
    #allocation12 [shape = 'u8[1024]{0}', space=smem, size = 0x400, scoped, tag = 'input window, operand 5, single buffered']
    #allocation13 [shape = 'u8[512]{0}', space=smem, size = 0x200, scoped, tag = 'input window, operand 6, single buffered']
    #allocation14 [shape = 's32[1]{0}', space=sflag, size = 0x4, scoped, tag = 'scoped memory for tpu_custom_call.1']
    #allocation15 [shape = 'u8[4096]{0}', space=smem, size = 0x1000, scoped, tag = 'input window, operand 7, single buffered']
    #allocation16 [shape = 'u8[512]{0}', space=smem, size = 0x200, scoped, tag = 'input window, operand 8, single buffered']
    #allocation17 [shape = 's32[1]{0}', space=sflag, size = 0x4, scoped, tag = 'scoped memory for tpu_custom_call.1']
    #allocation18 [shape = 'u8[65536]{0}', space=vmem, size = 0x10000, scoped, tag = 'output window, operand 0']
    %14 = vsyncpa [#allocation6], 0
    %15 = vsyncpa [#allocation8], 0
    %16 = vsyncpa [#allocation11], 0
    %17 = vsyncpa [#allocation14], 0
    %18 = vsyncpa [#allocation17], 0
    %19 = vsyncpa [#allocation5], 0
    %s20 = scalar_lea.sflag [#allocation5], 1
    %21 = vsyncpa %s20, 0
    loop: start=0, step=1, limit=6
    $region2: #{tpu_custom_call.1} parent=1 // loop_pre_header
      _
    $region3: #{tpu_custom_call.1} parent=1 // loop_header
      %s23 = sphi 0, %s27
      %p24 = scmp.ge.s32.totalorder %s23, 6
      %s30 = sphi 0, %s42
      %s31 = sphi 0, %s38
      %s32 = sphi 0, %s30
      %s33 = sphi 0, %s31
      %s34 = sphi 0, %s32
      %s35 = sphi 0, %s33
      %s43 = sphi 0, %s43
      %s45 = sphi 0, %s43
      %s46 = sphi 0, %s45
      %s60 = sphi 0, %s46
      %s64 = sphi 0, %s64
      %s66 = sphi 0, %s64
      %s67 = sphi 0, %s66
      %s81 = sphi 0, %s67
      %s85 = sphi 0, %s85
      %s87 = sphi 0, %s85
      %s88 = sphi 0, %s87
      %s102 = sphi 0, %s88
      %s106 = sphi 0, %s106
      %s108 = sphi 0, %s106
      %s109 = sphi 0, %s108
      %s123 = sphi 0, %s109
      %s127 = sphi 0, %s127
      %s129 = sphi 0, %s127
      %s130 = sphi 0, %s129
      %s144 = sphi 0, %s130
      %s148 = sphi 0, %s148
      %s150 = sphi 0, %s148
      %s151 = sphi 0, %s150
      %s165 = sphi 0, %s151
      %s169 = sphi 0, %s169
      %s171 = sphi 0, %s169
      %s172 = sphi 0, %s171
      %s186 = sphi 0, %s172
      %s190 = sphi 0, %s190
      %s192 = sphi 0, %s190
      %s193 = sphi 0, %s192
      %s207 = sphi 0, %s193
      %s215 = sphi 0, %s217
      %s218 = sphi 0, %s215
      %s219 = sphi 0, %s218
      %s235 = sphi 0, %s219
    $region4: #{tpu_custom_call.1} parent=1 // loop_header_branch
      %26 = sbr.rel (%p24) target = $region8
    $region5: #{tpu_custom_call.1} parent=1 // loop_body
      %s28 = ssub.s32 %s23, 1
      %s29 = ssub.s32 %s23, 2
      %s36 = sadd.s32 1, %s31
      %p37 = scmp.ge.s32.totalorder %s36, 2
      %s38 = scalar_select %p37, 0, %s36
      %s39 = sadd.s32 1, %s30
      %s40 = scalar_select %p37, %s39, %s30
      %p41 = scmp.ge.s32.totalorder %s40, 2
      %s42 = scalar_select %p41, 0, %s40
      %s44 = sadd.s32 %s43, 1
      %p47 = scmp.eq.s32.totalorder %s23, 3
      %p48 = scmp.ne.s32.totalorder %s43, %s45
      %p49 = scmp.eq.s32.totalorder %s23, 0
      %p50 = por %p48, %p49
      %p51 = scmp.ne.s32.totalorder %s43, %s45
      %p52 = scmp.eq.s32.totalorder %s28, 3
      %p53 = por %p51, %p52
      %p54 = scmp.ne.s32.totalorder %s45, %s46
      %p55 = scmp.eq.s32.totalorder %s28, 0
      %p56 = por %p54, %p55
      %p57 = scmp.ne.s32.totalorder %s45, %s46
      %p58 = scmp.eq.s32.totalorder %s29, 3
      %p59 = por %p57, %p58
      %p61 = scmp.ne.s32.totalorder %s46, %s60
      %p62 = scmp.eq.s32.totalorder %s29, 0
      %p63 = por %p61, %p62
      %s65 = sadd.s32 %s64, 1
      %p68 = scmp.eq.s32.totalorder %s23, 3
      %p69 = scmp.ne.s32.totalorder %s64, %s66
      %p70 = scmp.eq.s32.totalorder %s23, 0
      %p71 = por %p69, %p70
      %p72 = scmp.ne.s32.totalorder %s64, %s66
      %p73 = scmp.eq.s32.totalorder %s28, 3
      %p74 = por %p72, %p73
      %p75 = scmp.ne.s32.totalorder %s66, %s67
      %p76 = scmp.eq.s32.totalorder %s28, 0
      %p77 = por %p75, %p76
      %p78 = scmp.ne.s32.totalorder %s66, %s67
      %p79 = scmp.eq.s32.totalorder %s29, 3
      %p80 = por %p78, %p79
      %p82 = scmp.ne.s32.totalorder %s67, %s81
      %p83 = scmp.eq.s32.totalorder %s29, 0
      %p84 = por %p82, %p83
      %s86 = sadd.s32 %s85, 1
      %p89 = scmp.eq.s32.totalorder %s23, 3
      %p90 = scmp.ne.s32.totalorder %s85, %s87
      %p91 = scmp.eq.s32.totalorder %s23, 0
      %p92 = por %p90, %p91
      %p93 = scmp.ne.s32.totalorder %s85, %s87
      %p94 = scmp.eq.s32.totalorder %s28, 3
      %p95 = por %p93, %p94
      %p96 = scmp.ne.s32.totalorder %s87, %s88
      %p97 = scmp.eq.s32.totalorder %s28, 0
      %p98 = por %p96, %p97
      %p99 = scmp.ne.s32.totalorder %s87, %s88
      %p100 = scmp.eq.s32.totalorder %s29, 3
      %p101 = por %p99, %p100
      %p103 = scmp.ne.s32.totalorder %s88, %s102
      %p104 = scmp.eq.s32.totalorder %s29, 0
      %p105 = por %p103, %p104
      %s107 = sadd.s32 %s106, 1
      %p110 = scmp.eq.s32.totalorder %s23, 3
      %p111 = scmp.ne.s32.totalorder %s106, %s108
      %p112 = scmp.eq.s32.totalorder %s23, 0
      %p113 = por %p111, %p112
      %p114 = scmp.ne.s32.totalorder %s106, %s108
      %p115 = scmp.eq.s32.totalorder %s28, 3
      %p116 = por %p114, %p115
      %p117 = scmp.ne.s32.totalorder %s108, %s109
      %p118 = scmp.eq.s32.totalorder %s28, 0
      %p119 = por %p117, %p118
      %p120 = scmp.ne.s32.totalorder %s108, %s109
      %p121 = scmp.eq.s32.totalorder %s29, 3
      %p122 = por %p120, %p121
      %p124 = scmp.ne.s32.totalorder %s109, %s123
      %p125 = scmp.eq.s32.totalorder %s29, 0
      %p126 = por %p124, %p125
      %s128 = sadd.s32 %s127, 1
      %p131 = scmp.eq.s32.totalorder %s23, 3
      %p132 = scmp.ne.s32.totalorder %s127, %s129
      %p133 = scmp.eq.s32.totalorder %s23, 0
      %p134 = por %p132, %p133
      %p135 = scmp.ne.s32.totalorder %s127, %s129
      %p136 = scmp.eq.s32.totalorder %s28, 3
      %p137 = por %p135, %p136
      %p138 = scmp.ne.s32.totalorder %s129, %s130
      %p139 = scmp.eq.s32.totalorder %s28, 0
      %p140 = por %p138, %p139
      %p141 = scmp.ne.s32.totalorder %s129, %s130
      %p142 = scmp.eq.s32.totalorder %s29, 3
      %p143 = por %p141, %p142
      %p145 = scmp.ne.s32.totalorder %s130, %s144
      %p146 = scmp.eq.s32.totalorder %s29, 0
      %p147 = por %p145, %p146
      %s149 = sadd.s32 %s148, 1
      %p152 = scmp.eq.s32.totalorder %s23, 3
      %p153 = scmp.ne.s32.totalorder %s148, %s150
      %p154 = scmp.eq.s32.totalorder %s23, 0
      %p155 = por %p153, %p154
      %p156 = scmp.ne.s32.totalorder %s148, %s150
      %p157 = scmp.eq.s32.totalorder %s28, 3
      %p158 = por %p156, %p157
      %p159 = scmp.ne.s32.totalorder %s150, %s151
      %p160 = scmp.eq.s32.totalorder %s28, 0
      %p161 = por %p159, %p160
      %p162 = scmp.ne.s32.totalorder %s150, %s151
      %p163 = scmp.eq.s32.totalorder %s29, 3
      %p164 = por %p162, %p163
      %p166 = scmp.ne.s32.totalorder %s151, %s165
      %p167 = scmp.eq.s32.totalorder %s29, 0
      %p168 = por %p166, %p167
      %s170 = sadd.s32 %s169, 1
      %p173 = scmp.eq.s32.totalorder %s23, 3
      %p174 = scmp.ne.s32.totalorder %s169, %s171
      %p175 = scmp.eq.s32.totalorder %s23, 0
      %p176 = por %p174, %p175
      %p177 = scmp.ne.s32.totalorder %s169, %s171
      %p178 = scmp.eq.s32.totalorder %s28, 3
      %p179 = por %p177, %p178
      %p180 = scmp.ne.s32.totalorder %s171, %s172
      %p181 = scmp.eq.s32.totalorder %s28, 0
      %p182 = por %p180, %p181
      %p183 = scmp.ne.s32.totalorder %s171, %s172
      %p184 = scmp.eq.s32.totalorder %s29, 3
      %p185 = por %p183, %p184
      %p187 = scmp.ne.s32.totalorder %s172, %s186
      %p188 = scmp.eq.s32.totalorder %s29, 0
      %p189 = por %p187, %p188
      %s191 = sadd.s32 %s190, 1
      %p194 = scmp.eq.s32.totalorder %s23, 3
      %p195 = scmp.ne.s32.totalorder %s190, %s192
      %p196 = scmp.eq.s32.totalorder %s23, 0
      %p197 = por %p195, %p196
      %p198 = scmp.ne.s32.totalorder %s190, %s192
      %p199 = scmp.eq.s32.totalorder %s28, 3
      %p200 = por %p198, %p199
      %p201 = scmp.ne.s32.totalorder %s192, %s193
      %p202 = scmp.eq.s32.totalorder %s28, 0
      %p203 = por %p201, %p202
      %p204 = scmp.ne.s32.totalorder %s192, %s193
      %p205 = scmp.eq.s32.totalorder %s29, 3
      %p206 = por %p204, %p205
      %p208 = scmp.ne.s32.totalorder %s193, %s207
      %p209 = scmp.eq.s32.totalorder %s29, 0
      %p210 = por %p208, %p209
      %s211 = ssub.s32 %s30, %s42
      %s212 = ssub.s32 %s31, %s38
      %s213 = sor.u32 %s211, %s212
      %p214 = scmp.eq.s32.totalorder %s213, 0
      %s216 = sadd.s32 %s215, 1
      %s217 = scalar_select %p214, %s215, %s216
      %p220 = pneg %p214
      %p221 = scmp.eq.s32.totalorder %s23, 3
      %p222 = por %p220, %p221
      %p223 = scmp.ne.s32.totalorder %s215, %s218
      %p224 = scmp.eq.s32.totalorder %s23, 0
      %p225 = por %p223, %p224
      %p226 = scmp.ne.s32.totalorder %s215, %s218
      %p227 = scmp.eq.s32.totalorder %s28, 3
      %p228 = por %p226, %p227
      %p229 = scmp.ne.s32.totalorder %s218, %s219
      %p230 = scmp.eq.s32.totalorder %s28, 0
      %p231 = por %p229, %p230
      %p232 = scmp.ne.s32.totalorder %s218, %s219
      %p233 = scmp.eq.s32.totalorder %s29, 3
      %p234 = por %p232, %p233
      %p236 = scmp.ne.s32.totalorder %s219, %s235
      %p237 = scmp.eq.s32.totalorder %s29, 0
      %p238 = por %p236, %p237
      %p239 = scmp.le.s32.totalorder 1, %s23
      %p240 = scmp.lt.s32.totalorder %s23, 5
      %p241 = pnand %p239, %p240
      %p242 = pneg %p241
      // Predicated region
      $region9: #{tpu_custom_call.1} parent=5 // pred_check
        _
      $region10: #{tpu_custom_call.1} parent=5 // pred_check_branch
        %244 = sbr.rel (%p241) target = $region12
      $region11: #{tpu_custom_call.1} parent=5 // pred_region
        %s245 = ssub.s32 %s23, 1
        // Predicated region
        $region13: #{tpu_custom_call.1} parent=11 // pred_check
          %p246 = pneg %p56
        $region14: #{tpu_custom_call.1} parent=11 // pred_check_branch
          %248 = sbr.rel (%p246) target = $region16
        $region15: #{tpu_custom_call.1} parent=11 // pred_region
          %s250 = ssub.s32 32, 32
          %251 = vsyncadd [#allocation6], %s250
          %s253 = sshll.u32 %s1, 4
          %s254 = int_to_ptr.vmem [resolvable:$true] %s253
          %256 = dma.vmem_to_smem %s254, 32, [#allocation4], [#allocation6]
        $region16: #{tpu_custom_call.1} parent=11 // pred_fallthru
          _
        // Predicated region
        $region17: #{tpu_custom_call.1} parent=11 // pred_check
          %p257 = pneg %p77
        $region18: #{tpu_custom_call.1} parent=11 // pred_check_branch
          %259 = sbr.rel (%p257) target = $region20
        $region19: #{tpu_custom_call.1} parent=11 // pred_region
          %s261 = ssub.s32 16, 16
          %262 = vsyncadd [#allocation8], %s261
          %s264 = sshll.u32 %s2, 4
          %s265 = int_to_ptr.vmem [resolvable:$true] %s264
          %267 = dma.vmem_to_smem %s265, 16, [#allocation7], [#allocation8]
        $region20: #{tpu_custom_call.1} parent=11 // pred_fallthru
          _
        // Predicated region
        $region21: #{tpu_custom_call.1} parent=11 // pred_check
          %p268 = pneg %p98
        $region22: #{tpu_custom_call.1} parent=11 // pred_check_branch
          %270 = sbr.rel (%p268) target = $region24
        $region23: #{tpu_custom_call.1} parent=11 // pred_region
          %s272 = ssub.s32 32, 32
          %273 = vsyncadd [#allocation8], %s272
          %s275 = sshll.u32 %s3, 4
          %s276 = int_to_ptr.vmem [resolvable:$true] %s275
          %278 = dma.vmem_to_smem %s276, 32, [#allocation9], [#allocation8]
        $region24: #{tpu_custom_call.1} parent=11 // pred_fallthru
          _
        // Predicated region
        $region25: #{tpu_custom_call.1} parent=11 // pred_check
          %p279 = pneg %p119
        $region26: #{tpu_custom_call.1} parent=11 // pred_check_branch
          %281 = sbr.rel (%p279) target = $region28
        $region27: #{tpu_custom_call.1} parent=11 // pred_region
          %s283 = ssub.s32 16, 16
          %284 = vsyncadd [#allocation11], %s283
          %s286 = sshll.u32 %s4, 4
          %s287 = int_to_ptr.vmem [resolvable:$true] %s286
          %289 = dma.vmem_to_smem %s287, 16, [#allocation10], [#allocation11]
        $region28: #{tpu_custom_call.1} parent=11 // pred_fallthru
          _
        // Predicated region
        $region29: #{tpu_custom_call.1} parent=11 // pred_check
          %p290 = pneg %p140
        $region30: #{tpu_custom_call.1} parent=11 // pred_check_branch
          %292 = sbr.rel (%p290) target = $region32
        $region31: #{tpu_custom_call.1} parent=11 // pred_region
          %s294 = ssub.s32 32, 32
          %295 = vsyncadd [#allocation11], %s294
          %s297 = sshll.u32 %s5, 4
          %s298 = int_to_ptr.vmem [resolvable:$true] %s297
          %300 = dma.vmem_to_smem %s298, 32, [#allocation12], [#allocation11]
        $region32: #{tpu_custom_call.1} parent=11 // pred_fallthru
          _
        // Predicated region
        $region33: #{tpu_custom_call.1} parent=11 // pred_check
          %p301 = pneg %p161
        $region34: #{tpu_custom_call.1} parent=11 // pred_check_branch
          %303 = sbr.rel (%p301) target = $region36
        $region35: #{tpu_custom_call.1} parent=11 // pred_region
          %s305 = ssub.s32 16, 16
          %306 = vsyncadd [#allocation14], %s305
          %s308 = sshll.u32 %s6, 4
          %s309 = int_to_ptr.vmem [resolvable:$true] %s308
          %311 = dma.vmem_to_smem %s309, 16, [#allocation13], [#allocation14]
        $region36: #{tpu_custom_call.1} parent=11 // pred_fallthru
          _
        // Predicated region
        $region37: #{tpu_custom_call.1} parent=11 // pred_check
          %p312 = pneg %p182
        $region38: #{tpu_custom_call.1} parent=11 // pred_check_branch
          %314 = sbr.rel (%p312) target = $region40
        $region39: #{tpu_custom_call.1} parent=11 // pred_region
          %s316 = ssub.s32 128, 128
          %317 = vsyncadd [#allocation14], %s316
          %s319 = sshll.u32 %s7, 4
          %s320 = int_to_ptr.vmem [resolvable:$true] %s319
          %322 = dma.vmem_to_smem %s320, 128, [#allocation15], [#allocation14]
        $region40: #{tpu_custom_call.1} parent=11 // pred_fallthru
          _
        // Predicated region
        $region41: #{tpu_custom_call.1} parent=11 // pred_check
          %p323 = pneg %p203
        $region42: #{tpu_custom_call.1} parent=11 // pred_check_branch
          %325 = sbr.rel (%p323) target = $region44
        $region43: #{tpu_custom_call.1} parent=11 // pred_region
          %s327 = ssub.s32 16, 16
          %328 = vsyncadd [#allocation17], %s327
          %s330 = sshll.u32 %s8, 4
          %s331 = int_to_ptr.vmem [resolvable:$true] %s330
          %333 = dma.vmem_to_smem %s331, 16, [#allocation16], [#allocation17]
        $region44: #{tpu_custom_call.1} parent=11 // pred_fallthru
          _
      $region12: #{tpu_custom_call.1} parent=5 // pred_fallthru
        _
      %p334 = scmp.lt.s32.totalorder %s23, 4
      // Predicated region
      $region45: #{tpu_custom_call.1} parent=5 // pred_check
        %p335 = pneg %p334
      $region46: #{tpu_custom_call.1} parent=5 // pred_check_branch
        %337 = sbr.rel (%p335) target = $region48
      $region47: #{tpu_custom_call.1} parent=5 // pred_region
        _
      $region48: #{tpu_custom_call.1} parent=5 // pred_fallthru
        _
      %p338 = scmp.le.s32.totalorder 1, %s23
      %p339 = scmp.lt.s32.totalorder %s23, 5
      %p340 = pnand %p338, %p339
      %p341 = pneg %p340
      // Predicated region
      $region49: #{tpu_custom_call.1} parent=5 // pred_check
        _
      $region50: #{tpu_custom_call.1} parent=5 // pred_check_branch
        %343 = sbr.rel (%p340) target = $region52
      $region51: #{tpu_custom_call.1} parent=5 // pred_region
        %s344 = ssub.s32 %s23, 1
        // Predicated region
        $region53: #{tpu_custom_call.1} parent=51 // pred_check
          %p345 = pneg %p56
        $region54: #{tpu_custom_call.1} parent=51 // pred_check_branch
          %347 = sbr.rel (%p345) target = $region56
        $region55: #{tpu_custom_call.1} parent=51 // pred_region
          %348 = dma.done [#allocation6], 32
        $region56: #{tpu_custom_call.1} parent=51 // pred_fallthru
          _
        // Predicated region
        $region57: #{tpu_custom_call.1} parent=51 // pred_check
          %p349 = pneg %p77
        $region58: #{tpu_custom_call.1} parent=51 // pred_check_branch
          %351 = sbr.rel (%p349) target = $region60
        $region59: #{tpu_custom_call.1} parent=51 // pred_region
          %352 = dma.done [#allocation8], 16
        $region60: #{tpu_custom_call.1} parent=51 // pred_fallthru
          _
        // Predicated region
        $region61: #{tpu_custom_call.1} parent=51 // pred_check
          %p353 = pneg %p98
        $region62: #{tpu_custom_call.1} parent=51 // pred_check_branch
          %355 = sbr.rel (%p353) target = $region64
        $region63: #{tpu_custom_call.1} parent=51 // pred_region
          %356 = dma.done [#allocation8], 32
        $region64: #{tpu_custom_call.1} parent=51 // pred_fallthru
          _
        // Predicated region
        $region65: #{tpu_custom_call.1} parent=51 // pred_check
          %p357 = pneg %p119
        $region66: #{tpu_custom_call.1} parent=51 // pred_check_branch
          %359 = sbr.rel (%p357) target = $region68
        $region67: #{tpu_custom_call.1} parent=51 // pred_region
          %360 = dma.done [#allocation11], 16
        $region68: #{tpu_custom_call.1} parent=51 // pred_fallthru
          _
        // Predicated region
        $region69: #{tpu_custom_call.1} parent=51 // pred_check
          %p361 = pneg %p140
        $region70: #{tpu_custom_call.1} parent=51 // pred_check_branch
          %363 = sbr.rel (%p361) target = $region72
        $region71: #{tpu_custom_call.1} parent=51 // pred_region
          %364 = dma.done [#allocation11], 32
        $region72: #{tpu_custom_call.1} parent=51 // pred_fallthru
          _
        // Predicated region
        $region73: #{tpu_custom_call.1} parent=51 // pred_check
          %p365 = pneg %p161
        $region74: #{tpu_custom_call.1} parent=51 // pred_check_branch
          %367 = sbr.rel (%p365) target = $region76
        $region75: #{tpu_custom_call.1} parent=51 // pred_region
          %368 = dma.done [#allocation14], 16
        $region76: #{tpu_custom_call.1} parent=51 // pred_fallthru
          _
        // Predicated region
        $region77: #{tpu_custom_call.1} parent=51 // pred_check
          %p369 = pneg %p182
        $region78: #{tpu_custom_call.1} parent=51 // pred_check_branch
          %371 = sbr.rel (%p369) target = $region80
        $region79: #{tpu_custom_call.1} parent=51 // pred_region
          %372 = dma.done [#allocation14], 128
        $region80: #{tpu_custom_call.1} parent=51 // pred_fallthru
          _
        // Predicated region
        $region81: #{tpu_custom_call.1} parent=51 // pred_check
          %p373 = pneg %p203
        $region82: #{tpu_custom_call.1} parent=51 // pred_check_branch
          %375 = sbr.rel (%p373) target = $region84
        $region83: #{tpu_custom_call.1} parent=51 // pred_region
          %376 = dma.done [#allocation17], 16
        $region84: #{tpu_custom_call.1} parent=51 // pred_fallthru
          _
        %377 = sfence
        %p378 = pneg %p56
        %p379 = pneg %p53
        %p380 = pneg %p77
        %p381 = pneg %p74
        %p382 = pneg %p98
        %p383 = pneg %p95
        %p384 = pneg %p119
        %p385 = pneg %p116
        %p386 = pneg %p140
        %p387 = pneg %p137
        %p388 = pneg %p161
        %p389 = pneg %p158
        %p390 = pneg %p182
        %p391 = pneg %p179
        %p392 = pneg %p203
        %p393 = pneg %p200
        %p394 = pneg %p231
        %p395 = pneg %p228
        %s396 = sand.u32 %s218, 1
        %s397 = scalar_lea.sflag [#allocation5], %s396
        %s398 = sand.u32 %s218, 1
        %s399 = smul.addr %s398, 64
        %s400 = scalar_lea.vmem [#allocation18], %s399
        %p401 = scmp.lt.s32.totalorder %s33, 0
        %s402 = ssub.s32 0, %s33
        %s403 = scalar_select %p401, %s402, %s33
        %s404 = sand.u32 %s403, 1
        %s405 = ssub.s32 0, %s404
        %s406 = scalar_select %p401, %s405, %s404
        %p407 = scmp.ne.s32.totalorder %s406, 0
        %p408 = scmp.lt.s32.totalorder %s406, 0
        %p409 = pnand %p408, %p407
        %p410 = pneg %p409
        %s411 = sadd.s32 %s406, 2
        %s412 = scalar_select %p410, %s411, %s406
        %p413 = scmp.eq.s32.totalorder %s33, 0
        // Predicated region
        $region85: #{tpu_custom_call.1} parent=51 // pred_check
          %p414 = pneg %p413
        $region86: #{tpu_custom_call.1} parent=51 // pred_check_branch
          %416 = sbr.rel (%p414) target = $region88
        $region87: #{tpu_custom_call.1} parent=51 // pred_region
          %s417 = smul.u32 %s32, 384
          %s418 = scalar_lea.vmem %s0, %s417
          %p420 = scmp.lt.u32.totalorder 10, 8
          %p421 = pneg %p420
          // Predicated region
          $region89: #{tpu_custom_call.1} parent=87 // pred_check
            _
          $region90: #{tpu_custom_call.1} parent=87 // pred_check_branch
            %423 = sbr.rel (%p420) target = $region92
          $region91: #{tpu_custom_call.1} parent=87 // pred_region
            %s469 = sand.u32 10, 7
            %p470 = scmp.eq.s32.totalorder %s469, 0
            %p471 = pneg %p470
            // Predicated region
            $region104: #{tpu_custom_call.1} parent=91 // pred_check
              _
            $region105: #{tpu_custom_call.1} parent=91 // pred_check_branch
              %473 = sbr.rel (%p470) target = $region107
            $region106: #{tpu_custom_call.1} parent=91 // pred_region
              %s474 = sand.u32 10, 7
              %s475 = ssub.s32 10, %s474
              %s476 = scalar_lea.vmem %s418, %s475
              %s477 = ssub.s32 10, %s474
              %s478 = scalar_lea.vmem [#allocation2], %s477
              loop: start=0, step=1, limit=1
              $region108: #{tpu_custom_call.1} parent=106 // loop_pre_header
                _
              $region109: #{tpu_custom_call.1} parent=106 // loop_header
                %s480 = sphi 0, %s484
                %p481 = scmp.ge.s32.totalorder %s480, 1
                %s485 = sphi %s418, %s418
                %s486 = sphi [#allocation2], [#allocation2]
              $region110: #{tpu_custom_call.1} parent=106 // loop_header_branch
                %483 = sbr.rel (%p481) target = $region114
              $region111: #{tpu_custom_call.1} parent=106 // loop_body
                %v487 = vld [vmem:[%s485] sm:$0xff]
                %488 = vst [vmem:[%s486] sm:$0xff] %v487
                %v489 = vld [vmem:[%s485 + $0x18] sm:$0xff]
                %490 = vst [vmem:[%s486 + $0x10] sm:$0xff] %v489
                %v491 = vld [vmem:[%s485 + $0x30] sm:$0xff]
                %492 = vst [vmem:[%s486 + $0x20] sm:$0xff] %v491
                %v493 = vld [vmem:[%s485 + $0x48] sm:$0xff]
                %494 = vst [vmem:[%s486 + $0x30] sm:$0xff] %v493
                %v495 = vld [vmem:[%s485 + $0x60] sm:$0xff]
                %496 = vst [vmem:[%s486 + $0x40] sm:$0xff] %v495
                %v497 = vld [vmem:[%s485 + $0x78] sm:$0xff]
                %498 = vst [vmem:[%s486 + $0x50] sm:$0xff] %v497
                %v499 = vld [vmem:[%s485 + $0x90] sm:$0xff]
                %500 = vst [vmem:[%s486 + $0x60] sm:$0xff] %v499
                %v501 = vld [vmem:[%s485 + $0xa8] sm:$0xff]
                %502 = vst [vmem:[%s486 + $0x70] sm:$0xff] %v501
                %v503 = vld [vmem:[%s485 + $0xc0] sm:$0xff]
                %504 = vst [vmem:[%s486 + $0x80] sm:$0xff] %v503
                %v505 = vld [vmem:[%s485 + $0xd8] sm:$0xff]
                %506 = vst [vmem:[%s486 + $0x90] sm:$0xff] %v505
                %v507 = vld [vmem:[%s485 + $0xf0] sm:$0xff]
                %508 = vst [vmem:[%s486 + $0xa0] sm:$0xff] %v507
                %v509 = vld [vmem:[%s485 + $0x108] sm:$0xff]
                %510 = vst [vmem:[%s486 + $0xb0] sm:$0xff] %v509
                %v511 = vld [vmem:[%s485 + $0x120] sm:$0xff]
                %512 = vst [vmem:[%s486 + $0xc0] sm:$0xff] %v511
                %v513 = vld [vmem:[%s485 + $0x138] sm:$0xff]
                %514 = vst [vmem:[%s486 + $0xd0] sm:$0xff] %v513
                %v515 = vld [vmem:[%s485 + $0x150] sm:$0xff]
                %516 = vst [vmem:[%s486 + $0xe0] sm:$0xff] %v515
                %v517 = vld [vmem:[%s485 + $0x168] sm:$0xff]
                %518 = vst [vmem:[%s486 + $0xf0] sm:$0xff] %v517
              $region112: #{tpu_custom_call.1} parent=106 // loop_footer
                %s484 = sadd.s32 1, %s480
              $region113: #{tpu_custom_call.1} parent=106 // loop_footer_branch
                %479 = sbr.rel target = $region109
              $region114: #{tpu_custom_call.1} parent=106 // loop_exit
                _
              %s519 = sshll.u32 1, %s474
              %s520 = ssub.s32 %s519, 1
              loop: start=0, step=1, limit=1
              $region115: #{tpu_custom_call.1} parent=106 // loop_pre_header
                _
              $region116: #{tpu_custom_call.1} parent=106 // loop_header
                %s522 = sphi 0, %s526
                %p523 = scmp.ge.s32.totalorder %s522, 1
                %s527 = sphi %s476, %s476
                %s528 = sphi %s478, %s478
              $region117: #{tpu_custom_call.1} parent=106 // loop_header_branch
                %525 = sbr.rel (%p523) target = $region121
              $region118: #{tpu_custom_call.1} parent=106 // loop_body
                %v529 = vld [vmem:[%s527] sm:%s520]
                %530 = vst [vmem:[%s528] sm:%s520] %v529
                %v531 = vld [vmem:[%s527 + $0x18] sm:%s520]
                %532 = vst [vmem:[%s528 + $0x10] sm:%s520] %v531
                %v533 = vld [vmem:[%s527 + $0x30] sm:%s520]
                %534 = vst [vmem:[%s528 + $0x20] sm:%s520] %v533
                %v535 = vld [vmem:[%s527 + $0x48] sm:%s520]
                %536 = vst [vmem:[%s528 + $0x30] sm:%s520] %v535
                %v537 = vld [vmem:[%s527 + $0x60] sm:%s520]
                %538 = vst [vmem:[%s528 + $0x40] sm:%s520] %v537
                %v539 = vld [vmem:[%s527 + $0x78] sm:%s520]
                %540 = vst [vmem:[%s528 + $0x50] sm:%s520] %v539
                %v541 = vld [vmem:[%s527 + $0x90] sm:%s520]
                %542 = vst [vmem:[%s528 + $0x60] sm:%s520] %v541
                %v543 = vld [vmem:[%s527 + $0xa8] sm:%s520]
                %544 = vst [vmem:[%s528 + $0x70] sm:%s520] %v543
                %v545 = vld [vmem:[%s527 + $0xc0] sm:%s520]
                %546 = vst [vmem:[%s528 + $0x80] sm:%s520] %v545
                %v547 = vld [vmem:[%s527 + $0xd8] sm:%s520]
                %548 = vst [vmem:[%s528 + $0x90] sm:%s520] %v547
                %v549 = vld [vmem:[%s527 + $0xf0] sm:%s520]
                %550 = vst [vmem:[%s528 + $0xa0] sm:%s520] %v549
                %v551 = vld [vmem:[%s527 + $0x108] sm:%s520]
                %552 = vst [vmem:[%s528 + $0xb0] sm:%s520] %v551
                %v553 = vld [vmem:[%s527 + $0x120] sm:%s520]
                %554 = vst [vmem:[%s528 + $0xc0] sm:%s520] %v553
                %v555 = vld [vmem:[%s527 + $0x138] sm:%s520]
                %556 = vst [vmem:[%s528 + $0xd0] sm:%s520] %v555
                %v557 = vld [vmem:[%s527 + $0x150] sm:%s520]
                %558 = vst [vmem:[%s528 + $0xe0] sm:%s520] %v557
                %v559 = vld [vmem:[%s527 + $0x168] sm:%s520]
                %560 = vst [vmem:[%s528 + $0xf0] sm:%s520] %v559
              $region119: #{tpu_custom_call.1} parent=106 // loop_footer
                %s526 = sadd.s32 1, %s522
              $region120: #{tpu_custom_call.1} parent=106 // loop_footer_branch
                %521 = sbr.rel target = $region116
              $region121: #{tpu_custom_call.1} parent=106 // loop_exit
                _
            $region107: #{tpu_custom_call.1} parent=91 // pred_fallthru
              _
          $region92: #{tpu_custom_call.1} parent=87 // pred_fallthru
            _
          // Predicated region
          $region93: #{tpu_custom_call.1} parent=87 // pred_check
            %p424 = pneg %p420
          $region94: #{tpu_custom_call.1} parent=87 // pred_check_branch
            %426 = sbr.rel (%p424) target = $region96
          $region95: #{tpu_custom_call.1} parent=87 // pred_region
            %s427 = sshll.u32 1, 10
            %s428 = ssub.s32 %s427, 1
            loop: start=0, step=1, limit=1
            $region97: #{tpu_custom_call.1} parent=95 // loop_pre_header
              _
            $region98: #{tpu_custom_call.1} parent=95 // loop_header
              %s430 = sphi 0, %s434
              %p431 = scmp.ge.s32.totalorder %s430, 1
              %s435 = sphi %s418, %s418
              %s436 = sphi [#allocation2], [#allocation2]
            $region99: #{tpu_custom_call.1} parent=95 // loop_header_branch
              %433 = sbr.rel (%p431) target = $region103
            $region100: #{tpu_custom_call.1} parent=95 // loop_body
              %v437 = vld [vmem:[%s435] sm:%s428]
              %438 = vst [vmem:[%s436] sm:%s428] %v437
              %v439 = vld [vmem:[%s435 + $0x18] sm:%s428]
              %440 = vst [vmem:[%s436 + $0x10] sm:%s428] %v439
              %v441 = vld [vmem:[%s435 + $0x30] sm:%s428]
              %442 = vst [vmem:[%s436 + $0x20] sm:%s428] %v441
              %v443 = vld [vmem:[%s435 + $0x48] sm:%s428]
              %444 = vst [vmem:[%s436 + $0x30] sm:%s428] %v443
              %v445 = vld [vmem:[%s435 + $0x60] sm:%s428]
              %446 = vst [vmem:[%s436 + $0x40] sm:%s428] %v445
              %v447 = vld [vmem:[%s435 + $0x78] sm:%s428]
              %448 = vst [vmem:[%s436 + $0x50] sm:%s428] %v447
              %v449 = vld [vmem:[%s435 + $0x90] sm:%s428]
              %450 = vst [vmem:[%s436 + $0x60] sm:%s428] %v449
              %v451 = vld [vmem:[%s435 + $0xa8] sm:%s428]
              %452 = vst [vmem:[%s436 + $0x70] sm:%s428] %v451
              %v453 = vld [vmem:[%s435 + $0xc0] sm:%s428]
              %454 = vst [vmem:[%s436 + $0x80] sm:%s428] %v453
              %v455 = vld [vmem:[%s435 + $0xd8] sm:%s428]
              %456 = vst [vmem:[%s436 + $0x90] sm:%s428] %v455
              %v457 = vld [vmem:[%s435 + $0xf0] sm:%s428]
              %458 = vst [vmem:[%s436 + $0xa0] sm:%s428] %v457
              %v459 = vld [vmem:[%s435 + $0x108] sm:%s428]
              %460 = vst [vmem:[%s436 + $0xb0] sm:%s428] %v459
              %v461 = vld [vmem:[%s435 + $0x120] sm:%s428]
              %462 = vst [vmem:[%s436 + $0xc0] sm:%s428] %v461
              %v463 = vld [vmem:[%s435 + $0x138] sm:%s428]
              %464 = vst [vmem:[%s436 + $0xd0] sm:%s428] %v463
              %v465 = vld [vmem:[%s435 + $0x150] sm:%s428]
              %466 = vst [vmem:[%s436 + $0xe0] sm:%s428] %v465
              %v467 = vld [vmem:[%s435 + $0x168] sm:%s428]
              %468 = vst [vmem:[%s436 + $0xf0] sm:%s428] %v467
            $region101: #{tpu_custom_call.1} parent=95 // loop_footer
              %s434 = sadd.s32 1, %s430
            $region102: #{tpu_custom_call.1} parent=95 // loop_footer_branch
              %429 = sbr.rel target = $region98
            $region103: #{tpu_custom_call.1} parent=95 // loop_exit
              _
          $region96: #{tpu_custom_call.1} parent=87 // pred_fallthru
            _
          // Predicated region
          $region122: #{tpu_custom_call.1} parent=87 // pred_check
            _
          $region123: #{tpu_custom_call.1} parent=87 // pred_check_branch
            %563 = sbr.rel (0) target = $region125
          $region124: #{tpu_custom_call.1} parent=87 // pred_region
            %564 = vsyncadd [#allocation3], 2560
          $region125: #{tpu_custom_call.1} parent=87 // pred_fallthru
            _
        $region88: #{tpu_custom_call.1} parent=51 // pred_fallthru
          _
        %s565 = sadd.s32 %s33, 1
        %p566 = scmp.lt.s32.totalorder %s565, 2
        // Predicated region
        $region126: #{tpu_custom_call.1} parent=51 // pred_check
          %p567 = pneg %p566
        $region127: #{tpu_custom_call.1} parent=51 // pred_check_branch
          %569 = sbr.rel (%p567) target = $region129
        $region128: #{tpu_custom_call.1} parent=51 // pred_region
          %s570 = ssub.s32 1, %s412
          %s571 = smul.u32 %s565, 8
          %s572 = smul.u32 %s32, 384
          %s573 = sadd.s32 %s571, %s572
          %s574 = scalar_lea.vmem %s0, %s573
          %s575 = smul.u32 %s570, 256
          %s576 = scalar_lea.vmem [#allocation2], %s575
          %s577 = scalar_lea.sflag [#allocation3], %s570
          %p579 = scmp.lt.u32.totalorder 10, 8
          %p580 = pneg %p579
          // Predicated region
          $region130: #{tpu_custom_call.1} parent=128 // pred_check
            _
          $region131: #{tpu_custom_call.1} parent=128 // pred_check_branch
            %582 = sbr.rel (%p579) target = $region133
          $region132: #{tpu_custom_call.1} parent=128 // pred_region
            %s628 = sand.u32 10, 7
            %p629 = scmp.eq.s32.totalorder %s628, 0
            %p630 = pneg %p629
            // Predicated region
            $region145: #{tpu_custom_call.1} parent=132 // pred_check
              _
            $region146: #{tpu_custom_call.1} parent=132 // pred_check_branch
              %632 = sbr.rel (%p629) target = $region148
            $region147: #{tpu_custom_call.1} parent=132 // pred_region
              %s633 = sand.u32 10, 7
              %s634 = ssub.s32 10, %s633
              %s635 = scalar_lea.vmem %s574, %s634
              %s636 = ssub.s32 10, %s633
              %s637 = scalar_lea.vmem %s576, %s636 [#allocation2]
              loop: start=0, step=1, limit=1
              $region149: #{tpu_custom_call.1} parent=147 // loop_pre_header
                _
              $region150: #{tpu_custom_call.1} parent=147 // loop_header
                %s639 = sphi 0, %s643
                %p640 = scmp.ge.s32.totalorder %s639, 1
                %s644 = sphi %s574, %s574
                %s645 = sphi %s576, %s576
              $region151: #{tpu_custom_call.1} parent=147 // loop_header_branch
                %642 = sbr.rel (%p640) target = $region155
              $region152: #{tpu_custom_call.1} parent=147 // loop_body
                %v646 = vld [vmem:[%s644] sm:$0xff]
                %647 = vst [vmem:[%s645] sm:$0xff] %v646
                %v648 = vld [vmem:[%s644 + $0x18] sm:$0xff]
                %649 = vst [vmem:[%s645 + $0x10] sm:$0xff] %v648
                %v650 = vld [vmem:[%s644 + $0x30] sm:$0xff]
                %651 = vst [vmem:[%s645 + $0x20] sm:$0xff] %v650
                %v652 = vld [vmem:[%s644 + $0x48] sm:$0xff]
                %653 = vst [vmem:[%s645 + $0x30] sm:$0xff] %v652
                %v654 = vld [vmem:[%s644 + $0x60] sm:$0xff]
                %655 = vst [vmem:[%s645 + $0x40] sm:$0xff] %v654
                %v656 = vld [vmem:[%s644 + $0x78] sm:$0xff]
                %657 = vst [vmem:[%s645 + $0x50] sm:$0xff] %v656
                %v658 = vld [vmem:[%s644 + $0x90] sm:$0xff]
                %659 = vst [vmem:[%s645 + $0x60] sm:$0xff] %v658
                %v660 = vld [vmem:[%s644 + $0xa8] sm:$0xff]
                %661 = vst [vmem:[%s645 + $0x70] sm:$0xff] %v660
                %v662 = vld [vmem:[%s644 + $0xc0] sm:$0xff]
                %663 = vst [vmem:[%s645 + $0x80] sm:$0xff] %v662
                %v664 = vld [vmem:[%s644 + $0xd8] sm:$0xff]
                %665 = vst [vmem:[%s645 + $0x90] sm:$0xff] %v664
                %v666 = vld [vmem:[%s644 + $0xf0] sm:$0xff]
                %667 = vst [vmem:[%s645 + $0xa0] sm:$0xff] %v666
                %v668 = vld [vmem:[%s644 + $0x108] sm:$0xff]
                %669 = vst [vmem:[%s645 + $0xb0] sm:$0xff] %v668
                %v670 = vld [vmem:[%s644 + $0x120] sm:$0xff]
                %671 = vst [vmem:[%s645 + $0xc0] sm:$0xff] %v670
                %v672 = vld [vmem:[%s644 + $0x138] sm:$0xff]
                %673 = vst [vmem:[%s645 + $0xd0] sm:$0xff] %v672
                %v674 = vld [vmem:[%s644 + $0x150] sm:$0xff]
                %675 = vst [vmem:[%s645 + $0xe0] sm:$0xff] %v674
                %v676 = vld [vmem:[%s644 + $0x168] sm:$0xff]
                %677 = vst [vmem:[%s645 + $0xf0] sm:$0xff] %v676
              $region153: #{tpu_custom_call.1} parent=147 // loop_footer
                %s643 = sadd.s32 1, %s639
              $region154: #{tpu_custom_call.1} parent=147 // loop_footer_branch
                %638 = sbr.rel target = $region150
              $region155: #{tpu_custom_call.1} parent=147 // loop_exit
                _
              %s678 = sshll.u32 1, %s633
              %s679 = ssub.s32 %s678, 1
              loop: start=0, step=1, limit=1
              $region156: #{tpu_custom_call.1} parent=147 // loop_pre_header
                _
              $region157: #{tpu_custom_call.1} parent=147 // loop_header
                %s681 = sphi 0, %s685
                %p682 = scmp.ge.s32.totalorder %s681, 1
                %s686 = sphi %s635, %s635
                %s687 = sphi %s637, %s637
              $region158: #{tpu_custom_call.1} parent=147 // loop_header_branch
                %684 = sbr.rel (%p682) target = $region162
              $region159: #{tpu_custom_call.1} parent=147 // loop_body
                %v688 = vld [vmem:[%s686] sm:%s679]
                %689 = vst [vmem:[%s687] sm:%s679] %v688
                %v690 = vld [vmem:[%s686 + $0x18] sm:%s679]
                %691 = vst [vmem:[%s687 + $0x10] sm:%s679] %v690
                %v692 = vld [vmem:[%s686 + $0x30] sm:%s679]
                %693 = vst [vmem:[%s687 + $0x20] sm:%s679] %v692
                %v694 = vld [vmem:[%s686 + $0x48] sm:%s679]
                %695 = vst [vmem:[%s687 + $0x30] sm:%s679] %v694
                %v696 = vld [vmem:[%s686 + $0x60] sm:%s679]
                %697 = vst [vmem:[%s687 + $0x40] sm:%s679] %v696
                %v698 = vld [vmem:[%s686 + $0x78] sm:%s679]
                %699 = vst [vmem:[%s687 + $0x50] sm:%s679] %v698
                %v700 = vld [vmem:[%s686 + $0x90] sm:%s679]
                %701 = vst [vmem:[%s687 + $0x60] sm:%s679] %v700
                %v702 = vld [vmem:[%s686 + $0xa8] sm:%s679]
                %703 = vst [vmem:[%s687 + $0x70] sm:%s679] %v702
                %v704 = vld [vmem:[%s686 + $0xc0] sm:%s679]
                %705 = vst [vmem:[%s687 + $0x80] sm:%s679] %v704
                %v706 = vld [vmem:[%s686 + $0xd8] sm:%s679]
                %707 = vst [vmem:[%s687 + $0x90] sm:%s679] %v706
                %v708 = vld [vmem:[%s686 + $0xf0] sm:%s679]
                %709 = vst [vmem:[%s687 + $0xa0] sm:%s679] %v708
                %v710 = vld [vmem:[%s686 + $0x108] sm:%s679]
                %711 = vst [vmem:[%s687 + $0xb0] sm:%s679] %v710
                %v712 = vld [vmem:[%s686 + $0x120] sm:%s679]
                %713 = vst [vmem:[%s687 + $0xc0] sm:%s679] %v712
                %v714 = vld [vmem:[%s686 + $0x138] sm:%s679]
                %715 = vst [vmem:[%s687 + $0xd0] sm:%s679] %v714
                %v716 = vld [vmem:[%s686 + $0x150] sm:%s679]
                %717 = vst [vmem:[%s687 + $0xe0] sm:%s679] %v716
                %v718 = vld [vmem:[%s686 + $0x168] sm:%s679]
                %719 = vst [vmem:[%s687 + $0xf0] sm:%s679] %v718
              $region160: #{tpu_custom_call.1} parent=147 // loop_footer
                %s685 = sadd.s32 1, %s681
              $region161: #{tpu_custom_call.1} parent=147 // loop_footer_branch
                %680 = sbr.rel target = $region157
              $region162: #{tpu_custom_call.1} parent=147 // loop_exit
                _
            $region148: #{tpu_custom_call.1} parent=132 // pred_fallthru
              _
          $region133: #{tpu_custom_call.1} parent=128 // pred_fallthru
            _
          // Predicated region
          $region134: #{tpu_custom_call.1} parent=128 // pred_check
            %p583 = pneg %p579
          $region135: #{tpu_custom_call.1} parent=128 // pred_check_branch
            %585 = sbr.rel (%p583) target = $region137
          $region136: #{tpu_custom_call.1} parent=128 // pred_region
            %s586 = sshll.u32 1, 10
            %s587 = ssub.s32 %s586, 1
            loop: start=0, step=1, limit=1
            $region138: #{tpu_custom_call.1} parent=136 // loop_pre_header
              _
            $region139: #{tpu_custom_call.1} parent=136 // loop_header
              %s589 = sphi 0, %s593
              %p590 = scmp.ge.s32.totalorder %s589, 1
              %s594 = sphi %s574, %s574
              %s595 = sphi %s576, %s576
            $region140: #{tpu_custom_call.1} parent=136 // loop_header_branch
              %592 = sbr.rel (%p590) target = $region144
            $region141: #{tpu_custom_call.1} parent=136 // loop_body
              %v596 = vld [vmem:[%s594] sm:%s587]
              %597 = vst [vmem:[%s595] sm:%s587] %v596
              %v598 = vld [vmem:[%s594 + $0x18] sm:%s587]
              %599 = vst [vmem:[%s595 + $0x10] sm:%s587] %v598
              %v600 = vld [vmem:[%s594 + $0x30] sm:%s587]
              %601 = vst [vmem:[%s595 + $0x20] sm:%s587] %v600
              %v602 = vld [vmem:[%s594 + $0x48] sm:%s587]
              %603 = vst [vmem:[%s595 + $0x30] sm:%s587] %v602
              %v604 = vld [vmem:[%s594 + $0x60] sm:%s587]
              %605 = vst [vmem:[%s595 + $0x40] sm:%s587] %v604
              %v606 = vld [vmem:[%s594 + $0x78] sm:%s587]
              %607 = vst [vmem:[%s595 + $0x50] sm:%s587] %v606
              %v608 = vld [vmem:[%s594 + $0x90] sm:%s587]
              %609 = vst [vmem:[%s595 + $0x60] sm:%s587] %v608
              %v610 = vld [vmem:[%s594 + $0xa8] sm:%s587]
              %611 = vst [vmem:[%s595 + $0x70] sm:%s587] %v610
              %v612 = vld [vmem:[%s594 + $0xc0] sm:%s587]
              %613 = vst [vmem:[%s595 + $0x80] sm:%s587] %v612
              %v614 = vld [vmem:[%s594 + $0xd8] sm:%s587]
              %615 = vst [vmem:[%s595 + $0x90] sm:%s587] %v614
              %v616 = vld [vmem:[%s594 + $0xf0] sm:%s587]
              %617 = vst [vmem:[%s595 + $0xa0] sm:%s587] %v616
              %v618 = vld [vmem:[%s594 + $0x108] sm:%s587]
              %619 = vst [vmem:[%s595 + $0xb0] sm:%s587] %v618
              %v620 = vld [vmem:[%s594 + $0x120] sm:%s587]
              %621 = vst [vmem:[%s595 + $0xc0] sm:%s587] %v620
              %v622 = vld [vmem:[%s594 + $0x138] sm:%s587]
              %623 = vst [vmem:[%s595 + $0xd0] sm:%s587] %v622
              %v624 = vld [vmem:[%s594 + $0x150] sm:%s587]
              %625 = vst [vmem:[%s595 + $0xe0] sm:%s587] %v624
              %v626 = vld [vmem:[%s594 + $0x168] sm:%s587]
              %627 = vst [vmem:[%s595 + $0xf0] sm:%s587] %v626
            $region142: #{tpu_custom_call.1} parent=136 // loop_footer
              %s593 = sadd.s32 1, %s589
            $region143: #{tpu_custom_call.1} parent=136 // loop_footer_branch
              %588 = sbr.rel target = $region139
            $region144: #{tpu_custom_call.1} parent=136 // loop_exit
              _
          $region137: #{tpu_custom_call.1} parent=128 // pred_fallthru
            _
          // Predicated region
          $region163: #{tpu_custom_call.1} parent=128 // pred_check
            _
          $region164: #{tpu_custom_call.1} parent=128 // pred_check_branch
            %722 = sbr.rel (0) target = $region166
          $region165: #{tpu_custom_call.1} parent=128 // pred_region
            %723 = vsyncadd %s577, 2560
          $region166: #{tpu_custom_call.1} parent=128 // pred_fallthru
            _
        $region129: #{tpu_custom_call.1} parent=51 // pred_fallthru
          _
        %s724 = scalar_lea.sflag [#allocation3], %s412
        %s725 = smul.u32 16, 10
        %s726 = smul.u32 %s725, 1
        %s727 = sshll.u32 %s726, 4
        %728 = dma.done %s724, %s727
        %v729 = vlaneseq
        %v730 = vshrl.u32 %v729, 7
        %s731 = smul.u32 %s33, 8
        %v732 = vstv %s731
        %v733 = vadd.s32 %v730, %v732
        %v734 = vlaneseq
        %v735 = vand.u32 %v734, 127
        %vm736 = vcmp.ge.s32.totalorder %v733, 1
        %vm737 = vcmp.le.s32.totalorder %v733, 14
        %vm738 = vcmp.le.s32.totalorder %v735, 126
        %vm739 = vcmp.ge.s32.totalorder %v735, 1
        %v740 = vcvt.s32.f32 %v735
        %741 = vrot.lane.b32.xlu0 %v740, 127
        %v742 = vpop.permute.xlu0 %741
        %vm743 = vcmp.eq.s32.totalorder %v735, 127
        %v744 = vadd.s32 %v735, 1
        %v745 = vsel %vm743, 0, %v744
        %v746 = vcvt.s32.f32 %v745
        %v747 = vsub.f32 %v742, %v746
        %v748 = vand.u32 2147483647, %v747
        %749 = vadd.xlane.f32.xlu0 %v748
        %v750 = vpop.xlane.xlu0 %749
        %v751 = vrot.slane %v750, 4
        %v752 = vadd.f32 %v750, %v751
        %v753 = vrot.slane %v752, 2
        %v754 = vadd.f32 %v752, %v753
        %v755 = vrot.slane %v754, 1
        %v756 = vadd.f32 %v754, %v755
        %s757 = vtos %v756
        %p758 = scmp.eq.f32.partialorder %s757, 0.0
        %s759 = scalar_select %p758, 127, 1
        %s760 = ssub.s32 128, %s759
        %s761 = sld [smem:[#allocation16]]
        %v762 = vstv %s761
        %s763 = sld [smem:[#allocation16 + $0x1]]
        %v764 = vstv %s763
        %s765 = sld [smem:[#allocation16 + $0x2]]
        %v766 = vstv %s765
        %s767 = sld [smem:[#allocation16 + $0x3]]
        %v768 = vstv %s767
        %s769 = sld [smem:[#allocation16 + $0x4]]
        %v770 = vstv %s769
        %s771 = sld [smem:[#allocation16 + $0x5]]
        %v772 = vstv %s771
        %s773 = sld [smem:[#allocation16 + $0x6]]
        %v774 = vstv %s773
        %s775 = sld [smem:[#allocation16 + $0x7]]
        %v776 = vstv %s775
        %s777 = sld [smem:[#allocation7]]
        %v778 = vstv %s777
        %s779 = sld [smem:[#allocation7 + $0x1]]
        %v780 = vstv %s779
        %s781 = sld [smem:[#allocation10]]
        %v782 = vstv %s781
        %s783 = sld [smem:[#allocation10 + $0x1]]
        %v784 = vstv %s783
        %s785 = smul.u32 %s412, 256
        %s786 = scalar_lea.vmem [#allocation2], %s785
        %v787 = vld [vmem:[%s786] sm:$0xff]
        %v788 = vld [vmem:[%s786 + $0x8] sm:$0x3]
        %s789 = sld [smem:[#allocation15]]
        %v790 = vstv %s789
        %v791 = vmul.f32 %v787, %v790
        %v792 = vmul.f32 %v788, %v790
        %v793 = vadd.f32 %v762, %v791
        %v794 = vadd.f32 %v762, %v792
        %s795 = sld [smem:[#allocation15 + $0x80]]
        %v796 = vstv %s795
        %v797 = vmul.f32 %v787, %v796
        %v798 = vmul.f32 %v788, %v796
        %v799 = vadd.f32 %v764, %v797
        %v800 = vadd.f32 %v764, %v798
        %s801 = sld [smem:[#allocation15 + $0x100]]
        %v802 = vstv %s801
        %v803 = vmul.f32 %v787, %v802
        %v804 = vmul.f32 %v788, %v802
        %v805 = vadd.f32 %v766, %v803
        %v806 = vadd.f32 %v766, %v804
        %s807 = sld [smem:[#allocation15 + $0x180]]
        %v808 = vstv %s807
        %v809 = vmul.f32 %v787, %v808
        %v810 = vmul.f32 %v788, %v808
        %v811 = vadd.f32 %v768, %v809
        %v812 = vadd.f32 %v768, %v810
        %s813 = sld [smem:[#allocation15 + $0x200]]
        %v814 = vstv %s813
        %v815 = vmul.f32 %v787, %v814
        %v816 = vmul.f32 %v788, %v814
        %v817 = vadd.f32 %v770, %v815
        %v818 = vadd.f32 %v770, %v816
        %s819 = sld [smem:[#allocation15 + $0x280]]
        %v820 = vstv %s819
        %v821 = vmul.f32 %v787, %v820
        %v822 = vmul.f32 %v788, %v820
        %v823 = vadd.f32 %v772, %v821
        %v824 = vadd.f32 %v772, %v822
        %s825 = sld [smem:[#allocation15 + $0x300]]
        %v826 = vstv %s825
        %v827 = vmul.f32 %v787, %v826
        %v828 = vmul.f32 %v788, %v826
        %v829 = vadd.f32 %v774, %v827
        %v830 = vadd.f32 %v774, %v828
        %s831 = sld [smem:[#allocation15 + $0x380]]
        %v832 = vstv %s831
        %v833 = vmul.f32 %v787, %v832
        %v834 = vmul.f32 %v788, %v832
        %v835 = vadd.f32 %v776, %v833
        %v836 = vadd.f32 %v776, %v834
        %s837 = sld [smem:[#allocation4]]
        %v838 = vstv %s837
        %v839 = vmul.f32 %v787, %v838
        %v840 = vmul.f32 %v788, %v838
        %v841 = vadd.f32 %v778, %v839
        %v842 = vadd.f32 %v778, %v840
        %s843 = sld [smem:[#allocation9]]
        %v844 = vstv %s843
        %v845 = vmul.f32 %v787, %v844
        %v846 = vmul.f32 %v788, %v844
        %v847 = vadd.f32 %v782, %v845
        %v848 = vadd.f32 %v782, %v846
        %s849 = sld [smem:[#allocation4 + $0x80]]
        %v850 = vstv %s849
        %v851 = vmul.f32 %v787, %v850
        %v852 = vmul.f32 %v788, %v850
        %v853 = vadd.f32 %v780, %v851
        %v854 = vadd.f32 %v780, %v852
        %s855 = sld [smem:[#allocation9 + $0x80]]
        %v856 = vstv %s855
        %v857 = vmul.f32 %v787, %v856
        %v858 = vmul.f32 %v788, %v856
        %v859 = vadd.f32 %v784, %v857
        %v860 = vadd.f32 %v784, %v858
        %s861 = sadd.s32 16, %s785
        %s862 = scalar_lea.vmem [#allocation2], %s861
        %v863 = vld [vmem:[%s862] sm:$0xff]
        %v864 = vld [vmem:[%s862 + $0x8] sm:$0x3]
        %s865 = sld [smem:[#allocation15 + $0x1]]
        %v866 = vstv %s865
        %v867 = vmul.f32 %v863, %v866
        %v868 = vmul.f32 %v864, %v866
        %v869 = vadd.f32 %v793, %v867
        %v870 = vadd.f32 %v794, %v868
        %s871 = sld [smem:[#allocation15 + $0x81]]
        %v872 = vstv %s871
        %v873 = vmul.f32 %v863, %v872
        %v874 = vmul.f32 %v864, %v872
        %v875 = vadd.f32 %v799, %v873
        %v876 = vadd.f32 %v800, %v874
        %s877 = sld [smem:[#allocation15 + $0x101]]
        %v878 = vstv %s877
        %v879 = vmul.f32 %v863, %v878
        %v880 = vmul.f32 %v864, %v878
        %v881 = vadd.f32 %v805, %v879
        %v882 = vadd.f32 %v806, %v880
        %s883 = sld [smem:[#allocation15 + $0x181]]
        %v884 = vstv %s883
        %v885 = vmul.f32 %v863, %v884
        %v886 = vmul.f32 %v864, %v884
        %v887 = vadd.f32 %v811, %v885
        %v888 = vadd.f32 %v812, %v886
        %s889 = sld [smem:[#allocation15 + $0x201]]
        %v890 = vstv %s889
        %v891 = vmul.f32 %v863, %v890
        %v892 = vmul.f32 %v864, %v890
        %v893 = vadd.f32 %v817, %v891
        %v894 = vadd.f32 %v818, %v892
        %s895 = sld [smem:[#allocation15 + $0x281]]
        %v896 = vstv %s895
        %v897 = vmul.f32 %v863, %v896
        %v898 = vmul.f32 %v864, %v896
        %v899 = vadd.f32 %v823, %v897
        %v900 = vadd.f32 %v824, %v898
        %s901 = sld [smem:[#allocation15 + $0x301]]
        %v902 = vstv %s901
        %v903 = vmul.f32 %v863, %v902
        %v904 = vmul.f32 %v864, %v902
        %v905 = vadd.f32 %v829, %v903
        %v906 = vadd.f32 %v830, %v904
        %s907 = sld [smem:[#allocation15 + $0x381]]
        %v908 = vstv %s907
        %v909 = vmul.f32 %v863, %v908
        %v910 = vmul.f32 %v864, %v908
        %v911 = vadd.f32 %v835, %v909
        %v912 = vadd.f32 %v836, %v910
        %s913 = sld [smem:[#allocation4 + $0x1]]
        %v914 = vstv %s913
        %v915 = vmul.f32 %v863, %v914
        %v916 = vmul.f32 %v864, %v914
        %v917 = vadd.f32 %v841, %v915
        %v918 = vadd.f32 %v842, %v916
        %s919 = sld [smem:[#allocation9 + $0x1]]
        %v920 = vstv %s919
        %v921 = vmul.f32 %v863, %v920
        %v922 = vmul.f32 %v864, %v920
        %v923 = vadd.f32 %v847, %v921
        %v924 = vadd.f32 %v848, %v922
        %s925 = sld [smem:[#allocation4 + $0x81]]
        %v926 = vstv %s925
        %v927 = vmul.f32 %v863, %v926
        %v928 = vmul.f32 %v864, %v926
        %v929 = vadd.f32 %v853, %v927
        %v930 = vadd.f32 %v854, %v928
        %s931 = sld [smem:[#allocation9 + $0x81]]
        %v932 = vstv %s931
        %v933 = vmul.f32 %v863, %v932
        %v934 = vmul.f32 %v864, %v932
        %v935 = vadd.f32 %v859, %v933
        %v936 = vadd.f32 %v860, %v934
        %s937 = sadd.s32 32, %s785
        %s938 = scalar_lea.vmem [#allocation2], %s937
        %v939 = vld [vmem:[%s938] sm:$0xff]
        %v940 = vld [vmem:[%s938 + $0x8] sm:$0x3]
        %s941 = sld [smem:[#allocation15 + $0x2]]
        %v942 = vstv %s941
        %v943 = vmul.f32 %v939, %v942
        %v944 = vmul.f32 %v940, %v942
        %v945 = vadd.f32 %v869, %v943
        %v946 = vadd.f32 %v870, %v944
        %s947 = sld [smem:[#allocation15 + $0x82]]
        %v948 = vstv %s947
        %v949 = vmul.f32 %v939, %v948
        %v950 = vmul.f32 %v940, %v948
        %v951 = vadd.f32 %v875, %v949
        %v952 = vadd.f32 %v876, %v950
        %s953 = sld [smem:[#allocation15 + $0x102]]
        %v954 = vstv %s953
        %v955 = vmul.f32 %v939, %v954
        %v956 = vmul.f32 %v940, %v954
        %v957 = vadd.f32 %v881, %v955
        %v958 = vadd.f32 %v882, %v956
        %s959 = sld [smem:[#allocation15 + $0x182]]
        %v960 = vstv %s959
        %v961 = vmul.f32 %v939, %v960
        %v962 = vmul.f32 %v940, %v960
        %v963 = vadd.f32 %v887, %v961
        %v964 = vadd.f32 %v888, %v962
        %s965 = sld [smem:[#allocation15 + $0x202]]
        %v966 = vstv %s965
        %v967 = vmul.f32 %v939, %v966
        %v968 = vmul.f32 %v940, %v966
        %v969 = vadd.f32 %v893, %v967
        %v970 = vadd.f32 %v894, %v968
        %s971 = sld [smem:[#allocation15 + $0x282]]
        %v972 = vstv %s971
        %v973 = vmul.f32 %v939, %v972
        %v974 = vmul.f32 %v940, %v972
        %v975 = vadd.f32 %v899, %v973
        %v976 = vadd.f32 %v900, %v974
        %s977 = sld [smem:[#allocation15 + $0x302]]
        %v978 = vstv %s977
        %v979 = vmul.f32 %v939, %v978
        %v980 = vmul.f32 %v940, %v978
        %v981 = vadd.f32 %v905, %v979
        %v982 = vadd.f32 %v906, %v980
        %s983 = sld [smem:[#allocation15 + $0x382]]
        %v984 = vstv %s983
        %v985 = vmul.f32 %v939, %v984
        %v986 = vmul.f32 %v940, %v984
        %v987 = vadd.f32 %v911, %v985
        %v988 = vadd.f32 %v912, %v986
        %s989 = sld [smem:[#allocation4 + $0x2]]
        %v990 = vstv %s989
        %v991 = vmul.f32 %v939, %v990
        %v992 = vmul.f32 %v940, %v990
        %v993 = vadd.f32 %v917, %v991
        %v994 = vadd.f32 %v918, %v992
        %s995 = sld [smem:[#allocation9 + $0x2]]
        %v996 = vstv %s995
        %v997 = vmul.f32 %v939, %v996
        %v998 = vmul.f32 %v940, %v996
        %v999 = vadd.f32 %v923, %v997
        %v1000 = vadd.f32 %v924, %v998
        %s1001 = sld [smem:[#allocation4 + $0x82]]
        %v1002 = vstv %s1001
        %v1003 = vmul.f32 %v939, %v1002
        %v1004 = vmul.f32 %v940, %v1002
        %v1005 = vadd.f32 %v929, %v1003
        %v1006 = vadd.f32 %v930, %v1004
        %s1007 = sld [smem:[#allocation9 + $0x82]]
        %v1008 = vstv %s1007
        %v1009 = vmul.f32 %v939, %v1008
        %v1010 = vmul.f32 %v940, %v1008
        %v1011 = vadd.f32 %v935, %v1009
        %v1012 = vadd.f32 %v936, %v1010
        %s1013 = sadd.s32 48, %s785
        %s1014 = scalar_lea.vmem [#allocation2], %s1013
        %v1015 = vld [vmem:[%s1014] sm:$0xff]
        %v1016 = vld [vmem:[%s1014 + $0x8] sm:$0x3]
        %s1017 = sld [smem:[#allocation15 + $0x3]]
        %v1018 = vstv %s1017
        %v1019 = vmul.f32 %v1015, %v1018
        %v1020 = vmul.f32 %v1016, %v1018
        %v1021 = vadd.f32 %v945, %v1019
        %v1022 = vadd.f32 %v946, %v1020
        %s1023 = sld [smem:[#allocation15 + $0x83]]
        %v1024 = vstv %s1023
        %v1025 = vmul.f32 %v1015, %v1024
        %v1026 = vmul.f32 %v1016, %v1024
        %v1027 = vadd.f32 %v951, %v1025
        %v1028 = vadd.f32 %v952, %v1026
        %s1029 = sld [smem:[#allocation15 + $0x103]]
        %v1030 = vstv %s1029
        %v1031 = vmul.f32 %v1015, %v1030
        %v1032 = vmul.f32 %v1016, %v1030
        %v1033 = vadd.f32 %v957, %v1031
        %v1034 = vadd.f32 %v958, %v1032
        %s1035 = sld [smem:[#allocation15 + $0x183]]
        %v1036 = vstv %s1035
        %v1037 = vmul.f32 %v1015, %v1036
        %v1038 = vmul.f32 %v1016, %v1036
        %v1039 = vadd.f32 %v963, %v1037
        %v1040 = vadd.f32 %v964, %v1038
        %s1041 = sld [smem:[#allocation15 + $0x203]]
        %v1042 = vstv %s1041
        %v1043 = vmul.f32 %v1015, %v1042
        %v1044 = vmul.f32 %v1016, %v1042
        %v1045 = vadd.f32 %v969, %v1043
        %v1046 = vadd.f32 %v970, %v1044
        %s1047 = sld [smem:[#allocation15 + $0x283]]
        %v1048 = vstv %s1047
        %v1049 = vmul.f32 %v1015, %v1048
        %v1050 = vmul.f32 %v1016, %v1048
        %v1051 = vadd.f32 %v975, %v1049
        %v1052 = vadd.f32 %v976, %v1050
        %s1053 = sld [smem:[#allocation15 + $0x303]]
        %v1054 = vstv %s1053
        %v1055 = vmul.f32 %v1015, %v1054
        %v1056 = vmul.f32 %v1016, %v1054
        %v1057 = vadd.f32 %v981, %v1055
        %v1058 = vadd.f32 %v982, %v1056
        %s1059 = sld [smem:[#allocation15 + $0x383]]
        %v1060 = vstv %s1059
        %v1061 = vmul.f32 %v1015, %v1060
        %v1062 = vmul.f32 %v1016, %v1060
        %v1063 = vadd.f32 %v987, %v1061
        %v1064 = vadd.f32 %v988, %v1062
        %s1065 = sld [smem:[#allocation4 + $0x3]]
        %v1066 = vstv %s1065
        %v1067 = vmul.f32 %v1015, %v1066
        %v1068 = vmul.f32 %v1016, %v1066
        %v1069 = vadd.f32 %v993, %v1067
        %v1070 = vadd.f32 %v994, %v1068
        %s1071 = sld [smem:[#allocation9 + $0x3]]
        %v1072 = vstv %s1071
        %v1073 = vmul.f32 %v1015, %v1072
        %v1074 = vmul.f32 %v1016, %v1072
        %v1075 = vadd.f32 %v999, %v1073
        %v1076 = vadd.f32 %v1000, %v1074
        %s1077 = sld [smem:[#allocation4 + $0x83]]
        %v1078 = vstv %s1077
        %v1079 = vmul.f32 %v1015, %v1078
        %v1080 = vmul.f32 %v1016, %v1078
        %v1081 = vadd.f32 %v1005, %v1079
        %v1082 = vadd.f32 %v1006, %v1080
        %s1083 = sld [smem:[#allocation9 + $0x83]]
        %v1084 = vstv %s1083
        %v1085 = vmul.f32 %v1015, %v1084
        %v1086 = vmul.f32 %v1016, %v1084
        %v1087 = vadd.f32 %v1011, %v1085
        %v1088 = vadd.f32 %v1012, %v1086
        %s1089 = sadd.s32 64, %s785
        %s1090 = scalar_lea.vmem [#allocation2], %s1089
        %v1091 = vld [vmem:[%s1090] sm:$0xff]
        %v1092 = vld [vmem:[%s1090 + $0x8] sm:$0x3]
        %s1093 = sld [smem:[#allocation15 + $0x4]]
        %v1094 = vstv %s1093
        %v1095 = vmul.f32 %v1091, %v1094
        %v1096 = vmul.f32 %v1092, %v1094
        %v1097 = vadd.f32 %v1021, %v1095
        %v1098 = vadd.f32 %v1022, %v1096
        %s1099 = sld [smem:[#allocation15 + $0x84]]
        %v1100 = vstv %s1099
        %v1101 = vmul.f32 %v1091, %v1100
        %v1102 = vmul.f32 %v1092, %v1100
        %v1103 = vadd.f32 %v1027, %v1101
        %v1104 = vadd.f32 %v1028, %v1102
        %s1105 = sld [smem:[#allocation15 + $0x104]]
        %v1106 = vstv %s1105
        %v1107 = vmul.f32 %v1091, %v1106
        %v1108 = vmul.f32 %v1092, %v1106
        %v1109 = vadd.f32 %v1033, %v1107
        %v1110 = vadd.f32 %v1034, %v1108
        %s1111 = sld [smem:[#allocation15 + $0x184]]
        %v1112 = vstv %s1111
        %v1113 = vmul.f32 %v1091, %v1112
        %v1114 = vmul.f32 %v1092, %v1112
        %v1115 = vadd.f32 %v1039, %v1113
        %v1116 = vadd.f32 %v1040, %v1114
        %s1117 = sld [smem:[#allocation15 + $0x204]]
        %v1118 = vstv %s1117
        %v1119 = vmul.f32 %v1091, %v1118
        %v1120 = vmul.f32 %v1092, %v1118
        %v1121 = vadd.f32 %v1045, %v1119
        %v1122 = vadd.f32 %v1046, %v1120
        %s1123 = sld [smem:[#allocation15 + $0x284]]
        %v1124 = vstv %s1123
        %v1125 = vmul.f32 %v1091, %v1124
        %v1126 = vmul.f32 %v1092, %v1124
        %v1127 = vadd.f32 %v1051, %v1125
        %v1128 = vadd.f32 %v1052, %v1126
        %s1129 = sld [smem:[#allocation15 + $0x304]]
        %v1130 = vstv %s1129
        %v1131 = vmul.f32 %v1091, %v1130
        %v1132 = vmul.f32 %v1092, %v1130
        %v1133 = vadd.f32 %v1057, %v1131
        %v1134 = vadd.f32 %v1058, %v1132
        %s1135 = sld [smem:[#allocation15 + $0x384]]
        %v1136 = vstv %s1135
        %v1137 = vmul.f32 %v1091, %v1136
        %v1138 = vmul.f32 %v1092, %v1136
        %v1139 = vadd.f32 %v1063, %v1137
        %v1140 = vadd.f32 %v1064, %v1138
        %s1141 = sld [smem:[#allocation4 + $0x4]]
        %v1142 = vstv %s1141
        %v1143 = vmul.f32 %v1091, %v1142
        %v1144 = vmul.f32 %v1092, %v1142
        %v1145 = vadd.f32 %v1069, %v1143
        %v1146 = vadd.f32 %v1070, %v1144
        %s1147 = sld [smem:[#allocation9 + $0x4]]
        %v1148 = vstv %s1147
        %v1149 = vmul.f32 %v1091, %v1148
        %v1150 = vmul.f32 %v1092, %v1148
        %v1151 = vadd.f32 %v1075, %v1149
        %v1152 = vadd.f32 %v1076, %v1150
        %s1153 = sld [smem:[#allocation4 + $0x84]]
        %v1154 = vstv %s1153
        %v1155 = vmul.f32 %v1091, %v1154
        %v1156 = vmul.f32 %v1092, %v1154
        %v1157 = vadd.f32 %v1081, %v1155
        %v1158 = vadd.f32 %v1082, %v1156
        %s1159 = sld [smem:[#allocation9 + $0x84]]
        %v1160 = vstv %s1159
        %v1161 = vmul.f32 %v1091, %v1160
        %v1162 = vmul.f32 %v1092, %v1160
        %v1163 = vadd.f32 %v1087, %v1161
        %v1164 = vadd.f32 %v1088, %v1162
        %s1165 = sadd.s32 80, %s785
        %s1166 = scalar_lea.vmem [#allocation2], %s1165
        %v1167 = vld [vmem:[%s1166] sm:$0xff]
        %v1168 = vld [vmem:[%s1166 + $0x8] sm:$0x3]
        %s1169 = sld [smem:[#allocation15 + $0x5]]
        %v1170 = vstv %s1169
        %v1171 = vmul.f32 %v1167, %v1170
        %v1172 = vmul.f32 %v1168, %v1170
        %v1173 = vadd.f32 %v1097, %v1171
        %v1174 = vadd.f32 %v1098, %v1172
        %s1175 = sld [smem:[#allocation15 + $0x85]]
        %v1176 = vstv %s1175
        %v1177 = vmul.f32 %v1167, %v1176
        %v1178 = vmul.f32 %v1168, %v1176
        %v1179 = vadd.f32 %v1103, %v1177
        %v1180 = vadd.f32 %v1104, %v1178
        %s1181 = sld [smem:[#allocation15 + $0x105]]
        %v1182 = vstv %s1181
        %v1183 = vmul.f32 %v1167, %v1182
        %v1184 = vmul.f32 %v1168, %v1182
        %v1185 = vadd.f32 %v1109, %v1183
        %v1186 = vadd.f32 %v1110, %v1184
        %s1187 = sld [smem:[#allocation15 + $0x185]]
        %v1188 = vstv %s1187
        %v1189 = vmul.f32 %v1167, %v1188
        %v1190 = vmul.f32 %v1168, %v1188
        %v1191 = vadd.f32 %v1115, %v1189
        %v1192 = vadd.f32 %v1116, %v1190
        %s1193 = sld [smem:[#allocation15 + $0x205]]
        %v1194 = vstv %s1193
        %v1195 = vmul.f32 %v1167, %v1194
        %v1196 = vmul.f32 %v1168, %v1194
        %v1197 = vadd.f32 %v1121, %v1195
        %v1198 = vadd.f32 %v1122, %v1196
        %s1199 = sld [smem:[#allocation15 + $0x285]]
        %v1200 = vstv %s1199
        %v1201 = vmul.f32 %v1167, %v1200
        %v1202 = vmul.f32 %v1168, %v1200
        %v1203 = vadd.f32 %v1127, %v1201
        %v1204 = vadd.f32 %v1128, %v1202
        %s1205 = sld [smem:[#allocation15 + $0x305]]
        %v1206 = vstv %s1205
        %v1207 = vmul.f32 %v1167, %v1206
        %v1208 = vmul.f32 %v1168, %v1206
        %v1209 = vadd.f32 %v1133, %v1207
        %v1210 = vadd.f32 %v1134, %v1208
        %s1211 = sld [smem:[#allocation15 + $0x385]]
        %v1212 = vstv %s1211
        %v1213 = vmul.f32 %v1167, %v1212
        %v1214 = vmul.f32 %v1168, %v1212
        %v1215 = vadd.f32 %v1139, %v1213
        %v1216 = vadd.f32 %v1140, %v1214
        %s1217 = sld [smem:[#allocation4 + $0x5]]
        %v1218 = vstv %s1217
        %v1219 = vmul.f32 %v1167, %v1218
        %v1220 = vmul.f32 %v1168, %v1218
        %v1221 = vadd.f32 %v1145, %v1219
        %v1222 = vadd.f32 %v1146, %v1220
        %s1223 = sld [smem:[#allocation9 + $0x5]]
        %v1224 = vstv %s1223
        %v1225 = vmul.f32 %v1167, %v1224
        %v1226 = vmul.f32 %v1168, %v1224
        %v1227 = vadd.f32 %v1151, %v1225
        %v1228 = vadd.f32 %v1152, %v1226
        %s1229 = sld [smem:[#allocation4 + $0x85]]
        %v1230 = vstv %s1229
        %v1231 = vmul.f32 %v1167, %v1230
        %v1232 = vmul.f32 %v1168, %v1230
        %v1233 = vadd.f32 %v1157, %v1231
        %v1234 = vadd.f32 %v1158, %v1232
        %s1235 = sld [smem:[#allocation9 + $0x85]]
        %v1236 = vstv %s1235
        %v1237 = vmul.f32 %v1167, %v1236
        %v1238 = vmul.f32 %v1168, %v1236
        %v1239 = vadd.f32 %v1163, %v1237
        %v1240 = vadd.f32 %v1164, %v1238
        %s1241 = sadd.s32 96, %s785
        %s1242 = scalar_lea.vmem [#allocation2], %s1241
        %v1243 = vld [vmem:[%s1242] sm:$0xff]
        %v1244 = vld [vmem:[%s1242 + $0x8] sm:$0x3]
        %s1245 = sld [smem:[#allocation15 + $0x6]]
        %v1246 = vstv %s1245
        %v1247 = vmul.f32 %v1243, %v1246
        %v1248 = vmul.f32 %v1244, %v1246
        %v1249 = vadd.f32 %v1173, %v1247
        %v1250 = vadd.f32 %v1174, %v1248
        %s1251 = sld [smem:[#allocation15 + $0x86]]
        %v1252 = vstv %s1251
        %v1253 = vmul.f32 %v1243, %v1252
        %v1254 = vmul.f32 %v1244, %v1252
        %v1255 = vadd.f32 %v1179, %v1253
        %v1256 = vadd.f32 %v1180, %v1254
        %s1257 = sld [smem:[#allocation15 + $0x106]]
        %v1258 = vstv %s1257
        %v1259 = vmul.f32 %v1243, %v1258
        %v1260 = vmul.f32 %v1244, %v1258
        %v1261 = vadd.f32 %v1185, %v1259
        %v1262 = vadd.f32 %v1186, %v1260
        %s1263 = sld [smem:[#allocation15 + $0x186]]
        %v1264 = vstv %s1263
        %v1265 = vmul.f32 %v1243, %v1264
        %v1266 = vmul.f32 %v1244, %v1264
        %v1267 = vadd.f32 %v1191, %v1265
        %v1268 = vadd.f32 %v1192, %v1266
        %s1269 = sld [smem:[#allocation15 + $0x206]]
        %v1270 = vstv %s1269
        %v1271 = vmul.f32 %v1243, %v1270
        %v1272 = vmul.f32 %v1244, %v1270
        %v1273 = vadd.f32 %v1197, %v1271
        %v1274 = vadd.f32 %v1198, %v1272
        %s1275 = sld [smem:[#allocation15 + $0x286]]
        %v1276 = vstv %s1275
        %v1277 = vmul.f32 %v1243, %v1276
        %v1278 = vmul.f32 %v1244, %v1276
        %v1279 = vadd.f32 %v1203, %v1277
        %v1280 = vadd.f32 %v1204, %v1278
        %s1281 = sld [smem:[#allocation15 + $0x306]]
        %v1282 = vstv %s1281
        %v1283 = vmul.f32 %v1243, %v1282
        %v1284 = vmul.f32 %v1244, %v1282
        %v1285 = vadd.f32 %v1209, %v1283
        %v1286 = vadd.f32 %v1210, %v1284
        %s1287 = sld [smem:[#allocation15 + $0x386]]
        %v1288 = vstv %s1287
        %v1289 = vmul.f32 %v1243, %v1288
        %v1290 = vmul.f32 %v1244, %v1288
        %v1291 = vadd.f32 %v1215, %v1289
        %v1292 = vadd.f32 %v1216, %v1290
        %s1293 = sld [smem:[#allocation4 + $0x6]]
        %v1294 = vstv %s1293
        %v1295 = vmul.f32 %v1243, %v1294
        %v1296 = vmul.f32 %v1244, %v1294
        %v1297 = vadd.f32 %v1221, %v1295
        %v1298 = vadd.f32 %v1222, %v1296
        %s1299 = sld [smem:[#allocation9 + $0x6]]
        %v1300 = vstv %s1299
        %v1301 = vmul.f32 %v1243, %v1300
        %v1302 = vmul.f32 %v1244, %v1300
        %v1303 = vadd.f32 %v1227, %v1301
        %v1304 = vadd.f32 %v1228, %v1302
        %s1305 = sld [smem:[#allocation4 + $0x86]]
        %v1306 = vstv %s1305
        %v1307 = vmul.f32 %v1243, %v1306
        %v1308 = vmul.f32 %v1244, %v1306
        %v1309 = vadd.f32 %v1233, %v1307
        %v1310 = vadd.f32 %v1234, %v1308
        %s1311 = sld [smem:[#allocation9 + $0x86]]
        %v1312 = vstv %s1311
        %v1313 = vmul.f32 %v1243, %v1312
        %v1314 = vmul.f32 %v1244, %v1312
        %v1315 = vadd.f32 %v1239, %v1313
        %v1316 = vadd.f32 %v1240, %v1314
        %s1317 = sadd.s32 112, %s785
        %s1318 = scalar_lea.vmem [#allocation2], %s1317
        %v1319 = vld [vmem:[%s1318] sm:$0xff]
        %v1320 = vld [vmem:[%s1318 + $0x8] sm:$0x3]
        %s1321 = sld [smem:[#allocation15 + $0x7]]
        %v1322 = vstv %s1321
        %v1323 = vmul.f32 %v1319, %v1322
        %v1324 = vmul.f32 %v1320, %v1322
        %v1325 = vadd.f32 %v1249, %v1323
        %v1326 = vadd.f32 %v1250, %v1324
        %s1327 = sld [smem:[#allocation15 + $0x87]]
        %v1328 = vstv %s1327
        %v1329 = vmul.f32 %v1319, %v1328
        %v1330 = vmul.f32 %v1320, %v1328
        %v1331 = vadd.f32 %v1255, %v1329
        %v1332 = vadd.f32 %v1256, %v1330
        %s1333 = sld [smem:[#allocation15 + $0x107]]
        %v1334 = vstv %s1333
        %v1335 = vmul.f32 %v1319, %v1334
        %v1336 = vmul.f32 %v1320, %v1334
        %v1337 = vadd.f32 %v1261, %v1335
        %v1338 = vadd.f32 %v1262, %v1336
        %s1339 = sld [smem:[#allocation15 + $0x187]]
        %v1340 = vstv %s1339
        %v1341 = vmul.f32 %v1319, %v1340
        %v1342 = vmul.f32 %v1320, %v1340
        %v1343 = vadd.f32 %v1267, %v1341
        %v1344 = vadd.f32 %v1268, %v1342
        %s1345 = sld [smem:[#allocation15 + $0x207]]
        %v1346 = vstv %s1345
        %v1347 = vmul.f32 %v1319, %v1346
        %v1348 = vmul.f32 %v1320, %v1346
        %v1349 = vadd.f32 %v1273, %v1347
        %v1350 = vadd.f32 %v1274, %v1348
        %s1351 = sld [smem:[#allocation15 + $0x287]]
        %v1352 = vstv %s1351
        %v1353 = vmul.f32 %v1319, %v1352
        %v1354 = vmul.f32 %v1320, %v1352
        %v1355 = vadd.f32 %v1279, %v1353
        %v1356 = vadd.f32 %v1280, %v1354
        %s1357 = sld [smem:[#allocation15 + $0x307]]
        %v1358 = vstv %s1357
        %v1359 = vmul.f32 %v1319, %v1358
        %v1360 = vmul.f32 %v1320, %v1358
        %v1361 = vadd.f32 %v1285, %v1359
        %v1362 = vadd.f32 %v1286, %v1360
        %s1363 = sld [smem:[#allocation15 + $0x387]]
        %v1364 = vstv %s1363
        %v1365 = vmul.f32 %v1319, %v1364
        %v1366 = vmul.f32 %v1320, %v1364
        %v1367 = vadd.f32 %v1291, %v1365
        %v1368 = vadd.f32 %v1292, %v1366
        %s1369 = sld [smem:[#allocation4 + $0x7]]
        %v1370 = vstv %s1369
        %v1371 = vmul.f32 %v1319, %v1370
        %v1372 = vmul.f32 %v1320, %v1370
        %v1373 = vadd.f32 %v1297, %v1371
        %v1374 = vadd.f32 %v1298, %v1372
        %s1375 = sld [smem:[#allocation9 + $0x7]]
        %v1376 = vstv %s1375
        %v1377 = vmul.f32 %v1319, %v1376
        %v1378 = vmul.f32 %v1320, %v1376
        %v1379 = vadd.f32 %v1303, %v1377
        %v1380 = vadd.f32 %v1304, %v1378
        %s1381 = sld [smem:[#allocation4 + $0x87]]
        %v1382 = vstv %s1381
        %v1383 = vmul.f32 %v1319, %v1382
        %v1384 = vmul.f32 %v1320, %v1382
        %v1385 = vadd.f32 %v1309, %v1383
        %v1386 = vadd.f32 %v1310, %v1384
        %s1387 = sld [smem:[#allocation9 + $0x87]]
        %v1388 = vstv %s1387
        %v1389 = vmul.f32 %v1319, %v1388
        %v1390 = vmul.f32 %v1320, %v1388
        %v1391 = vadd.f32 %v1315, %v1389
        %v1392 = vadd.f32 %v1316, %v1390
        %s1393 = sadd.s32 128, %s785
        %s1394 = scalar_lea.vmem [#allocation2], %s1393
        %v1395 = vld [vmem:[%s1394] sm:$0xff]
        %v1396 = vld [vmem:[%s1394 + $0x8] sm:$0x3]
        %s1397 = sld [smem:[#allocation15 + $0x8]]
        %v1398 = vstv %s1397
        %v1399 = vmul.f32 %v1395, %v1398
        %v1400 = vmul.f32 %v1396, %v1398
        %v1401 = vadd.f32 %v1325, %v1399
        %v1402 = vadd.f32 %v1326, %v1400
        %s1403 = sld [smem:[#allocation15 + $0x88]]
        %v1404 = vstv %s1403
        %v1405 = vmul.f32 %v1395, %v1404
        %v1406 = vmul.f32 %v1396, %v1404
        %v1407 = vadd.f32 %v1331, %v1405
        %v1408 = vadd.f32 %v1332, %v1406
        %s1409 = sld [smem:[#allocation15 + $0x108]]
        %v1410 = vstv %s1409
        %v1411 = vmul.f32 %v1395, %v1410
        %v1412 = vmul.f32 %v1396, %v1410
        %v1413 = vadd.f32 %v1337, %v1411
        %v1414 = vadd.f32 %v1338, %v1412
        %s1415 = sld [smem:[#allocation15 + $0x188]]
        %v1416 = vstv %s1415
        %v1417 = vmul.f32 %v1395, %v1416
        %v1418 = vmul.f32 %v1396, %v1416
        %v1419 = vadd.f32 %v1343, %v1417
        %v1420 = vadd.f32 %v1344, %v1418
        %s1421 = sld [smem:[#allocation15 + $0x208]]
        %v1422 = vstv %s1421
        %v1423 = vmul.f32 %v1395, %v1422
        %v1424 = vmul.f32 %v1396, %v1422
        %v1425 = vadd.f32 %v1349, %v1423
        %v1426 = vadd.f32 %v1350, %v1424
        %s1427 = sld [smem:[#allocation15 + $0x288]]
        %v1428 = vstv %s1427
        %v1429 = vmul.f32 %v1395, %v1428
        %v1430 = vmul.f32 %v1396, %v1428
        %v1431 = vadd.f32 %v1355, %v1429
        %v1432 = vadd.f32 %v1356, %v1430
        %s1433 = sld [smem:[#allocation15 + $0x308]]
        %v1434 = vstv %s1433
        %v1435 = vmul.f32 %v1395, %v1434
        %v1436 = vmul.f32 %v1396, %v1434
        %v1437 = vadd.f32 %v1361, %v1435
        %v1438 = vadd.f32 %v1362, %v1436
        %s1439 = sld [smem:[#allocation15 + $0x388]]
        %v1440 = vstv %s1439
        %v1441 = vmul.f32 %v1395, %v1440
        %v1442 = vmul.f32 %v1396, %v1440
        %v1443 = vadd.f32 %v1367, %v1441
        %v1444 = vadd.f32 %v1368, %v1442
        %s1445 = sld [smem:[#allocation4 + $0x8]]
        %v1446 = vstv %s1445
        %v1447 = vmul.f32 %v1395, %v1446
        %v1448 = vmul.f32 %v1396, %v1446
        %v1449 = vadd.f32 %v1373, %v1447
        %v1450 = vadd.f32 %v1374, %v1448
        %s1451 = sld [smem:[#allocation9 + $0x8]]
        %v1452 = vstv %s1451
        %v1453 = vmul.f32 %v1395, %v1452
        %v1454 = vmul.f32 %v1396, %v1452
        %v1455 = vadd.f32 %v1379, %v1453
        %v1456 = vadd.f32 %v1380, %v1454
        %s1457 = sld [smem:[#allocation4 + $0x88]]
        %v1458 = vstv %s1457
        %v1459 = vmul.f32 %v1395, %v1458
        %v1460 = vmul.f32 %v1396, %v1458
        %v1461 = vadd.f32 %v1385, %v1459
        %v1462 = vadd.f32 %v1386, %v1460
        %s1463 = sld [smem:[#allocation9 + $0x88]]
        %v1464 = vstv %s1463
        %v1465 = vmul.f32 %v1395, %v1464
        %v1466 = vmul.f32 %v1396, %v1464
        %v1467 = vadd.f32 %v1391, %v1465
        %v1468 = vadd.f32 %v1392, %v1466
        %s1469 = sadd.s32 144, %s785
        %s1470 = scalar_lea.vmem [#allocation2], %s1469
        %v1471 = vld [vmem:[%s1470] sm:$0xff]
        %v1472 = vld [vmem:[%s1470 + $0x8] sm:$0x3]
        %s1473 = sld [smem:[#allocation15 + $0x9]]
        %v1474 = vstv %s1473
        %v1475 = vmul.f32 %v1471, %v1474
        %v1476 = vmul.f32 %v1472, %v1474
        %v1477 = vadd.f32 %v1401, %v1475
        %v1478 = vadd.f32 %v1402, %v1476
        %s1479 = sld [smem:[#allocation15 + $0x89]]
        %v1480 = vstv %s1479
        %v1481 = vmul.f32 %v1471, %v1480
        %v1482 = vmul.f32 %v1472, %v1480
        %v1483 = vadd.f32 %v1407, %v1481
        %v1484 = vadd.f32 %v1408, %v1482
        %s1485 = sld [smem:[#allocation15 + $0x109]]
        %v1486 = vstv %s1485
        %v1487 = vmul.f32 %v1471, %v1486
        %v1488 = vmul.f32 %v1472, %v1486
        %v1489 = vadd.f32 %v1413, %v1487
        %v1490 = vadd.f32 %v1414, %v1488
        %s1491 = sld [smem:[#allocation15 + $0x189]]
        %v1492 = vstv %s1491
        %v1493 = vmul.f32 %v1471, %v1492
        %v1494 = vmul.f32 %v1472, %v1492
        %v1495 = vadd.f32 %v1419, %v1493
        %v1496 = vadd.f32 %v1420, %v1494
        %s1497 = sld [smem:[#allocation15 + $0x209]]
        %v1498 = vstv %s1497
        %v1499 = vmul.f32 %v1471, %v1498
        %v1500 = vmul.f32 %v1472, %v1498
        %v1501 = vadd.f32 %v1425, %v1499
        %v1502 = vadd.f32 %v1426, %v1500
        %s1503 = sld [smem:[#allocation15 + $0x289]]
        %v1504 = vstv %s1503
        %v1505 = vmul.f32 %v1471, %v1504
        %v1506 = vmul.f32 %v1472, %v1504
        %v1507 = vadd.f32 %v1431, %v1505
        %v1508 = vadd.f32 %v1432, %v1506
        %s1509 = sld [smem:[#allocation15 + $0x309]]
        %v1510 = vstv %s1509
        %v1511 = vmul.f32 %v1471, %v1510
        %v1512 = vmul.f32 %v1472, %v1510
        %v1513 = vadd.f32 %v1437, %v1511
        %v1514 = vadd.f32 %v1438, %v1512
        %s1515 = sld [smem:[#allocation15 + $0x389]]
        %v1516 = vstv %s1515
        %v1517 = vmul.f32 %v1471, %v1516
        %v1518 = vmul.f32 %v1472, %v1516
        %v1519 = vadd.f32 %v1443, %v1517
        %v1520 = vadd.f32 %v1444, %v1518
        %s1521 = sld [smem:[#allocation4 + $0x9]]
        %v1522 = vstv %s1521
        %v1523 = vmul.f32 %v1471, %v1522
        %v1524 = vmul.f32 %v1472, %v1522
        %v1525 = vadd.f32 %v1449, %v1523
        %v1526 = vadd.f32 %v1450, %v1524
        %s1527 = sld [smem:[#allocation9 + $0x9]]
        %v1528 = vstv %s1527
        %v1529 = vmul.f32 %v1471, %v1528
        %v1530 = vmul.f32 %v1472, %v1528
        %v1531 = vadd.f32 %v1455, %v1529
        %v1532 = vadd.f32 %v1456, %v1530
        %s1533 = sld [smem:[#allocation4 + $0x89]]
        %v1534 = vstv %s1533
        %v1535 = vmul.f32 %v1471, %v1534
        %v1536 = vmul.f32 %v1472, %v1534
        %v1537 = vadd.f32 %v1461, %v1535
        %v1538 = vadd.f32 %v1462, %v1536
        %s1539 = sld [smem:[#allocation9 + $0x89]]
        %v1540 = vstv %s1539
        %v1541 = vmul.f32 %v1471, %v1540
        %v1542 = vmul.f32 %v1472, %v1540
        %v1543 = vadd.f32 %v1467, %v1541
        %v1544 = vadd.f32 %v1468, %v1542
        %s1545 = sadd.s32 160, %s785
        %s1546 = scalar_lea.vmem [#allocation2], %s1545
        %v1547 = vld [vmem:[%s1546] sm:$0xff]
        %v1548 = vld [vmem:[%s1546 + $0x8] sm:$0x3]
        %s1549 = sld [smem:[#allocation15 + $0xa]]
        %v1550 = vstv %s1549
        %v1551 = vmul.f32 %v1547, %v1550
        %v1552 = vmul.f32 %v1548, %v1550
        %v1553 = vadd.f32 %v1477, %v1551
        %v1554 = vadd.f32 %v1478, %v1552
        %s1555 = sld [smem:[#allocation15 + $0x8a]]
        %v1556 = vstv %s1555
        %v1557 = vmul.f32 %v1547, %v1556
        %v1558 = vmul.f32 %v1548, %v1556
        %v1559 = vadd.f32 %v1483, %v1557
        %v1560 = vadd.f32 %v1484, %v1558
        %s1561 = sld [smem:[#allocation15 + $0x10a]]
        %v1562 = vstv %s1561
        %v1563 = vmul.f32 %v1547, %v1562
        %v1564 = vmul.f32 %v1548, %v1562
        %v1565 = vadd.f32 %v1489, %v1563
        %v1566 = vadd.f32 %v1490, %v1564
        %s1567 = sld [smem:[#allocation15 + $0x18a]]
        %v1568 = vstv %s1567
        %v1569 = vmul.f32 %v1547, %v1568
        %v1570 = vmul.f32 %v1548, %v1568
        %v1571 = vadd.f32 %v1495, %v1569
        %v1572 = vadd.f32 %v1496, %v1570
        %s1573 = sld [smem:[#allocation15 + $0x20a]]
        %v1574 = vstv %s1573
        %v1575 = vmul.f32 %v1547, %v1574
        %v1576 = vmul.f32 %v1548, %v1574
        %v1577 = vadd.f32 %v1501, %v1575
        %v1578 = vadd.f32 %v1502, %v1576
        %s1579 = sld [smem:[#allocation15 + $0x28a]]
        %v1580 = vstv %s1579
        %v1581 = vmul.f32 %v1547, %v1580
        %v1582 = vmul.f32 %v1548, %v1580
        %v1583 = vadd.f32 %v1507, %v1581
        %v1584 = vadd.f32 %v1508, %v1582
        %s1585 = sld [smem:[#allocation15 + $0x30a]]
        %v1586 = vstv %s1585
        %v1587 = vmul.f32 %v1547, %v1586
        %v1588 = vmul.f32 %v1548, %v1586
        %v1589 = vadd.f32 %v1513, %v1587
        %v1590 = vadd.f32 %v1514, %v1588
        %s1591 = sld [smem:[#allocation15 + $0x38a]]
        %v1592 = vstv %s1591
        %v1593 = vmul.f32 %v1547, %v1592
        %v1594 = vmul.f32 %v1548, %v1592
        %v1595 = vadd.f32 %v1519, %v1593
        %v1596 = vadd.f32 %v1520, %v1594
        %s1597 = sld [smem:[#allocation4 + $0xa]]
        %v1598 = vstv %s1597
        %v1599 = vmul.f32 %v1547, %v1598
        %v1600 = vmul.f32 %v1548, %v1598
        %v1601 = vadd.f32 %v1525, %v1599
        %v1602 = vadd.f32 %v1526, %v1600
        %s1603 = sld [smem:[#allocation9 + $0xa]]
        %v1604 = vstv %s1603
        %v1605 = vmul.f32 %v1547, %v1604
        %v1606 = vmul.f32 %v1548, %v1604
        %v1607 = vadd.f32 %v1531, %v1605
        %v1608 = vadd.f32 %v1532, %v1606
        %s1609 = sld [smem:[#allocation4 + $0x8a]]
        %v1610 = vstv %s1609
        %v1611 = vmul.f32 %v1547, %v1610
        %v1612 = vmul.f32 %v1548, %v1610
        %v1613 = vadd.f32 %v1537, %v1611
        %v1614 = vadd.f32 %v1538, %v1612
        %s1615 = sld [smem:[#allocation9 + $0x8a]]
        %v1616 = vstv %s1615
        %v1617 = vmul.f32 %v1547, %v1616
        %v1618 = vmul.f32 %v1548, %v1616
        %v1619 = vadd.f32 %v1543, %v1617
        %v1620 = vadd.f32 %v1544, %v1618
        %s1621 = sadd.s32 176, %s785
        %s1622 = scalar_lea.vmem [#allocation2], %s1621
        %v1623 = vld [vmem:[%s1622] sm:$0xff]
        %v1624 = vld [vmem:[%s1622 + $0x8] sm:$0x3]
        %s1625 = sld [smem:[#allocation15 + $0xb]]
        %v1626 = vstv %s1625
        %v1627 = vmul.f32 %v1623, %v1626
        %v1628 = vmul.f32 %v1624, %v1626
        %v1629 = vadd.f32 %v1553, %v1627
        %v1630 = vadd.f32 %v1554, %v1628
        %s1631 = sld [smem:[#allocation15 + $0x8b]]
        %v1632 = vstv %s1631
        %v1633 = vmul.f32 %v1623, %v1632
        %v1634 = vmul.f32 %v1624, %v1632
        %v1635 = vadd.f32 %v1559, %v1633
        %v1636 = vadd.f32 %v1560, %v1634
        %s1637 = sld [smem:[#allocation15 + $0x10b]]
        %v1638 = vstv %s1637
        %v1639 = vmul.f32 %v1623, %v1638
        %v1640 = vmul.f32 %v1624, %v1638
        %v1641 = vadd.f32 %v1565, %v1639
        %v1642 = vadd.f32 %v1566, %v1640
        %s1643 = sld [smem:[#allocation15 + $0x18b]]
        %v1644 = vstv %s1643
        %v1645 = vmul.f32 %v1623, %v1644
        %v1646 = vmul.f32 %v1624, %v1644
        %v1647 = vadd.f32 %v1571, %v1645
        %v1648 = vadd.f32 %v1572, %v1646
        %s1649 = sld [smem:[#allocation15 + $0x20b]]
        %v1650 = vstv %s1649
        %v1651 = vmul.f32 %v1623, %v1650
        %v1652 = vmul.f32 %v1624, %v1650
        %v1653 = vadd.f32 %v1577, %v1651
        %v1654 = vadd.f32 %v1578, %v1652
        %s1655 = sld [smem:[#allocation15 + $0x28b]]
        %v1656 = vstv %s1655
        %v1657 = vmul.f32 %v1623, %v1656
        %v1658 = vmul.f32 %v1624, %v1656
        %v1659 = vadd.f32 %v1583, %v1657
        %v1660 = vadd.f32 %v1584, %v1658
        %s1661 = sld [smem:[#allocation15 + $0x30b]]
        %v1662 = vstv %s1661
        %v1663 = vmul.f32 %v1623, %v1662
        %v1664 = vmul.f32 %v1624, %v1662
        %v1665 = vadd.f32 %v1589, %v1663
        %v1666 = vadd.f32 %v1590, %v1664
        %s1667 = sld [smem:[#allocation15 + $0x38b]]
        %v1668 = vstv %s1667
        %v1669 = vmul.f32 %v1623, %v1668
        %v1670 = vmul.f32 %v1624, %v1668
        %v1671 = vadd.f32 %v1595, %v1669
        %v1672 = vadd.f32 %v1596, %v1670
        %s1673 = sld [smem:[#allocation4 + $0xb]]
        %v1674 = vstv %s1673
        %v1675 = vmul.f32 %v1623, %v1674
        %v1676 = vmul.f32 %v1624, %v1674
        %v1677 = vadd.f32 %v1601, %v1675
        %v1678 = vadd.f32 %v1602, %v1676
        %s1679 = sld [smem:[#allocation9 + $0xb]]
        %v1680 = vstv %s1679
        %v1681 = vmul.f32 %v1623, %v1680
        %v1682 = vmul.f32 %v1624, %v1680
        %v1683 = vadd.f32 %v1607, %v1681
        %v1684 = vadd.f32 %v1608, %v1682
        %s1685 = sld [smem:[#allocation4 + $0x8b]]
        %v1686 = vstv %s1685
        %v1687 = vmul.f32 %v1623, %v1686
        %v1688 = vmul.f32 %v1624, %v1686
        %v1689 = vadd.f32 %v1613, %v1687
        %v1690 = vadd.f32 %v1614, %v1688
        %s1691 = sld [smem:[#allocation9 + $0x8b]]
        %v1692 = vstv %s1691
        %v1693 = vmul.f32 %v1623, %v1692
        %v1694 = vmul.f32 %v1624, %v1692
        %v1695 = vadd.f32 %v1619, %v1693
        %v1696 = vadd.f32 %v1620, %v1694
        %s1697 = sadd.s32 192, %s785
        %s1698 = scalar_lea.vmem [#allocation2], %s1697
        %v1699 = vld [vmem:[%s1698] sm:$0xff]
        %v1700 = vld [vmem:[%s1698 + $0x8] sm:$0x3]
        %s1701 = sld [smem:[#allocation15 + $0xc]]
        %v1702 = vstv %s1701
        %v1703 = vmul.f32 %v1699, %v1702
        %v1704 = vmul.f32 %v1700, %v1702
        %v1705 = vadd.f32 %v1629, %v1703
        %v1706 = vadd.f32 %v1630, %v1704
        %s1707 = sld [smem:[#allocation15 + $0x8c]]
        %v1708 = vstv %s1707
        %v1709 = vmul.f32 %v1699, %v1708
        %v1710 = vmul.f32 %v1700, %v1708
        %v1711 = vadd.f32 %v1635, %v1709
        %v1712 = vadd.f32 %v1636, %v1710
        %s1713 = sld [smem:[#allocation15 + $0x10c]]
        %v1714 = vstv %s1713
        %v1715 = vmul.f32 %v1699, %v1714
        %v1716 = vmul.f32 %v1700, %v1714
        %v1717 = vadd.f32 %v1641, %v1715
        %v1718 = vadd.f32 %v1642, %v1716
        %s1719 = sld [smem:[#allocation15 + $0x18c]]
        %v1720 = vstv %s1719
        %v1721 = vmul.f32 %v1699, %v1720
        %v1722 = vmul.f32 %v1700, %v1720
        %v1723 = vadd.f32 %v1647, %v1721
        %v1724 = vadd.f32 %v1648, %v1722
        %s1725 = sld [smem:[#allocation15 + $0x20c]]
        %v1726 = vstv %s1725
        %v1727 = vmul.f32 %v1699, %v1726
        %v1728 = vmul.f32 %v1700, %v1726
        %v1729 = vadd.f32 %v1653, %v1727
        %v1730 = vadd.f32 %v1654, %v1728
        %s1731 = sld [smem:[#allocation15 + $0x28c]]
        %v1732 = vstv %s1731
        %v1733 = vmul.f32 %v1699, %v1732
        %v1734 = vmul.f32 %v1700, %v1732
        %v1735 = vadd.f32 %v1659, %v1733
        %v1736 = vadd.f32 %v1660, %v1734
        %s1737 = sld [smem:[#allocation15 + $0x30c]]
        %v1738 = vstv %s1737
        %v1739 = vmul.f32 %v1699, %v1738
        %v1740 = vmul.f32 %v1700, %v1738
        %v1741 = vadd.f32 %v1665, %v1739
        %v1742 = vadd.f32 %v1666, %v1740
        %s1743 = sld [smem:[#allocation15 + $0x38c]]
        %v1744 = vstv %s1743
        %v1745 = vmul.f32 %v1699, %v1744
        %v1746 = vmul.f32 %v1700, %v1744
        %v1747 = vadd.f32 %v1671, %v1745
        %v1748 = vadd.f32 %v1672, %v1746
        %s1749 = sld [smem:[#allocation4 + $0xc]]
        %v1750 = vstv %s1749
        %v1751 = vmul.f32 %v1699, %v1750
        %v1752 = vmul.f32 %v1700, %v1750
        %v1753 = vadd.f32 %v1677, %v1751
        %v1754 = vadd.f32 %v1678, %v1752
        %s1755 = sld [smem:[#allocation9 + $0xc]]
        %v1756 = vstv %s1755
        %v1757 = vmul.f32 %v1699, %v1756
        %v1758 = vmul.f32 %v1700, %v1756
        %v1759 = vadd.f32 %v1683, %v1757
        %v1760 = vadd.f32 %v1684, %v1758
        %s1761 = sld [smem:[#allocation4 + $0x8c]]
        %v1762 = vstv %s1761
        %v1763 = vmul.f32 %v1699, %v1762
        %v1764 = vmul.f32 %v1700, %v1762
        %v1765 = vadd.f32 %v1689, %v1763
        %v1766 = vadd.f32 %v1690, %v1764
        %s1767 = sld [smem:[#allocation9 + $0x8c]]
        %v1768 = vstv %s1767
        %v1769 = vmul.f32 %v1699, %v1768
        %v1770 = vmul.f32 %v1700, %v1768
        %v1771 = vadd.f32 %v1695, %v1769
        %v1772 = vadd.f32 %v1696, %v1770
        %s1773 = sadd.s32 208, %s785
        %s1774 = scalar_lea.vmem [#allocation2], %s1773
        %v1775 = vld [vmem:[%s1774] sm:$0xff]
        %v1776 = vld [vmem:[%s1774 + $0x8] sm:$0x3]
        %s1777 = sld [smem:[#allocation15 + $0xd]]
        %v1778 = vstv %s1777
        %v1779 = vmul.f32 %v1775, %v1778
        %v1780 = vmul.f32 %v1776, %v1778
        %v1781 = vadd.f32 %v1705, %v1779
        %v1782 = vadd.f32 %v1706, %v1780
        %s1783 = sld [smem:[#allocation15 + $0x8d]]
        %v1784 = vstv %s1783
        %v1785 = vmul.f32 %v1775, %v1784
        %v1786 = vmul.f32 %v1776, %v1784
        %v1787 = vadd.f32 %v1711, %v1785
        %v1788 = vadd.f32 %v1712, %v1786
        %s1789 = sld [smem:[#allocation15 + $0x10d]]
        %v1790 = vstv %s1789
        %v1791 = vmul.f32 %v1775, %v1790
        %v1792 = vmul.f32 %v1776, %v1790
        %v1793 = vadd.f32 %v1717, %v1791
        %v1794 = vadd.f32 %v1718, %v1792
        %s1795 = sld [smem:[#allocation15 + $0x18d]]
        %v1796 = vstv %s1795
        %v1797 = vmul.f32 %v1775, %v1796
        %v1798 = vmul.f32 %v1776, %v1796
        %v1799 = vadd.f32 %v1723, %v1797
        %v1800 = vadd.f32 %v1724, %v1798
        %s1801 = sld [smem:[#allocation15 + $0x20d]]
        %v1802 = vstv %s1801
        %v1803 = vmul.f32 %v1775, %v1802
        %v1804 = vmul.f32 %v1776, %v1802
        %v1805 = vadd.f32 %v1729, %v1803
        %v1806 = vadd.f32 %v1730, %v1804
        %s1807 = sld [smem:[#allocation15 + $0x28d]]
        %v1808 = vstv %s1807
        %v1809 = vmul.f32 %v1775, %v1808
        %v1810 = vmul.f32 %v1776, %v1808
        %v1811 = vadd.f32 %v1735, %v1809
        %v1812 = vadd.f32 %v1736, %v1810
        %s1813 = sld [smem:[#allocation15 + $0x30d]]
        %v1814 = vstv %s1813
        %v1815 = vmul.f32 %v1775, %v1814
        %v1816 = vmul.f32 %v1776, %v1814
        %v1817 = vadd.f32 %v1741, %v1815
        %v1818 = vadd.f32 %v1742, %v1816
        %s1819 = sld [smem:[#allocation15 + $0x38d]]
        %v1820 = vstv %s1819
        %v1821 = vmul.f32 %v1775, %v1820
        %v1822 = vmul.f32 %v1776, %v1820
        %v1823 = vadd.f32 %v1747, %v1821
        %v1824 = vadd.f32 %v1748, %v1822
        %s1825 = sld [smem:[#allocation4 + $0xd]]
        %v1826 = vstv %s1825
        %v1827 = vmul.f32 %v1775, %v1826
        %v1828 = vmul.f32 %v1776, %v1826
        %v1829 = vadd.f32 %v1753, %v1827
        %v1830 = vadd.f32 %v1754, %v1828
        %s1831 = sld [smem:[#allocation9 + $0xd]]
        %v1832 = vstv %s1831
        %v1833 = vmul.f32 %v1775, %v1832
        %v1834 = vmul.f32 %v1776, %v1832
        %v1835 = vadd.f32 %v1759, %v1833
        %v1836 = vadd.f32 %v1760, %v1834
        %s1837 = sld [smem:[#allocation4 + $0x8d]]
        %v1838 = vstv %s1837
        %v1839 = vmul.f32 %v1775, %v1838
        %v1840 = vmul.f32 %v1776, %v1838
        %v1841 = vadd.f32 %v1765, %v1839
        %v1842 = vadd.f32 %v1766, %v1840
        %s1843 = sld [smem:[#allocation9 + $0x8d]]
        %v1844 = vstv %s1843
        %v1845 = vmul.f32 %v1775, %v1844
        %v1846 = vmul.f32 %v1776, %v1844
        %v1847 = vadd.f32 %v1771, %v1845
        %v1848 = vadd.f32 %v1772, %v1846
        %s1849 = sadd.s32 224, %s785
        %s1850 = scalar_lea.vmem [#allocation2], %s1849
        %v1851 = vld [vmem:[%s1850] sm:$0xff]
        %v1852 = vld [vmem:[%s1850 + $0x8] sm:$0x3]
        %s1853 = sld [smem:[#allocation15 + $0xe]]
        %v1854 = vstv %s1853
        %v1855 = vmul.f32 %v1851, %v1854
        %v1856 = vmul.f32 %v1852, %v1854
        %v1857 = vadd.f32 %v1781, %v1855
        %v1858 = vadd.f32 %v1782, %v1856
        %s1859 = sld [smem:[#allocation15 + $0x8e]]
        %v1860 = vstv %s1859
        %v1861 = vmul.f32 %v1851, %v1860
        %v1862 = vmul.f32 %v1852, %v1860
        %v1863 = vadd.f32 %v1787, %v1861
        %v1864 = vadd.f32 %v1788, %v1862
        %s1865 = sld [smem:[#allocation15 + $0x10e]]
        %v1866 = vstv %s1865
        %v1867 = vmul.f32 %v1851, %v1866
        %v1868 = vmul.f32 %v1852, %v1866
        %v1869 = vadd.f32 %v1793, %v1867
        %v1870 = vadd.f32 %v1794, %v1868
        %s1871 = sld [smem:[#allocation15 + $0x18e]]
        %v1872 = vstv %s1871
        %v1873 = vmul.f32 %v1851, %v1872
        %v1874 = vmul.f32 %v1852, %v1872
        %v1875 = vadd.f32 %v1799, %v1873
        %v1876 = vadd.f32 %v1800, %v1874
        %s1877 = sld [smem:[#allocation15 + $0x20e]]
        %v1878 = vstv %s1877
        %v1879 = vmul.f32 %v1851, %v1878
        %v1880 = vmul.f32 %v1852, %v1878
        %v1881 = vadd.f32 %v1805, %v1879
        %v1882 = vadd.f32 %v1806, %v1880
        %s1883 = sld [smem:[#allocation15 + $0x28e]]
        %v1884 = vstv %s1883
        %v1885 = vmul.f32 %v1851, %v1884
        %v1886 = vmul.f32 %v1852, %v1884
        %v1887 = vadd.f32 %v1811, %v1885
        %v1888 = vadd.f32 %v1812, %v1886
        %s1889 = sld [smem:[#allocation15 + $0x30e]]
        %v1890 = vstv %s1889
        %v1891 = vmul.f32 %v1851, %v1890
        %v1892 = vmul.f32 %v1852, %v1890
        %v1893 = vadd.f32 %v1817, %v1891
        %v1894 = vadd.f32 %v1818, %v1892
        %s1895 = sld [smem:[#allocation15 + $0x38e]]
        %v1896 = vstv %s1895
        %v1897 = vmul.f32 %v1851, %v1896
        %v1898 = vmul.f32 %v1852, %v1896
        %v1899 = vadd.f32 %v1823, %v1897
        %v1900 = vadd.f32 %v1824, %v1898
        %s1901 = sld [smem:[#allocation4 + $0xe]]
        %v1902 = vstv %s1901
        %v1903 = vmul.f32 %v1851, %v1902
        %v1904 = vmul.f32 %v1852, %v1902
        %v1905 = vadd.f32 %v1829, %v1903
        %v1906 = vadd.f32 %v1830, %v1904
        %s1907 = sld [smem:[#allocation9 + $0xe]]
        %v1908 = vstv %s1907
        %v1909 = vmul.f32 %v1851, %v1908
        %v1910 = vmul.f32 %v1852, %v1908
        %v1911 = vadd.f32 %v1835, %v1909
        %v1912 = vadd.f32 %v1836, %v1910
        %s1913 = sld [smem:[#allocation4 + $0x8e]]
        %v1914 = vstv %s1913
        %v1915 = vmul.f32 %v1851, %v1914
        %v1916 = vmul.f32 %v1852, %v1914
        %v1917 = vadd.f32 %v1841, %v1915
        %v1918 = vadd.f32 %v1842, %v1916
        %s1919 = sld [smem:[#allocation9 + $0x8e]]
        %v1920 = vstv %s1919
        %v1921 = vmul.f32 %v1851, %v1920
        %v1922 = vmul.f32 %v1852, %v1920
        %v1923 = vadd.f32 %v1847, %v1921
        %v1924 = vadd.f32 %v1848, %v1922
        %s1925 = sadd.s32 240, %s785
        %s1926 = scalar_lea.vmem [#allocation2], %s1925
        %v1927 = vld [vmem:[%s1926] sm:$0xff]
        %v1928 = vld [vmem:[%s1926 + $0x8] sm:$0x3]
        %s1929 = sld [smem:[#allocation15 + $0xf]]
        %v1930 = vstv %s1929
        %v1931 = vmul.f32 %v1927, %v1930
        %v1932 = vmul.f32 %v1928, %v1930
        %v1933 = vadd.f32 %v1857, %v1931
        %v1934 = vadd.f32 %v1858, %v1932
        %s1935 = sld [smem:[#allocation15 + $0x8f]]
        %v1936 = vstv %s1935
        %v1937 = vmul.f32 %v1927, %v1936
        %v1938 = vmul.f32 %v1928, %v1936
        %v1939 = vadd.f32 %v1863, %v1937
        %v1940 = vadd.f32 %v1864, %v1938
        %s1941 = sld [smem:[#allocation15 + $0x10f]]
        %v1942 = vstv %s1941
        %v1943 = vmul.f32 %v1927, %v1942
        %v1944 = vmul.f32 %v1928, %v1942
        %v1945 = vadd.f32 %v1869, %v1943
        %v1946 = vadd.f32 %v1870, %v1944
        %s1947 = sld [smem:[#allocation15 + $0x18f]]
        %v1948 = vstv %s1947
        %v1949 = vmul.f32 %v1927, %v1948
        %v1950 = vmul.f32 %v1928, %v1948
        %v1951 = vadd.f32 %v1875, %v1949
        %v1952 = vadd.f32 %v1876, %v1950
        %s1953 = sld [smem:[#allocation15 + $0x20f]]
        %v1954 = vstv %s1953
        %v1955 = vmul.f32 %v1927, %v1954
        %v1956 = vmul.f32 %v1928, %v1954
        %v1957 = vadd.f32 %v1881, %v1955
        %v1958 = vadd.f32 %v1882, %v1956
        %s1959 = sld [smem:[#allocation15 + $0x28f]]
        %v1960 = vstv %s1959
        %v1961 = vmul.f32 %v1927, %v1960
        %v1962 = vmul.f32 %v1928, %v1960
        %v1963 = vadd.f32 %v1887, %v1961
        %v1964 = vadd.f32 %v1888, %v1962
        %s1965 = sld [smem:[#allocation15 + $0x30f]]
        %v1966 = vstv %s1965
        %v1967 = vmul.f32 %v1927, %v1966
        %v1968 = vmul.f32 %v1928, %v1966
        %v1969 = vadd.f32 %v1893, %v1967
        %v1970 = vadd.f32 %v1894, %v1968
        %s1971 = sld [smem:[#allocation15 + $0x38f]]
        %v1972 = vstv %s1971
        %v1973 = vmul.f32 %v1927, %v1972
        %v1974 = vmul.f32 %v1928, %v1972
        %v1975 = vadd.f32 %v1899, %v1973
        %v1976 = vadd.f32 %v1900, %v1974
        %s1977 = sld [smem:[#allocation4 + $0xf]]
        %v1978 = vstv %s1977
        %v1979 = vmul.f32 %v1927, %v1978
        %v1980 = vmul.f32 %v1928, %v1978
        %v1981 = vadd.f32 %v1905, %v1979
        %v1982 = vadd.f32 %v1906, %v1980
        %s1983 = sld [smem:[#allocation9 + $0xf]]
        %v1984 = vstv %s1983
        %v1985 = vmul.f32 %v1927, %v1984
        %v1986 = vmul.f32 %v1928, %v1984
        %v1987 = vadd.f32 %v1911, %v1985
        %v1988 = vadd.f32 %v1912, %v1986
        %s1989 = sld [smem:[#allocation4 + $0x8f]]
        %v1990 = vstv %s1989
        %v1991 = vmul.f32 %v1927, %v1990
        %v1992 = vmul.f32 %v1928, %v1990
        %v1993 = vadd.f32 %v1917, %v1991
        %v1994 = vadd.f32 %v1918, %v1992
        %s1995 = sld [smem:[#allocation9 + $0x8f]]
        %v1996 = vstv %s1995
        %v1997 = vmul.f32 %v1927, %v1996
        %v1998 = vmul.f32 %v1928, %v1996
        %v1999 = vadd.f32 %v1923, %v1997
        %v2000 = vadd.f32 %v1924, %v1998
        %s2001 = sand.u32 %s759, 127
        %s2002 = sand.u32 %s2001, 127
        %2003 = vrot.lane.b32.xlu0 %v1987, %s2002
        %v2004 = vpop.permute.xlu0 %2003
        %2005 = vrot.lane.b32.xlu0 %v1988, %s2002
        %v2006 = vpop.permute.xlu0 %2005
        %v2007 = vsel %vm738, %v2004, 0.0
        %v2008 = vsel %vm738, %v2006, 0.0
        %s2009 = sand.u32 %s760, 127
        %s2010 = sand.u32 %s2009, 127
        %2011 = vrot.lane.b32.xlu0 %v1987, %s2010
        %v2012 = vpop.permute.xlu0 %2011
        %2013 = vrot.lane.b32.xlu0 %v1988, %s2010
        %v2014 = vpop.permute.xlu0 %2013
        %v2015 = vsel %vm739, %v2012, 0.0
        %v2016 = vsel %vm739, %v2014, 0.0
        %v2017 = vsel %vm736, %v2015, 0.0
        %v2018 = vsel %vm736, %v1987, 0.0
        %v2019 = vsel %vm736, %v2007, 0.0
        %vm2022 = vcmask 1045504
        %v2023 = vrot.slane %v2007, 2
        %v2024 = vrot.slane %v2008, 2
        %v2025 = vsel %vm2022, %v2023, %v2024
        %v2027 = vsel %vm737, %v2025, 0.0
        %v2030 = vrot.slane %v1987, 2
        %v2031 = vrot.slane %v1988, 2
        %v2032 = vsel %vm2022, %v2030, %v2031
        %v2034 = vsel %vm737, %v2032, 0.0
        %v2037 = vrot.slane %v2015, 2
        %v2038 = vrot.slane %v2016, 2
        %v2039 = vsel %vm2022, %v2037, %v2038
        %v2041 = vsel %vm737, %v2039, 0.0
        %v2043 = vrot.slane %v2017, 7
        %v2045 = vsub.f32 %v1987, %v2043
        %v2046 = vsub.f32 %v1988, %v2043
        %v2048 = vrot.slane %v2018, 7
        %v2050 = vsub.f32 %v1987, %v2048
        %v2051 = vsub.f32 %v1988, %v2048
        %v2053 = vrot.slane %v2019, 7
        %v2055 = vsub.f32 %v1987, %v2053
        %v2056 = vsub.f32 %v1988, %v2053
        %v2057 = vsub.f32 %v1987, %v2007
        %v2058 = vsub.f32 %v1988, %v2008
        %v2060 = vrot.slane %v2027, 7
        %v2062 = vsub.f32 %v1987, %v2060
        %v2063 = vsub.f32 %v1988, %v2060
        %v2065 = vrot.slane %v2034, 7
        %v2067 = vsub.f32 %v1987, %v2065
        %v2068 = vsub.f32 %v1988, %v2065
        %v2070 = vrot.slane %v2041, 7
        %v2072 = vsub.f32 %v1987, %v2070
        %v2073 = vsub.f32 %v1988, %v2070
        %v2074 = vsub.f32 %v1987, %v2015
        %v2075 = vsub.f32 %v1988, %v2016
        %v2076 = vmul.f32 %v2045, %v2062
        %v2077 = vmul.f32 %v2046, %v2063
        %v2078 = vmul.f32 %v2050, %v2067
        %v2079 = vmul.f32 %v2051, %v2068
        %v2080 = vmul.f32 %v2055, %v2072
        %v2081 = vmul.f32 %v2056, %v2073
        %v2082 = vmul.f32 %v2057, %v2074
        %v2083 = vmul.f32 %v2058, %v2075
        %v2084 = vmin.f32 %v2076, %v2078
        %v2085 = vmin.f32 %v2077, %v2079
        %v2086 = vmax.f32 %v2076, %v2078
        %v2087 = vmax.f32 %v2077, %v2079
        %v2088 = vmin.f32 %v2080, %v2082
        %v2089 = vmin.f32 %v2081, %v2083
        %v2090 = vmax.f32 %v2080, %v2082
        %v2091 = vmax.f32 %v2081, %v2083
        %v2092 = vmin.f32 %v2084, %v2088
        %v2093 = vmin.f32 %v2085, %v2089
        %v2094 = vmax.f32 %v2086, %v2090
        %v2095 = vmax.f32 %v2087, %v2091
        %v2096 = vmax.f32 %v2084, %v2088
        %v2097 = vmax.f32 %v2085, %v2089
        %v2098 = vmin.f32 %v2086, %v2090
        %v2099 = vmin.f32 %v2087, %v2091
        %v2100 = vmin.f32 %v2096, %v2098
        %v2101 = vmin.f32 %v2097, %v2099
        %v2102 = vmax.f32 %v2096, %v2098
        %v2103 = vmax.f32 %v2097, %v2099
        %s2104 = sld [smem:[#allocation12]]
        %v2105 = vstv %s2104
        %v2106 = vmul.f32 %v2092, %v2105
        %v2107 = vmul.f32 %v2093, %v2105
        %s2108 = sld [smem:[#allocation12 + $0x1]]
        %v2109 = vstv %s2108
        %v2110 = vmul.f32 %v2100, %v2109
        %v2111 = vmul.f32 %v2101, %v2109
        %v2112 = vadd.f32 %v2106, %v2110
        %v2113 = vadd.f32 %v2107, %v2111
        %s2114 = sld [smem:[#allocation12 + $0x2]]
        %v2115 = vstv %s2114
        %v2116 = vmul.f32 %v2102, %v2115
        %v2117 = vmul.f32 %v2103, %v2115
        %v2118 = vadd.f32 %v2112, %v2116
        %v2119 = vadd.f32 %v2113, %v2117
        %s2120 = sld [smem:[#allocation12 + $0x3]]
        %v2121 = vstv %s2120
        %v2122 = vmul.f32 %v2094, %v2121
        %v2123 = vmul.f32 %v2095, %v2121
        %v2124 = vadd.f32 %v2118, %v2122
        %v2125 = vadd.f32 %v2119, %v2123
        %s2126 = sld [smem:[#allocation13]]
        %v2127 = vstv %s2126
        %v2128 = vadd.f32 %v2124, %v2127
        %v2129 = vadd.f32 %v2125, %v2127
        %s2130 = sld [smem:[#allocation15 + $0x10]]
        %v2131 = vstv %s2130
        %v2132 = vmul.f32 %v2128, %v2131
        %v2133 = vmul.f32 %v2129, %v2131
        %v2134 = vadd.f32 %v1933, %v2132
        %v2135 = vadd.f32 %v1934, %v2133
        %s2136 = sld [smem:[#allocation15 + $0x90]]
        %v2137 = vstv %s2136
        %v2138 = vmul.f32 %v2128, %v2137
        %v2139 = vmul.f32 %v2129, %v2137
        %v2140 = vadd.f32 %v1939, %v2138
        %v2141 = vadd.f32 %v1940, %v2139
        %s2142 = sld [smem:[#allocation15 + $0x110]]
        %v2143 = vstv %s2142
        %v2144 = vmul.f32 %v2128, %v2143
        %v2145 = vmul.f32 %v2129, %v2143
        %v2146 = vadd.f32 %v1945, %v2144
        %v2147 = vadd.f32 %v1946, %v2145
        %s2148 = sld [smem:[#allocation15 + $0x190]]
        %v2149 = vstv %s2148
        %v2150 = vmul.f32 %v2128, %v2149
        %v2151 = vmul.f32 %v2129, %v2149
        %v2152 = vadd.f32 %v1951, %v2150
        %v2153 = vadd.f32 %v1952, %v2151
        %s2154 = sld [smem:[#allocation15 + $0x210]]
        %v2155 = vstv %s2154
        %v2156 = vmul.f32 %v2128, %v2155
        %v2157 = vmul.f32 %v2129, %v2155
        %v2158 = vadd.f32 %v1957, %v2156
        %v2159 = vadd.f32 %v1958, %v2157
        %s2160 = sld [smem:[#allocation15 + $0x290]]
        %v2161 = vstv %s2160
        %v2162 = vmul.f32 %v2128, %v2161
        %v2163 = vmul.f32 %v2129, %v2161
        %v2164 = vadd.f32 %v1963, %v2162
        %v2165 = vadd.f32 %v1964, %v2163
        %s2166 = sld [smem:[#allocation15 + $0x310]]
        %v2167 = vstv %s2166
        %v2168 = vmul.f32 %v2128, %v2167
        %v2169 = vmul.f32 %v2129, %v2167
        %v2170 = vadd.f32 %v1969, %v2168
        %v2171 = vadd.f32 %v1970, %v2169
        %s2172 = sld [smem:[#allocation15 + $0x390]]
        %v2173 = vstv %s2172
        %v2174 = vmul.f32 %v2128, %v2173
        %v2175 = vmul.f32 %v2129, %v2173
        %v2176 = vadd.f32 %v1975, %v2174
        %v2177 = vadd.f32 %v1976, %v2175
        %2178 = vrot.lane.b32.xlu0 %v1999, %s2002
        %v2179 = vpop.permute.xlu0 %2178
        %2180 = vrot.lane.b32.xlu0 %v2000, %s2002
        %v2181 = vpop.permute.xlu0 %2180
        %v2182 = vsel %vm738, %v2179, 0.0
        %v2183 = vsel %vm738, %v2181, 0.0
        %2184 = vrot.lane.b32.xlu0 %v1999, %s2010
        %v2185 = vpop.permute.xlu0 %2184
        %2186 = vrot.lane.b32.xlu0 %v2000, %s2010
        %v2187 = vpop.permute.xlu0 %2186
        %v2188 = vsel %vm739, %v2185, 0.0
        %v2189 = vsel %vm739, %v2187, 0.0
        %v2190 = vsel %vm736, %v2188, 0.0
        %v2191 = vsel %vm736, %v1999, 0.0
        %v2192 = vsel %vm736, %v2182, 0.0
        %v2195 = vrot.slane %v2182, 2
        %v2196 = vrot.slane %v2183, 2
        %v2197 = vsel %vm2022, %v2195, %v2196
        %v2199 = vsel %vm737, %v2197, 0.0
        %v2202 = vrot.slane %v1999, 2
        %v2203 = vrot.slane %v2000, 2
        %v2204 = vsel %vm2022, %v2202, %v2203
        %v2206 = vsel %vm737, %v2204, 0.0
        %v2209 = vrot.slane %v2188, 2
        %v2210 = vrot.slane %v2189, 2
        %v2211 = vsel %vm2022, %v2209, %v2210
        %v2213 = vsel %vm737, %v2211, 0.0
        %v2215 = vrot.slane %v2190, 7
        %v2217 = vsub.f32 %v1999, %v2215
        %v2218 = vsub.f32 %v2000, %v2215
        %v2220 = vrot.slane %v2191, 7
        %v2222 = vsub.f32 %v1999, %v2220
        %v2223 = vsub.f32 %v2000, %v2220
        %v2225 = vrot.slane %v2192, 7
        %v2227 = vsub.f32 %v1999, %v2225
        %v2228 = vsub.f32 %v2000, %v2225
        %v2229 = vsub.f32 %v1999, %v2182
        %v2230 = vsub.f32 %v2000, %v2183
        %v2232 = vrot.slane %v2199, 7
        %v2234 = vsub.f32 %v1999, %v2232
        %v2235 = vsub.f32 %v2000, %v2232
        %v2237 = vrot.slane %v2206, 7
        %v2239 = vsub.f32 %v1999, %v2237
        %v2240 = vsub.f32 %v2000, %v2237
        %v2242 = vrot.slane %v2213, 7
        %v2244 = vsub.f32 %v1999, %v2242
        %v2245 = vsub.f32 %v2000, %v2242
        %v2246 = vsub.f32 %v1999, %v2188
        %v2247 = vsub.f32 %v2000, %v2189
        %v2248 = vmul.f32 %v2217, %v2234
        %v2249 = vmul.f32 %v2218, %v2235
        %v2250 = vmul.f32 %v2222, %v2239
        %v2251 = vmul.f32 %v2223, %v2240
        %v2252 = vmul.f32 %v2227, %v2244
        %v2253 = vmul.f32 %v2228, %v2245
        %v2254 = vmul.f32 %v2229, %v2246
        %v2255 = vmul.f32 %v2230, %v2247
        %v2256 = vmin.f32 %v2248, %v2250
        %v2257 = vmin.f32 %v2249, %v2251
        %v2258 = vmax.f32 %v2248, %v2250
        %v2259 = vmax.f32 %v2249, %v2251
        %v2260 = vmin.f32 %v2252, %v2254
        %v2261 = vmin.f32 %v2253, %v2255
        %v2262 = vmax.f32 %v2252, %v2254
        %v2263 = vmax.f32 %v2253, %v2255
        %v2264 = vmin.f32 %v2256, %v2260
        %v2265 = vmin.f32 %v2257, %v2261
        %v2266 = vmax.f32 %v2258, %v2262
        %v2267 = vmax.f32 %v2259, %v2263
        %v2268 = vmax.f32 %v2256, %v2260
        %v2269 = vmax.f32 %v2257, %v2261
        %v2270 = vmin.f32 %v2258, %v2262
        %v2271 = vmin.f32 %v2259, %v2263
        %v2272 = vmin.f32 %v2268, %v2270
        %v2273 = vmin.f32 %v2269, %v2271
        %v2274 = vmax.f32 %v2268, %v2270
        %v2275 = vmax.f32 %v2269, %v2271
        %s2276 = sld [smem:[#allocation12 + $0x80]]
        %v2277 = vstv %s2276
        %v2278 = vmul.f32 %v2264, %v2277
        %v2279 = vmul.f32 %v2265, %v2277
        %s2280 = sld [smem:[#allocation12 + $0x81]]
        %v2281 = vstv %s2280
        %v2282 = vmul.f32 %v2272, %v2281
        %v2283 = vmul.f32 %v2273, %v2281
        %v2284 = vadd.f32 %v2278, %v2282
        %v2285 = vadd.f32 %v2279, %v2283
        %s2286 = sld [smem:[#allocation12 + $0x82]]
        %v2287 = vstv %s2286
        %v2288 = vmul.f32 %v2274, %v2287
        %v2289 = vmul.f32 %v2275, %v2287
        %v2290 = vadd.f32 %v2284, %v2288
        %v2291 = vadd.f32 %v2285, %v2289
        %s2292 = sld [smem:[#allocation12 + $0x83]]
        %v2293 = vstv %s2292
        %v2294 = vmul.f32 %v2266, %v2293
        %v2295 = vmul.f32 %v2267, %v2293
        %v2296 = vadd.f32 %v2290, %v2294
        %v2297 = vadd.f32 %v2291, %v2295
        %s2298 = sld [smem:[#allocation13 + $0x1]]
        %v2299 = vstv %s2298
        %v2300 = vadd.f32 %v2296, %v2299
        %v2301 = vadd.f32 %v2297, %v2299
        %s2302 = sld [smem:[#allocation15 + $0x11]]
        %v2303 = vstv %s2302
        %v2304 = vmul.f32 %v2300, %v2303
        %v2305 = vmul.f32 %v2301, %v2303
        %v2306 = vadd.f32 %v2134, %v2304
        %v2307 = vadd.f32 %v2135, %v2305
        %s2308 = sld [smem:[#allocation15 + $0x91]]
        %v2309 = vstv %s2308
        %v2310 = vmul.f32 %v2300, %v2309
        %v2311 = vmul.f32 %v2301, %v2309
        %v2312 = vadd.f32 %v2140, %v2310
        %v2313 = vadd.f32 %v2141, %v2311
        %s2314 = sld [smem:[#allocation15 + $0x111]]
        %v2315 = vstv %s2314
        %v2316 = vmul.f32 %v2300, %v2315
        %v2317 = vmul.f32 %v2301, %v2315
        %v2318 = vadd.f32 %v2146, %v2316
        %v2319 = vadd.f32 %v2147, %v2317
        %s2320 = sld [smem:[#allocation15 + $0x191]]
        %v2321 = vstv %s2320
        %v2322 = vmul.f32 %v2300, %v2321
        %v2323 = vmul.f32 %v2301, %v2321
        %v2324 = vadd.f32 %v2152, %v2322
        %v2325 = vadd.f32 %v2153, %v2323
        %s2326 = sld [smem:[#allocation15 + $0x211]]
        %v2327 = vstv %s2326
        %v2328 = vmul.f32 %v2300, %v2327
        %v2329 = vmul.f32 %v2301, %v2327
        %v2330 = vadd.f32 %v2158, %v2328
        %v2331 = vadd.f32 %v2159, %v2329
        %s2332 = sld [smem:[#allocation15 + $0x291]]
        %v2333 = vstv %s2332
        %v2334 = vmul.f32 %v2300, %v2333
        %v2335 = vmul.f32 %v2301, %v2333
        %v2336 = vadd.f32 %v2164, %v2334
        %v2337 = vadd.f32 %v2165, %v2335
        %s2338 = sld [smem:[#allocation15 + $0x311]]
        %v2339 = vstv %s2338
        %v2340 = vmul.f32 %v2300, %v2339
        %v2341 = vmul.f32 %v2301, %v2339
        %v2342 = vadd.f32 %v2170, %v2340
        %v2343 = vadd.f32 %v2171, %v2341
        %s2344 = sld [smem:[#allocation15 + $0x391]]
        %v2345 = vstv %s2344
        %v2346 = vmul.f32 %v2300, %v2345
        %v2347 = vmul.f32 %v2301, %v2345
        %v2348 = vadd.f32 %v2176, %v2346
        %v2349 = vadd.f32 %v2177, %v2347
        %2350 = vrot.lane.b32.xlu0 %v1981, %s2002
        %v2351 = vpop.permute.xlu0 %2350
        %2352 = vrot.lane.b32.xlu0 %v1982, %s2002
        %v2353 = vpop.permute.xlu0 %2352
        %v2354 = vsel %vm738, %v2351, 0.0
        %v2355 = vsel %vm738, %v2353, 0.0
        %2356 = vrot.lane.b32.xlu0 %v1981, %s2010
        %v2357 = vpop.permute.xlu0 %2356
        %2358 = vrot.lane.b32.xlu0 %v1982, %s2010
        %v2359 = vpop.permute.xlu0 %2358
        %v2360 = vsel %vm739, %v2357, 0.0
        %v2361 = vsel %vm739, %v2359, 0.0
        %v2362 = vsel %vm736, %v2360, 0.0
        %v2363 = vsel %vm736, %v1981, 0.0
        %v2364 = vsel %vm736, %v2354, 0.0
        %v2367 = vrot.slane %v2354, 2
        %v2368 = vrot.slane %v2355, 2
        %v2369 = vsel %vm2022, %v2367, %v2368
        %v2371 = vsel %vm737, %v2369, 0.0
        %v2374 = vrot.slane %v1981, 2
        %v2375 = vrot.slane %v1982, 2
        %v2376 = vsel %vm2022, %v2374, %v2375
        %v2378 = vsel %vm737, %v2376, 0.0
        %v2381 = vrot.slane %v2360, 2
        %v2382 = vrot.slane %v2361, 2
        %v2383 = vsel %vm2022, %v2381, %v2382
        %v2385 = vsel %vm737, %v2383, 0.0
        %v2387 = vrot.slane %v2362, 7
        %v2389 = vsub.f32 %v1981, %v2387
        %v2390 = vsub.f32 %v1982, %v2387
        %s2391 = sld [smem:[#allocation15 + $0x12]]
        %v2392 = vstv %s2391
        %v2393 = vmul.f32 %v2389, %v2392
        %v2394 = vmul.f32 %v2390, %v2392
        %v2395 = vadd.f32 %v2306, %v2393
        %v2396 = vadd.f32 %v2307, %v2394
        %s2397 = sld [smem:[#allocation15 + $0x92]]
        %v2398 = vstv %s2397
        %v2399 = vmul.f32 %v2389, %v2398
        %v2400 = vmul.f32 %v2390, %v2398
        %v2401 = vadd.f32 %v2312, %v2399
        %v2402 = vadd.f32 %v2313, %v2400
        %s2403 = sld [smem:[#allocation15 + $0x112]]
        %v2404 = vstv %s2403
        %v2405 = vmul.f32 %v2389, %v2404
        %v2406 = vmul.f32 %v2390, %v2404
        %v2407 = vadd.f32 %v2318, %v2405
        %v2408 = vadd.f32 %v2319, %v2406
        %s2409 = sld [smem:[#allocation15 + $0x192]]
        %v2410 = vstv %s2409
        %v2411 = vmul.f32 %v2389, %v2410
        %v2412 = vmul.f32 %v2390, %v2410
        %v2413 = vadd.f32 %v2324, %v2411
        %v2414 = vadd.f32 %v2325, %v2412
        %s2415 = sld [smem:[#allocation15 + $0x212]]
        %v2416 = vstv %s2415
        %v2417 = vmul.f32 %v2389, %v2416
        %v2418 = vmul.f32 %v2390, %v2416
        %v2419 = vadd.f32 %v2330, %v2417
        %v2420 = vadd.f32 %v2331, %v2418
        %s2421 = sld [smem:[#allocation15 + $0x292]]
        %v2422 = vstv %s2421
        %v2423 = vmul.f32 %v2389, %v2422
        %v2424 = vmul.f32 %v2390, %v2422
        %v2425 = vadd.f32 %v2336, %v2423
        %v2426 = vadd.f32 %v2337, %v2424
        %s2427 = sld [smem:[#allocation15 + $0x312]]
        %v2428 = vstv %s2427
        %v2429 = vmul.f32 %v2389, %v2428
        %v2430 = vmul.f32 %v2390, %v2428
        %v2431 = vadd.f32 %v2342, %v2429
        %v2432 = vadd.f32 %v2343, %v2430
        %s2433 = sld [smem:[#allocation15 + $0x392]]
        %v2434 = vstv %s2433
        %v2435 = vmul.f32 %v2389, %v2434
        %v2436 = vmul.f32 %v2390, %v2434
        %v2437 = vadd.f32 %v2348, %v2435
        %v2438 = vadd.f32 %v2349, %v2436
        %v2440 = vrot.slane %v2363, 7
        %v2442 = vsub.f32 %v1981, %v2440
        %v2443 = vsub.f32 %v1982, %v2440
        %s2444 = sld [smem:[#allocation15 + $0x14]]
        %v2445 = vstv %s2444
        %v2446 = vmul.f32 %v2442, %v2445
        %v2447 = vmul.f32 %v2443, %v2445
        %v2448 = vadd.f32 %v2395, %v2446
        %v2449 = vadd.f32 %v2396, %v2447
        %s2450 = sld [smem:[#allocation15 + $0x94]]
        %v2451 = vstv %s2450
        %v2452 = vmul.f32 %v2442, %v2451
        %v2453 = vmul.f32 %v2443, %v2451
        %v2454 = vadd.f32 %v2401, %v2452
        %v2455 = vadd.f32 %v2402, %v2453
        %s2456 = sld [smem:[#allocation15 + $0x114]]
        %v2457 = vstv %s2456
        %v2458 = vmul.f32 %v2442, %v2457
        %v2459 = vmul.f32 %v2443, %v2457
        %v2460 = vadd.f32 %v2407, %v2458
        %v2461 = vadd.f32 %v2408, %v2459
        %s2462 = sld [smem:[#allocation15 + $0x194]]
        %v2463 = vstv %s2462
        %v2464 = vmul.f32 %v2442, %v2463
        %v2465 = vmul.f32 %v2443, %v2463
        %v2466 = vadd.f32 %v2413, %v2464
        %v2467 = vadd.f32 %v2414, %v2465
        %s2468 = sld [smem:[#allocation15 + $0x214]]
        %v2469 = vstv %s2468
        %v2470 = vmul.f32 %v2442, %v2469
        %v2471 = vmul.f32 %v2443, %v2469
        %v2472 = vadd.f32 %v2419, %v2470
        %v2473 = vadd.f32 %v2420, %v2471
        %s2474 = sld [smem:[#allocation15 + $0x294]]
        %v2475 = vstv %s2474
        %v2476 = vmul.f32 %v2442, %v2475
        %v2477 = vmul.f32 %v2443, %v2475
        %v2478 = vadd.f32 %v2425, %v2476
        %v2479 = vadd.f32 %v2426, %v2477
        %s2480 = sld [smem:[#allocation15 + $0x314]]
        %v2481 = vstv %s2480
        %v2482 = vmul.f32 %v2442, %v2481
        %v2483 = vmul.f32 %v2443, %v2481
        %v2484 = vadd.f32 %v2431, %v2482
        %v2485 = vadd.f32 %v2432, %v2483
        %s2486 = sld [smem:[#allocation15 + $0x394]]
        %v2487 = vstv %s2486
        %v2488 = vmul.f32 %v2442, %v2487
        %v2489 = vmul.f32 %v2443, %v2487
        %v2490 = vadd.f32 %v2437, %v2488
        %v2491 = vadd.f32 %v2438, %v2489
        %v2493 = vrot.slane %v2364, 7
        %v2495 = vsub.f32 %v1981, %v2493
        %v2496 = vsub.f32 %v1982, %v2493
        %s2497 = sld [smem:[#allocation15 + $0x16]]
        %v2498 = vstv %s2497
        %v2499 = vmul.f32 %v2495, %v2498
        %v2500 = vmul.f32 %v2496, %v2498
        %v2501 = vadd.f32 %v2448, %v2499
        %v2502 = vadd.f32 %v2449, %v2500
        %s2503 = sld [smem:[#allocation15 + $0x96]]
        %v2504 = vstv %s2503
        %v2505 = vmul.f32 %v2495, %v2504
        %v2506 = vmul.f32 %v2496, %v2504
        %v2507 = vadd.f32 %v2454, %v2505
        %v2508 = vadd.f32 %v2455, %v2506
        %s2509 = sld [smem:[#allocation15 + $0x116]]
        %v2510 = vstv %s2509
        %v2511 = vmul.f32 %v2495, %v2510
        %v2512 = vmul.f32 %v2496, %v2510
        %v2513 = vadd.f32 %v2460, %v2511
        %v2514 = vadd.f32 %v2461, %v2512
        %s2515 = sld [smem:[#allocation15 + $0x196]]
        %v2516 = vstv %s2515
        %v2517 = vmul.f32 %v2495, %v2516
        %v2518 = vmul.f32 %v2496, %v2516
        %v2519 = vadd.f32 %v2466, %v2517
        %v2520 = vadd.f32 %v2467, %v2518
        %s2521 = sld [smem:[#allocation15 + $0x216]]
        %v2522 = vstv %s2521
        %v2523 = vmul.f32 %v2495, %v2522
        %v2524 = vmul.f32 %v2496, %v2522
        %v2525 = vadd.f32 %v2472, %v2523
        %v2526 = vadd.f32 %v2473, %v2524
        %s2527 = sld [smem:[#allocation15 + $0x296]]
        %v2528 = vstv %s2527
        %v2529 = vmul.f32 %v2495, %v2528
        %v2530 = vmul.f32 %v2496, %v2528
        %v2531 = vadd.f32 %v2478, %v2529
        %v2532 = vadd.f32 %v2479, %v2530
        %s2533 = sld [smem:[#allocation15 + $0x316]]
        %v2534 = vstv %s2533
        %v2535 = vmul.f32 %v2495, %v2534
        %v2536 = vmul.f32 %v2496, %v2534
        %v2537 = vadd.f32 %v2484, %v2535
        %v2538 = vadd.f32 %v2485, %v2536
        %s2539 = sld [smem:[#allocation15 + $0x396]]
        %v2540 = vstv %s2539
        %v2541 = vmul.f32 %v2495, %v2540
        %v2542 = vmul.f32 %v2496, %v2540
        %v2543 = vadd.f32 %v2490, %v2541
        %v2544 = vadd.f32 %v2491, %v2542
        %v2545 = vsub.f32 %v1981, %v2354
        %v2546 = vsub.f32 %v1982, %v2355
        %s2547 = sld [smem:[#allocation15 + $0x18]]
        %v2548 = vstv %s2547
        %v2549 = vmul.f32 %v2545, %v2548
        %v2550 = vmul.f32 %v2546, %v2548
        %v2551 = vadd.f32 %v2501, %v2549
        %v2552 = vadd.f32 %v2502, %v2550
        %s2553 = sld [smem:[#allocation15 + $0x98]]
        %v2554 = vstv %s2553
        %v2555 = vmul.f32 %v2545, %v2554
        %v2556 = vmul.f32 %v2546, %v2554
        %v2557 = vadd.f32 %v2507, %v2555
        %v2558 = vadd.f32 %v2508, %v2556
        %s2559 = sld [smem:[#allocation15 + $0x118]]
        %v2560 = vstv %s2559
        %v2561 = vmul.f32 %v2545, %v2560
        %v2562 = vmul.f32 %v2546, %v2560
        %v2563 = vadd.f32 %v2513, %v2561
        %v2564 = vadd.f32 %v2514, %v2562
        %s2565 = sld [smem:[#allocation15 + $0x198]]
        %v2566 = vstv %s2565
        %v2567 = vmul.f32 %v2545, %v2566
        %v2568 = vmul.f32 %v2546, %v2566
        %v2569 = vadd.f32 %v2519, %v2567
        %v2570 = vadd.f32 %v2520, %v2568
        %s2571 = sld [smem:[#allocation15 + $0x218]]
        %v2572 = vstv %s2571
        %v2573 = vmul.f32 %v2545, %v2572
        %v2574 = vmul.f32 %v2546, %v2572
        %v2575 = vadd.f32 %v2525, %v2573
        %v2576 = vadd.f32 %v2526, %v2574
        %s2577 = sld [smem:[#allocation15 + $0x298]]
        %v2578 = vstv %s2577
        %v2579 = vmul.f32 %v2545, %v2578
        %v2580 = vmul.f32 %v2546, %v2578
        %v2581 = vadd.f32 %v2531, %v2579
        %v2582 = vadd.f32 %v2532, %v2580
        %s2583 = sld [smem:[#allocation15 + $0x318]]
        %v2584 = vstv %s2583
        %v2585 = vmul.f32 %v2545, %v2584
        %v2586 = vmul.f32 %v2546, %v2584
        %v2587 = vadd.f32 %v2537, %v2585
        %v2588 = vadd.f32 %v2538, %v2586
        %s2589 = sld [smem:[#allocation15 + $0x398]]
        %v2590 = vstv %s2589
        %v2591 = vmul.f32 %v2545, %v2590
        %v2592 = vmul.f32 %v2546, %v2590
        %v2593 = vadd.f32 %v2543, %v2591
        %v2594 = vadd.f32 %v2544, %v2592
        %v2596 = vrot.slane %v2371, 7
        %v2598 = vsub.f32 %v1981, %v2596
        %v2599 = vsub.f32 %v1982, %v2596
        %s2600 = sld [smem:[#allocation15 + $0x1a]]
        %v2601 = vstv %s2600
        %v2602 = vmul.f32 %v2598, %v2601
        %v2603 = vmul.f32 %v2599, %v2601
        %v2604 = vadd.f32 %v2551, %v2602
        %v2605 = vadd.f32 %v2552, %v2603
        %s2606 = sld [smem:[#allocation15 + $0x9a]]
        %v2607 = vstv %s2606
        %v2608 = vmul.f32 %v2598, %v2607
        %v2609 = vmul.f32 %v2599, %v2607
        %v2610 = vadd.f32 %v2557, %v2608
        %v2611 = vadd.f32 %v2558, %v2609
        %s2612 = sld [smem:[#allocation15 + $0x11a]]
        %v2613 = vstv %s2612
        %v2614 = vmul.f32 %v2598, %v2613
        %v2615 = vmul.f32 %v2599, %v2613
        %v2616 = vadd.f32 %v2563, %v2614
        %v2617 = vadd.f32 %v2564, %v2615
        %s2618 = sld [smem:[#allocation15 + $0x19a]]
        %v2619 = vstv %s2618
        %v2620 = vmul.f32 %v2598, %v2619
        %v2621 = vmul.f32 %v2599, %v2619
        %v2622 = vadd.f32 %v2569, %v2620
        %v2623 = vadd.f32 %v2570, %v2621
        %s2624 = sld [smem:[#allocation15 + $0x21a]]
        %v2625 = vstv %s2624
        %v2626 = vmul.f32 %v2598, %v2625
        %v2627 = vmul.f32 %v2599, %v2625
        %v2628 = vadd.f32 %v2575, %v2626
        %v2629 = vadd.f32 %v2576, %v2627
        %s2630 = sld [smem:[#allocation15 + $0x29a]]
        %v2631 = vstv %s2630
        %v2632 = vmul.f32 %v2598, %v2631
        %v2633 = vmul.f32 %v2599, %v2631
        %v2634 = vadd.f32 %v2581, %v2632
        %v2635 = vadd.f32 %v2582, %v2633
        %s2636 = sld [smem:[#allocation15 + $0x31a]]
        %v2637 = vstv %s2636
        %v2638 = vmul.f32 %v2598, %v2637
        %v2639 = vmul.f32 %v2599, %v2637
        %v2640 = vadd.f32 %v2587, %v2638
        %v2641 = vadd.f32 %v2588, %v2639
        %s2642 = sld [smem:[#allocation15 + $0x39a]]
        %v2643 = vstv %s2642
        %v2644 = vmul.f32 %v2598, %v2643
        %v2645 = vmul.f32 %v2599, %v2643
        %v2646 = vadd.f32 %v2593, %v2644
        %v2647 = vadd.f32 %v2594, %v2645
        %v2649 = vrot.slane %v2378, 7
        %v2651 = vsub.f32 %v1981, %v2649
        %v2652 = vsub.f32 %v1982, %v2649
        %s2653 = sld [smem:[#allocation15 + $0x1c]]
        %v2654 = vstv %s2653
        %v2655 = vmul.f32 %v2651, %v2654
        %v2656 = vmul.f32 %v2652, %v2654
        %v2657 = vadd.f32 %v2604, %v2655
        %v2658 = vadd.f32 %v2605, %v2656
        %s2659 = sld [smem:[#allocation15 + $0x9c]]
        %v2660 = vstv %s2659
        %v2661 = vmul.f32 %v2651, %v2660
        %v2662 = vmul.f32 %v2652, %v2660
        %v2663 = vadd.f32 %v2610, %v2661
        %v2664 = vadd.f32 %v2611, %v2662
        %s2665 = sld [smem:[#allocation15 + $0x11c]]
        %v2666 = vstv %s2665
        %v2667 = vmul.f32 %v2651, %v2666
        %v2668 = vmul.f32 %v2652, %v2666
        %v2669 = vadd.f32 %v2616, %v2667
        %v2670 = vadd.f32 %v2617, %v2668
        %s2671 = sld [smem:[#allocation15 + $0x19c]]
        %v2672 = vstv %s2671
        %v2673 = vmul.f32 %v2651, %v2672
        %v2674 = vmul.f32 %v2652, %v2672
        %v2675 = vadd.f32 %v2622, %v2673
        %v2676 = vadd.f32 %v2623, %v2674
        %s2677 = sld [smem:[#allocation15 + $0x21c]]
        %v2678 = vstv %s2677
        %v2679 = vmul.f32 %v2651, %v2678
        %v2680 = vmul.f32 %v2652, %v2678
        %v2681 = vadd.f32 %v2628, %v2679
        %v2682 = vadd.f32 %v2629, %v2680
        %s2683 = sld [smem:[#allocation15 + $0x29c]]
        %v2684 = vstv %s2683
        %v2685 = vmul.f32 %v2651, %v2684
        %v2686 = vmul.f32 %v2652, %v2684
        %v2687 = vadd.f32 %v2634, %v2685
        %v2688 = vadd.f32 %v2635, %v2686
        %s2689 = sld [smem:[#allocation15 + $0x31c]]
        %v2690 = vstv %s2689
        %v2691 = vmul.f32 %v2651, %v2690
        %v2692 = vmul.f32 %v2652, %v2690
        %v2693 = vadd.f32 %v2640, %v2691
        %v2694 = vadd.f32 %v2641, %v2692
        %s2695 = sld [smem:[#allocation15 + $0x39c]]
        %v2696 = vstv %s2695
        %v2697 = vmul.f32 %v2651, %v2696
        %v2698 = vmul.f32 %v2652, %v2696
        %v2699 = vadd.f32 %v2646, %v2697
        %v2700 = vadd.f32 %v2647, %v2698
        %v2702 = vrot.slane %v2385, 7
        %v2704 = vsub.f32 %v1981, %v2702
        %v2705 = vsub.f32 %v1982, %v2702
        %s2706 = sld [smem:[#allocation15 + $0x1e]]
        %v2707 = vstv %s2706
        %v2708 = vmul.f32 %v2704, %v2707
        %v2709 = vmul.f32 %v2705, %v2707
        %v2710 = vadd.f32 %v2657, %v2708
        %v2711 = vadd.f32 %v2658, %v2709
        %s2712 = sld [smem:[#allocation15 + $0x9e]]
        %v2713 = vstv %s2712
        %v2714 = vmul.f32 %v2704, %v2713
        %v2715 = vmul.f32 %v2705, %v2713
        %v2716 = vadd.f32 %v2663, %v2714
        %v2717 = vadd.f32 %v2664, %v2715
        %s2718 = sld [smem:[#allocation15 + $0x11e]]
        %v2719 = vstv %s2718
        %v2720 = vmul.f32 %v2704, %v2719
        %v2721 = vmul.f32 %v2705, %v2719
        %v2722 = vadd.f32 %v2669, %v2720
        %v2723 = vadd.f32 %v2670, %v2721
        %s2724 = sld [smem:[#allocation15 + $0x19e]]
        %v2725 = vstv %s2724
        %v2726 = vmul.f32 %v2704, %v2725
        %v2727 = vmul.f32 %v2705, %v2725
        %v2728 = vadd.f32 %v2675, %v2726
        %v2729 = vadd.f32 %v2676, %v2727
        %s2730 = sld [smem:[#allocation15 + $0x21e]]
        %v2731 = vstv %s2730
        %v2732 = vmul.f32 %v2704, %v2731
        %v2733 = vmul.f32 %v2705, %v2731
        %v2734 = vadd.f32 %v2681, %v2732
        %v2735 = vadd.f32 %v2682, %v2733
        %s2736 = sld [smem:[#allocation15 + $0x29e]]
        %v2737 = vstv %s2736
        %v2738 = vmul.f32 %v2704, %v2737
        %v2739 = vmul.f32 %v2705, %v2737
        %v2740 = vadd.f32 %v2687, %v2738
        %v2741 = vadd.f32 %v2688, %v2739
        %s2742 = sld [smem:[#allocation15 + $0x31e]]
        %v2743 = vstv %s2742
        %v2744 = vmul.f32 %v2704, %v2743
        %v2745 = vmul.f32 %v2705, %v2743
        %v2746 = vadd.f32 %v2693, %v2744
        %v2747 = vadd.f32 %v2694, %v2745
        %s2748 = sld [smem:[#allocation15 + $0x39e]]
        %v2749 = vstv %s2748
        %v2750 = vmul.f32 %v2704, %v2749
        %v2751 = vmul.f32 %v2705, %v2749
        %v2752 = vadd.f32 %v2699, %v2750
        %v2753 = vadd.f32 %v2700, %v2751
        %v2754 = vsub.f32 %v1981, %v2360
        %v2755 = vsub.f32 %v1982, %v2361
        %s2756 = sld [smem:[#allocation15 + $0x20]]
        %v2757 = vstv %s2756
        %v2758 = vmul.f32 %v2754, %v2757
        %v2759 = vmul.f32 %v2755, %v2757
        %v2760 = vadd.f32 %v2710, %v2758
        %v2761 = vadd.f32 %v2711, %v2759
        %s2762 = sld [smem:[#allocation15 + $0xa0]]
        %v2763 = vstv %s2762
        %v2764 = vmul.f32 %v2754, %v2763
        %v2765 = vmul.f32 %v2755, %v2763
        %v2766 = vadd.f32 %v2716, %v2764
        %v2767 = vadd.f32 %v2717, %v2765
        %s2768 = sld [smem:[#allocation15 + $0x120]]
        %v2769 = vstv %s2768
        %v2770 = vmul.f32 %v2754, %v2769
        %v2771 = vmul.f32 %v2755, %v2769
        %v2772 = vadd.f32 %v2722, %v2770
        %v2773 = vadd.f32 %v2723, %v2771
        %s2774 = sld [smem:[#allocation15 + $0x1a0]]
        %v2775 = vstv %s2774
        %v2776 = vmul.f32 %v2754, %v2775
        %v2777 = vmul.f32 %v2755, %v2775
        %v2778 = vadd.f32 %v2728, %v2776
        %v2779 = vadd.f32 %v2729, %v2777
        %s2780 = sld [smem:[#allocation15 + $0x220]]
        %v2781 = vstv %s2780
        %v2782 = vmul.f32 %v2754, %v2781
        %v2783 = vmul.f32 %v2755, %v2781
        %v2784 = vadd.f32 %v2734, %v2782
        %v2785 = vadd.f32 %v2735, %v2783
        %s2786 = sld [smem:[#allocation15 + $0x2a0]]
        %v2787 = vstv %s2786
        %v2788 = vmul.f32 %v2754, %v2787
        %v2789 = vmul.f32 %v2755, %v2787
        %v2790 = vadd.f32 %v2740, %v2788
        %v2791 = vadd.f32 %v2741, %v2789
        %s2792 = sld [smem:[#allocation15 + $0x320]]
        %v2793 = vstv %s2792
        %v2794 = vmul.f32 %v2754, %v2793
        %v2795 = vmul.f32 %v2755, %v2793
        %v2796 = vadd.f32 %v2746, %v2794
        %v2797 = vadd.f32 %v2747, %v2795
        %s2798 = sld [smem:[#allocation15 + $0x3a0]]
        %v2799 = vstv %s2798
        %v2800 = vmul.f32 %v2754, %v2799
        %v2801 = vmul.f32 %v2755, %v2799
        %v2802 = vadd.f32 %v2752, %v2800
        %v2803 = vadd.f32 %v2753, %v2801
        %2804 = vrot.lane.b32.xlu0 %v1993, %s2002
        %v2805 = vpop.permute.xlu0 %2804
        %2806 = vrot.lane.b32.xlu0 %v1994, %s2002
        %v2807 = vpop.permute.xlu0 %2806
        %v2808 = vsel %vm738, %v2805, 0.0
        %v2809 = vsel %vm738, %v2807, 0.0
        %2810 = vrot.lane.b32.xlu0 %v1993, %s2010
        %v2811 = vpop.permute.xlu0 %2810
        %2812 = vrot.lane.b32.xlu0 %v1994, %s2010
        %v2813 = vpop.permute.xlu0 %2812
        %v2814 = vsel %vm739, %v2811, 0.0
        %v2815 = vsel %vm739, %v2813, 0.0
        %v2816 = vsel %vm736, %v2814, 0.0
        %v2817 = vsel %vm736, %v1993, 0.0
        %v2818 = vsel %vm736, %v2808, 0.0
        %v2821 = vrot.slane %v2808, 2
        %v2822 = vrot.slane %v2809, 2
        %v2823 = vsel %vm2022, %v2821, %v2822
        %v2825 = vsel %vm737, %v2823, 0.0
        %v2828 = vrot.slane %v1993, 2
        %v2829 = vrot.slane %v1994, 2
        %v2830 = vsel %vm2022, %v2828, %v2829
        %v2832 = vsel %vm737, %v2830, 0.0
        %v2835 = vrot.slane %v2814, 2
        %v2836 = vrot.slane %v2815, 2
        %v2837 = vsel %vm2022, %v2835, %v2836
        %v2839 = vsel %vm737, %v2837, 0.0
        %v2841 = vrot.slane %v2816, 7
        %v2843 = vsub.f32 %v1993, %v2841
        %v2844 = vsub.f32 %v1994, %v2841
        %s2845 = sld [smem:[#allocation15 + $0x13]]
        %v2846 = vstv %s2845
        %v2847 = vmul.f32 %v2843, %v2846
        %v2848 = vmul.f32 %v2844, %v2846
        %v2849 = vadd.f32 %v2760, %v2847
        %v2850 = vadd.f32 %v2761, %v2848
        %s2851 = sld [smem:[#allocation15 + $0x93]]
        %v2852 = vstv %s2851
        %v2853 = vmul.f32 %v2843, %v2852
        %v2854 = vmul.f32 %v2844, %v2852
        %v2855 = vadd.f32 %v2766, %v2853
        %v2856 = vadd.f32 %v2767, %v2854
        %s2857 = sld [smem:[#allocation15 + $0x113]]
        %v2858 = vstv %s2857
        %v2859 = vmul.f32 %v2843, %v2858
        %v2860 = vmul.f32 %v2844, %v2858
        %v2861 = vadd.f32 %v2772, %v2859
        %v2862 = vadd.f32 %v2773, %v2860
        %s2863 = sld [smem:[#allocation15 + $0x193]]
        %v2864 = vstv %s2863
        %v2865 = vmul.f32 %v2843, %v2864
        %v2866 = vmul.f32 %v2844, %v2864
        %v2867 = vadd.f32 %v2778, %v2865
        %v2868 = vadd.f32 %v2779, %v2866
        %s2869 = sld [smem:[#allocation15 + $0x213]]
        %v2870 = vstv %s2869
        %v2871 = vmul.f32 %v2843, %v2870
        %v2872 = vmul.f32 %v2844, %v2870
        %v2873 = vadd.f32 %v2784, %v2871
        %v2874 = vadd.f32 %v2785, %v2872
        %s2875 = sld [smem:[#allocation15 + $0x293]]
        %v2876 = vstv %s2875
        %v2877 = vmul.f32 %v2843, %v2876
        %v2878 = vmul.f32 %v2844, %v2876
        %v2879 = vadd.f32 %v2790, %v2877
        %v2880 = vadd.f32 %v2791, %v2878
        %s2881 = sld [smem:[#allocation15 + $0x313]]
        %v2882 = vstv %s2881
        %v2883 = vmul.f32 %v2843, %v2882
        %v2884 = vmul.f32 %v2844, %v2882
        %v2885 = vadd.f32 %v2796, %v2883
        %v2886 = vadd.f32 %v2797, %v2884
        %s2887 = sld [smem:[#allocation15 + $0x393]]
        %v2888 = vstv %s2887
        %v2889 = vmul.f32 %v2843, %v2888
        %v2890 = vmul.f32 %v2844, %v2888
        %v2891 = vadd.f32 %v2802, %v2889
        %v2892 = vadd.f32 %v2803, %v2890
        %v2894 = vrot.slane %v2817, 7
        %v2896 = vsub.f32 %v1993, %v2894
        %v2897 = vsub.f32 %v1994, %v2894
        %s2898 = sld [smem:[#allocation15 + $0x15]]
        %v2899 = vstv %s2898
        %v2900 = vmul.f32 %v2896, %v2899
        %v2901 = vmul.f32 %v2897, %v2899
        %v2902 = vadd.f32 %v2849, %v2900
        %v2903 = vadd.f32 %v2850, %v2901
        %s2904 = sld [smem:[#allocation15 + $0x95]]
        %v2905 = vstv %s2904
        %v2906 = vmul.f32 %v2896, %v2905
        %v2907 = vmul.f32 %v2897, %v2905
        %v2908 = vadd.f32 %v2855, %v2906
        %v2909 = vadd.f32 %v2856, %v2907
        %s2910 = sld [smem:[#allocation15 + $0x115]]
        %v2911 = vstv %s2910
        %v2912 = vmul.f32 %v2896, %v2911
        %v2913 = vmul.f32 %v2897, %v2911
        %v2914 = vadd.f32 %v2861, %v2912
        %v2915 = vadd.f32 %v2862, %v2913
        %s2916 = sld [smem:[#allocation15 + $0x195]]
        %v2917 = vstv %s2916
        %v2918 = vmul.f32 %v2896, %v2917
        %v2919 = vmul.f32 %v2897, %v2917
        %v2920 = vadd.f32 %v2867, %v2918
        %v2921 = vadd.f32 %v2868, %v2919
        %s2922 = sld [smem:[#allocation15 + $0x215]]
        %v2923 = vstv %s2922
        %v2924 = vmul.f32 %v2896, %v2923
        %v2925 = vmul.f32 %v2897, %v2923
        %v2926 = vadd.f32 %v2873, %v2924
        %v2927 = vadd.f32 %v2874, %v2925
        %s2928 = sld [smem:[#allocation15 + $0x295]]
        %v2929 = vstv %s2928
        %v2930 = vmul.f32 %v2896, %v2929
        %v2931 = vmul.f32 %v2897, %v2929
        %v2932 = vadd.f32 %v2879, %v2930
        %v2933 = vadd.f32 %v2880, %v2931
        %s2934 = sld [smem:[#allocation15 + $0x315]]
        %v2935 = vstv %s2934
        %v2936 = vmul.f32 %v2896, %v2935
        %v2937 = vmul.f32 %v2897, %v2935
        %v2938 = vadd.f32 %v2885, %v2936
        %v2939 = vadd.f32 %v2886, %v2937
        %s2940 = sld [smem:[#allocation15 + $0x395]]
        %v2941 = vstv %s2940
        %v2942 = vmul.f32 %v2896, %v2941
        %v2943 = vmul.f32 %v2897, %v2941
        %v2944 = vadd.f32 %v2891, %v2942
        %v2945 = vadd.f32 %v2892, %v2943
        %v2947 = vrot.slane %v2818, 7
        %v2949 = vsub.f32 %v1993, %v2947
        %v2950 = vsub.f32 %v1994, %v2947
        %s2951 = sld [smem:[#allocation15 + $0x17]]
        %v2952 = vstv %s2951
        %v2953 = vmul.f32 %v2949, %v2952
        %v2954 = vmul.f32 %v2950, %v2952
        %v2955 = vadd.f32 %v2902, %v2953
        %v2956 = vadd.f32 %v2903, %v2954
        %s2957 = sld [smem:[#allocation15 + $0x97]]
        %v2958 = vstv %s2957
        %v2959 = vmul.f32 %v2949, %v2958
        %v2960 = vmul.f32 %v2950, %v2958
        %v2961 = vadd.f32 %v2908, %v2959
        %v2962 = vadd.f32 %v2909, %v2960
        %s2963 = sld [smem:[#allocation15 + $0x117]]
        %v2964 = vstv %s2963
        %v2965 = vmul.f32 %v2949, %v2964
        %v2966 = vmul.f32 %v2950, %v2964
        %v2967 = vadd.f32 %v2914, %v2965
        %v2968 = vadd.f32 %v2915, %v2966
        %s2969 = sld [smem:[#allocation15 + $0x197]]
        %v2970 = vstv %s2969
        %v2971 = vmul.f32 %v2949, %v2970
        %v2972 = vmul.f32 %v2950, %v2970
        %v2973 = vadd.f32 %v2920, %v2971
        %v2974 = vadd.f32 %v2921, %v2972
        %s2975 = sld [smem:[#allocation15 + $0x217]]
        %v2976 = vstv %s2975
        %v2977 = vmul.f32 %v2949, %v2976
        %v2978 = vmul.f32 %v2950, %v2976
        %v2979 = vadd.f32 %v2926, %v2977
        %v2980 = vadd.f32 %v2927, %v2978
        %s2981 = sld [smem:[#allocation15 + $0x297]]
        %v2982 = vstv %s2981
        %v2983 = vmul.f32 %v2949, %v2982
        %v2984 = vmul.f32 %v2950, %v2982
        %v2985 = vadd.f32 %v2932, %v2983
        %v2986 = vadd.f32 %v2933, %v2984
        %s2987 = sld [smem:[#allocation15 + $0x317]]
        %v2988 = vstv %s2987
        %v2989 = vmul.f32 %v2949, %v2988
        %v2990 = vmul.f32 %v2950, %v2988
        %v2991 = vadd.f32 %v2938, %v2989
        %v2992 = vadd.f32 %v2939, %v2990
        %s2993 = sld [smem:[#allocation15 + $0x397]]
        %v2994 = vstv %s2993
        %v2995 = vmul.f32 %v2949, %v2994
        %v2996 = vmul.f32 %v2950, %v2994
        %v2997 = vadd.f32 %v2944, %v2995
        %v2998 = vadd.f32 %v2945, %v2996
        %v2999 = vsub.f32 %v1993, %v2808
        %v3000 = vsub.f32 %v1994, %v2809
        %s3001 = sld [smem:[#allocation15 + $0x19]]
        %v3002 = vstv %s3001
        %v3003 = vmul.f32 %v2999, %v3002
        %v3004 = vmul.f32 %v3000, %v3002
        %v3005 = vadd.f32 %v2955, %v3003
        %v3006 = vadd.f32 %v2956, %v3004
        %s3007 = sld [smem:[#allocation15 + $0x99]]
        %v3008 = vstv %s3007
        %v3009 = vmul.f32 %v2999, %v3008
        %v3010 = vmul.f32 %v3000, %v3008
        %v3011 = vadd.f32 %v2961, %v3009
        %v3012 = vadd.f32 %v2962, %v3010
        %s3013 = sld [smem:[#allocation15 + $0x119]]
        %v3014 = vstv %s3013
        %v3015 = vmul.f32 %v2999, %v3014
        %v3016 = vmul.f32 %v3000, %v3014
        %v3017 = vadd.f32 %v2967, %v3015
        %v3018 = vadd.f32 %v2968, %v3016
        %s3019 = sld [smem:[#allocation15 + $0x199]]
        %v3020 = vstv %s3019
        %v3021 = vmul.f32 %v2999, %v3020
        %v3022 = vmul.f32 %v3000, %v3020
        %v3023 = vadd.f32 %v2973, %v3021
        %v3024 = vadd.f32 %v2974, %v3022
        %s3025 = sld [smem:[#allocation15 + $0x219]]
        %v3026 = vstv %s3025
        %v3027 = vmul.f32 %v2999, %v3026
        %v3028 = vmul.f32 %v3000, %v3026
        %v3029 = vadd.f32 %v2979, %v3027
        %v3030 = vadd.f32 %v2980, %v3028
        %s3031 = sld [smem:[#allocation15 + $0x299]]
        %v3032 = vstv %s3031
        %v3033 = vmul.f32 %v2999, %v3032
        %v3034 = vmul.f32 %v3000, %v3032
        %v3035 = vadd.f32 %v2985, %v3033
        %v3036 = vadd.f32 %v2986, %v3034
        %s3037 = sld [smem:[#allocation15 + $0x319]]
        %v3038 = vstv %s3037
        %v3039 = vmul.f32 %v2999, %v3038
        %v3040 = vmul.f32 %v3000, %v3038
        %v3041 = vadd.f32 %v2991, %v3039
        %v3042 = vadd.f32 %v2992, %v3040
        %s3043 = sld [smem:[#allocation15 + $0x399]]
        %v3044 = vstv %s3043
        %v3045 = vmul.f32 %v2999, %v3044
        %v3046 = vmul.f32 %v3000, %v3044
        %v3047 = vadd.f32 %v2997, %v3045
        %v3048 = vadd.f32 %v2998, %v3046
        %v3050 = vrot.slane %v2825, 7
        %v3052 = vsub.f32 %v1993, %v3050
        %v3053 = vsub.f32 %v1994, %v3050
        %s3054 = sld [smem:[#allocation15 + $0x1b]]
        %v3055 = vstv %s3054
        %v3056 = vmul.f32 %v3052, %v3055
        %v3057 = vmul.f32 %v3053, %v3055
        %v3058 = vadd.f32 %v3005, %v3056
        %v3059 = vadd.f32 %v3006, %v3057
        %s3060 = sld [smem:[#allocation15 + $0x9b]]
        %v3061 = vstv %s3060
        %v3062 = vmul.f32 %v3052, %v3061
        %v3063 = vmul.f32 %v3053, %v3061
        %v3064 = vadd.f32 %v3011, %v3062
        %v3065 = vadd.f32 %v3012, %v3063
        %s3066 = sld [smem:[#allocation15 + $0x11b]]
        %v3067 = vstv %s3066
        %v3068 = vmul.f32 %v3052, %v3067
        %v3069 = vmul.f32 %v3053, %v3067
        %v3070 = vadd.f32 %v3017, %v3068
        %v3071 = vadd.f32 %v3018, %v3069
        %s3072 = sld [smem:[#allocation15 + $0x19b]]
        %v3073 = vstv %s3072
        %v3074 = vmul.f32 %v3052, %v3073
        %v3075 = vmul.f32 %v3053, %v3073
        %v3076 = vadd.f32 %v3023, %v3074
        %v3077 = vadd.f32 %v3024, %v3075
        %s3078 = sld [smem:[#allocation15 + $0x21b]]
        %v3079 = vstv %s3078
        %v3080 = vmul.f32 %v3052, %v3079
        %v3081 = vmul.f32 %v3053, %v3079
        %v3082 = vadd.f32 %v3029, %v3080
        %v3083 = vadd.f32 %v3030, %v3081
        %s3084 = sld [smem:[#allocation15 + $0x29b]]
        %v3085 = vstv %s3084
        %v3086 = vmul.f32 %v3052, %v3085
        %v3087 = vmul.f32 %v3053, %v3085
        %v3088 = vadd.f32 %v3035, %v3086
        %v3089 = vadd.f32 %v3036, %v3087
        %s3090 = sld [smem:[#allocation15 + $0x31b]]
        %v3091 = vstv %s3090
        %v3092 = vmul.f32 %v3052, %v3091
        %v3093 = vmul.f32 %v3053, %v3091
        %v3094 = vadd.f32 %v3041, %v3092
        %v3095 = vadd.f32 %v3042, %v3093
        %s3096 = sld [smem:[#allocation15 + $0x39b]]
        %v3097 = vstv %s3096
        %v3098 = vmul.f32 %v3052, %v3097
        %v3099 = vmul.f32 %v3053, %v3097
        %v3100 = vadd.f32 %v3047, %v3098
        %v3101 = vadd.f32 %v3048, %v3099
        %v3103 = vrot.slane %v2832, 7
        %v3105 = vsub.f32 %v1993, %v3103
        %v3106 = vsub.f32 %v1994, %v3103
        %s3107 = sld [smem:[#allocation15 + $0x1d]]
        %v3108 = vstv %s3107
        %v3109 = vmul.f32 %v3105, %v3108
        %v3110 = vmul.f32 %v3106, %v3108
        %v3111 = vadd.f32 %v3058, %v3109
        %v3112 = vadd.f32 %v3059, %v3110
        %s3113 = sld [smem:[#allocation15 + $0x9d]]
        %v3114 = vstv %s3113
        %v3115 = vmul.f32 %v3105, %v3114
        %v3116 = vmul.f32 %v3106, %v3114
        %v3117 = vadd.f32 %v3064, %v3115
        %v3118 = vadd.f32 %v3065, %v3116
        %s3119 = sld [smem:[#allocation15 + $0x11d]]
        %v3120 = vstv %s3119
        %v3121 = vmul.f32 %v3105, %v3120
        %v3122 = vmul.f32 %v3106, %v3120
        %v3123 = vadd.f32 %v3070, %v3121
        %v3124 = vadd.f32 %v3071, %v3122
        %s3125 = sld [smem:[#allocation15 + $0x19d]]
        %v3126 = vstv %s3125
        %v3127 = vmul.f32 %v3105, %v3126
        %v3128 = vmul.f32 %v3106, %v3126
        %v3129 = vadd.f32 %v3076, %v3127
        %v3130 = vadd.f32 %v3077, %v3128
        %s3131 = sld [smem:[#allocation15 + $0x21d]]
        %v3132 = vstv %s3131
        %v3133 = vmul.f32 %v3105, %v3132
        %v3134 = vmul.f32 %v3106, %v3132
        %v3135 = vadd.f32 %v3082, %v3133
        %v3136 = vadd.f32 %v3083, %v3134
        %s3137 = sld [smem:[#allocation15 + $0x29d]]
        %v3138 = vstv %s3137
        %v3139 = vmul.f32 %v3105, %v3138
        %v3140 = vmul.f32 %v3106, %v3138
        %v3141 = vadd.f32 %v3088, %v3139
        %v3142 = vadd.f32 %v3089, %v3140
        %s3143 = sld [smem:[#allocation15 + $0x31d]]
        %v3144 = vstv %s3143
        %v3145 = vmul.f32 %v3105, %v3144
        %v3146 = vmul.f32 %v3106, %v3144
        %v3147 = vadd.f32 %v3094, %v3145
        %v3148 = vadd.f32 %v3095, %v3146
        %s3149 = sld [smem:[#allocation15 + $0x39d]]
        %v3150 = vstv %s3149
        %v3151 = vmul.f32 %v3105, %v3150
        %v3152 = vmul.f32 %v3106, %v3150
        %v3153 = vadd.f32 %v3100, %v3151
        %v3154 = vadd.f32 %v3101, %v3152
        %v3156 = vrot.slane %v2839, 7
        %v3158 = vsub.f32 %v1993, %v3156
        %v3159 = vsub.f32 %v1994, %v3156
        %s3160 = sld [smem:[#allocation15 + $0x1f]]
        %v3161 = vstv %s3160
        %v3162 = vmul.f32 %v3158, %v3161
        %v3163 = vmul.f32 %v3159, %v3161
        %v3164 = vadd.f32 %v3111, %v3162
        %v3165 = vadd.f32 %v3112, %v3163
        %s3166 = sld [smem:[#allocation15 + $0x9f]]
        %v3167 = vstv %s3166
        %v3168 = vmul.f32 %v3158, %v3167
        %v3169 = vmul.f32 %v3159, %v3167
        %v3170 = vadd.f32 %v3117, %v3168
        %v3171 = vadd.f32 %v3118, %v3169
        %s3172 = sld [smem:[#allocation15 + $0x11f]]
        %v3173 = vstv %s3172
        %v3174 = vmul.f32 %v3158, %v3173
        %v3175 = vmul.f32 %v3159, %v3173
        %v3176 = vadd.f32 %v3123, %v3174
        %v3177 = vadd.f32 %v3124, %v3175
        %s3178 = sld [smem:[#allocation15 + $0x19f]]
        %v3179 = vstv %s3178
        %v3180 = vmul.f32 %v3158, %v3179
        %v3181 = vmul.f32 %v3159, %v3179
        %v3182 = vadd.f32 %v3129, %v3180
        %v3183 = vadd.f32 %v3130, %v3181
        %s3184 = sld [smem:[#allocation15 + $0x21f]]
        %v3185 = vstv %s3184
        %v3186 = vmul.f32 %v3158, %v3185
        %v3187 = vmul.f32 %v3159, %v3185
        %v3188 = vadd.f32 %v3135, %v3186
        %v3189 = vadd.f32 %v3136, %v3187
        %s3190 = sld [smem:[#allocation15 + $0x29f]]
        %v3191 = vstv %s3190
        %v3192 = vmul.f32 %v3158, %v3191
        %v3193 = vmul.f32 %v3159, %v3191
        %v3194 = vadd.f32 %v3141, %v3192
        %v3195 = vadd.f32 %v3142, %v3193
        %s3196 = sld [smem:[#allocation15 + $0x31f]]
        %v3197 = vstv %s3196
        %v3198 = vmul.f32 %v3158, %v3197
        %v3199 = vmul.f32 %v3159, %v3197
        %v3200 = vadd.f32 %v3147, %v3198
        %v3201 = vadd.f32 %v3148, %v3199
        %s3202 = sld [smem:[#allocation15 + $0x39f]]
        %v3203 = vstv %s3202
        %v3204 = vmul.f32 %v3158, %v3203
        %v3205 = vmul.f32 %v3159, %v3203
        %v3206 = vadd.f32 %v3153, %v3204
        %v3207 = vadd.f32 %v3154, %v3205
        %v3208 = vsub.f32 %v1993, %v2814
        %v3209 = vsub.f32 %v1994, %v2815
        %s3210 = sld [smem:[#allocation15 + $0x21]]
        %v3211 = vstv %s3210
        %v3212 = vmul.f32 %v3208, %v3211
        %v3213 = vmul.f32 %v3209, %v3211
        %v3214 = vadd.f32 %v3164, %v3212
        %v3215 = vadd.f32 %v3165, %v3213
        %s3216 = sld [smem:[#allocation15 + $0xa1]]
        %v3217 = vstv %s3216
        %v3218 = vmul.f32 %v3208, %v3217
        %v3219 = vmul.f32 %v3209, %v3217
        %v3220 = vadd.f32 %v3170, %v3218
        %v3221 = vadd.f32 %v3171, %v3219
        %s3222 = sld [smem:[#allocation15 + $0x121]]
        %v3223 = vstv %s3222
        %v3224 = vmul.f32 %v3208, %v3223
        %v3225 = vmul.f32 %v3209, %v3223
        %v3226 = vadd.f32 %v3176, %v3224
        %v3227 = vadd.f32 %v3177, %v3225
        %s3228 = sld [smem:[#allocation15 + $0x1a1]]
        %v3229 = vstv %s3228
        %v3230 = vmul.f32 %v3208, %v3229
        %v3231 = vmul.f32 %v3209, %v3229
        %v3232 = vadd.f32 %v3182, %v3230
        %v3233 = vadd.f32 %v3183, %v3231
        %s3234 = sld [smem:[#allocation15 + $0x221]]
        %v3235 = vstv %s3234
        %v3236 = vmul.f32 %v3208, %v3235
        %v3237 = vmul.f32 %v3209, %v3235
        %v3238 = vadd.f32 %v3188, %v3236
        %v3239 = vadd.f32 %v3189, %v3237
        %s3240 = sld [smem:[#allocation15 + $0x2a1]]
        %v3241 = vstv %s3240
        %v3242 = vmul.f32 %v3208, %v3241
        %v3243 = vmul.f32 %v3209, %v3241
        %v3244 = vadd.f32 %v3194, %v3242
        %v3245 = vadd.f32 %v3195, %v3243
        %s3246 = sld [smem:[#allocation15 + $0x321]]
        %v3247 = vstv %s3246
        %v3248 = vmul.f32 %v3208, %v3247
        %v3249 = vmul.f32 %v3209, %v3247
        %v3250 = vadd.f32 %v3200, %v3248
        %v3251 = vadd.f32 %v3201, %v3249
        %s3252 = sld [smem:[#allocation15 + $0x3a1]]
        %v3253 = vstv %s3252
        %v3254 = vmul.f32 %v3208, %v3253
        %v3255 = vmul.f32 %v3209, %v3253
        %v3256 = vadd.f32 %v3206, %v3254
        %v3257 = vadd.f32 %v3207, %v3255
        %3258 = vst [vmem:[%s400 - $0x1] sm:$0xfe] %v3214
        %3259 = vst [vmem:[%s400 + $0x7] sm:$0x1] %v3215
        %s3260 = scalar_lea.vmem %s400, 8 [#allocation18]
        %3261 = vst [vmem:[%s3260 - $0x1] sm:$0xfe] %v3220
        %3262 = vst [vmem:[%s3260 + $0x7] sm:$0x1] %v3221
        %s3263 = scalar_lea.vmem %s400, 16 [#allocation18]
        %3264 = vst [vmem:[%s3263 - $0x1] sm:$0xfe] %v3226
        %3265 = vst [vmem:[%s3263 + $0x7] sm:$0x1] %v3227
        %s3266 = scalar_lea.vmem %s400, 24 [#allocation18]
        %3267 = vst [vmem:[%s3266 - $0x1] sm:$0xfe] %v3232
        %3268 = vst [vmem:[%s3266 + $0x7] sm:$0x1] %v3233
        %s3269 = scalar_lea.vmem %s400, 32 [#allocation18]
        %3270 = vst [vmem:[%s3269 - $0x1] sm:$0xfe] %v3238
        %3271 = vst [vmem:[%s3269 + $0x7] sm:$0x1] %v3239
        %s3272 = scalar_lea.vmem %s400, 40 [#allocation18]
        %3273 = vst [vmem:[%s3272 - $0x1] sm:$0xfe] %v3244
        %3274 = vst [vmem:[%s3272 + $0x7] sm:$0x1] %v3245
        %s3275 = scalar_lea.vmem %s400, 48 [#allocation18]
        %3276 = vst [vmem:[%s3275 - $0x1] sm:$0xfe] %v3250
        %3277 = vst [vmem:[%s3275 + $0x7] sm:$0x1] %v3251
        %s3278 = scalar_lea.vmem %s400, 56 [#allocation18]
        %3279 = vst [vmem:[%s3278 - $0x1] sm:$0xfe] %v3256
        %3280 = vst [vmem:[%s3278 + $0x7] sm:$0x1] %v3257
        %s3281 = sand.u32 %s218, 1
        %s3282 = scalar_lea.sflag [#allocation5], %s3281
        %s3283 = sand.u32 %s218, 1
        %s3284 = smul.addr %s3283, 64
        %s3285 = scalar_lea.vmem [#allocation18], %s3284
        // Predicated region
        $region167: #{tpu_custom_call.1} parent=51 // pred_check
          %p3286 = pneg %p228
        $region168: #{tpu_custom_call.1} parent=51 // pred_check_branch
          %3288 = sbr.rel (%p3286) target = $region170
        $region169: #{tpu_custom_call.1} parent=51 // pred_region
          %s3290 = ssub.s32 1024, 1024
          %3291 = vsyncadd %s3282, %s3290
          %s3292 = smul.addr %s32, 16
          %s3293 = sadd.s32 %s33, %s3292
          %s3294 = smul.addr %s3293, 128
          %s3295 = scalar_lea.hbm %s9, %s3294
          %s3296 = sshll.u32 %s3285, 4
          %s3297 = int_to_ptr.vmem [resolvable:$true] %s3296
          %3302 = dma.vmem_to_hbm [thread:$0]  %s3297, 1024, %s3295, %s3282, 128, 256, 8
        $region170: #{tpu_custom_call.1} parent=51 // pred_fallthru
          _
      $region52: #{tpu_custom_call.1} parent=5 // pred_fallthru
        _
      %p3303 = scmp.le.s32.totalorder 2, %s23
      // Predicated region
      $region171: #{tpu_custom_call.1} parent=5 // pred_check
        %p3304 = pneg %p3303
      $region172: #{tpu_custom_call.1} parent=5 // pred_check_branch
        %3306 = sbr.rel (%p3304) target = $region174
      $region173: #{tpu_custom_call.1} parent=5 // pred_region
        %s3307 = ssub.s32 %s23, 2
        // Predicated region
        $region175: #{tpu_custom_call.1} parent=173 // pred_check
          %p3308 = pneg %p234
        $region176: #{tpu_custom_call.1} parent=173 // pred_check_branch
          %3310 = sbr.rel (%p3308) target = $region178
        $region177: #{tpu_custom_call.1} parent=173 // pred_region
          %s3311 = sand.u32 %s219, 1
          %s3312 = scalar_lea.sflag [#allocation5], %s3311
          %s3313 = sand.u32 %s219, 1
          %s3314 = smul.addr %s3313, 64
          %s3315 = scalar_lea.vmem [#allocation18], %s3314
          %3316 = dma.done %s3312, 1024
        $region178: #{tpu_custom_call.1} parent=173 // pred_fallthru
          _
      $region174: #{tpu_custom_call.1} parent=5 // pred_fallthru
        _
    $region6: #{tpu_custom_call.1} parent=1 // loop_footer
      %s27 = sadd.s32 1, %s23
    $region7: #{tpu_custom_call.1} parent=1 // loop_footer_branch
      %22 = sbr.rel target = $region3
    $region8: #{tpu_custom_call.1} parent=1 // loop_exit
      _
    %3317 = vsyncpa [#allocation5], 1
    %s3318 = scalar_lea.sflag [#allocation5], 1
    %3319 = vsyncpa %s3318, 1
    %3320 = vsyncpa [#allocation6], 1
    %s3321 = scalar_lea.sflag [#allocation6], 1
    %3322 = vsyncpa %s3321, 1
    %3323 = vsyncpa [#allocation8], 1
    %3324 = vsyncpa [#allocation11], 1
    %3325 = vsyncpa [#allocation14], 1
    %3326 = vsyncpa [#allocation17], 1
  %3327 = vsyncmov [#allocation3]
  %s3328 = vpop.sfrf %3327
  %p3329 = scmp.eq.s32.totalorder %s3328, 0
  %p3330 = pneg %p3329
  %3332 = shalt.err (%p3330)
  %s3333 = scalar_lea.sflag [#allocation3], 1
  %3334 = vsyncmov %s3333
  %s3335 = vpop.sfrf %3334
  %p3336 = scmp.eq.s32.totalorder %s3335, 0
  %p3337 = pneg %p3336
  %3339 = shalt.err (%p3337)

</llo_original>
